<compile_context>
chip_gen: v5e
topology: v5e:2x2
jax: 0.10.0
libtpu: 0.0.40
codegen_flags: <defaults>
</compile_context>

<pallas_src>
import jax
import jax.numpy as jnp
from jax.experimental import pallas as pl
from jax.experimental.pallas import tpu as pltpu

# ---------------- model hyper-parameters (small but structurally faithful) ---
IN_CH = 9          # in_channels
OUT_CH = 80        # out_channels
LAYERS = 6
STACKS = 3
RES_CH = 128       # residual_channels (small)
GATE_CH = 128      # gate_channels (split into tanh/sigmoid halves)
SKIP_CH = 128      # skip_out_channels (small)
KSIZE = 3
LAYERS_PER_STACK = LAYERS // STACKS
DILATIONS = tuple(2 ** (l % LAYERS_PER_STACK) for l in range(LAYERS))  # 1,2,1,2,1,2
GATE_OUT = GATE_CH // 2

B = 2
T = 64
BT = B * T          # batch folded into the matmul M dimension
IN_PAD = 128        # lane-dense input channel width
OUT_PAD = 128       # lane-dense output channel width (sliced to OUT_CH outside)

# bias-slab row offsets: [b_in | b_dil x6 | b_res x6 | sum(b_skip) | b_p1 | b_p2]
_B_IN = 0
_B_DIL = 1
_B_RES = 1 + LAYERS
_B_SKIP = 1 + 2 * LAYERS
_B_P1 = 2 + 2 * LAYERS
_B_P2 = 3 + 2 * LAYERS
_NBIAS = 4 + 2 * LAYERS          # 16 rows -> two (8,128) sublane tiles


# --------------------------------- kernel ------------------------------------
def neuralformants_kernel(x_ref, w1x1_ref, wdil_ref, wsr_ref, bias_ref,
                          o_ref, skips_ref):
    f32 = jnp.float32
    bf16 = jnp.bfloat16

    biases = bias_ref[...]                                    # (16, 128) f32, ~2 vregs

    # input 1x1 conv: (BT, IN_PAD) @ (IN_PAD, RES_CH); padded rows of w_in are zero.
    h = jnp.dot(x_ref[...], w1x1_ref[0],
                preferred_element_type=f32) + biases[_B_IN:_B_IN + 1]

    # skip accumulator lives in VMEM scratch (not vregs) across the unrolled loop.
    skips_ref[...] = jnp.zeros((BT, SKIP_CH), f32)

    # time-within-segment row index + per-dilation boundary masks, hoisted out of
    # the layer loop; masking on time-within-segment keeps the "same" zero padding
    # from leaking across the folded batch boundary.
    tmod = jax.lax.broadcasted_iota(jnp.int32, (BT, 1), 0) % T
    masks = {d: (tmod >= d, tmod < T - d) for d in sorted(set(DILATIONS))}

    for l in range(LAYERS):                                   # static unroll (6 layers)
        d = DILATIONS[l]
        residual = h
        hb = h.astype(bf16)
        m_left, m_right = masks[d]

        # shifted taps: XLU roll in f32 (portable), then cast+mask in one bf16 select.
        h_left = jnp.where(m_left,
                           pltpu.roll(h, d, axis=0).astype(bf16), 0.0)       # h[t-d]
        h_right = jnp.where(m_right,
                            pltpu.roll(h, BT - d, axis=0).astype(bf16), 0.0)  # h[t+d]

        # fused k=3 dilated conv: one matmul with K = 3*RES_CH = 384.
        hcat = jnp.concatenate([h_left, hb, h_right], axis=1)  # (BT, 384) bf16
        y = jnp.dot(hcat, wdil_ref[l],
                    preferred_element_type=f32) + biases[_B_DIL + l:_B_DIL + l + 1]

        # gated activation (f32 transcendentals: portable v5e/v6e/v7x).
        # TODO(synk): bf16 tanh/sigmoid + 256-lane gate output on v6e/v7x only.
        z = jnp.tanh(y[:, :GATE_OUT]) * jax.nn.sigmoid(y[:, GATE_OUT:])

        # fused skip + residual 1x1 convs: (BT, GATE_OUT) @ (GATE_OUT, SKIP+RES).
        sr = jnp.dot(z.astype(bf16), wsr_ref[l], preferred_element_type=f32)
        skips_ref[...] = skips_ref[...] + sr[:, :SKIP_CH]      # consume sr immediately
        h = sr[:, SKIP_CH:] + biases[_B_RES + l:_B_RES + l + 1] + residual

    # postnet: (+ Σ_l b_skip) -> ReLU -> 1x1 conv -> ReLU -> 1x1 conv (128-lane out).
    p = jax.nn.relu(skips_ref[...] + biases[_B_SKIP:_B_SKIP + 1])
    p = jnp.dot(p.astype(bf16), w1x1_ref[1],
                preferred_element_type=f32) + biases[_B_P1:_B_P1 + 1]
    p = jax.nn.relu(p)
    p = jnp.dot(p.astype(bf16), w1x1_ref[2],
                preferred_element_type=f32) + biases[_B_P2:_B_P2 + 1]

    o_ref[...] = p                                            # lane-dense (BT, 128) store


# --------------------------- one-time parameter prep --------------------------
def prepare_params(params):
    """Pack / pad / cast all weights once (hoisted out of the per-call forward)."""
    bf16 = jnp.bfloat16
    w_in = jnp.pad(params["w_in"], ((0, IN_PAD - IN_CH), (0, 0)))          # (128,128)
    w_p2 = jnp.pad(params["w_p2"], ((0, 0), (0, OUT_PAD - OUT_CH)))        # (128,128)
    w_1x1 = jnp.stack([w_in, params["w_p1"], w_p2]).astype(bf16)           # (3,128,128)
    w_dil = params["w_dil"].reshape(LAYERS, KSIZE * RES_CH, GATE_CH).astype(bf16)
    w_sr = jnp.concatenate([params["w_skip"], params["w_res"]], axis=-1).astype(bf16)

    biases = jnp.concatenate([
        params["b_in"],                                                    # (1,128)
        params["b_dil"].reshape(LAYERS, GATE_CH),                          # (6,128)
        params["b_res"].reshape(LAYERS, RES_CH),                           # (6,128)
        params["b_skip"].sum(axis=0),                                      # (1,128)
        params["b_p1"],                                                    # (1,128)
        jnp.pad(params["b_p2"], ((0, 0), (0, OUT_PAD - OUT_CH))),          # (1,128)
    ], axis=0).astype(jnp.float32)
    assert biases.shape == (_NBIAS, 128)
    return {"w_1x1": w_1x1, "w_dil": w_dil, "w_sr": w_sr, "biases": biases}


# -------------------------------- forward ------------------------------------
@jax.jit
def neuralformants_forward(x_nct, prepped):
    """x_nct: (B, IN_CH, T) float32 (PyTorch NCW). Returns (B, OUT_CH, T) f32."""
    b_, cin, t_ = x_nct.shape
    assert (b_, cin, t_) == (B, IN_CH, T)

    # fold batch into M, pad channels to a full lane tile, cast the MXU operand to bf16
    x = jnp.transpose(x_nct, (0, 2, 1)).reshape(BT, IN_CH)
    x = jnp.pad(x, ((0, 0), (0, IN_PAD - IN_CH))).astype(jnp.bfloat16)

    out = pl.pallas_call(
        neuralformants_kernel,
        out_shape=jax.ShapeDtypeStruct((BT, OUT_PAD), jnp.float32),
        scratch_shapes=[pltpu.VMEM((BT, SKIP_CH), jnp.float32)],
    )(x, prepped["w_1x1"], prepped["w_dil"], prepped["w_sr"], prepped["biases"])

    out = out[:, :OUT_CH].reshape(B, T, OUT_CH)
    return jnp.transpose(out, (0, 2, 1))                      # back to NCW


# --------------------------- deterministic params ----------------------------
def init_params(key):
    ks = jax.random.split(key, 12)

    def w(k, shape, fan_in):
        return (0.1 / jnp.sqrt(fan_in)) * jax.random.normal(k, shape, jnp.float32)

    return {
        "w_in":   w(ks[0], (IN_CH, RES_CH), IN_CH),
        "b_in":   0.01 * jax.random.normal(ks[1], (1, RES_CH), jnp.float32),
        "w_dil":  w(ks[2], (LAYERS, KSIZE, RES_CH, GATE_CH), KSIZE * RES_CH),
        "b_dil":  0.01 * jax.random.normal(ks[3], (LAYERS, 1, GATE_CH), jnp.float32),
        "w_res":  w(ks[4], (LAYERS, GATE_OUT, RES_CH), GATE_OUT),
        "b_res":  0.01 * jax.random.normal(ks[5], (LAYERS, 1, RES_CH), jnp.float32),
        "w_skip": w(ks[6], (LAYERS, GATE_OUT, SKIP_CH), GATE_OUT),
        "b_skip": 0.01 * jax.random.normal(ks[7], (LAYERS, 1, SKIP_CH), jnp.float32),
        "w_p1":   w(ks[8], (SKIP_CH, SKIP_CH), SKIP_CH),
        "b_p1":   0.01 * jax.random.normal(ks[9], (1, SKIP_CH), jnp.float32),
        "w_p2":   w(ks[10], (SKIP_CH, OUT_CH), SKIP_CH),
        "b_p2":   0.01 * jax.random.normal(ks[11], (1, OUT_CH), jnp.float32),
    }


# -------------------------- pure-JAX references (check) -----------------------
def reference_forward(x_nct, p):
    """Full-f32 HIGHEST-precision reference (module semantics)."""
    x = jnp.transpose(x_nct, (0, 2, 1))
    hp = jax.lax.Precision.HIGHEST
    mm = lambda a, b: jnp.matmul(a, b, precision=hp)
    h = mm(x, p["w_in"]) + p["b_in"]
    skips = jnp.zeros((x.shape[0], x.shape[1], SKIP_CH), jnp.float32)
    for l in range(LAYERS):
        d = DILATIONS[l]
        res = h
        zpad = jnp.zeros((h.shape[0], d, RES_CH), jnp.float32)
        h_l = jnp.concatenate([zpad, h[:, :-d]], axis=1)
        h_r = jnp.concatenate([h[:, d:], zpad], axis=1)
        y = (mm(h_l, p["w_dil"][l, 0]) + mm(h, p["w_dil"][l, 1])
             + mm(h_r, p["w_dil"][l, 2]) + p["b_dil"][l])
        z = jnp.tanh(y[..., :GATE_OUT]) * jax.nn.sigmoid(y[..., GATE_OUT:])
        skips = skips + mm(z, p["w_skip"][l]) + p["b_skip"][l]
        h = mm(z, p["w_res"][l]) + p["b_res"][l] + res
    q = jax.nn.relu(skips)
    q = mm(q, p["w_p1"]) + p["b_p1"]
    q = jax.nn.relu(q)
    q = mm(q, p["w_p2"]) + p["b_p2"]
    return jnp.transpose(q, (0, 2, 1))


def reference_forward_bf16(x_nct, p):
    """Reference with the same bf16-input / f32-accumulation matmul policy as the kernel."""
    bf16, f32 = jnp.bfloat16, jnp.float32
    mm = lambda a, b: jnp.matmul(a.astype(bf16), b.astype(bf16),
                                 preferred_element_type=f32)
    x = jnp.transpose(x_nct, (0, 2, 1))
    h = mm(x, p["w_in"]) + p["b_in"]
    skips = jnp.zeros((x.shape[0], x.shape[1], SKIP_CH), f32)
    for l in range(LAYERS):
        d = DILATIONS[l]
        res = h
        zpad = jnp.zeros((h.shape[0], d, RES_CH), f32)
        h_l = jnp.concatenate([zpad, h[:, :-d]], axis=1)
        h_r = jnp.concatenate([h[:, d:], zpad], axis=1)
        y = (mm(h_l, p["w_dil"][l, 0]) + mm(h, p["w_dil"][l, 1])
             + mm(h_r, p["w_dil"][l, 2]) + p["b_dil"][l])
        z = jnp.tanh(y[..., :GATE_OUT]) * jax.nn.sigmoid(y[..., GATE_OUT:])
        skips = skips + mm(z, p["w_skip"][l]) + p["b_skip"][l]
        h = mm(z, p["w_res"][l]) + p["b_res"][l] + res
    q = jax.nn.relu(skips)
    q = mm(q, p["w_p1"]) + p["b_p1"]
    q = jax.nn.relu(q)
    q = mm(q, p["w_p2"]) + p["b_p2"]
    return jnp.transpose(q, (0, 2, 1))


# ----------------------------------- main ------------------------------------
if __name__ == "__main__":
    key = jax.random.PRNGKey(0)
    k_x, k_p = jax.random.split(key)
    x = jax.random.normal(k_x, (B, IN_CH, T), jnp.float32)   # PyTorch NCW input
    params = init_params(k_p)

    prepped = prepare_params(params)                          # one-time weight prep
    prepped = jax.tree_util.tree_map(jax.block_until_ready, prepped)

    out = jax.block_until_ready(neuralformants_forward(x, prepped))
    assert out.shape == (B, OUT_CH, T), out.shape
    assert bool(jnp.all(jnp.isfinite(out)))

    # exact-policy check (same bf16-in / f32-acc matmuls): validates kernel logic
    ref_match = jax.block_until_ready(reference_forward_bf16(x, params))
    assert jnp.allclose(out, ref_match, rtol=2e-3, atol=2e-3), \
        float(jnp.max(jnp.abs(out - ref_match)))

    # module-semantics f32 check: bf16 MXU inputs, so a looser tolerance
    ref_f32 = jax.block_until_ready(reference_forward(x, params))
    assert jnp.allclose(out, ref_f32, rtol=2e-2, atol=2e-2), \
        float(jnp.max(jnp.abs(out - ref_f32)))

    print("KERNEL_OK")
</pallas_src>

<mosaic_0001>
module attributes {stable_mosaic.version = 11 : i64} {
  func.func @neuralformants_kernel(%arg0: memref<128x128xbf16, #tpu.memory_space<vmem>>, %arg1: memref<3x128x128xbf16, #tpu.memory_space<vmem>>, %arg2: memref<6x384x128xbf16, #tpu.memory_space<vmem>>, %arg3: memref<6x64x256xbf16, #tpu.memory_space<vmem>>, %arg4: memref<16x128xf32, #tpu.memory_space<vmem>>, %arg5: memref<128x128xf32, #tpu.memory_space<vmem>>, %arg6: memref<128x128xf32, #tpu.memory_space<vmem>>) attributes {dimension_semantics = [], scalar_prefetch = 0 : i64, scratch_operands = 1 : i64, tpu.core_type = #tpu.core_type<tc>} {
    %c0 = arith.constant 0 : index
    %c0_0 = arith.constant 0 : index
    %0 = vector.load %arg4[%c0, %c0_0] : memref<16x128xf32, #tpu.memory_space<vmem>>, vector<16x128xf32>
    %c0_1 = arith.constant 0 : index
    %c0_2 = arith.constant 0 : index
    %1 = vector.load %arg0[%c0_1, %c0_2] : memref<128x128xbf16, #tpu.memory_space<vmem>>, vector<128x128xbf16>
    %c0_3 = arith.constant 0 : index
    %c0_4 = arith.constant 0 : index
    %c0_5 = arith.constant 0 : index
    %2 = vector.load %arg1[%c0_3, %c0_4, %c0_5] : memref<3x128x128xbf16, #tpu.memory_space<vmem>>, vector<1x128x128xbf16>
    %3 = vector.shape_cast %2 : vector<1x128x128xbf16> to vector<128x128xbf16>
    %cst = arith.constant dense<0.000000e+00> : vector<128x128xf32>
    %4 = tpu.matmul %1, %3, %cst {dimension_numbers = #tpu.dot_dimension_numbers<[1], [0], [0], [1], [0, 0, 1, 1], [], []>} : vector<128x128xbf16>, vector<128x128xbf16>, vector<128x128xf32> -> vector<128x128xf32>
    %5 = vector.extract_strided_slice %0 {offsets = [0, 0], sizes = [1, 128], strides = [1, 1]} : vector<16x128xf32> to vector<1x128xf32>
    %6 = vector.broadcast %5 : vector<1x128xf32> to vector<128x128xf32>
    %7 = arith.addf %4, %6 : vector<128x128xf32>
    %cst_6 = arith.constant 0.000000e+00 : f32
    %8 = vector.broadcast %cst_6 : f32 to vector<128x128xf32>
    %c0_7 = arith.constant 0 : index
    %c0_8 = arith.constant 0 : index
    %9 = vector.load %arg6[%c0_7, %c0_8] : memref<128x128xf32, #tpu.memory_space<vmem>>, vector<128x128xf32>
    tpu.vector_store %arg6[%c0_7, %c0_8], %8 {strides = array<i32>} : memref<128x128xf32, #tpu.memory_space<vmem>>, vector<128x128xf32>,
    %10 = tpu.iota {dimensions = array<i32: 0>} : vector<128x1xi32>
    %c64_i32 = arith.constant 64 : i32
    %c0_i32 = arith.constant 0 : i32
    %11 = arith.cmpi eq, %c64_i32, %c0_i32 : i32
    %c1_i32 = arith.constant 1 : i32
    %12 = arith.select %11, %c1_i32, %c64_i32 : i32
    %13 = vector.broadcast %12 : i32 to vector<128x1xi32>
    %14 = arith.remsi %10, %13 : vector<128x1xi32>
    %c0_i32_9 = arith.constant 0 : i32
    %15 = vector.broadcast %c0_i32_9 : i32 to vector<128x1xi32>
    %16 = arith.cmpi ne, %14, %15 : vector<128x1xi32>
    %c0_i32_10 = arith.constant 0 : i32
    %17 = vector.broadcast %c0_i32_10 : i32 to vector<128x1xi32>
    %18 = arith.cmpi slt, %14, %17 : vector<128x1xi32>
    %c0_i32_11 = arith.constant 0 : i32
    %19 = arith.cmpi slt, %12, %c0_i32_11 : i32
    %20 = vector.broadcast %19 : i1 to vector<128x1xi1>
    %21 = vector.broadcast %20 : vector<128x1xi1> to vector<128x1xi1>
    %22 = arith.xori %18, %21 : vector<128x1xi1>
    %23 = arith.andi %22, %16 : vector<128x1xi1>
    %24 = vector.broadcast %12 : i32 to vector<128x1xi32>
    %25 = arith.addi %14, %24 : vector<128x1xi32>
    %26 = arith.select %23, %25, %14 : vector<128x1xi1>, vector<128x1xi32>
    %c1_i32_12 = arith.constant 1 : i32
    %27 = vector.broadcast %c1_i32_12 : i32 to vector<128x1xi32>
    %28 = arith.cmpi sge, %26, %27 : vector<128x1xi32>
    %c63_i32 = arith.constant 63 : i32
    %29 = vector.broadcast %c63_i32 : i32 to vector<128x1xi32>
    %30 = arith.cmpi slt, %26, %29 : vector<128x1xi32>
    %c2_i32 = arith.constant 2 : i32
    %31 = vector.broadcast %c2_i32 : i32 to vector<128x1xi32>
    %32 = arith.cmpi sge, %26, %31 : vector<128x1xi32>
    %c62_i32 = arith.constant 62 : i32
    %33 = vector.broadcast %c62_i32 : i32 to vector<128x1xi32>
    %34 = arith.cmpi slt, %26, %33 : vector<128x1xi32>
    %35 = arith.truncf %7 : vector<128x128xf32> to vector<128x128xbf16>
    %c1_i32_13 = arith.constant 1 : i32
    %36 = tpu.dynamic_rotate %7 by %c1_i32_13 dim 0 : vector<128x128xf32>, i32 -> vector<128x128xf32>
    %37 = arith.truncf %36 : vector<128x128xf32> to vector<128x128xbf16>
    %cst_14 = arith.constant 0.000000e+00 : f32
    %38 = arith.truncf %cst_14 : f32 to bf16
    %39 = vector.shape_cast %28 : vector<128x1xi1> to vector<128x1xi1>
    %40 = vector.broadcast %39 : vector<128x1xi1> to vector<128x128xi1>
    %41 = vector.broadcast %38 : bf16 to vector<128x128xbf16>
    %42 = arith.select %40, %37, %41 : vector<128x128xi1>, vector<128x128xbf16>
    %c127_i32 = arith.constant 127 : i32
    %43 = tpu.dynamic_rotate %7 by %c127_i32 dim 0 : vector<128x128xf32>, i32 -> vector<128x128xf32>
    %44 = arith.truncf %43 : vector<128x128xf32> to vector<128x128xbf16>
    %cst_15 = arith.constant 0.000000e+00 : f32
    %45 = arith.truncf %cst_15 : f32 to bf16
    %46 = vector.shape_cast %30 : vector<128x1xi1> to vector<128x1xi1>
    %47 = vector.broadcast %46 : vector<128x1xi1> to vector<128x128xi1>
    %48 = vector.broadcast %45 : bf16 to vector<128x128xbf16>
    %49 = arith.select %47, %44, %48 : vector<128x128xi1>, vector<128x128xbf16>
    %50 = tpu.concatenate %42, %35, %49 in 1 : vector<128x128xbf16>, vector<128x128xbf16>, vector<128x128xbf16> -> vector<128x384xbf16>
    %c0_16 = arith.constant 0 : index
    %c0_17 = arith.constant 0 : index
    %c0_18 = arith.constant 0 : index
    %51 = vector.load %arg2[%c0_16, %c0_17, %c0_18] : memref<6x384x128xbf16, #tpu.memory_space<vmem>>, vector<1x384x128xbf16>
    %52 = vector.shape_cast %51 : vector<1x384x128xbf16> to vector<384x128xbf16>
    %cst_19 = arith.constant dense<0.000000e+00> : vector<128x128xf32>
    %53 = tpu.matmul %50, %52, %cst_19 {dimension_numbers = #tpu.dot_dimension_numbers<[1], [0], [0], [1], [0, 0, 1, 1], [], []>} : vector<128x384xbf16>, vector<384x128xbf16>, vector<128x128xf32> -> vector<128x128xf32>
    %54 = vector.extract_strided_slice %0 {offsets = [1, 0], sizes = [1, 128], strides = [1, 1]} : vector<16x128xf32> to vector<1x128xf32>
    %55 = vector.broadcast %54 : vector<1x128xf32> to vector<128x128xf32>
    %56 = arith.addf %53, %55 : vector<128x128xf32>
    %57 = vector.extract_strided_slice %56 {offsets = [0, 0], sizes = [128, 64], strides = [1, 1]} : vector<128x128xf32> to vector<128x64xf32>
    %58 = math.tanh %57 : vector<128x64xf32>
    %59 = vector.extract_strided_slice %56 {offsets = [0, 64], sizes = [128, 64], strides = [1, 1]} : vector<128x128xf32> to vector<128x64xf32>
    %60 = arith.negf %59 : vector<128x64xf32>
    %61 = math.exp %60 : vector<128x64xf32>
    %cst_20 = arith.constant 1.000000e+00 : f32
    %62 = vector.broadcast %cst_20 : f32 to vector<128x64xf32>
    %63 = arith.addf %62, %61 : vector<128x64xf32>
    %64 = arith.divf %62, %63 : vector<128x64xf32>
    %65 = arith.mulf %58, %64 : vector<128x64xf32>
    %66 = arith.truncf %65 : vector<128x64xf32> to vector<128x64xbf16>
    %c0_21 = arith.constant 0 : index
    %c0_22 = arith.constant 0 : index
    %c0_23 = arith.constant 0 : index
    %67 = vector.load %arg3[%c0_21, %c0_22, %c0_23] : memref<6x64x256xbf16, #tpu.memory_space<vmem>>, vector<1x64x256xbf16>
    %68 = vector.shape_cast %67 : vector<1x64x256xbf16> to vector<64x256xbf16>
    %cst_24 = arith.constant dense<0.000000e+00> : vector<128x256xf32>
    %69 = tpu.matmul %66, %68, %cst_24 {dimension_numbers = #tpu.dot_dimension_numbers<[1], [0], [0], [1], [0, 0, 1, 1], [], []>} : vector<128x64xbf16>, vector<64x256xbf16>, vector<128x256xf32> -> vector<128x256xf32>
    %c0_25 = arith.constant 0 : index
    %c0_26 = arith.constant 0 : index
    %70 = vector.load %arg6[%c0_25, %c0_26] : memref<128x128xf32, #tpu.memory_space<vmem>>, vector<128x128xf32>
    %71 = vector.extract_strided_slice %69 {offsets = [0, 0], sizes = [128, 128], strides = [1, 1]} : vector<128x256xf32> to vector<128x128xf32>
    %72 = arith.addf %70, %71 : vector<128x128xf32>
    %c0_27 = arith.constant 0 : index
    %c0_28 = arith.constant 0 : index
    %73 = vector.load %arg6[%c0_27, %c0_28] : memref<128x128xf32, #tpu.memory_space<vmem>>, vector<128x128xf32>
    tpu.vector_store %arg6[%c0_27, %c0_28], %72 {strides = array<i32>} : memref<128x128xf32, #tpu.memory_space<vmem>>, vector<128x128xf32>,
    %74 = vector.extract_strided_slice %69 {offsets = [0, 128], sizes = [128, 128], strides = [1, 1]} : vector<128x256xf32> to vector<128x128xf32>
    %75 = vector.extract_strided_slice %0 {offsets = [7, 0], sizes = [1, 128], strides = [1, 1]} : vector<16x128xf32> to vector<1x128xf32>
    %76 = vector.broadcast %75 : vector<1x128xf32> to vector<128x128xf32>
    %77 = arith.addf %74, %76 : vector<128x128xf32>
    %78 = arith.addf %77, %7 : vector<128x128xf32>
    %79 = arith.truncf %78 : vector<128x128xf32> to vector<128x128xbf16>
    %c2_i32_29 = arith.constant 2 : i32
    %80 = tpu.dynamic_rotate %78 by %c2_i32_29 dim 0 : vector<128x128xf32>, i32 -> vector<128x128xf32>
    %81 = arith.truncf %80 : vector<128x128xf32> to vector<128x128xbf16>
    %cst_30 = arith.constant 0.000000e+00 : f32
    %82 = arith.truncf %cst_30 : f32 to bf16
    %83 = vector.shape_cast %32 : vector<128x1xi1> to vector<128x1xi1>
    %84 = vector.broadcast %83 : vector<128x1xi1> to vector<128x128xi1>
    %85 = vector.broadcast %82 : bf16 to vector<128x128xbf16>
    %86 = arith.select %84, %81, %85 : vector<128x128xi1>, vector<128x128xbf16>
    %c126_i32 = arith.constant 126 : i32
    %87 = tpu.dynamic_rotate %78 by %c126_i32 dim 0 : vector<128x128xf32>, i32 -> vector<128x128xf32>
    %88 = arith.truncf %87 : vector<128x128xf32> to vector<128x128xbf16>
    %cst_31 = arith.constant 0.000000e+00 : f32
    %89 = arith.truncf %cst_31 : f32 to bf16
    %90 = vector.shape_cast %34 : vector<128x1xi1> to vector<128x1xi1>
    %91 = vector.broadcast %90 : vector<128x1xi1> to vector<128x128xi1>
    %92 = vector.broadcast %89 : bf16 to vector<128x128xbf16>
    %93 = arith.select %91, %88, %92 : vector<128x128xi1>, vector<128x128xbf16>
    %94 = tpu.concatenate %86, %79, %93 in 1 : vector<128x128xbf16>, vector<128x128xbf16>, vector<128x128xbf16> -> vector<128x384xbf16>
    %c1 = arith.constant 1 : index
    %c0_32 = arith.constant 0 : index
    %c0_33 = arith.constant 0 : index
    %95 = vector.load %arg2[%c1, %c0_32, %c0_33] : memref<6x384x128xbf16, #tpu.memory_space<vmem>>, vector<1x384x128xbf16>
    %96 = vector.shape_cast %95 : vector<1x384x128xbf16> to vector<384x128xbf16>
    %cst_34 = arith.constant dense<0.000000e+00> : vector<128x128xf32>
    %97 = tpu.matmul %94, %96, %cst_34 {dimension_numbers = #tpu.dot_dimension_numbers<[1], [0], [0], [1], [0, 0, 1, 1], [], []>} : vector<128x384xbf16>, vector<384x128xbf16>, vector<128x128xf32> -> vector<128x128xf32>
    %98 = vector.extract_strided_slice %0 {offsets = [2, 0], sizes = [1, 128], strides = [1, 1]} : vector<16x128xf32> to vector<1x128xf32>
    %99 = vector.broadcast %98 : vector<1x128xf32> to vector<128x128xf32>
    %100 = arith.addf %97, %99 : vector<128x128xf32>
    %101 = vector.extract_strided_slice %100 {offsets = [0, 0], sizes = [128, 64], strides = [1, 1]} : vector<128x128xf32> to vector<128x64xf32>
    %102 = math.tanh %101 : vector<128x64xf32>
    %103 = vector.extract_strided_slice %100 {offsets = [0, 64], sizes = [128, 64], strides = [1, 1]} : vector<128x128xf32> to vector<128x64xf32>
    %104 = arith.negf %103 : vector<128x64xf32>
    %105 = math.exp %104 : vector<128x64xf32>
    %cst_35 = arith.constant 1.000000e+00 : f32
    %106 = vector.broadcast %cst_35 : f32 to vector<128x64xf32>
    %107 = arith.addf %106, %105 : vector<128x64xf32>
    %108 = arith.divf %106, %107 : vector<128x64xf32>
    %109 = arith.mulf %102, %108 : vector<128x64xf32>
    %110 = arith.truncf %109 : vector<128x64xf32> to vector<128x64xbf16>
    %c1_36 = arith.constant 1 : index
    %c0_37 = arith.constant 0 : index
    %c0_38 = arith.constant 0 : index
    %111 = vector.load %arg3[%c1_36, %c0_37, %c0_38] : memref<6x64x256xbf16, #tpu.memory_space<vmem>>, vector<1x64x256xbf16>
    %112 = vector.shape_cast %111 : vector<1x64x256xbf16> to vector<64x256xbf16>
    %cst_39 = arith.constant dense<0.000000e+00> : vector<128x256xf32>
    %113 = tpu.matmul %110, %112, %cst_39 {dimension_numbers = #tpu.dot_dimension_numbers<[1], [0], [0], [1], [0, 0, 1, 1], [], []>} : vector<128x64xbf16>, vector<64x256xbf16>, vector<128x256xf32> -> vector<128x256xf32>
    %c0_40 = arith.constant 0 : index
    %c0_41 = arith.constant 0 : index
    %114 = vector.load %arg6[%c0_40, %c0_41] : memref<128x128xf32, #tpu.memory_space<vmem>>, vector<128x128xf32>
    %115 = vector.extract_strided_slice %113 {offsets = [0, 0], sizes = [128, 128], strides = [1, 1]} : vector<128x256xf32> to vector<128x128xf32>
    %116 = arith.addf %114, %115 : vector<128x128xf32>
    %c0_42 = arith.constant 0 : index
    %c0_43 = arith.constant 0 : index
    %117 = vector.load %arg6[%c0_42, %c0_43] : memref<128x128xf32, #tpu.memory_space<vmem>>, vector<128x128xf32>
    tpu.vector_store %arg6[%c0_42, %c0_43], %116 {strides = array<i32>} : memref<128x128xf32, #tpu.memory_space<vmem>>, vector<128x128xf32>,
    %118 = vector.extract_strided_slice %113 {offsets = [0, 128], sizes = [128, 128], strides = [1, 1]} : vector<128x256xf32> to vector<128x128xf32>
    %119 = vector.extract_strided_slice %0 {offsets = [8, 0], sizes = [1, 128], strides = [1, 1]} : vector<16x128xf32> to vector<1x128xf32>
    %120 = vector.broadcast %119 : vector<1x128xf32> to vector<128x128xf32>
    %121 = arith.addf %118, %120 : vector<128x128xf32>
    %122 = arith.addf %121, %78 : vector<128x128xf32>
    %123 = arith.truncf %122 : vector<128x128xf32> to vector<128x128xbf16>
    %c1_i32_44 = arith.constant 1 : i32
    %124 = tpu.dynamic_rotate %122 by %c1_i32_44 dim 0 : vector<128x128xf32>, i32 -> vector<128x128xf32>
    %125 = arith.truncf %124 : vector<128x128xf32> to vector<128x128xbf16>
    %cst_45 = arith.constant 0.000000e+00 : f32
    %126 = arith.truncf %cst_45 : f32 to bf16
    %127 = vector.shape_cast %28 : vector<128x1xi1> to vector<128x1xi1>
    %128 = vector.broadcast %127 : vector<128x1xi1> to vector<128x128xi1>
    %129 = vector.broadcast %126 : bf16 to vector<128x128xbf16>
    %130 = arith.select %128, %125, %129 : vector<128x128xi1>, vector<128x128xbf16>
    %c127_i32_46 = arith.constant 127 : i32
    %131 = tpu.dynamic_rotate %122 by %c127_i32_46 dim 0 : vector<128x128xf32>, i32 -> vector<128x128xf32>
    %132 = arith.truncf %131 : vector<128x128xf32> to vector<128x128xbf16>
    %cst_47 = arith.constant 0.000000e+00 : f32
    %133 = arith.truncf %cst_47 : f32 to bf16
    %134 = vector.shape_cast %30 : vector<128x1xi1> to vector<128x1xi1>
    %135 = vector.broadcast %134 : vector<128x1xi1> to vector<128x128xi1>
    %136 = vector.broadcast %133 : bf16 to vector<128x128xbf16>
    %137 = arith.select %135, %132, %136 : vector<128x128xi1>, vector<128x128xbf16>
    %138 = tpu.concatenate %130, %123, %137 in 1 : vector<128x128xbf16>, vector<128x128xbf16>, vector<128x128xbf16> -> vector<128x384xbf16>
    %c2 = arith.constant 2 : index
    %c0_48 = arith.constant 0 : index
    %c0_49 = arith.constant 0 : index
    %139 = vector.load %arg2[%c2, %c0_48, %c0_49] : memref<6x384x128xbf16, #tpu.memory_space<vmem>>, vector<1x384x128xbf16>
    %140 = vector.shape_cast %139 : vector<1x384x128xbf16> to vector<384x128xbf16>
    %cst_50 = arith.constant dense<0.000000e+00> : vector<128x128xf32>
    %141 = tpu.matmul %138, %140, %cst_50 {dimension_numbers = #tpu.dot_dimension_numbers<[1], [0], [0], [1], [0, 0, 1, 1], [], []>} : vector<128x384xbf16>, vector<384x128xbf16>, vector<128x128xf32> -> vector<128x128xf32>
    %142 = vector.extract_strided_slice %0 {offsets = [3, 0], sizes = [1, 128], strides = [1, 1]} : vector<16x128xf32> to vector<1x128xf32>
    %143 = vector.broadcast %142 : vector<1x128xf32> to vector<128x128xf32>
    %144 = arith.addf %141, %143 : vector<128x128xf32>
    %145 = vector.extract_strided_slice %144 {offsets = [0, 0], sizes = [128, 64], strides = [1, 1]} : vector<128x128xf32> to vector<128x64xf32>
    %146 = math.tanh %145 : vector<128x64xf32>
    %147 = vector.extract_strided_slice %144 {offsets = [0, 64], sizes = [128, 64], strides = [1, 1]} : vector<128x128xf32> to vector<128x64xf32>
    %148 = arith.negf %147 : vector<128x64xf32>
    %149 = math.exp %148 : vector<128x64xf32>
    %cst_51 = arith.constant 1.000000e+00 : f32
    %150 = vector.broadcast %cst_51 : f32 to vector<128x64xf32>
    %151 = arith.addf %150, %149 : vector<128x64xf32>
    %152 = arith.divf %150, %151 : vector<128x64xf32>
    %153 = arith.mulf %146, %152 : vector<128x64xf32>
    %154 = arith.truncf %153 : vector<128x64xf32> to vector<128x64xbf16>
    %c2_52 = arith.constant 2 : index
    %c0_53 = arith.constant 0 : index
    %c0_54 = arith.constant 0 : index
    %155 = vector.load %arg3[%c2_52, %c0_53, %c0_54] : memref<6x64x256xbf16, #tpu.memory_space<vmem>>, vector<1x64x256xbf16>
    %156 = vector.shape_cast %155 : vector<1x64x256xbf16> to vector<64x256xbf16>
    %cst_55 = arith.constant dense<0.000000e+00> : vector<128x256xf32>
    %157 = tpu.matmul %154, %156, %cst_55 {dimension_numbers = #tpu.dot_dimension_numbers<[1], [0], [0], [1], [0, 0, 1, 1], [], []>} : vector<128x64xbf16>, vector<64x256xbf16>, vector<128x256xf32> -> vector<128x256xf32>
    %c0_56 = arith.constant 0 : index
    %c0_57 = arith.constant 0 : index
    %158 = vector.load %arg6[%c0_56, %c0_57] : memref<128x128xf32, #tpu.memory_space<vmem>>, vector<128x128xf32>
    %159 = vector.extract_strided_slice %157 {offsets = [0, 0], sizes = [128, 128], strides = [1, 1]} : vector<128x256xf32> to vector<128x128xf32>
    %160 = arith.addf %158, %159 : vector<128x128xf32>
    %c0_58 = arith.constant 0 : index
    %c0_59 = arith.constant 0 : index
    %161 = vector.load %arg6[%c0_58, %c0_59] : memref<128x128xf32, #tpu.memory_space<vmem>>, vector<128x128xf32>
    tpu.vector_store %arg6[%c0_58, %c0_59], %160 {strides = array<i32>} : memref<128x128xf32, #tpu.memory_space<vmem>>, vector<128x128xf32>,
    %162 = vector.extract_strided_slice %157 {offsets = [0, 128], sizes = [128, 128], strides = [1, 1]} : vector<128x256xf32> to vector<128x128xf32>
    %163 = vector.extract_strided_slice %0 {offsets = [9, 0], sizes = [1, 128], strides = [1, 1]} : vector<16x128xf32> to vector<1x128xf32>
    %164 = vector.broadcast %163 : vector<1x128xf32> to vector<128x128xf32>
    %165 = arith.addf %162, %164 : vector<128x128xf32>
    %166 = arith.addf %165, %122 : vector<128x128xf32>
    %167 = arith.truncf %166 : vector<128x128xf32> to vector<128x128xbf16>
    %c2_i32_60 = arith.constant 2 : i32
    %168 = tpu.dynamic_rotate %166 by %c2_i32_60 dim 0 : vector<128x128xf32>, i32 -> vector<128x128xf32>
    %169 = arith.truncf %168 : vector<128x128xf32> to vector<128x128xbf16>
    %cst_61 = arith.constant 0.000000e+00 : f32
    %170 = arith.truncf %cst_61 : f32 to bf16
    %171 = vector.shape_cast %32 : vector<128x1xi1> to vector<128x1xi1>
    %172 = vector.broadcast %171 : vector<128x1xi1> to vector<128x128xi1>
    %173 = vector.broadcast %170 : bf16 to vector<128x128xbf16>
    %174 = arith.select %172, %169, %173 : vector<128x128xi1>, vector<128x128xbf16>
    %c126_i32_62 = arith.constant 126 : i32
    %175 = tpu.dynamic_rotate %166 by %c126_i32_62 dim 0 : vector<128x128xf32>, i32 -> vector<128x128xf32>
    %176 = arith.truncf %175 : vector<128x128xf32> to vector<128x128xbf16>
    %cst_63 = arith.constant 0.000000e+00 : f32
    %177 = arith.truncf %cst_63 : f32 to bf16
    %178 = vector.shape_cast %34 : vector<128x1xi1> to vector<128x1xi1>
    %179 = vector.broadcast %178 : vector<128x1xi1> to vector<128x128xi1>
    %180 = vector.broadcast %177 : bf16 to vector<128x128xbf16>
    %181 = arith.select %179, %176, %180 : vector<128x128xi1>, vector<128x128xbf16>
    %182 = tpu.concatenate %174, %167, %181 in 1 : vector<128x128xbf16>, vector<128x128xbf16>, vector<128x128xbf16> -> vector<128x384xbf16>
    %c3 = arith.constant 3 : index
    %c0_64 = arith.constant 0 : index
    %c0_65 = arith.constant 0 : index
    %183 = vector.load %arg2[%c3, %c0_64, %c0_65] : memref<6x384x128xbf16, #tpu.memory_space<vmem>>, vector<1x384x128xbf16>
    %184 = vector.shape_cast %183 : vector<1x384x128xbf16> to vector<384x128xbf16>
    %cst_66 = arith.constant dense<0.000000e+00> : vector<128x128xf32>
    %185 = tpu.matmul %182, %184, %cst_66 {dimension_numbers = #tpu.dot_dimension_numbers<[1], [0], [0], [1], [0, 0, 1, 1], [], []>} : vector<128x384xbf16>, vector<384x128xbf16>, vector<128x128xf32> -> vector<128x128xf32>
    %186 = vector.extract_strided_slice %0 {offsets = [4, 0], sizes = [1, 128], strides = [1, 1]} : vector<16x128xf32> to vector<1x128xf32>
    %187 = vector.broadcast %186 : vector<1x128xf32> to vector<128x128xf32>
    %188 = arith.addf %185, %187 : vector<128x128xf32>
    %189 = vector.extract_strided_slice %188 {offsets = [0, 0], sizes = [128, 64], strides = [1, 1]} : vector<128x128xf32> to vector<128x64xf32>
    %190 = math.tanh %189 : vector<128x64xf32>
    %191 = vector.extract_strided_slice %188 {offsets = [0, 64], sizes = [128, 64], strides = [1, 1]} : vector<128x128xf32> to vector<128x64xf32>
    %192 = arith.negf %191 : vector<128x64xf32>
    %193 = math.exp %192 : vector<128x64xf32>
    %cst_67 = arith.constant 1.000000e+00 : f32
    %194 = vector.broadcast %cst_67 : f32 to vector<128x64xf32>
    %195 = arith.addf %194, %193 : vector<128x64xf32>
    %196 = arith.divf %194, %195 : vector<128x64xf32>
    %197 = arith.mulf %190, %196 : vector<128x64xf32>
    %198 = arith.truncf %197 : vector<128x64xf32> to vector<128x64xbf16>
    %c3_68 = arith.constant 3 : index
    %c0_69 = arith.constant 0 : index
    %c0_70 = arith.constant 0 : index
    %199 = vector.load %arg3[%c3_68, %c0_69, %c0_70] : memref<6x64x256xbf16, #tpu.memory_space<vmem>>, vector<1x64x256xbf16>
    %200 = vector.shape_cast %199 : vector<1x64x256xbf16> to vector<64x256xbf16>
    %cst_71 = arith.constant dense<0.000000e+00> : vector<128x256xf32>
    %201 = tpu.matmul %198, %200, %cst_71 {dimension_numbers = #tpu.dot_dimension_numbers<[1], [0], [0], [1], [0, 0, 1, 1], [], []>} : vector<128x64xbf16>, vector<64x256xbf16>, vector<128x256xf32> -> vector<128x256xf32>
    %c0_72 = arith.constant 0 : index
    %c0_73 = arith.constant 0 : index
    %202 = vector.load %arg6[%c0_72, %c0_73] : memref<128x128xf32, #tpu.memory_space<vmem>>, vector<128x128xf32>
    %203 = vector.extract_strided_slice %201 {offsets = [0, 0], sizes = [128, 128], strides = [1, 1]} : vector<128x256xf32> to vector<128x128xf32>
    %204 = arith.addf %202, %203 : vector<128x128xf32>
    %c0_74 = arith.constant 0 : index
    %c0_75 = arith.constant 0 : index
    %205 = vector.load %arg6[%c0_74, %c0_75] : memref<128x128xf32, #tpu.memory_space<vmem>>, vector<128x128xf32>
    tpu.vector_store %arg6[%c0_74, %c0_75], %204 {strides = array<i32>} : memref<128x128xf32, #tpu.memory_space<vmem>>, vector<128x128xf32>,
    %206 = vector.extract_strided_slice %201 {offsets = [0, 128], sizes = [128, 128], strides = [1, 1]} : vector<128x256xf32> to vector<128x128xf32>
    %207 = vector.extract_strided_slice %0 {offsets = [10, 0], sizes = [1, 128], strides = [1, 1]} : vector<16x128xf32> to vector<1x128xf32>
    %208 = vector.broadcast %207 : vector<1x128xf32> to vector<128x128xf32>
    %209 = arith.addf %206, %208 : vector<128x128xf32>
    %210 = arith.addf %209, %166 : vector<128x128xf32>
    %211 = arith.truncf %210 : vector<128x128xf32> to vector<128x128xbf16>
    %c1_i32_76 = arith.constant 1 : i32
    %212 = tpu.dynamic_rotate %210 by %c1_i32_76 dim 0 : vector<128x128xf32>, i32 -> vector<128x128xf32>
    %213 = arith.truncf %212 : vector<128x128xf32> to vector<128x128xbf16>
    %cst_77 = arith.constant 0.000000e+00 : f32
    %214 = arith.truncf %cst_77 : f32 to bf16
    %215 = vector.shape_cast %28 : vector<128x1xi1> to vector<128x1xi1>
    %216 = vector.broadcast %215 : vector<128x1xi1> to vector<128x128xi1>
    %217 = vector.broadcast %214 : bf16 to vector<128x128xbf16>
    %218 = arith.select %216, %213, %217 : vector<128x128xi1>, vector<128x128xbf16>
    %c127_i32_78 = arith.constant 127 : i32
    %219 = tpu.dynamic_rotate %210 by %c127_i32_78 dim 0 : vector<128x128xf32>, i32 -> vector<128x128xf32>
    %220 = arith.truncf %219 : vector<128x128xf32> to vector<128x128xbf16>
    %cst_79 = arith.constant 0.000000e+00 : f32
    %221 = arith.truncf %cst_79 : f32 to bf16
    %222 = vector.shape_cast %30 : vector<128x1xi1> to vector<128x1xi1>
    %223 = vector.broadcast %222 : vector<128x1xi1> to vector<128x128xi1>
    %224 = vector.broadcast %221 : bf16 to vector<128x128xbf16>
    %225 = arith.select %223, %220, %224 : vector<128x128xi1>, vector<128x128xbf16>
    %226 = tpu.concatenate %218, %211, %225 in 1 : vector<128x128xbf16>, vector<128x128xbf16>, vector<128x128xbf16> -> vector<128x384xbf16>
    %c4 = arith.constant 4 : index
    %c0_80 = arith.constant 0 : index
    %c0_81 = arith.constant 0 : index
    %227 = vector.load %arg2[%c4, %c0_80, %c0_81] : memref<6x384x128xbf16, #tpu.memory_space<vmem>>, vector<1x384x128xbf16>
    %228 = vector.shape_cast %227 : vector<1x384x128xbf16> to vector<384x128xbf16>
    %cst_82 = arith.constant dense<0.000000e+00> : vector<128x128xf32>
    %229 = tpu.matmul %226, %228, %cst_82 {dimension_numbers = #tpu.dot_dimension_numbers<[1], [0], [0], [1], [0, 0, 1, 1], [], []>} : vector<128x384xbf16>, vector<384x128xbf16>, vector<128x128xf32> -> vector<128x128xf32>
    %230 = vector.extract_strided_slice %0 {offsets = [5, 0], sizes = [1, 128], strides = [1, 1]} : vector<16x128xf32> to vector<1x128xf32>
    %231 = vector.broadcast %230 : vector<1x128xf32> to vector<128x128xf32>
    %232 = arith.addf %229, %231 : vector<128x128xf32>
    %233 = vector.extract_strided_slice %232 {offsets = [0, 0], sizes = [128, 64], strides = [1, 1]} : vector<128x128xf32> to vector<128x64xf32>
    %234 = math.tanh %233 : vector<128x64xf32>
    %235 = vector.extract_strided_slice %232 {offsets = [0, 64], sizes = [128, 64], strides = [1, 1]} : vector<128x128xf32> to vector<128x64xf32>
    %236 = arith.negf %235 : vector<128x64xf32>
    %237 = math.exp %236 : vector<128x64xf32>
    %cst_83 = arith.constant 1.000000e+00 : f32
    %238 = vector.broadcast %cst_83 : f32 to vector<128x64xf32>
    %239 = arith.addf %238, %237 : vector<128x64xf32>
    %240 = arith.divf %238, %239 : vector<128x64xf32>
    %241 = arith.mulf %234, %240 : vector<128x64xf32>
    %242 = arith.truncf %241 : vector<128x64xf32> to vector<128x64xbf16>
    %c4_84 = arith.constant 4 : index
    %c0_85 = arith.constant 0 : index
    %c0_86 = arith.constant 0 : index
    %243 = vector.load %arg3[%c4_84, %c0_85, %c0_86] : memref<6x64x256xbf16, #tpu.memory_space<vmem>>, vector<1x64x256xbf16>
    %244 = vector.shape_cast %243 : vector<1x64x256xbf16> to vector<64x256xbf16>
    %cst_87 = arith.constant dense<0.000000e+00> : vector<128x256xf32>
    %245 = tpu.matmul %242, %244, %cst_87 {dimension_numbers = #tpu.dot_dimension_numbers<[1], [0], [0], [1], [0, 0, 1, 1], [], []>} : vector<128x64xbf16>, vector<64x256xbf16>, vector<128x256xf32> -> vector<128x256xf32>
    %c0_88 = arith.constant 0 : index
    %c0_89 = arith.constant 0 : index
    %246 = vector.load %arg6[%c0_88, %c0_89] : memref<128x128xf32, #tpu.memory_space<vmem>>, vector<128x128xf32>
    %247 = vector.extract_strided_slice %245 {offsets = [0, 0], sizes = [128, 128], strides = [1, 1]} : vector<128x256xf32> to vector<128x128xf32>
    %248 = arith.addf %246, %247 : vector<128x128xf32>
    %c0_90 = arith.constant 0 : index
    %c0_91 = arith.constant 0 : index
    %249 = vector.load %arg6[%c0_90, %c0_91] : memref<128x128xf32, #tpu.memory_space<vmem>>, vector<128x128xf32>
    tpu.vector_store %arg6[%c0_90, %c0_91], %248 {strides = array<i32>} : memref<128x128xf32, #tpu.memory_space<vmem>>, vector<128x128xf32>,
    %250 = vector.extract_strided_slice %245 {offsets = [0, 128], sizes = [128, 128], strides = [1, 1]} : vector<128x256xf32> to vector<128x128xf32>
    %251 = vector.extract_strided_slice %0 {offsets = [11, 0], sizes = [1, 128], strides = [1, 1]} : vector<16x128xf32> to vector<1x128xf32>
    %252 = vector.broadcast %251 : vector<1x128xf32> to vector<128x128xf32>
    %253 = arith.addf %250, %252 : vector<128x128xf32>
    %254 = arith.addf %253, %210 : vector<128x128xf32>
    %255 = arith.truncf %254 : vector<128x128xf32> to vector<128x128xbf16>
    %c2_i32_92 = arith.constant 2 : i32
    %256 = tpu.dynamic_rotate %254 by %c2_i32_92 dim 0 : vector<128x128xf32>, i32 -> vector<128x128xf32>
    %257 = arith.truncf %256 : vector<128x128xf32> to vector<128x128xbf16>
    %cst_93 = arith.constant 0.000000e+00 : f32
    %258 = arith.truncf %cst_93 : f32 to bf16
    %259 = vector.shape_cast %32 : vector<128x1xi1> to vector<128x1xi1>
    %260 = vector.broadcast %259 : vector<128x1xi1> to vector<128x128xi1>
    %261 = vector.broadcast %258 : bf16 to vector<128x128xbf16>
    %262 = arith.select %260, %257, %261 : vector<128x128xi1>, vector<128x128xbf16>
    %c126_i32_94 = arith.constant 126 : i32
    %263 = tpu.dynamic_rotate %254 by %c126_i32_94 dim 0 : vector<128x128xf32>, i32 -> vector<128x128xf32>
    %264 = arith.truncf %263 : vector<128x128xf32> to vector<128x128xbf16>
    %cst_95 = arith.constant 0.000000e+00 : f32
    %265 = arith.truncf %cst_95 : f32 to bf16
    %266 = vector.shape_cast %34 : vector<128x1xi1> to vector<128x1xi1>
    %267 = vector.broadcast %266 : vector<128x1xi1> to vector<128x128xi1>
    %268 = vector.broadcast %265 : bf16 to vector<128x128xbf16>
    %269 = arith.select %267, %264, %268 : vector<128x128xi1>, vector<128x128xbf16>
    %270 = tpu.concatenate %262, %255, %269 in 1 : vector<128x128xbf16>, vector<128x128xbf16>, vector<128x128xbf16> -> vector<128x384xbf16>
    %c5 = arith.constant 5 : index
    %c0_96 = arith.constant 0 : index
    %c0_97 = arith.constant 0 : index
    %271 = vector.load %arg2[%c5, %c0_96, %c0_97] : memref<6x384x128xbf16, #tpu.memory_space<vmem>>, vector<1x384x128xbf16>
    %272 = vector.shape_cast %271 : vector<1x384x128xbf16> to vector<384x128xbf16>
    %cst_98 = arith.constant dense<0.000000e+00> : vector<128x128xf32>
    %273 = tpu.matmul %270, %272, %cst_98 {dimension_numbers = #tpu.dot_dimension_numbers<[1], [0], [0], [1], [0, 0, 1, 1], [], []>} : vector<128x384xbf16>, vector<384x128xbf16>, vector<128x128xf32> -> vector<128x128xf32>
    %274 = vector.extract_strided_slice %0 {offsets = [6, 0], sizes = [1, 128], strides = [1, 1]} : vector<16x128xf32> to vector<1x128xf32>
    %275 = vector.broadcast %274 : vector<1x128xf32> to vector<128x128xf32>
    %276 = arith.addf %273, %275 : vector<128x128xf32>
    %277 = vector.extract_strided_slice %276 {offsets = [0, 0], sizes = [128, 64], strides = [1, 1]} : vector<128x128xf32> to vector<128x64xf32>
    %278 = math.tanh %277 : vector<128x64xf32>
    %279 = vector.extract_strided_slice %276 {offsets = [0, 64], sizes = [128, 64], strides = [1, 1]} : vector<128x128xf32> to vector<128x64xf32>
    %280 = arith.negf %279 : vector<128x64xf32>
    %281 = math.exp %280 : vector<128x64xf32>
    %cst_99 = arith.constant 1.000000e+00 : f32
    %282 = vector.broadcast %cst_99 : f32 to vector<128x64xf32>
    %283 = arith.addf %282, %281 : vector<128x64xf32>
    %284 = arith.divf %282, %283 : vector<128x64xf32>
    %285 = arith.mulf %278, %284 : vector<128x64xf32>
    %286 = arith.truncf %285 : vector<128x64xf32> to vector<128x64xbf16>
    %c5_100 = arith.constant 5 : index
    %c0_101 = arith.constant 0 : index
    %c0_102 = arith.constant 0 : index
    %287 = vector.load %arg3[%c5_100, %c0_101, %c0_102] : memref<6x64x256xbf16, #tpu.memory_space<vmem>>, vector<1x64x256xbf16>
    %288 = vector.shape_cast %287 : vector<1x64x256xbf16> to vector<64x256xbf16>
    %cst_103 = arith.constant dense<0.000000e+00> : vector<128x256xf32>
    %289 = tpu.matmul %286, %288, %cst_103 {dimension_numbers = #tpu.dot_dimension_numbers<[1], [0], [0], [1], [0, 0, 1, 1], [], []>} : vector<128x64xbf16>, vector<64x256xbf16>, vector<128x256xf32> -> vector<128x256xf32>
    %c0_104 = arith.constant 0 : index
    %c0_105 = arith.constant 0 : index
    %290 = vector.load %arg6[%c0_104, %c0_105] : memref<128x128xf32, #tpu.memory_space<vmem>>, vector<128x128xf32>
    %291 = vector.extract_strided_slice %289 {offsets = [0, 0], sizes = [128, 128], strides = [1, 1]} : vector<128x256xf32> to vector<128x128xf32>
    %292 = arith.addf %290, %291 : vector<128x128xf32>
    %c0_106 = arith.constant 0 : index
    %c0_107 = arith.constant 0 : index
    %293 = vector.load %arg6[%c0_106, %c0_107] : memref<128x128xf32, #tpu.memory_space<vmem>>, vector<128x128xf32>
    tpu.vector_store %arg6[%c0_106, %c0_107], %292 {strides = array<i32>} : memref<128x128xf32, #tpu.memory_space<vmem>>, vector<128x128xf32>,
    %c0_108 = arith.constant 0 : index
    %c0_109 = arith.constant 0 : index
    %294 = vector.load %arg6[%c0_108, %c0_109] : memref<128x128xf32, #tpu.memory_space<vmem>>, vector<128x128xf32>
    %295 = vector.extract_strided_slice %0 {offsets = [13, 0], sizes = [1, 128], strides = [1, 1]} : vector<16x128xf32> to vector<1x128xf32>
    %296 = vector.broadcast %295 : vector<1x128xf32> to vector<128x128xf32>
    %297 = arith.addf %294, %296 : vector<128x128xf32>
    %cst_110 = arith.constant 0.000000e+00 : f32
    %298 = vector.broadcast %cst_110 : f32 to vector<128x128xf32>
    %299 = arith.maximumf %297, %298 : vector<128x128xf32>
    %300 = arith.truncf %299 : vector<128x128xf32> to vector<128x128xbf16>
    %c1_111 = arith.constant 1 : index
    %c0_112 = arith.constant 0 : index
    %c0_113 = arith.constant 0 : index
    %301 = vector.load %arg1[%c1_111, %c0_112, %c0_113] : memref<3x128x128xbf16, #tpu.memory_space<vmem>>, vector<1x128x128xbf16>
    %302 = vector.shape_cast %301 : vector<1x128x128xbf16> to vector<128x128xbf16>
    %cst_114 = arith.constant dense<0.000000e+00> : vector<128x128xf32>
    %303 = tpu.matmul %300, %302, %cst_114 {dimension_numbers = #tpu.dot_dimension_numbers<[1], [0], [0], [1], [0, 0, 1, 1], [], []>} : vector<128x128xbf16>, vector<128x128xbf16>, vector<128x128xf32> -> vector<128x128xf32>
    %304 = vector.extract_strided_slice %0 {offsets = [14, 0], sizes = [1, 128], strides = [1, 1]} : vector<16x128xf32> to vector<1x128xf32>
    %305 = vector.broadcast %304 : vector<1x128xf32> to vector<128x128xf32>
    %306 = arith.addf %303, %305 : vector<128x128xf32>
    %cst_115 = arith.constant 0.000000e+00 : f32
    %307 = vector.broadcast %cst_115 : f32 to vector<128x128xf32>
    %308 = arith.maximumf %306, %307 : vector<128x128xf32>
    %309 = arith.truncf %308 : vector<128x128xf32> to vector<128x128xbf16>
    %c2_116 = arith.constant 2 : index
    %c0_117 = arith.constant 0 : index
    %c0_118 = arith.constant 0 : index
    %310 = vector.load %arg1[%c2_116, %c0_117, %c0_118] : memref<3x128x128xbf16, #tpu.memory_space<vmem>>, vector<1x128x128xbf16>
    %311 = vector.shape_cast %310 : vector<1x128x128xbf16> to vector<128x128xbf16>
    %cst_119 = arith.constant dense<0.000000e+00> : vector<128x128xf32>
    %312 = tpu.matmul %309, %311, %cst_119 {dimension_numbers = #tpu.dot_dimension_numbers<[1], [0], [0], [1], [0, 0, 1, 1], [], []>} : vector<128x128xbf16>, vector<128x128xbf16>, vector<128x128xf32> -> vector<128x128xf32>
    %313 = vector.extract_strided_slice %0 {offsets = [15, 0], sizes = [1, 128], strides = [1, 1]} : vector<16x128xf32> to vector<1x128xf32>
    %314 = vector.broadcast %313 : vector<1x128xf32> to vector<128x128xf32>
    %315 = arith.addf %312, %314 : vector<128x128xf32>
    %c0_120 = arith.constant 0 : index
    %c0_121 = arith.constant 0 : index
    %316 = vector.load %arg5[%c0_120, %c0_121] : memref<128x128xf32, #tpu.memory_space<vmem>>, vector<128x128xf32>
    tpu.vector_store %arg5[%c0_120, %c0_121], %315 {strides = array<i32>} : memref<128x128xf32, #tpu.memory_space<vmem>>, vector<128x128xf32>,
    return
  }
}

</mosaic_0001>

<llo_original>
// kernel: neuralformants_forward.1
$region0: #{neuralformants_forward.1}
  #allocation0 [shape = 'u32[]', space=smem, size = 0x4, offset = 0x4, fixed_abs, tag = 'smem constant byte address 0x4 - core index']
  #allocation1 [shape = 'u32[72,128]{1,0:T(1,128)}', space=vmem, size = 0x9000, scoped, tag = 'internal scratch']
  #allocation2 [shape = 'f32[128,128]{1,0:T(8,128)}', space=vmem, size = 0x10000, scoped, tag = 'scratch operand']
  %s0 = inlined_call_operand.vmem [shape: bf16[128,128], index: 0, kind: input, shape index: {}]
  %s1 = inlined_call_operand.vmem [shape: bf16[3,128,128], index: 1, kind: input, shape index: {}]
  %s2 = inlined_call_operand.hbm [shape: bf16[6,384,128], index: 2, kind: input, shape index: {}]
  %s3 = inlined_call_operand.hbm [shape: bf16[6,64,256], index: 3, kind: input, shape index: {}]
  %s4 = inlined_call_operand.vmem [shape: f32[16,128], index: 4, kind: input, shape index: {}]
  %s5 = inlined_call_operand.hbm [shape: f32[128,128], index: 5, kind: output, shape index: {}]
  %s6 = sld [smem:[#allocation0]]
  $region38: #{neuralformants_forward.1} parent=0
    _
  %s8 = ssub.s32 1, %s6
  %s9 = scalar_select 0, %s8, %s6
  $region1: #{neuralformants_forward.1} parent=0
    #allocation3 [shape = 'u8[589824]{0}', space=vmem, size = 0x90000, scoped, tag = 'input window, operand 2, single buffered']
    #allocation4 [shape = 's32[1]{0}', space=sflag, size = 0x4, scoped, tag = 'scoped memory for neuralformants_forward.1']
    #allocation5 [shape = 's32[1]{0}', space=sflag, size = 0x4, scoped, tag = 'scoped memory for neuralformants_forward.1']
    #allocation6 [shape = 'u8[196608]{0}', space=vmem, size = 0x30000, scoped, tag = 'input window, operand 3, single buffered']
    #allocation7 [shape = 's32[1]{0}', space=sflag, size = 0x4, scoped, tag = 'scoped memory for neuralformants_forward.1']
    #allocation8 [shape = 'u8[65536]{0}', space=vmem, size = 0x10000, scoped, tag = 'output window, operand 0, single buffered']
    %10 = vsyncpa [#allocation4], 0
    %11 = vsyncpa [#allocation7], 0
    %12 = vsyncpa [#allocation5], 0
    // Predicated region
    $region2: #{neuralformants_forward.1} parent=1 // pred_check
      _
    $region3: #{neuralformants_forward.1} parent=1 // pred_check_branch
      %14 = sbr.rel (0) target = $region5
    $region4: #{neuralformants_forward.1} parent=1 // pred_region
      _
    $region5: #{neuralformants_forward.1} parent=1 // pred_fallthru
      _
    // Predicated region
    $region6: #{neuralformants_forward.1} parent=1 // pred_check
      _
    $region7: #{neuralformants_forward.1} parent=1 // pred_check_branch
      %16 = sbr.rel (0) target = $region9
    $region8: #{neuralformants_forward.1} parent=1 // pred_region
      _
    $region9: #{neuralformants_forward.1} parent=1 // pred_fallthru
      _
    // Predicated region
    $region10: #{neuralformants_forward.1} parent=1 // pred_check
      _
    $region11: #{neuralformants_forward.1} parent=1 // pred_check_branch
      %18 = sbr.rel (0) target = $region13
    $region12: #{neuralformants_forward.1} parent=1 // pred_region
      %20 = vsyncadd [#allocation4], 0
      %s21 = sshll.u32 %s2, 4
      %s22 = int_to_ptr.hbm [resolvable:$true] %s21
      %s23 = sshll.u32 [#allocation3], 4
      %s24 = int_to_ptr.vmem [resolvable:$true] %s23
      %29 = dma.hbm_to_vmem [thread:$0]  %s22, 18432, %s24, [#allocation4], 64, 64, 4
    $region13: #{neuralformants_forward.1} parent=1 // pred_fallthru
      _
    // Predicated region
    $region14: #{neuralformants_forward.1} parent=1 // pred_check
      _
    $region15: #{neuralformants_forward.1} parent=1 // pred_check_branch
      %31 = sbr.rel (0) target = $region17
    $region16: #{neuralformants_forward.1} parent=1 // pred_region
      %33 = vsyncadd [#allocation7], 0
      %s34 = sshll.u32 %s3, 4
      %s35 = int_to_ptr.hbm [resolvable:$true] %s34
      %s36 = sshll.u32 [#allocation6], 4
      %s37 = int_to_ptr.vmem [resolvable:$true] %s36
      %42 = dma.hbm_to_vmem [thread:$0]  %s35, 6144, %s37, [#allocation7], 128, 128, 8
    $region17: #{neuralformants_forward.1} parent=1 // pred_fallthru
      _
    // Predicated region
    $region18: #{neuralformants_forward.1} parent=1 // pred_check
      _
    $region19: #{neuralformants_forward.1} parent=1 // pred_check_branch
      %44 = sbr.rel (0) target = $region21
    $region20: #{neuralformants_forward.1} parent=1 // pred_region
      _
    $region21: #{neuralformants_forward.1} parent=1 // pred_fallthru
      _
    // Predicated region
    $region22: #{neuralformants_forward.1} parent=1 // pred_check
      _
    $region23: #{neuralformants_forward.1} parent=1 // pred_check_branch
      %46 = sbr.rel (0) target = $region25
    $region24: #{neuralformants_forward.1} parent=1 // pred_region
      %48 = dma.done [#allocation4], 18432
    $region25: #{neuralformants_forward.1} parent=1 // pred_fallthru
      _
    // Predicated region
    $region26: #{neuralformants_forward.1} parent=1 // pred_check
      _
    $region27: #{neuralformants_forward.1} parent=1 // pred_check_branch
      %50 = sbr.rel (0) target = $region29
    $region28: #{neuralformants_forward.1} parent=1 // pred_region
      %52 = dma.done [#allocation7], 6144
    $region29: #{neuralformants_forward.1} parent=1 // pred_fallthru
      _
    %v54 = vld [vmem:[%s4] sm:$0xff]
    %v55 = vld [vmem:[%s4 + $0x8] sm:$0xff]
    %v56 = vld [vmem:[%s0] sm:$0xf]
    %v57 = vld [vmem:[%s0 + $0x4] sm:$0xf]
    %v58 = vld [vmem:[%s0 + $0x8] sm:$0xf]
    %v59 = vld [vmem:[%s0 + $0xc] sm:$0xf]
    %v60 = vld [vmem:[%s0 + $0x10] sm:$0xf]
    %v61 = vld [vmem:[%s0 + $0x14] sm:$0xf]
    %v62 = vld [vmem:[%s0 + $0x18] sm:$0xf]
    %v63 = vld [vmem:[%s0 + $0x1c] sm:$0xf]
    %v64 = vld [vmem:[%s0 + $0x20] sm:$0xf]
    %v65 = vld [vmem:[%s0 + $0x24] sm:$0xf]
    %v66 = vld [vmem:[%s0 + $0x28] sm:$0xf]
    %v67 = vld [vmem:[%s0 + $0x2c] sm:$0xf]
    %v68 = vld [vmem:[%s0 + $0x30] sm:$0xf]
    %v69 = vld [vmem:[%s0 + $0x34] sm:$0xf]
    %v70 = vld [vmem:[%s0 + $0x38] sm:$0xf]
    %v71 = vld [vmem:[%s0 + $0x3c] sm:$0xf]
    %v72 = vld [vmem:[%s1] sm:$0xf]
    %v73 = vld [vmem:[%s1 + $0x4] sm:$0xf]
    %v74 = vld [vmem:[%s1 + $0x8] sm:$0xf]
    %v75 = vld [vmem:[%s1 + $0xc] sm:$0xf]
    %v76 = vld [vmem:[%s1 + $0x10] sm:$0xf]
    %v77 = vld [vmem:[%s1 + $0x14] sm:$0xf]
    %v78 = vld [vmem:[%s1 + $0x18] sm:$0xf]
    %v79 = vld [vmem:[%s1 + $0x1c] sm:$0xf]
    %v80 = vld [vmem:[%s1 + $0x20] sm:$0xf]
    %v81 = vld [vmem:[%s1 + $0x24] sm:$0xf]
    %v82 = vld [vmem:[%s1 + $0x28] sm:$0xf]
    %v83 = vld [vmem:[%s1 + $0x2c] sm:$0xf]
    %v84 = vld [vmem:[%s1 + $0x30] sm:$0xf]
    %v85 = vld [vmem:[%s1 + $0x34] sm:$0xf]
    %v86 = vld [vmem:[%s1 + $0x38] sm:$0xf]
    %v87 = vld [vmem:[%s1 + $0x3c] sm:$0xf]
    %v88 = vperm.slane %v54, 0
    %v105 = vunpack.c.l.b16 %v56
    %v106 = vunpack.c.l.b16 %v57
    %v107 = vunpack.c.l.b16 %v58
    %v108 = vunpack.c.l.b16 %v59
    %v109 = vunpack.c.l.b16 %v60
    %v110 = vunpack.c.l.b16 %v61
    %v111 = vunpack.c.l.b16 %v62
    %v112 = vunpack.c.l.b16 %v63
    %v113 = vunpack.c.l.b16 %v64
    %v114 = vunpack.c.l.b16 %v65
    %v115 = vunpack.c.l.b16 %v66
    %v116 = vunpack.c.l.b16 %v67
    %v117 = vunpack.c.l.b16 %v68
    %v118 = vunpack.c.l.b16 %v69
    %v119 = vunpack.c.l.b16 %v70
    %v120 = vunpack.c.l.b16 %v71
    %v121 = vpack.c.b16 %v106, %v105
    %v122 = vpack.c.b16 %v108, %v107
    %v123 = vpack.c.b16 %v110, %v109
    %v124 = vpack.c.b16 %v112, %v111
    %v125 = vpack.c.b16 %v114, %v113
    %v126 = vpack.c.b16 %v116, %v115
    %v127 = vpack.c.b16 %v118, %v117
    %v128 = vpack.c.b16 %v120, %v119
    %v153 = vunpack.c.l.b16 %v72
    %v154 = vunpack.c.l.b16 %v73
    %v155 = vunpack.c.l.b16 %v74
    %v156 = vunpack.c.l.b16 %v75
    %v157 = vunpack.c.l.b16 %v76
    %v158 = vunpack.c.l.b16 %v77
    %v159 = vunpack.c.l.b16 %v78
    %v160 = vunpack.c.l.b16 %v79
    %v161 = vunpack.c.l.b16 %v80
    %v162 = vunpack.c.l.b16 %v81
    %v163 = vunpack.c.l.b16 %v82
    %v164 = vunpack.c.l.b16 %v83
    %v165 = vunpack.c.l.b16 %v84
    %v166 = vunpack.c.l.b16 %v85
    %v167 = vunpack.c.l.b16 %v86
    %v168 = vunpack.c.l.b16 %v87
    %v169 = vpack.c.b16 %v154, %v153
    %v170 = vpack.c.b16 %v156, %v155
    %v171 = vpack.c.b16 %v158, %v157
    %v172 = vpack.c.b16 %v160, %v159
    %v173 = vpack.c.b16 %v162, %v161
    %v174 = vpack.c.b16 %v164, %v163
    %v175 = vpack.c.b16 %v166, %v165
    %v176 = vpack.c.b16 %v168, %v167
    %185 = vmatpush.bf16.msra.mxu0 %v176
    %186 = vmatpush.bf16.msra.mxu0 %v175
    %187 = vmatpush.bf16.msra.mxu0 %v174
    %188 = vmatpush.bf16.msra.mxu0 %v173
    %189 = vmatpush.bf16.msra.mxu0 %v172
    %190 = vmatpush.bf16.msra.mxu0 %v171
    %191 = vmatpush.bf16.msra.mxu0 %v170
    %192 = vmatpush.bf16.msra.mxu0 %v169
    %193 = vmatmul.bf16.gmra.mxu0 %v121
    %v194 = vpop.f32.mrf.mxu0
    %v195 = vadd.f32 %v88, %v194
    %v196 = vpop.f32.mrf.mxu0
    %v197 = vadd.f32 %v88, %v196
    %198 = vmatmul.bf16.gmra.mxu0 %v122
    %v199 = vpop.f32.mrf.mxu0
    %v200 = vadd.f32 %v88, %v199
    %v201 = vpop.f32.mrf.mxu0
    %v202 = vadd.f32 %v88, %v201
    %203 = vmatmul.bf16.gmra.mxu0 %v123
    %v204 = vpop.f32.mrf.mxu0
    %v205 = vadd.f32 %v88, %v204
    %v206 = vpop.f32.mrf.mxu0
    %v207 = vadd.f32 %v88, %v206
    %208 = vmatmul.bf16.gmra.mxu0 %v124
    %v209 = vpop.f32.mrf.mxu0
    %v210 = vadd.f32 %v88, %v209
    %v211 = vpop.f32.mrf.mxu0
    %v212 = vadd.f32 %v88, %v211
    %213 = vmatmul.bf16.gmra.mxu0 %v125
    %v214 = vpop.f32.mrf.mxu0
    %v215 = vadd.f32 %v88, %v214
    %v216 = vpop.f32.mrf.mxu0
    %v217 = vadd.f32 %v88, %v216
    %218 = vmatmul.bf16.gmra.mxu0 %v126
    %v219 = vpop.f32.mrf.mxu0
    %v220 = vadd.f32 %v88, %v219
    %v221 = vpop.f32.mrf.mxu0
    %v222 = vadd.f32 %v88, %v221
    %223 = vmatmul.bf16.gmra.mxu0 %v127
    %v224 = vpop.f32.mrf.mxu0
    %v225 = vadd.f32 %v88, %v224
    %v226 = vpop.f32.mrf.mxu0
    %v227 = vadd.f32 %v88, %v226
    %228 = vmatmul.bf16.gmra.mxu0 %v128
    %v229 = vpop.f32.mrf.mxu0
    %v230 = vadd.f32 %v88, %v229
    %v231 = vpop.f32.mrf.mxu0
    %v232 = vadd.f32 %v88, %v231
    %233 = vdwg.mxu0
    %234 = vst [vmem:[#allocation2] sm:$0xff] 0.0
    %235 = vst [vmem:[#allocation2 + $0x8] sm:$0xff] 0.0
    %236 = vst [vmem:[#allocation2 + $0x10] sm:$0xff] 0.0
    %237 = vst [vmem:[#allocation2 + $0x18] sm:$0xff] 0.0
    %238 = vst [vmem:[#allocation2 + $0x20] sm:$0xff] 0.0
    %239 = vst [vmem:[#allocation2 + $0x28] sm:$0xff] 0.0
    %240 = vst [vmem:[#allocation2 + $0x30] sm:$0xff] 0.0
    %241 = vst [vmem:[#allocation2 + $0x38] sm:$0xff] 0.0
    %242 = vst [vmem:[#allocation2 + $0x40] sm:$0xff] 0.0
    %243 = vst [vmem:[#allocation2 + $0x48] sm:$0xff] 0.0
    %244 = vst [vmem:[#allocation2 + $0x50] sm:$0xff] 0.0
    %245 = vst [vmem:[#allocation2 + $0x58] sm:$0xff] 0.0
    %246 = vst [vmem:[#allocation2 + $0x60] sm:$0xff] 0.0
    %247 = vst [vmem:[#allocation2 + $0x68] sm:$0xff] 0.0
    %248 = vst [vmem:[#allocation2 + $0x70] sm:$0xff] 0.0
    %249 = vst [vmem:[#allocation2 + $0x78] sm:$0xff] 0.0
    %v250 = vlaneseq
    %v251 = vshrl.u32 %v250, 7
    %v252 = vadd.s32 %v251, 8
    %v253 = vadd.s32 %v251, 16
    %v254 = vadd.s32 %v251, 24
    %v255 = vadd.s32 %v251, 32
    %v256 = vadd.s32 %v251, 40
    %v257 = vadd.s32 %v251, 48
    %v258 = vadd.s32 %v251, 56
    %v259 = vadd.s32 %v251, 64
    %v260 = vadd.s32 %v251, 72
    %v261 = vadd.s32 %v251, 80
    %v262 = vadd.s32 %v251, 88
    %v263 = vadd.s32 %v251, 96
    %v264 = vadd.s32 %v251, 104
    %v265 = vadd.s32 %v251, 112
    %v266 = vadd.s32 %v251, 120
    %vm267 = vcmp.lt.s32.totalorder %v251, 0
    %v268 = vsub.s32 0, %v251
    %v269 = vsel %vm267, %v268, %v251
    %v270 = vshrl.u32 %v269, 6
    %v271 = vand.u32 %v269, 63
    %v272 = vsub.s32 0, %v271
    %v273 = vsel %vm267, %v272, %v271
    %vm274 = vcmp.lt.s32.totalorder %v252, 0
    %v275 = vsub.s32 0, %v252
    %v276 = vsel %vm274, %v275, %v252
    %v277 = vshrl.u32 %v276, 6
    %v278 = vand.u32 %v276, 63
    %v279 = vsub.s32 0, %v278
    %v280 = vsel %vm274, %v279, %v278
    %vm281 = vcmp.lt.s32.totalorder %v253, 0
    %v282 = vsub.s32 0, %v253
    %v283 = vsel %vm281, %v282, %v253
    %v284 = vshrl.u32 %v283, 6
    %v285 = vand.u32 %v283, 63
    %v286 = vsub.s32 0, %v285
    %v287 = vsel %vm281, %v286, %v285
    %vm288 = vcmp.lt.s32.totalorder %v254, 0
    %v289 = vsub.s32 0, %v254
    %v290 = vsel %vm288, %v289, %v254
    %v291 = vshrl.u32 %v290, 6
    %v292 = vand.u32 %v290, 63
    %v293 = vsub.s32 0, %v292
    %v294 = vsel %vm288, %v293, %v292
    %vm295 = vcmp.lt.s32.totalorder %v255, 0
    %v296 = vsub.s32 0, %v255
    %v297 = vsel %vm295, %v296, %v255
    %v298 = vshrl.u32 %v297, 6
    %v299 = vand.u32 %v297, 63
    %v300 = vsub.s32 0, %v299
    %v301 = vsel %vm295, %v300, %v299
    %vm302 = vcmp.lt.s32.totalorder %v256, 0
    %v303 = vsub.s32 0, %v256
    %v304 = vsel %vm302, %v303, %v256
    %v305 = vshrl.u32 %v304, 6
    %v306 = vand.u32 %v304, 63
    %v307 = vsub.s32 0, %v306
    %v308 = vsel %vm302, %v307, %v306
    %vm309 = vcmp.lt.s32.totalorder %v257, 0
    %v310 = vsub.s32 0, %v257
    %v311 = vsel %vm309, %v310, %v257
    %v312 = vshrl.u32 %v311, 6
    %v313 = vand.u32 %v311, 63
    %v314 = vsub.s32 0, %v313
    %v315 = vsel %vm309, %v314, %v313
    %vm316 = vcmp.lt.s32.totalorder %v258, 0
    %v317 = vsub.s32 0, %v258
    %v318 = vsel %vm316, %v317, %v258
    %v319 = vshrl.u32 %v318, 6
    %v320 = vand.u32 %v318, 63
    %v321 = vsub.s32 0, %v320
    %v322 = vsel %vm316, %v321, %v320
    %vm323 = vcmp.lt.s32.totalorder %v259, 0
    %v324 = vsub.s32 0, %v259
    %v325 = vsel %vm323, %v324, %v259
    %v326 = vshrl.u32 %v325, 6
    %v327 = vand.u32 %v325, 63
    %v328 = vsub.s32 0, %v327
    %v329 = vsel %vm323, %v328, %v327
    %vm330 = vcmp.lt.s32.totalorder %v260, 0
    %v331 = vsub.s32 0, %v260
    %v332 = vsel %vm330, %v331, %v260
    %v333 = vshrl.u32 %v332, 6
    %v334 = vand.u32 %v332, 63
    %v335 = vsub.s32 0, %v334
    %v336 = vsel %vm330, %v335, %v334
    %vm337 = vcmp.lt.s32.totalorder %v261, 0
    %v338 = vsub.s32 0, %v261
    %v339 = vsel %vm337, %v338, %v261
    %v340 = vshrl.u32 %v339, 6
    %v341 = vand.u32 %v339, 63
    %v342 = vsub.s32 0, %v341
    %v343 = vsel %vm337, %v342, %v341
    %vm344 = vcmp.lt.s32.totalorder %v262, 0
    %v345 = vsub.s32 0, %v262
    %v346 = vsel %vm344, %v345, %v262
    %v347 = vshrl.u32 %v346, 6
    %v348 = vand.u32 %v346, 63
    %v349 = vsub.s32 0, %v348
    %v350 = vsel %vm344, %v349, %v348
    %vm351 = vcmp.lt.s32.totalorder %v263, 0
    %v352 = vsub.s32 0, %v263
    %v353 = vsel %vm351, %v352, %v263
    %v354 = vshrl.u32 %v353, 6
    %v355 = vand.u32 %v353, 63
    %v356 = vsub.s32 0, %v355
    %v357 = vsel %vm351, %v356, %v355
    %vm358 = vcmp.lt.s32.totalorder %v264, 0
    %v359 = vsub.s32 0, %v264
    %v360 = vsel %vm358, %v359, %v264
    %v361 = vshrl.u32 %v360, 6
    %v362 = vand.u32 %v360, 63
    %v363 = vsub.s32 0, %v362
    %v364 = vsel %vm358, %v363, %v362
    %vm365 = vcmp.lt.s32.totalorder %v265, 0
    %v366 = vsub.s32 0, %v265
    %v367 = vsel %vm365, %v366, %v265
    %v368 = vshrl.u32 %v367, 6
    %v369 = vand.u32 %v367, 63
    %v370 = vsub.s32 0, %v369
    %v371 = vsel %vm365, %v370, %v369
    %vm372 = vcmp.lt.s32.totalorder %v266, 0
    %v373 = vsub.s32 0, %v266
    %v374 = vsel %vm372, %v373, %v266
    %v375 = vshrl.u32 %v374, 6
    %v376 = vand.u32 %v374, 63
    %v377 = vsub.s32 0, %v376
    %v378 = vsel %vm372, %v377, %v376
    %vm379 = vcmp.ne.s32.totalorder %v273, 0
    %vm380 = vcmp.ne.s32.totalorder %v280, 0
    %vm381 = vcmp.ne.s32.totalorder %v287, 0
    %vm382 = vcmp.ne.s32.totalorder %v294, 0
    %vm383 = vcmp.ne.s32.totalorder %v301, 0
    %vm384 = vcmp.ne.s32.totalorder %v308, 0
    %vm385 = vcmp.ne.s32.totalorder %v315, 0
    %vm386 = vcmp.ne.s32.totalorder %v322, 0
    %vm387 = vcmp.ne.s32.totalorder %v329, 0
    %vm388 = vcmp.ne.s32.totalorder %v336, 0
    %vm389 = vcmp.ne.s32.totalorder %v343, 0
    %vm390 = vcmp.ne.s32.totalorder %v350, 0
    %vm391 = vcmp.ne.s32.totalorder %v357, 0
    %vm392 = vcmp.ne.s32.totalorder %v364, 0
    %vm393 = vcmp.ne.s32.totalorder %v371, 0
    %vm394 = vcmp.ne.s32.totalorder %v378, 0
    %vm395 = vcmp.lt.s32.totalorder %v273, 0
    %vm396 = vcmp.lt.s32.totalorder %v280, 0
    %vm397 = vcmp.lt.s32.totalorder %v287, 0
    %vm398 = vcmp.lt.s32.totalorder %v294, 0
    %vm399 = vcmp.lt.s32.totalorder %v301, 0
    %vm400 = vcmp.lt.s32.totalorder %v308, 0
    %vm401 = vcmp.lt.s32.totalorder %v315, 0
    %vm402 = vcmp.lt.s32.totalorder %v322, 0
    %vm403 = vcmp.lt.s32.totalorder %v329, 0
    %vm404 = vcmp.lt.s32.totalorder %v336, 0
    %vm405 = vcmp.lt.s32.totalorder %v343, 0
    %vm406 = vcmp.lt.s32.totalorder %v350, 0
    %vm407 = vcmp.lt.s32.totalorder %v357, 0
    %vm408 = vcmp.lt.s32.totalorder %v364, 0
    %vm409 = vcmp.lt.s32.totalorder %v371, 0
    %vm410 = vcmp.lt.s32.totalorder %v378, 0
    %vm411 = vmand %vm395, %vm379
    %vm412 = vmand %vm396, %vm380
    %vm413 = vmand %vm397, %vm381
    %vm414 = vmand %vm398, %vm382
    %vm415 = vmand %vm399, %vm383
    %vm416 = vmand %vm400, %vm384
    %vm417 = vmand %vm401, %vm385
    %vm418 = vmand %vm402, %vm386
    %vm419 = vmand %vm403, %vm387
    %vm420 = vmand %vm404, %vm388
    %vm421 = vmand %vm405, %vm389
    %vm422 = vmand %vm406, %vm390
    %vm423 = vmand %vm407, %vm391
    %vm424 = vmand %vm408, %vm392
    %vm425 = vmand %vm409, %vm393
    %vm426 = vmand %vm410, %vm394
    %v427 = vadd.s32 %v273, 64
    %v428 = vadd.s32 %v280, 64
    %v429 = vadd.s32 %v287, 64
    %v430 = vadd.s32 %v294, 64
    %v431 = vadd.s32 %v301, 64
    %v432 = vadd.s32 %v308, 64
    %v433 = vadd.s32 %v315, 64
    %v434 = vadd.s32 %v322, 64
    %v435 = vadd.s32 %v329, 64
    %v436 = vadd.s32 %v336, 64
    %v437 = vadd.s32 %v343, 64
    %v438 = vadd.s32 %v350, 64
    %v439 = vadd.s32 %v357, 64
    %v440 = vadd.s32 %v364, 64
    %v441 = vadd.s32 %v371, 64
    %v442 = vadd.s32 %v378, 64
    %v443 = vsel %vm411, %v427, %v273
    %v444 = vsel %vm412, %v428, %v280
    %v445 = vsel %vm413, %v429, %v287
    %v446 = vsel %vm414, %v430, %v294
    %v447 = vsel %vm415, %v431, %v301
    %v448 = vsel %vm416, %v432, %v308
    %v449 = vsel %vm417, %v433, %v315
    %v450 = vsel %vm418, %v434, %v322
    %v451 = vsel %vm419, %v435, %v329
    %v452 = vsel %vm420, %v436, %v336
    %v453 = vsel %vm421, %v437, %v343
    %v454 = vsel %vm422, %v438, %v350
    %v455 = vsel %vm423, %v439, %v357
    %v456 = vsel %vm424, %v440, %v364
    %v457 = vsel %vm425, %v441, %v371
    %v458 = vsel %vm426, %v442, %v378
    %vm459 = vcmp.ge.s32.totalorder %v443, 1
    %vm460 = vcmp.ge.s32.totalorder %v444, 1
    %vm461 = vcmp.ge.s32.totalorder %v445, 1
    %vm462 = vcmp.ge.s32.totalorder %v446, 1
    %vm463 = vcmp.ge.s32.totalorder %v447, 1
    %vm464 = vcmp.ge.s32.totalorder %v448, 1
    %vm465 = vcmp.ge.s32.totalorder %v449, 1
    %vm466 = vcmp.ge.s32.totalorder %v450, 1
    %vm467 = vcmp.ge.s32.totalorder %v451, 1
    %vm468 = vcmp.ge.s32.totalorder %v452, 1
    %vm469 = vcmp.ge.s32.totalorder %v453, 1
    %vm470 = vcmp.ge.s32.totalorder %v454, 1
    %vm471 = vcmp.ge.s32.totalorder %v455, 1
    %vm472 = vcmp.ge.s32.totalorder %v456, 1
    %vm473 = vcmp.ge.s32.totalorder %v457, 1
    %vm474 = vcmp.ge.s32.totalorder %v458, 1
    %vm475 = vcmp.lt.s32.totalorder %v443, 63
    %vm476 = vcmp.lt.s32.totalorder %v444, 63
    %vm477 = vcmp.lt.s32.totalorder %v445, 63
    %vm478 = vcmp.lt.s32.totalorder %v446, 63
    %vm479 = vcmp.lt.s32.totalorder %v447, 63
    %vm480 = vcmp.lt.s32.totalorder %v448, 63
    %vm481 = vcmp.lt.s32.totalorder %v449, 63
    %vm482 = vcmp.lt.s32.totalorder %v450, 63
    %vm483 = vcmp.lt.s32.totalorder %v451, 63
    %vm484 = vcmp.lt.s32.totalorder %v452, 63
    %vm485 = vcmp.lt.s32.totalorder %v453, 63
    %vm486 = vcmp.lt.s32.totalorder %v454, 63
    %vm487 = vcmp.lt.s32.totalorder %v455, 63
    %vm488 = vcmp.lt.s32.totalorder %v456, 63
    %vm489 = vcmp.lt.s32.totalorder %v457, 63
    %vm490 = vcmp.lt.s32.totalorder %v458, 63
    %vm491 = vcmp.ge.s32.totalorder %v443, 2
    %vm492 = vcmp.ge.s32.totalorder %v444, 2
    %vm493 = vcmp.ge.s32.totalorder %v445, 2
    %vm494 = vcmp.ge.s32.totalorder %v446, 2
    %vm495 = vcmp.ge.s32.totalorder %v447, 2
    %vm496 = vcmp.ge.s32.totalorder %v448, 2
    %vm497 = vcmp.ge.s32.totalorder %v449, 2
    %vm498 = vcmp.ge.s32.totalorder %v450, 2
    %vm499 = vcmp.ge.s32.totalorder %v451, 2
    %vm500 = vcmp.ge.s32.totalorder %v452, 2
    %vm501 = vcmp.ge.s32.totalorder %v453, 2
    %vm502 = vcmp.ge.s32.totalorder %v454, 2
    %vm503 = vcmp.ge.s32.totalorder %v455, 2
    %vm504 = vcmp.ge.s32.totalorder %v456, 2
    %vm505 = vcmp.ge.s32.totalorder %v457, 2
    %vm506 = vcmp.ge.s32.totalorder %v458, 2
    %vm507 = vcmp.lt.s32.totalorder %v443, 62
    %vm508 = vcmp.lt.s32.totalorder %v444, 62
    %vm509 = vcmp.lt.s32.totalorder %v445, 62
    %vm510 = vcmp.lt.s32.totalorder %v446, 62
    %vm511 = vcmp.lt.s32.totalorder %v447, 62
    %vm512 = vcmp.lt.s32.totalorder %v448, 62
    %vm513 = vcmp.lt.s32.totalorder %v449, 62
    %vm514 = vcmp.lt.s32.totalorder %v450, 62
    %vm515 = vcmp.lt.s32.totalorder %v451, 62
    %vm516 = vcmp.lt.s32.totalorder %v452, 62
    %vm517 = vcmp.lt.s32.totalorder %v453, 62
    %vm518 = vcmp.lt.s32.totalorder %v454, 62
    %vm519 = vcmp.lt.s32.totalorder %v455, 62
    %vm520 = vcmp.lt.s32.totalorder %v456, 62
    %vm521 = vcmp.lt.s32.totalorder %v457, 62
    %vm522 = vcmp.lt.s32.totalorder %v458, 62
    %v523 = vpack.c.bf16 %v195, %v195
    %v524 = vpack.c.bf16 %v197, %v197
    %v525 = vpack.c.bf16 %v200, %v200
    %v526 = vpack.c.bf16 %v202, %v202
    %v527 = vpack.c.bf16 %v205, %v205
    %v528 = vpack.c.bf16 %v207, %v207
    %v529 = vpack.c.bf16 %v210, %v210
    %v530 = vpack.c.bf16 %v212, %v212
    %v531 = vpack.c.bf16 %v215, %v215
    %v532 = vpack.c.bf16 %v217, %v217
    %v533 = vpack.c.bf16 %v220, %v220
    %v534 = vpack.c.bf16 %v222, %v222
    %v535 = vpack.c.bf16 %v225, %v225
    %v536 = vpack.c.bf16 %v227, %v227
    %v537 = vpack.c.bf16 %v230, %v230
    %v538 = vpack.c.bf16 %v232, %v232
    %v539 = vrot.slane %v195, 7
    %v540 = vrot.slane %v197, 7
    %v541 = vrot.slane %v200, 7
    %v542 = vrot.slane %v202, 7
    %v543 = vrot.slane %v205, 7
    %v544 = vrot.slane %v207, 7
    %v545 = vrot.slane %v210, 7
    %v546 = vrot.slane %v212, 7
    %v547 = vrot.slane %v215, 7
    %v548 = vrot.slane %v217, 7
    %v549 = vrot.slane %v220, 7
    %v550 = vrot.slane %v222, 7
    %v551 = vrot.slane %v225, 7
    %v552 = vrot.slane %v227, 7
    %v553 = vrot.slane %v230, 7
    %v554 = vrot.slane %v232, 7
    %vm555 = vcmp.lt.s32.totalorder %v251, 1
    %v556 = vsel %vm555, %v553, %v554
    %v557 = vsel %vm555, %v552, %v553
    %v558 = vsel %vm555, %v551, %v552
    %v559 = vsel %vm555, %v550, %v551
    %v560 = vsel %vm555, %v549, %v550
    %v561 = vsel %vm555, %v548, %v549
    %v562 = vsel %vm555, %v547, %v548
    %v563 = vsel %vm555, %v546, %v547
    %v564 = vsel %vm555, %v545, %v546
    %v565 = vsel %vm555, %v544, %v545
    %v566 = vsel %vm555, %v543, %v544
    %v567 = vsel %vm555, %v542, %v543
    %v568 = vsel %vm555, %v541, %v542
    %v569 = vsel %vm555, %v540, %v541
    %v570 = vsel %vm555, %v539, %v540
    %v571 = vsel %vm555, %v554, %v539
    %v572 = vpack.c.bf16 %v571, %v571
    %v573 = vpack.c.bf16 %v570, %v570
    %v574 = vpack.c.bf16 %v569, %v569
    %v575 = vpack.c.bf16 %v568, %v568
    %v576 = vpack.c.bf16 %v567, %v567
    %v577 = vpack.c.bf16 %v566, %v566
    %v578 = vpack.c.bf16 %v565, %v565
    %v579 = vpack.c.bf16 %v564, %v564
    %v580 = vpack.c.bf16 %v563, %v563
    %v581 = vpack.c.bf16 %v562, %v562
    %v582 = vpack.c.bf16 %v561, %v561
    %v583 = vpack.c.bf16 %v560, %v560
    %v584 = vpack.c.bf16 %v559, %v559
    %v585 = vpack.c.bf16 %v558, %v558
    %v586 = vpack.c.bf16 %v557, %v557
    %v587 = vpack.c.bf16 %v556, %v556
    %v588 = vsel %vm459, 1, 0
    %v589 = vsel %vm460, 1, 0
    %v590 = vsel %vm461, 1, 0
    %v591 = vsel %vm462, 1, 0
    %v592 = vsel %vm463, 1, 0
    %v593 = vsel %vm464, 1, 0
    %v594 = vsel %vm465, 1, 0
    %v595 = vsel %vm466, 1, 0
    %v596 = vsel %vm467, 1, 0
    %v597 = vsel %vm468, 1, 0
    %v598 = vsel %vm469, 1, 0
    %v599 = vsel %vm470, 1, 0
    %v600 = vsel %vm471, 1, 0
    %v601 = vsel %vm472, 1, 0
    %v602 = vsel %vm473, 1, 0
    %v603 = vsel %vm474, 1, 0
    %vm604 = vcmp.eq.s32.totalorder %v588, 1
    %vm605 = vcmp.eq.s32.totalorder %v589, 1
    %vm606 = vcmp.eq.s32.totalorder %v590, 1
    %vm607 = vcmp.eq.s32.totalorder %v591, 1
    %vm608 = vcmp.eq.s32.totalorder %v592, 1
    %vm609 = vcmp.eq.s32.totalorder %v593, 1
    %vm610 = vcmp.eq.s32.totalorder %v594, 1
    %vm611 = vcmp.eq.s32.totalorder %v595, 1
    %vm612 = vcmp.eq.s32.totalorder %v596, 1
    %vm613 = vcmp.eq.s32.totalorder %v597, 1
    %vm614 = vcmp.eq.s32.totalorder %v598, 1
    %vm615 = vcmp.eq.s32.totalorder %v599, 1
    %vm616 = vcmp.eq.s32.totalorder %v600, 1
    %vm617 = vcmp.eq.s32.totalorder %v601, 1
    %vm618 = vcmp.eq.s32.totalorder %v602, 1
    %vm619 = vcmp.eq.s32.totalorder %v603, 1
    %vm620 = vmpackc.low %vm604, %vm604
    %vm621 = vmpackc.low %vm605, %vm605
    %vm622 = vmpackc.low %vm606, %vm606
    %vm623 = vmpackc.low %vm607, %vm607
    %vm624 = vmpackc.low %vm608, %vm608
    %vm625 = vmpackc.low %vm609, %vm609
    %vm626 = vmpackc.low %vm610, %vm610
    %vm627 = vmpackc.low %vm611, %vm611
    %vm628 = vmpackc.low %vm612, %vm612
    %vm629 = vmpackc.low %vm613, %vm613
    %vm630 = vmpackc.low %vm614, %vm614
    %vm631 = vmpackc.low %vm615, %vm615
    %vm632 = vmpackc.low %vm616, %vm616
    %vm633 = vmpackc.low %vm617, %vm617
    %vm634 = vmpackc.low %vm618, %vm618
    %vm635 = vmpackc.low %vm619, %vm619
    %v636 = vsel %vm620, %v572, 0
    %v637 = vsel %vm621, %v573, 0
    %v638 = vsel %vm622, %v574, 0
    %v639 = vsel %vm623, %v575, 0
    %v640 = vsel %vm624, %v576, 0
    %v641 = vsel %vm625, %v577, 0
    %v642 = vsel %vm626, %v578, 0
    %v643 = vsel %vm627, %v579, 0
    %v644 = vsel %vm628, %v580, 0
    %v645 = vsel %vm629, %v581, 0
    %v646 = vsel %vm630, %v582, 0
    %v647 = vsel %vm631, %v583, 0
    %v648 = vsel %vm632, %v584, 0
    %v649 = vsel %vm633, %v585, 0
    %v650 = vsel %vm634, %v586, 0
    %v651 = vsel %vm635, %v587, 0
    %v652 = vrot.slane %v195, 1
    %v653 = vrot.slane %v197, 1
    %v654 = vrot.slane %v200, 1
    %v655 = vrot.slane %v202, 1
    %v656 = vrot.slane %v205, 1
    %v657 = vrot.slane %v207, 1
    %v658 = vrot.slane %v210, 1
    %v659 = vrot.slane %v212, 1
    %v660 = vrot.slane %v215, 1
    %v661 = vrot.slane %v217, 1
    %v662 = vrot.slane %v220, 1
    %v663 = vrot.slane %v222, 1
    %v664 = vrot.slane %v225, 1
    %v665 = vrot.slane %v227, 1
    %v666 = vrot.slane %v230, 1
    %v667 = vrot.slane %v232, 1
    %vm668 = vcmp.lt.s32.totalorder %v251, 7
    %v669 = vsel %vm668, %v666, %v667
    %v670 = vsel %vm668, %v665, %v666
    %v671 = vsel %vm668, %v664, %v665
    %v672 = vsel %vm668, %v663, %v664
    %v673 = vsel %vm668, %v662, %v663
    %v674 = vsel %vm668, %v661, %v662
    %v675 = vsel %vm668, %v660, %v661
    %v676 = vsel %vm668, %v659, %v660
    %v677 = vsel %vm668, %v658, %v659
    %v678 = vsel %vm668, %v657, %v658
    %v679 = vsel %vm668, %v656, %v657
    %v680 = vsel %vm668, %v655, %v656
    %v681 = vsel %vm668, %v654, %v655
    %v682 = vsel %vm668, %v653, %v654
    %v683 = vsel %vm668, %v652, %v653
    %v684 = vsel %vm668, %v667, %v652
    %v685 = vpack.c.bf16 %v683, %v683
    %v686 = vpack.c.bf16 %v682, %v682
    %v687 = vpack.c.bf16 %v681, %v681
    %v688 = vpack.c.bf16 %v680, %v680
    %v689 = vpack.c.bf16 %v679, %v679
    %v690 = vpack.c.bf16 %v678, %v678
    %v691 = vpack.c.bf16 %v677, %v677
    %v692 = vpack.c.bf16 %v676, %v676
    %v693 = vpack.c.bf16 %v675, %v675
    %v694 = vpack.c.bf16 %v674, %v674
    %v695 = vpack.c.bf16 %v673, %v673
    %v696 = vpack.c.bf16 %v672, %v672
    %v697 = vpack.c.bf16 %v671, %v671
    %v698 = vpack.c.bf16 %v670, %v670
    %v699 = vpack.c.bf16 %v669, %v669
    %v700 = vpack.c.bf16 %v684, %v684
    %v701 = vsel %vm475, 1, 0
    %v702 = vsel %vm476, 1, 0
    %v703 = vsel %vm477, 1, 0
    %v704 = vsel %vm478, 1, 0
    %v705 = vsel %vm479, 1, 0
    %v706 = vsel %vm480, 1, 0
    %v707 = vsel %vm481, 1, 0
    %v708 = vsel %vm482, 1, 0
    %v709 = vsel %vm483, 1, 0
    %v710 = vsel %vm484, 1, 0
    %v711 = vsel %vm485, 1, 0
    %v712 = vsel %vm486, 1, 0
    %v713 = vsel %vm487, 1, 0
    %v714 = vsel %vm488, 1, 0
    %v715 = vsel %vm489, 1, 0
    %v716 = vsel %vm490, 1, 0
    %vm717 = vcmp.eq.s32.totalorder %v701, 1
    %vm718 = vcmp.eq.s32.totalorder %v702, 1
    %vm719 = vcmp.eq.s32.totalorder %v703, 1
    %vm720 = vcmp.eq.s32.totalorder %v704, 1
    %vm721 = vcmp.eq.s32.totalorder %v705, 1
    %vm722 = vcmp.eq.s32.totalorder %v706, 1
    %vm723 = vcmp.eq.s32.totalorder %v707, 1
    %vm724 = vcmp.eq.s32.totalorder %v708, 1
    %vm725 = vcmp.eq.s32.totalorder %v709, 1
    %vm726 = vcmp.eq.s32.totalorder %v710, 1
    %vm727 = vcmp.eq.s32.totalorder %v711, 1
    %vm728 = vcmp.eq.s32.totalorder %v712, 1
    %vm729 = vcmp.eq.s32.totalorder %v713, 1
    %vm730 = vcmp.eq.s32.totalorder %v714, 1
    %vm731 = vcmp.eq.s32.totalorder %v715, 1
    %vm732 = vcmp.eq.s32.totalorder %v716, 1
    %vm733 = vmpackc.low %vm717, %vm717
    %vm734 = vmpackc.low %vm718, %vm718
    %vm735 = vmpackc.low %vm719, %vm719
    %vm736 = vmpackc.low %vm720, %vm720
    %vm737 = vmpackc.low %vm721, %vm721
    %vm738 = vmpackc.low %vm722, %vm722
    %vm739 = vmpackc.low %vm723, %vm723
    %vm740 = vmpackc.low %vm724, %vm724
    %vm741 = vmpackc.low %vm725, %vm725
    %vm742 = vmpackc.low %vm726, %vm726
    %vm743 = vmpackc.low %vm727, %vm727
    %vm744 = vmpackc.low %vm728, %vm728
    %vm745 = vmpackc.low %vm729, %vm729
    %vm746 = vmpackc.low %vm730, %vm730
    %vm747 = vmpackc.low %vm731, %vm731
    %vm748 = vmpackc.low %vm732, %vm732
    %v749 = vsel %vm733, %v685, 0
    %v750 = vsel %vm734, %v686, 0
    %v751 = vsel %vm735, %v687, 0
    %v752 = vsel %vm736, %v688, 0
    %v753 = vsel %vm737, %v689, 0
    %v754 = vsel %vm738, %v690, 0
    %v755 = vsel %vm739, %v691, 0
    %v756 = vsel %vm740, %v692, 0
    %v757 = vsel %vm741, %v693, 0
    %v758 = vsel %vm742, %v694, 0
    %v759 = vsel %vm743, %v695, 0
    %v760 = vsel %vm744, %v696, 0
    %v761 = vsel %vm745, %v697, 0
    %v762 = vsel %vm746, %v698, 0
    %v763 = vsel %vm747, %v699, 0
    %v764 = vsel %vm748, %v700, 0
    %v781 = vunpack.c.l.b16 %v636
    %v782 = vunpack.c.l.b16 %v637
    %v783 = vunpack.c.l.b16 %v638
    %v784 = vunpack.c.l.b16 %v639
    %v785 = vunpack.c.l.b16 %v640
    %v786 = vunpack.c.l.b16 %v641
    %v787 = vunpack.c.l.b16 %v642
    %v788 = vunpack.c.l.b16 %v643
    %v789 = vunpack.c.l.b16 %v644
    %v790 = vunpack.c.l.b16 %v645
    %v791 = vunpack.c.l.b16 %v646
    %v792 = vunpack.c.l.b16 %v647
    %v793 = vunpack.c.l.b16 %v648
    %v794 = vunpack.c.l.b16 %v649
    %v795 = vunpack.c.l.b16 %v650
    %v796 = vunpack.c.l.b16 %v651
    %v797 = vpack.c.b16 %v782, %v781
    %v798 = vpack.c.b16 %v784, %v783
    %v799 = vpack.c.b16 %v786, %v785
    %v800 = vpack.c.b16 %v788, %v787
    %v801 = vpack.c.b16 %v790, %v789
    %v802 = vpack.c.b16 %v792, %v791
    %v803 = vpack.c.b16 %v794, %v793
    %v804 = vpack.c.b16 %v796, %v795
    %v829 = vunpack.c.l.b16 %v523
    %v830 = vunpack.c.l.b16 %v524
    %v831 = vunpack.c.l.b16 %v525
    %v832 = vunpack.c.l.b16 %v526
    %v833 = vunpack.c.l.b16 %v527
    %v834 = vunpack.c.l.b16 %v528
    %v835 = vunpack.c.l.b16 %v529
    %v836 = vunpack.c.l.b16 %v530
    %v837 = vunpack.c.l.b16 %v531
    %v838 = vunpack.c.l.b16 %v532
    %v839 = vunpack.c.l.b16 %v533
    %v840 = vunpack.c.l.b16 %v534
    %v841 = vunpack.c.l.b16 %v535
    %v842 = vunpack.c.l.b16 %v536
    %v843 = vunpack.c.l.b16 %v537
    %v844 = vunpack.c.l.b16 %v538
    %v845 = vpack.c.b16 %v830, %v829
    %v846 = vpack.c.b16 %v832, %v831
    %v847 = vpack.c.b16 %v834, %v833
    %v848 = vpack.c.b16 %v836, %v835
    %v849 = vpack.c.b16 %v838, %v837
    %v850 = vpack.c.b16 %v840, %v839
    %v851 = vpack.c.b16 %v842, %v841
    %v852 = vpack.c.b16 %v844, %v843
    %v877 = vunpack.c.l.b16 %v749
    %v878 = vunpack.c.l.b16 %v750
    %v879 = vunpack.c.l.b16 %v751
    %v880 = vunpack.c.l.b16 %v752
    %v881 = vunpack.c.l.b16 %v753
    %v882 = vunpack.c.l.b16 %v754
    %v883 = vunpack.c.l.b16 %v755
    %v884 = vunpack.c.l.b16 %v756
    %v885 = vunpack.c.l.b16 %v757
    %v886 = vunpack.c.l.b16 %v758
    %v887 = vunpack.c.l.b16 %v759
    %v888 = vunpack.c.l.b16 %v760
    %v889 = vunpack.c.l.b16 %v761
    %v890 = vunpack.c.l.b16 %v762
    %v891 = vunpack.c.l.b16 %v763
    %v892 = vunpack.c.l.b16 %v764
    %v893 = vpack.c.b16 %v878, %v877
    %v894 = vpack.c.b16 %v880, %v879
    %v895 = vpack.c.b16 %v882, %v881
    %v896 = vpack.c.b16 %v884, %v883
    %v897 = vpack.c.b16 %v886, %v885
    %v898 = vpack.c.b16 %v888, %v887
    %v899 = vpack.c.b16 %v890, %v889
    %v900 = vpack.c.b16 %v892, %v891
    %v909 = vld [vmem:[#allocation3] sm:$0xf]
    %v910 = vld [vmem:[#allocation3 + $0x4] sm:$0xf]
    %v911 = vld [vmem:[#allocation3 + $0x8] sm:$0xf]
    %v912 = vld [vmem:[#allocation3 + $0xc] sm:$0xf]
    %v913 = vld [vmem:[#allocation3 + $0x10] sm:$0xf]
    %v914 = vld [vmem:[#allocation3 + $0x14] sm:$0xf]
    %v915 = vld [vmem:[#allocation3 + $0x18] sm:$0xf]
    %v916 = vld [vmem:[#allocation3 + $0x1c] sm:$0xf]
    %v917 = vld [vmem:[#allocation3 + $0x20] sm:$0xf]
    %v918 = vld [vmem:[#allocation3 + $0x24] sm:$0xf]
    %v919 = vld [vmem:[#allocation3 + $0x28] sm:$0xf]
    %v920 = vld [vmem:[#allocation3 + $0x2c] sm:$0xf]
    %v921 = vld [vmem:[#allocation3 + $0x30] sm:$0xf]
    %v922 = vld [vmem:[#allocation3 + $0x34] sm:$0xf]
    %v923 = vld [vmem:[#allocation3 + $0x38] sm:$0xf]
    %v924 = vld [vmem:[#allocation3 + $0x3c] sm:$0xf]
    %v925 = vld [vmem:[#allocation3 + $0x40] sm:$0xf]
    %v926 = vld [vmem:[#allocation3 + $0x44] sm:$0xf]
    %v927 = vld [vmem:[#allocation3 + $0x48] sm:$0xf]
    %v928 = vld [vmem:[#allocation3 + $0x4c] sm:$0xf]
    %v929 = vld [vmem:[#allocation3 + $0x50] sm:$0xf]
    %v930 = vld [vmem:[#allocation3 + $0x54] sm:$0xf]
    %v931 = vld [vmem:[#allocation3 + $0x58] sm:$0xf]
    %v932 = vld [vmem:[#allocation3 + $0x5c] sm:$0xf]
    %v933 = vld [vmem:[#allocation3 + $0x60] sm:$0xf]
    %v934 = vld [vmem:[#allocation3 + $0x64] sm:$0xf]
    %v935 = vld [vmem:[#allocation3 + $0x68] sm:$0xf]
    %v936 = vld [vmem:[#allocation3 + $0x6c] sm:$0xf]
    %v937 = vld [vmem:[#allocation3 + $0x70] sm:$0xf]
    %v938 = vld [vmem:[#allocation3 + $0x74] sm:$0xf]
    %v939 = vld [vmem:[#allocation3 + $0x78] sm:$0xf]
    %v940 = vld [vmem:[#allocation3 + $0x7c] sm:$0xf]
    %v941 = vld [vmem:[#allocation3 + $0x80] sm:$0xf]
    %v942 = vld [vmem:[#allocation3 + $0x84] sm:$0xf]
    %v943 = vld [vmem:[#allocation3 + $0x88] sm:$0xf]
    %v944 = vld [vmem:[#allocation3 + $0x8c] sm:$0xf]
    %v945 = vld [vmem:[#allocation3 + $0x90] sm:$0xf]
    %v946 = vld [vmem:[#allocation3 + $0x94] sm:$0xf]
    %v947 = vld [vmem:[#allocation3 + $0x98] sm:$0xf]
    %v948 = vld [vmem:[#allocation3 + $0x9c] sm:$0xf]
    %v949 = vld [vmem:[#allocation3 + $0xa0] sm:$0xf]
    %v950 = vld [vmem:[#allocation3 + $0xa4] sm:$0xf]
    %v951 = vld [vmem:[#allocation3 + $0xa8] sm:$0xf]
    %v952 = vld [vmem:[#allocation3 + $0xac] sm:$0xf]
    %v953 = vld [vmem:[#allocation3 + $0xb0] sm:$0xf]
    %v954 = vld [vmem:[#allocation3 + $0xb4] sm:$0xf]
    %v955 = vld [vmem:[#allocation3 + $0xb8] sm:$0xf]
    %v956 = vld [vmem:[#allocation3 + $0xbc] sm:$0xf]
    %v957 = vperm.slane %v54, 1
    %v1006 = vunpack.c.l.b16 %v909
    %v1007 = vunpack.c.l.b16 %v910
    %v1008 = vunpack.c.l.b16 %v911
    %v1009 = vunpack.c.l.b16 %v912
    %v1010 = vunpack.c.l.b16 %v913
    %v1011 = vunpack.c.l.b16 %v914
    %v1012 = vunpack.c.l.b16 %v915
    %v1013 = vunpack.c.l.b16 %v916
    %v1014 = vunpack.c.l.b16 %v917
    %v1015 = vunpack.c.l.b16 %v918
    %v1016 = vunpack.c.l.b16 %v919
    %v1017 = vunpack.c.l.b16 %v920
    %v1018 = vunpack.c.l.b16 %v921
    %v1019 = vunpack.c.l.b16 %v922
    %v1020 = vunpack.c.l.b16 %v923
    %v1021 = vunpack.c.l.b16 %v924
    %v1022 = vunpack.c.l.b16 %v925
    %v1023 = vunpack.c.l.b16 %v926
    %v1024 = vunpack.c.l.b16 %v927
    %v1025 = vunpack.c.l.b16 %v928
    %v1026 = vunpack.c.l.b16 %v929
    %v1027 = vunpack.c.l.b16 %v930
    %v1028 = vunpack.c.l.b16 %v931
    %v1029 = vunpack.c.l.b16 %v932
    %v1030 = vunpack.c.l.b16 %v933
    %v1031 = vunpack.c.l.b16 %v934
    %v1032 = vunpack.c.l.b16 %v935
    %v1033 = vunpack.c.l.b16 %v936
    %v1034 = vunpack.c.l.b16 %v937
    %v1035 = vunpack.c.l.b16 %v938
    %v1036 = vunpack.c.l.b16 %v939
    %v1037 = vunpack.c.l.b16 %v940
    %v1038 = vunpack.c.l.b16 %v941
    %v1039 = vunpack.c.l.b16 %v942
    %v1040 = vunpack.c.l.b16 %v943
    %v1041 = vunpack.c.l.b16 %v944
    %v1042 = vunpack.c.l.b16 %v945
    %v1043 = vunpack.c.l.b16 %v946
    %v1044 = vunpack.c.l.b16 %v947
    %v1045 = vunpack.c.l.b16 %v948
    %v1046 = vunpack.c.l.b16 %v949
    %v1047 = vunpack.c.l.b16 %v950
    %v1048 = vunpack.c.l.b16 %v951
    %v1049 = vunpack.c.l.b16 %v952
    %v1050 = vunpack.c.l.b16 %v953
    %v1051 = vunpack.c.l.b16 %v954
    %v1052 = vunpack.c.l.b16 %v955
    %v1053 = vunpack.c.l.b16 %v956
    %v1054 = vpack.c.b16 %v1007, %v1006
    %v1055 = vpack.c.b16 %v1009, %v1008
    %v1056 = vpack.c.b16 %v1011, %v1010
    %v1057 = vpack.c.b16 %v1013, %v1012
    %v1058 = vpack.c.b16 %v1015, %v1014
    %v1059 = vpack.c.b16 %v1017, %v1016
    %v1060 = vpack.c.b16 %v1019, %v1018
    %v1061 = vpack.c.b16 %v1021, %v1020
    %v1062 = vpack.c.b16 %v1023, %v1022
    %v1063 = vpack.c.b16 %v1025, %v1024
    %v1064 = vpack.c.b16 %v1027, %v1026
    %v1065 = vpack.c.b16 %v1029, %v1028
    %v1066 = vpack.c.b16 %v1031, %v1030
    %v1067 = vpack.c.b16 %v1033, %v1032
    %v1068 = vpack.c.b16 %v1035, %v1034
    %v1069 = vpack.c.b16 %v1037, %v1036
    %v1070 = vpack.c.b16 %v1039, %v1038
    %v1071 = vpack.c.b16 %v1041, %v1040
    %v1072 = vpack.c.b16 %v1043, %v1042
    %v1073 = vpack.c.b16 %v1045, %v1044
    %v1074 = vpack.c.b16 %v1047, %v1046
    %v1075 = vpack.c.b16 %v1049, %v1048
    %v1076 = vpack.c.b16 %v1051, %v1050
    %v1077 = vpack.c.b16 %v1053, %v1052
    %1102 = vmatpush.bf16.msra.mxu0 %v1061
    %1103 = vmatpush.bf16.msra.mxu0 %v1060
    %1104 = vmatpush.bf16.msra.mxu0 %v1059
    %1105 = vmatpush.bf16.msra.mxu0 %v1058
    %1106 = vmatpush.bf16.msra.mxu0 %v1057
    %1107 = vmatpush.bf16.msra.mxu0 %v1056
    %1108 = vmatpush.bf16.msra.mxu0 %v1055
    %1109 = vmatpush.bf16.msra.mxu0 %v1054
    %1110 = vmatmul.bf16.gmra.mxu0 %v797
    %v1111 = vpop.f32.mrf.mxu0
    %v1112 = vadd.f32 %v957, %v1111
    %v1113 = vpop.f32.mrf.mxu0
    %v1114 = vadd.f32 %v957, %v1113
    %1115 = vmatmul.bf16.gmra.mxu0 %v798
    %v1116 = vpop.f32.mrf.mxu0
    %v1117 = vadd.f32 %v957, %v1116
    %v1118 = vpop.f32.mrf.mxu0
    %v1119 = vadd.f32 %v957, %v1118
    %1120 = vmatmul.bf16.gmra.mxu0 %v799
    %v1121 = vpop.f32.mrf.mxu0
    %v1122 = vadd.f32 %v957, %v1121
    %v1123 = vpop.f32.mrf.mxu0
    %v1124 = vadd.f32 %v957, %v1123
    %1125 = vmatmul.bf16.gmra.mxu0 %v800
    %v1126 = vpop.f32.mrf.mxu0
    %v1127 = vadd.f32 %v957, %v1126
    %v1128 = vpop.f32.mrf.mxu0
    %v1129 = vadd.f32 %v957, %v1128
    %1130 = vmatmul.bf16.gmra.mxu0 %v801
    %v1131 = vpop.f32.mrf.mxu0
    %v1132 = vadd.f32 %v957, %v1131
    %v1133 = vpop.f32.mrf.mxu0
    %v1134 = vadd.f32 %v957, %v1133
    %1135 = vmatmul.bf16.gmra.mxu0 %v802
    %v1136 = vpop.f32.mrf.mxu0
    %v1137 = vadd.f32 %v957, %v1136
    %v1138 = vpop.f32.mrf.mxu0
    %v1139 = vadd.f32 %v957, %v1138
    %1140 = vmatmul.bf16.gmra.mxu0 %v803
    %v1141 = vpop.f32.mrf.mxu0
    %v1142 = vadd.f32 %v957, %v1141
    %v1143 = vpop.f32.mrf.mxu0
    %v1144 = vadd.f32 %v957, %v1143
    %1145 = vmatmul.bf16.gmra.mxu0 %v804
    %v1146 = vpop.f32.mrf.mxu0
    %v1147 = vadd.f32 %v957, %v1146
    %v1148 = vpop.f32.mrf.mxu0
    %v1149 = vadd.f32 %v957, %v1148
    %1150 = vdwg.mxu0
    %1151 = vmatpush.bf16.msra.mxu0 %v1069
    %1152 = vmatpush.bf16.msra.mxu0 %v1068
    %1153 = vmatpush.bf16.msra.mxu0 %v1067
    %1154 = vmatpush.bf16.msra.mxu0 %v1066
    %1155 = vmatpush.bf16.msra.mxu0 %v1065
    %1156 = vmatpush.bf16.msra.mxu0 %v1064
    %1157 = vmatpush.bf16.msra.mxu0 %v1063
    %1158 = vmatpush.bf16.msra.mxu0 %v1062
    %1159 = vmatmul.bf16.gmra.mxu0 %v845
    %v1160 = vpop.f32.mrf.mxu0
    %v1161 = vadd.f32 %v1112, %v1160
    %v1162 = vpop.f32.mrf.mxu0
    %v1163 = vadd.f32 %v1114, %v1162
    %1164 = vmatmul.bf16.gmra.mxu0 %v846
    %v1165 = vpop.f32.mrf.mxu0
    %v1166 = vadd.f32 %v1117, %v1165
    %v1167 = vpop.f32.mrf.mxu0
    %v1168 = vadd.f32 %v1119, %v1167
    %1169 = vmatmul.bf16.gmra.mxu0 %v847
    %v1170 = vpop.f32.mrf.mxu0
    %v1171 = vadd.f32 %v1122, %v1170
    %v1172 = vpop.f32.mrf.mxu0
    %v1173 = vadd.f32 %v1124, %v1172
    %1174 = vmatmul.bf16.gmra.mxu0 %v848
    %v1175 = vpop.f32.mrf.mxu0
    %v1176 = vadd.f32 %v1127, %v1175
    %v1177 = vpop.f32.mrf.mxu0
    %v1178 = vadd.f32 %v1129, %v1177
    %1179 = vmatmul.bf16.gmra.mxu0 %v849
    %v1180 = vpop.f32.mrf.mxu0
    %v1181 = vadd.f32 %v1132, %v1180
    %v1182 = vpop.f32.mrf.mxu0
    %v1183 = vadd.f32 %v1134, %v1182
    %1184 = vmatmul.bf16.gmra.mxu0 %v850
    %v1185 = vpop.f32.mrf.mxu0
    %v1186 = vadd.f32 %v1137, %v1185
    %v1187 = vpop.f32.mrf.mxu0
    %v1188 = vadd.f32 %v1139, %v1187
    %1189 = vmatmul.bf16.gmra.mxu0 %v851
    %v1190 = vpop.f32.mrf.mxu0
    %v1191 = vadd.f32 %v1142, %v1190
    %v1192 = vpop.f32.mrf.mxu0
    %v1193 = vadd.f32 %v1144, %v1192
    %1194 = vmatmul.bf16.gmra.mxu0 %v852
    %v1195 = vpop.f32.mrf.mxu0
    %v1196 = vadd.f32 %v1147, %v1195
    %v1197 = vpop.f32.mrf.mxu0
    %v1198 = vadd.f32 %v1149, %v1197
    %1199 = vdwg.mxu0
    %1200 = vmatpush.bf16.msra.mxu0 %v1077
    %1201 = vmatpush.bf16.msra.mxu0 %v1076
    %1202 = vmatpush.bf16.msra.mxu0 %v1075
    %1203 = vmatpush.bf16.msra.mxu0 %v1074
    %1204 = vmatpush.bf16.msra.mxu0 %v1073
    %1205 = vmatpush.bf16.msra.mxu0 %v1072
    %1206 = vmatpush.bf16.msra.mxu0 %v1071
    %1207 = vmatpush.bf16.msra.mxu0 %v1070
    %1208 = vmatmul.bf16.gmra.mxu0 %v893
    %v1209 = vpop.f32.mrf.mxu0
    %v1210 = vadd.f32 %v1161, %v1209
    %v1211 = vpop.f32.mrf.mxu0
    %v1212 = vadd.f32 %v1163, %v1211
    %1213 = vmatmul.bf16.gmra.mxu0 %v894
    %v1214 = vpop.f32.mrf.mxu0
    %v1215 = vadd.f32 %v1166, %v1214
    %v1216 = vpop.f32.mrf.mxu0
    %v1217 = vadd.f32 %v1168, %v1216
    %1218 = vmatmul.bf16.gmra.mxu0 %v895
    %v1219 = vpop.f32.mrf.mxu0
    %v1220 = vadd.f32 %v1171, %v1219
    %v1221 = vpop.f32.mrf.mxu0
    %v1222 = vadd.f32 %v1173, %v1221
    %1223 = vmatmul.bf16.gmra.mxu0 %v896
    %v1224 = vpop.f32.mrf.mxu0
    %v1225 = vadd.f32 %v1176, %v1224
    %v1226 = vpop.f32.mrf.mxu0
    %v1227 = vadd.f32 %v1178, %v1226
    %1228 = vmatmul.bf16.gmra.mxu0 %v897
    %v1229 = vpop.f32.mrf.mxu0
    %v1230 = vadd.f32 %v1181, %v1229
    %v1231 = vpop.f32.mrf.mxu0
    %v1232 = vadd.f32 %v1183, %v1231
    %1233 = vmatmul.bf16.gmra.mxu0 %v898
    %v1234 = vpop.f32.mrf.mxu0
    %v1235 = vadd.f32 %v1186, %v1234
    %v1236 = vpop.f32.mrf.mxu0
    %v1237 = vadd.f32 %v1188, %v1236
    %1238 = vmatmul.bf16.gmra.mxu0 %v899
    %v1239 = vpop.f32.mrf.mxu0
    %v1240 = vadd.f32 %v1191, %v1239
    %v1241 = vpop.f32.mrf.mxu0
    %v1242 = vadd.f32 %v1193, %v1241
    %1243 = vmatmul.bf16.gmra.mxu0 %v900
    %v1244 = vpop.f32.mrf.mxu0
    %v1245 = vadd.f32 %v1196, %v1244
    %v1246 = vpop.f32.mrf.mxu0
    %v1247 = vadd.f32 %v1198, %v1246
    %1248 = vdwg.mxu0
    %v1249 = vtanh.pop %v1210
    %v1250 = vtanh.pop %v1212
    %v1251 = vtanh.pop %v1215
    %v1252 = vtanh.pop %v1217
    %v1253 = vtanh.pop %v1220
    %v1254 = vtanh.pop %v1222
    %v1255 = vtanh.pop %v1225
    %v1256 = vtanh.pop %v1227
    %v1257 = vtanh.pop %v1230
    %v1258 = vtanh.pop %v1232
    %v1259 = vtanh.pop %v1235
    %v1260 = vtanh.pop %v1237
    %v1261 = vtanh.pop %v1240
    %v1262 = vtanh.pop %v1242
    %v1263 = vtanh.pop %v1245
    %v1264 = vtanh.pop %v1247
    %v1265 = vxor.u32 %v1210, 2147483648
    %v1266 = vxor.u32 %v1212, 2147483648
    %v1267 = vxor.u32 %v1215, 2147483648
    %v1268 = vxor.u32 %v1217, 2147483648
    %v1269 = vxor.u32 %v1220, 2147483648
    %v1270 = vxor.u32 %v1222, 2147483648
    %v1271 = vxor.u32 %v1225, 2147483648
    %v1272 = vxor.u32 %v1227, 2147483648
    %v1273 = vxor.u32 %v1230, 2147483648
    %v1274 = vxor.u32 %v1232, 2147483648
    %v1275 = vxor.u32 %v1235, 2147483648
    %v1276 = vxor.u32 %v1237, 2147483648
    %v1277 = vxor.u32 %v1240, 2147483648
    %v1278 = vxor.u32 %v1242, 2147483648
    %v1279 = vxor.u32 %v1245, 2147483648
    %v1280 = vxor.u32 %v1247, 2147483648
    %v1281 = vmul.f32 %v1265, 1.442695
    %v1282 = vpow.pop %v1281
    %v1283 = vmul.f32 %v1266, 1.442695
    %v1284 = vpow.pop %v1283
    %v1285 = vmul.f32 %v1267, 1.442695
    %v1286 = vpow.pop %v1285
    %v1287 = vmul.f32 %v1268, 1.442695
    %v1288 = vpow.pop %v1287
    %v1289 = vmul.f32 %v1269, 1.442695
    %v1290 = vpow.pop %v1289
    %v1291 = vmul.f32 %v1270, 1.442695
    %v1292 = vpow.pop %v1291
    %v1293 = vmul.f32 %v1271, 1.442695
    %v1294 = vpow.pop %v1293
    %v1295 = vmul.f32 %v1272, 1.442695
    %v1296 = vpow.pop %v1295
    %v1297 = vmul.f32 %v1273, 1.442695
    %v1298 = vpow.pop %v1297
    %v1299 = vmul.f32 %v1274, 1.442695
    %v1300 = vpow.pop %v1299
    %v1301 = vmul.f32 %v1275, 1.442695
    %v1302 = vpow.pop %v1301
    %v1303 = vmul.f32 %v1276, 1.442695
    %v1304 = vpow.pop %v1303
    %v1305 = vmul.f32 %v1277, 1.442695
    %v1306 = vpow.pop %v1305
    %v1307 = vmul.f32 %v1278, 1.442695
    %v1308 = vpow.pop %v1307
    %v1309 = vmul.f32 %v1279, 1.442695
    %v1310 = vpow.pop %v1309
    %v1311 = vmul.f32 %v1280, 1.442695
    %v1312 = vpow.pop %v1311
    %v1313 = vadd.f32 %v1282, 1.0
    %v1314 = vadd.f32 %v1284, 1.0
    %v1315 = vadd.f32 %v1286, 1.0
    %v1316 = vadd.f32 %v1288, 1.0
    %v1317 = vadd.f32 %v1290, 1.0
    %v1318 = vadd.f32 %v1292, 1.0
    %v1319 = vadd.f32 %v1294, 1.0
    %v1320 = vadd.f32 %v1296, 1.0
    %v1321 = vadd.f32 %v1298, 1.0
    %v1322 = vadd.f32 %v1300, 1.0
    %v1323 = vadd.f32 %v1302, 1.0
    %v1324 = vadd.f32 %v1304, 1.0
    %v1325 = vadd.f32 %v1306, 1.0
    %v1326 = vadd.f32 %v1308, 1.0
    %v1327 = vadd.f32 %v1310, 1.0
    %v1328 = vadd.f32 %v1312, 1.0
    %v1329 = vrcp.pop %v1313
    %v1330 = vmul.f32 %v1313, %v1329
    %v1331 = vsub.f32 1.0, %v1330
    %v1332 = vmul.f32 %v1329, %v1331
    %v1333 = vadd.f32 %v1329, %v1332
    %vm1334 = vweird.f32 %v1313
    %vm1335 = vweird.f32 %v1329
    %vm1336 = vmor %vm1334, %vm1335
    %v1337 = vsel %vm1336, %v1329, %v1333
    %v1338 = vand.u32 2147483647, %v1313
    %vm1339 = vcmp.eq.f32.partialorder %v1338, 8.507059e+37
    %v1340 = vand.u32 %v1313, 2147483648
    %v1341 = vor.u32 1.1754944e-38, %v1340
    %v1342 = vsel %vm1339, %v1341, %v1337
    %v1343 = vmul.f32 1.0, %v1342
    %v1344 = vrcp.pop %v1314
    %v1345 = vmul.f32 %v1314, %v1344
    %v1346 = vsub.f32 1.0, %v1345
    %v1347 = vmul.f32 %v1344, %v1346
    %v1348 = vadd.f32 %v1344, %v1347
    %vm1349 = vweird.f32 %v1314
    %vm1350 = vweird.f32 %v1344
    %vm1351 = vmor %vm1349, %vm1350
    %v1352 = vsel %vm1351, %v1344, %v1348
    %v1353 = vand.u32 2147483647, %v1314
    %vm1354 = vcmp.eq.f32.partialorder %v1353, 8.507059e+37
    %v1355 = vand.u32 %v1314, 2147483648
    %v1356 = vor.u32 1.1754944e-38, %v1355
    %v1357 = vsel %vm1354, %v1356, %v1352
    %v1358 = vmul.f32 1.0, %v1357
    %v1359 = vrcp.pop %v1315
    %v1360 = vmul.f32 %v1315, %v1359
    %v1361 = vsub.f32 1.0, %v1360
    %v1362 = vmul.f32 %v1359, %v1361
    %v1363 = vadd.f32 %v1359, %v1362
    %vm1364 = vweird.f32 %v1315
    %vm1365 = vweird.f32 %v1359
    %vm1366 = vmor %vm1364, %vm1365
    %v1367 = vsel %vm1366, %v1359, %v1363
    %v1368 = vand.u32 2147483647, %v1315
    %vm1369 = vcmp.eq.f32.partialorder %v1368, 8.507059e+37
    %v1370 = vand.u32 %v1315, 2147483648
    %v1371 = vor.u32 1.1754944e-38, %v1370
    %v1372 = vsel %vm1369, %v1371, %v1367
    %v1373 = vmul.f32 1.0, %v1372
    %v1374 = vrcp.pop %v1316
    %v1375 = vmul.f32 %v1316, %v1374
    %v1376 = vsub.f32 1.0, %v1375
    %v1377 = vmul.f32 %v1374, %v1376
    %v1378 = vadd.f32 %v1374, %v1377
    %vm1379 = vweird.f32 %v1316
    %vm1380 = vweird.f32 %v1374
    %vm1381 = vmor %vm1379, %vm1380
    %v1382 = vsel %vm1381, %v1374, %v1378
    %v1383 = vand.u32 2147483647, %v1316
    %vm1384 = vcmp.eq.f32.partialorder %v1383, 8.507059e+37
    %v1385 = vand.u32 %v1316, 2147483648
    %v1386 = vor.u32 1.1754944e-38, %v1385
    %v1387 = vsel %vm1384, %v1386, %v1382
    %v1388 = vmul.f32 1.0, %v1387
    %v1389 = vrcp.pop %v1317
    %v1390 = vmul.f32 %v1317, %v1389
    %v1391 = vsub.f32 1.0, %v1390
    %v1392 = vmul.f32 %v1389, %v1391
    %v1393 = vadd.f32 %v1389, %v1392
    %vm1394 = vweird.f32 %v1317
    %vm1395 = vweird.f32 %v1389
    %vm1396 = vmor %vm1394, %vm1395
    %v1397 = vsel %vm1396, %v1389, %v1393
    %v1398 = vand.u32 2147483647, %v1317
    %vm1399 = vcmp.eq.f32.partialorder %v1398, 8.507059e+37
    %v1400 = vand.u32 %v1317, 2147483648
    %v1401 = vor.u32 1.1754944e-38, %v1400
    %v1402 = vsel %vm1399, %v1401, %v1397
    %v1403 = vmul.f32 1.0, %v1402
    %v1404 = vrcp.pop %v1318
    %v1405 = vmul.f32 %v1318, %v1404
    %v1406 = vsub.f32 1.0, %v1405
    %v1407 = vmul.f32 %v1404, %v1406
    %v1408 = vadd.f32 %v1404, %v1407
    %vm1409 = vweird.f32 %v1318
    %vm1410 = vweird.f32 %v1404
    %vm1411 = vmor %vm1409, %vm1410
    %v1412 = vsel %vm1411, %v1404, %v1408
    %v1413 = vand.u32 2147483647, %v1318
    %vm1414 = vcmp.eq.f32.partialorder %v1413, 8.507059e+37
    %v1415 = vand.u32 %v1318, 2147483648
    %v1416 = vor.u32 1.1754944e-38, %v1415
    %v1417 = vsel %vm1414, %v1416, %v1412
    %v1418 = vmul.f32 1.0, %v1417
    %v1419 = vrcp.pop %v1319
    %v1420 = vmul.f32 %v1319, %v1419
    %v1421 = vsub.f32 1.0, %v1420
    %v1422 = vmul.f32 %v1419, %v1421
    %v1423 = vadd.f32 %v1419, %v1422
    %vm1424 = vweird.f32 %v1319
    %vm1425 = vweird.f32 %v1419
    %vm1426 = vmor %vm1424, %vm1425
    %v1427 = vsel %vm1426, %v1419, %v1423
    %v1428 = vand.u32 2147483647, %v1319
    %vm1429 = vcmp.eq.f32.partialorder %v1428, 8.507059e+37
    %v1430 = vand.u32 %v1319, 2147483648
    %v1431 = vor.u32 1.1754944e-38, %v1430
    %v1432 = vsel %vm1429, %v1431, %v1427
    %v1433 = vmul.f32 1.0, %v1432
    %v1434 = vrcp.pop %v1320
    %v1435 = vmul.f32 %v1320, %v1434
    %v1436 = vsub.f32 1.0, %v1435
    %v1437 = vmul.f32 %v1434, %v1436
    %v1438 = vadd.f32 %v1434, %v1437
    %vm1439 = vweird.f32 %v1320
    %vm1440 = vweird.f32 %v1434
    %vm1441 = vmor %vm1439, %vm1440
    %v1442 = vsel %vm1441, %v1434, %v1438
    %v1443 = vand.u32 2147483647, %v1320
    %vm1444 = vcmp.eq.f32.partialorder %v1443, 8.507059e+37
    %v1445 = vand.u32 %v1320, 2147483648
    %v1446 = vor.u32 1.1754944e-38, %v1445
    %v1447 = vsel %vm1444, %v1446, %v1442
    %v1448 = vmul.f32 1.0, %v1447
    %v1449 = vrcp.pop %v1321
    %v1450 = vmul.f32 %v1321, %v1449
    %v1451 = vsub.f32 1.0, %v1450
    %v1452 = vmul.f32 %v1449, %v1451
    %v1453 = vadd.f32 %v1449, %v1452
    %vm1454 = vweird.f32 %v1321
    %vm1455 = vweird.f32 %v1449
    %vm1456 = vmor %vm1454, %vm1455
    %v1457 = vsel %vm1456, %v1449, %v1453
    %v1458 = vand.u32 2147483647, %v1321
    %vm1459 = vcmp.eq.f32.partialorder %v1458, 8.507059e+37
    %v1460 = vand.u32 %v1321, 2147483648
    %v1461 = vor.u32 1.1754944e-38, %v1460
    %v1462 = vsel %vm1459, %v1461, %v1457
    %v1463 = vmul.f32 1.0, %v1462
    %v1464 = vrcp.pop %v1322
    %v1465 = vmul.f32 %v1322, %v1464
    %v1466 = vsub.f32 1.0, %v1465
    %v1467 = vmul.f32 %v1464, %v1466
    %v1468 = vadd.f32 %v1464, %v1467
    %vm1469 = vweird.f32 %v1322
    %vm1470 = vweird.f32 %v1464
    %vm1471 = vmor %vm1469, %vm1470
    %v1472 = vsel %vm1471, %v1464, %v1468
    %v1473 = vand.u32 2147483647, %v1322
    %vm1474 = vcmp.eq.f32.partialorder %v1473, 8.507059e+37
    %v1475 = vand.u32 %v1322, 2147483648
    %v1476 = vor.u32 1.1754944e-38, %v1475
    %v1477 = vsel %vm1474, %v1476, %v1472
    %v1478 = vmul.f32 1.0, %v1477
    %v1479 = vrcp.pop %v1323
    %v1480 = vmul.f32 %v1323, %v1479
    %v1481 = vsub.f32 1.0, %v1480
    %v1482 = vmul.f32 %v1479, %v1481
    %v1483 = vadd.f32 %v1479, %v1482
    %vm1484 = vweird.f32 %v1323
    %vm1485 = vweird.f32 %v1479
    %vm1486 = vmor %vm1484, %vm1485
    %v1487 = vsel %vm1486, %v1479, %v1483
    %v1488 = vand.u32 2147483647, %v1323
    %vm1489 = vcmp.eq.f32.partialorder %v1488, 8.507059e+37
    %v1490 = vand.u32 %v1323, 2147483648
    %v1491 = vor.u32 1.1754944e-38, %v1490
    %v1492 = vsel %vm1489, %v1491, %v1487
    %v1493 = vmul.f32 1.0, %v1492
    %v1494 = vrcp.pop %v1324
    %v1495 = vmul.f32 %v1324, %v1494
    %v1496 = vsub.f32 1.0, %v1495
    %v1497 = vmul.f32 %v1494, %v1496
    %v1498 = vadd.f32 %v1494, %v1497
    %vm1499 = vweird.f32 %v1324
    %vm1500 = vweird.f32 %v1494
    %vm1501 = vmor %vm1499, %vm1500
    %v1502 = vsel %vm1501, %v1494, %v1498
    %v1503 = vand.u32 2147483647, %v1324
    %vm1504 = vcmp.eq.f32.partialorder %v1503, 8.507059e+37
    %v1505 = vand.u32 %v1324, 2147483648
    %v1506 = vor.u32 1.1754944e-38, %v1505
    %v1507 = vsel %vm1504, %v1506, %v1502
    %v1508 = vmul.f32 1.0, %v1507
    %v1509 = vrcp.pop %v1325
    %v1510 = vmul.f32 %v1325, %v1509
    %v1511 = vsub.f32 1.0, %v1510
    %v1512 = vmul.f32 %v1509, %v1511
    %v1513 = vadd.f32 %v1509, %v1512
    %vm1514 = vweird.f32 %v1325
    %vm1515 = vweird.f32 %v1509
    %vm1516 = vmor %vm1514, %vm1515
    %v1517 = vsel %vm1516, %v1509, %v1513
    %v1518 = vand.u32 2147483647, %v1325
    %vm1519 = vcmp.eq.f32.partialorder %v1518, 8.507059e+37
    %v1520 = vand.u32 %v1325, 2147483648
    %v1521 = vor.u32 1.1754944e-38, %v1520
    %v1522 = vsel %vm1519, %v1521, %v1517
    %v1523 = vmul.f32 1.0, %v1522
    %v1524 = vrcp.pop %v1326
    %v1525 = vmul.f32 %v1326, %v1524
    %v1526 = vsub.f32 1.0, %v1525
    %v1527 = vmul.f32 %v1524, %v1526
    %v1528 = vadd.f32 %v1524, %v1527
    %vm1529 = vweird.f32 %v1326
    %vm1530 = vweird.f32 %v1524
    %vm1531 = vmor %vm1529, %vm1530
    %v1532 = vsel %vm1531, %v1524, %v1528
    %v1533 = vand.u32 2147483647, %v1326
    %vm1534 = vcmp.eq.f32.partialorder %v1533, 8.507059e+37
    %v1535 = vand.u32 %v1326, 2147483648
    %v1536 = vor.u32 1.1754944e-38, %v1535
    %v1537 = vsel %vm1534, %v1536, %v1532
    %v1538 = vmul.f32 1.0, %v1537
    %v1539 = vrcp.pop %v1327
    %v1540 = vmul.f32 %v1327, %v1539
    %v1541 = vsub.f32 1.0, %v1540
    %v1542 = vmul.f32 %v1539, %v1541
    %v1543 = vadd.f32 %v1539, %v1542
    %vm1544 = vweird.f32 %v1327
    %vm1545 = vweird.f32 %v1539
    %vm1546 = vmor %vm1544, %vm1545
    %v1547 = vsel %vm1546, %v1539, %v1543
    %v1548 = vand.u32 2147483647, %v1327
    %vm1549 = vcmp.eq.f32.partialorder %v1548, 8.507059e+37
    %v1550 = vand.u32 %v1327, 2147483648
    %v1551 = vor.u32 1.1754944e-38, %v1550
    %v1552 = vsel %vm1549, %v1551, %v1547
    %v1553 = vmul.f32 1.0, %v1552
    %v1554 = vrcp.pop %v1328
    %v1555 = vmul.f32 %v1328, %v1554
    %v1556 = vsub.f32 1.0, %v1555
    %v1557 = vmul.f32 %v1554, %v1556
    %v1558 = vadd.f32 %v1554, %v1557
    %vm1559 = vweird.f32 %v1328
    %vm1560 = vweird.f32 %v1554
    %vm1561 = vmor %vm1559, %vm1560
    %v1562 = vsel %vm1561, %v1554, %v1558
    %v1563 = vand.u32 2147483647, %v1328
    %vm1564 = vcmp.eq.f32.partialorder %v1563, 8.507059e+37
    %v1565 = vand.u32 %v1328, 2147483648
    %v1566 = vor.u32 1.1754944e-38, %v1565
    %v1567 = vsel %vm1564, %v1566, %v1562
    %v1568 = vmul.f32 1.0, %v1567
    %1585 = vrot.lane.b32.xlu0 %v1343, 64
    %v1586 = vpop.permute.xlu0 %1585
    %1587 = vrot.lane.b32.xlu0 %v1358, 64
    %v1588 = vpop.permute.xlu0 %1587
    %1589 = vrot.lane.b32.xlu0 %v1373, 64
    %v1590 = vpop.permute.xlu0 %1589
    %1591 = vrot.lane.b32.xlu0 %v1388, 64
    %v1592 = vpop.permute.xlu0 %1591
    %1593 = vrot.lane.b32.xlu0 %v1403, 64
    %v1594 = vpop.permute.xlu0 %1593
    %1595 = vrot.lane.b32.xlu0 %v1418, 64
    %v1596 = vpop.permute.xlu0 %1595
    %1597 = vrot.lane.b32.xlu0 %v1433, 64
    %v1598 = vpop.permute.xlu0 %1597
    %1599 = vrot.lane.b32.xlu0 %v1448, 64
    %v1600 = vpop.permute.xlu0 %1599
    %1601 = vrot.lane.b32.xlu0 %v1463, 64
    %v1602 = vpop.permute.xlu0 %1601
    %1603 = vrot.lane.b32.xlu0 %v1478, 64
    %v1604 = vpop.permute.xlu0 %1603
    %1605 = vrot.lane.b32.xlu0 %v1493, 64
    %v1606 = vpop.permute.xlu0 %1605
    %1607 = vrot.lane.b32.xlu0 %v1508, 64
    %v1608 = vpop.permute.xlu0 %1607
    %1609 = vrot.lane.b32.xlu0 %v1523, 64
    %v1610 = vpop.permute.xlu0 %1609
    %1611 = vrot.lane.b32.xlu0 %v1538, 64
    %v1612 = vpop.permute.xlu0 %1611
    %1613 = vrot.lane.b32.xlu0 %v1553, 64
    %v1614 = vpop.permute.xlu0 %1613
    %1615 = vrot.lane.b32.xlu0 %v1568, 64
    %v1616 = vpop.permute.xlu0 %1615
    %v1633 = vmul.f32 %v1249, %v1586
    %v1634 = vmul.f32 %v1250, %v1588
    %v1635 = vmul.f32 %v1251, %v1590
    %v1636 = vmul.f32 %v1252, %v1592
    %v1637 = vmul.f32 %v1253, %v1594
    %v1638 = vmul.f32 %v1254, %v1596
    %v1639 = vmul.f32 %v1255, %v1598
    %v1640 = vmul.f32 %v1256, %v1600
    %v1641 = vmul.f32 %v1257, %v1602
    %v1642 = vmul.f32 %v1258, %v1604
    %v1643 = vmul.f32 %v1259, %v1606
    %v1644 = vmul.f32 %v1260, %v1608
    %v1645 = vmul.f32 %v1261, %v1610
    %v1646 = vmul.f32 %v1262, %v1612
    %v1647 = vmul.f32 %v1263, %v1614
    %v1648 = vmul.f32 %v1264, %v1616
    %v1649 = vpack.c.bf16 %v1634, %v1633
    %v1650 = vpack.c.bf16 %v1636, %v1635
    %v1651 = vpack.c.bf16 %v1638, %v1637
    %v1652 = vpack.c.bf16 %v1640, %v1639
    %v1653 = vpack.c.bf16 %v1642, %v1641
    %v1654 = vpack.c.bf16 %v1644, %v1643
    %v1655 = vpack.c.bf16 %v1646, %v1645
    %v1656 = vpack.c.bf16 %v1648, %v1647
    %v1657 = vld [vmem:[#allocation6] sm:$0xff]
    %v1658 = vld [vmem:[#allocation6 + $0x8] sm:$0xff]
    %v1659 = vld [vmem:[#allocation6 + $0x10] sm:$0xff]
    %v1660 = vld [vmem:[#allocation6 + $0x18] sm:$0xff]
    %v1661 = vld [vmem:[#allocation6 + $0x20] sm:$0xff]
    %v1662 = vld [vmem:[#allocation6 + $0x28] sm:$0xff]
    %v1663 = vld [vmem:[#allocation6 + $0x30] sm:$0xff]
    %v1664 = vld [vmem:[#allocation6 + $0x38] sm:$0xff]
    %v1673 = vunpack.c.l.b16 %v1657
    %v1674 = vunpack.c.h.b16 %v1657
    %v1675 = vunpack.c.l.b16 %v1658
    %v1676 = vunpack.c.h.b16 %v1658
    %v1677 = vunpack.c.l.b16 %v1659
    %v1678 = vunpack.c.h.b16 %v1659
    %v1679 = vunpack.c.l.b16 %v1660
    %v1680 = vunpack.c.h.b16 %v1660
    %v1681 = vunpack.c.l.b16 %v1661
    %v1682 = vunpack.c.h.b16 %v1661
    %v1683 = vunpack.c.l.b16 %v1662
    %v1684 = vunpack.c.h.b16 %v1662
    %v1685 = vunpack.c.l.b16 %v1663
    %v1686 = vunpack.c.h.b16 %v1663
    %v1687 = vunpack.c.l.b16 %v1664
    %v1688 = vunpack.c.h.b16 %v1664
    %v1689 = vpack.c.b16 %v1675, %v1673
    %v1690 = vpack.c.b16 %v1676, %v1674
    %v1691 = vpack.c.b16 %v1679, %v1677
    %v1692 = vpack.c.b16 %v1680, %v1678
    %v1693 = vpack.c.b16 %v1683, %v1681
    %v1694 = vpack.c.b16 %v1684, %v1682
    %v1695 = vpack.c.b16 %v1687, %v1685
    %v1696 = vpack.c.b16 %v1688, %v1686
    %vm1705 = vcmask 523264
    %v1707 = vsel %vm1705, %v1649, 0
    %v1710 = vsel %vm1705, %v1650, 0
    %v1713 = vsel %vm1705, %v1651, 0
    %v1716 = vsel %vm1705, %v1652, 0
    %v1719 = vsel %vm1705, %v1653, 0
    %v1722 = vsel %vm1705, %v1654, 0
    %v1725 = vsel %vm1705, %v1655, 0
    %v1728 = vsel %vm1705, %v1656, 0
    %1730 = vmatpush.bf16.msra.mxu0 0
    %1731 = vmatpush.bf16.msra.mxu0 0
    %1732 = vmatpush.bf16.msra.mxu0 0
    %1733 = vmatpush.bf16.msra.mxu0 0
    %1734 = vmatpush.bf16.msra.mxu0 %v1695
    %1735 = vmatpush.bf16.msra.mxu0 %v1693
    %1736 = vmatpush.bf16.msra.mxu0 %v1691
    %1737 = vmatpush.bf16.msra.mxu0 %v1689
    %1738 = vmatmul.bf16.gmra.mxu0 %v1707
    %v1739 = vpop.f32.mrf.mxu0
    %v1740 = vadd.f32 0.0, %v1739
    %v1741 = vpop.f32.mrf.mxu0
    %v1742 = vadd.f32 0.0, %v1741
    %1743 = vmatmul.bf16.gmra.mxu0 %v1710
    %v1744 = vpop.f32.mrf.mxu0
    %v1745 = vadd.f32 0.0, %v1744
    %v1746 = vpop.f32.mrf.mxu0
    %v1747 = vadd.f32 0.0, %v1746
    %1748 = vmatmul.bf16.gmra.mxu0 %v1713
    %v1749 = vpop.f32.mrf.mxu0
    %v1750 = vadd.f32 0.0, %v1749
    %v1751 = vpop.f32.mrf.mxu0
    %v1752 = vadd.f32 0.0, %v1751
    %1753 = vmatmul.bf16.gmra.mxu0 %v1716
    %v1754 = vpop.f32.mrf.mxu0
    %v1755 = vadd.f32 0.0, %v1754
    %v1756 = vpop.f32.mrf.mxu0
    %v1757 = vadd.f32 0.0, %v1756
    %1758 = vmatmul.bf16.gmra.mxu0 %v1719
    %v1759 = vpop.f32.mrf.mxu0
    %v1760 = vadd.f32 0.0, %v1759
    %v1761 = vpop.f32.mrf.mxu0
    %v1762 = vadd.f32 0.0, %v1761
    %1763 = vmatmul.bf16.gmra.mxu0 %v1722
    %v1764 = vpop.f32.mrf.mxu0
    %v1765 = vadd.f32 0.0, %v1764
    %v1766 = vpop.f32.mrf.mxu0
    %v1767 = vadd.f32 0.0, %v1766
    %1768 = vmatmul.bf16.gmra.mxu0 %v1725
    %v1769 = vpop.f32.mrf.mxu0
    %v1770 = vadd.f32 0.0, %v1769
    %v1771 = vpop.f32.mrf.mxu0
    %v1772 = vadd.f32 0.0, %v1771
    %1773 = vmatmul.bf16.gmra.mxu0 %v1728
    %v1774 = vpop.f32.mrf.mxu0
    %v1775 = vadd.f32 0.0, %v1774
    %v1776 = vpop.f32.mrf.mxu0
    %v1777 = vadd.f32 0.0, %v1776
    %1778 = vdwg.mxu0
    %1779 = vmatpush.bf16.msra.mxu0 0
    %1780 = vmatpush.bf16.msra.mxu0 0
    %1781 = vmatpush.bf16.msra.mxu0 0
    %1782 = vmatpush.bf16.msra.mxu0 0
    %1783 = vmatpush.bf16.msra.mxu0 %v1696
    %1784 = vmatpush.bf16.msra.mxu0 %v1694
    %1785 = vmatpush.bf16.msra.mxu0 %v1692
    %1786 = vmatpush.bf16.msra.mxu0 %v1690
    %1787 = vmatmul.bf16.gmra.mxu0 %v1707
    %v1788 = vpop.f32.mrf.mxu0
    %v1789 = vadd.f32 0.0, %v1788
    %v1790 = vpop.f32.mrf.mxu0
    %v1791 = vadd.f32 0.0, %v1790
    %1792 = vmatmul.bf16.gmra.mxu0 %v1710
    %v1793 = vpop.f32.mrf.mxu0
    %v1794 = vadd.f32 0.0, %v1793
    %v1795 = vpop.f32.mrf.mxu0
    %v1796 = vadd.f32 0.0, %v1795
    %1797 = vmatmul.bf16.gmra.mxu0 %v1713
    %v1798 = vpop.f32.mrf.mxu0
    %v1799 = vadd.f32 0.0, %v1798
    %v1800 = vpop.f32.mrf.mxu0
    %v1801 = vadd.f32 0.0, %v1800
    %1802 = vmatmul.bf16.gmra.mxu0 %v1716
    %v1803 = vpop.f32.mrf.mxu0
    %v1804 = vadd.f32 0.0, %v1803
    %v1805 = vpop.f32.mrf.mxu0
    %v1806 = vadd.f32 0.0, %v1805
    %1807 = vmatmul.bf16.gmra.mxu0 %v1719
    %v1808 = vpop.f32.mrf.mxu0
    %v1809 = vadd.f32 0.0, %v1808
    %v1810 = vpop.f32.mrf.mxu0
    %v1811 = vadd.f32 0.0, %v1810
    %1812 = vmatmul.bf16.gmra.mxu0 %v1722
    %v1813 = vpop.f32.mrf.mxu0
    %v1814 = vadd.f32 0.0, %v1813
    %v1815 = vpop.f32.mrf.mxu0
    %v1816 = vadd.f32 0.0, %v1815
    %1817 = vmatmul.bf16.gmra.mxu0 %v1725
    %v1818 = vpop.f32.mrf.mxu0
    %v1819 = vadd.f32 0.0, %v1818
    %v1820 = vpop.f32.mrf.mxu0
    %v1821 = vadd.f32 0.0, %v1820
    %1822 = vmatmul.bf16.gmra.mxu0 %v1728
    %v1823 = vpop.f32.mrf.mxu0
    %v1824 = vadd.f32 0.0, %v1823
    %v1825 = vpop.f32.mrf.mxu0
    %v1826 = vadd.f32 0.0, %v1825
    %1827 = vdwg.mxu0
    %v1828 = vld [vmem:[#allocation2] sm:$0xff]
    %v1829 = vld [vmem:[#allocation2 + $0x8] sm:$0xff]
    %v1830 = vld [vmem:[#allocation2 + $0x10] sm:$0xff]
    %v1831 = vld [vmem:[#allocation2 + $0x18] sm:$0xff]
    %v1832 = vld [vmem:[#allocation2 + $0x20] sm:$0xff]
    %v1833 = vld [vmem:[#allocation2 + $0x28] sm:$0xff]
    %v1834 = vld [vmem:[#allocation2 + $0x30] sm:$0xff]
    %v1835 = vld [vmem:[#allocation2 + $0x38] sm:$0xff]
    %v1836 = vld [vmem:[#allocation2 + $0x40] sm:$0xff]
    %v1837 = vld [vmem:[#allocation2 + $0x48] sm:$0xff]
    %v1838 = vld [vmem:[#allocation2 + $0x50] sm:$0xff]
    %v1839 = vld [vmem:[#allocation2 + $0x58] sm:$0xff]
    %v1840 = vld [vmem:[#allocation2 + $0x60] sm:$0xff]
    %v1841 = vld [vmem:[#allocation2 + $0x68] sm:$0xff]
    %v1842 = vld [vmem:[#allocation2 + $0x70] sm:$0xff]
    %v1843 = vld [vmem:[#allocation2 + $0x78] sm:$0xff]
    %v1844 = vadd.f32 %v1828, %v1740
    %v1845 = vadd.f32 %v1829, %v1742
    %v1846 = vadd.f32 %v1830, %v1745
    %v1847 = vadd.f32 %v1831, %v1747
    %v1848 = vadd.f32 %v1832, %v1750
    %v1849 = vadd.f32 %v1833, %v1752
    %v1850 = vadd.f32 %v1834, %v1755
    %v1851 = vadd.f32 %v1835, %v1757
    %v1852 = vadd.f32 %v1836, %v1760
    %v1853 = vadd.f32 %v1837, %v1762
    %v1854 = vadd.f32 %v1838, %v1765
    %v1855 = vadd.f32 %v1839, %v1767
    %v1856 = vadd.f32 %v1840, %v1770
    %v1857 = vadd.f32 %v1841, %v1772
    %v1858 = vadd.f32 %v1842, %v1775
    %v1859 = vadd.f32 %v1843, %v1777
    %1860 = vst [vmem:[#allocation2] sm:$0xff] %v1844
    %1861 = vst [vmem:[#allocation2 + $0x8] sm:$0xff] %v1845
    %1862 = vst [vmem:[#allocation2 + $0x10] sm:$0xff] %v1846
    %1863 = vst [vmem:[#allocation2 + $0x18] sm:$0xff] %v1847
    %1864 = vst [vmem:[#allocation2 + $0x20] sm:$0xff] %v1848
    %1865 = vst [vmem:[#allocation2 + $0x28] sm:$0xff] %v1849
    %1866 = vst [vmem:[#allocation2 + $0x30] sm:$0xff] %v1850
    %1867 = vst [vmem:[#allocation2 + $0x38] sm:$0xff] %v1851
    %1868 = vst [vmem:[#allocation2 + $0x40] sm:$0xff] %v1852
    %1869 = vst [vmem:[#allocation2 + $0x48] sm:$0xff] %v1853
    %1870 = vst [vmem:[#allocation2 + $0x50] sm:$0xff] %v1854
    %1871 = vst [vmem:[#allocation2 + $0x58] sm:$0xff] %v1855
    %1872 = vst [vmem:[#allocation2 + $0x60] sm:$0xff] %v1856
    %1873 = vst [vmem:[#allocation2 + $0x68] sm:$0xff] %v1857
    %1874 = vst [vmem:[#allocation2 + $0x70] sm:$0xff] %v1858
    %1875 = vst [vmem:[#allocation2 + $0x78] sm:$0xff] %v1859
    %v1876 = vperm.slane %v54, 7
    %v1877 = vadd.f32 %v1789, %v1876
    %v1878 = vadd.f32 %v1791, %v1876
    %v1879 = vadd.f32 %v1794, %v1876
    %v1880 = vadd.f32 %v1796, %v1876
    %v1881 = vadd.f32 %v1799, %v1876
    %v1882 = vadd.f32 %v1801, %v1876
    %v1883 = vadd.f32 %v1804, %v1876
    %v1884 = vadd.f32 %v1806, %v1876
    %v1885 = vadd.f32 %v1809, %v1876
    %v1886 = vadd.f32 %v1811, %v1876
    %v1887 = vadd.f32 %v1814, %v1876
    %v1888 = vadd.f32 %v1816, %v1876
    %v1889 = vadd.f32 %v1819, %v1876
    %v1890 = vadd.f32 %v1821, %v1876
    %v1891 = vadd.f32 %v1824, %v1876
    %v1892 = vadd.f32 %v1826, %v1876
    %v1893 = vadd.f32 %v1877, %v195
    %v1894 = vadd.f32 %v1878, %v197
    %v1895 = vadd.f32 %v1879, %v200
    %v1896 = vadd.f32 %v1880, %v202
    %v1897 = vadd.f32 %v1881, %v205
    %v1898 = vadd.f32 %v1882, %v207
    %v1899 = vadd.f32 %v1883, %v210
    %v1900 = vadd.f32 %v1884, %v212
    %v1901 = vadd.f32 %v1885, %v215
    %v1902 = vadd.f32 %v1886, %v217
    %v1903 = vadd.f32 %v1887, %v220
    %v1904 = vadd.f32 %v1888, %v222
    %v1905 = vadd.f32 %v1889, %v225
    %v1906 = vadd.f32 %v1890, %v227
    %v1907 = vadd.f32 %v1891, %v230
    %v1908 = vadd.f32 %v1892, %v232
    %v1909 = vpack.c.bf16 %v1893, %v1893
    %v1910 = vpack.c.bf16 %v1894, %v1894
    %v1911 = vpack.c.bf16 %v1895, %v1895
    %v1912 = vpack.c.bf16 %v1896, %v1896
    %v1913 = vpack.c.bf16 %v1897, %v1897
    %v1914 = vpack.c.bf16 %v1898, %v1898
    %v1915 = vpack.c.bf16 %v1899, %v1899
    %v1916 = vpack.c.bf16 %v1900, %v1900
    %v1917 = vpack.c.bf16 %v1901, %v1901
    %v1918 = vpack.c.bf16 %v1902, %v1902
    %v1919 = vpack.c.bf16 %v1903, %v1903
    %v1920 = vpack.c.bf16 %v1904, %v1904
    %v1921 = vpack.c.bf16 %v1905, %v1905
    %v1922 = vpack.c.bf16 %v1906, %v1906
    %v1923 = vpack.c.bf16 %v1907, %v1907
    %v1924 = vpack.c.bf16 %v1908, %v1908
    %v1925 = vrot.slane %v1893, 6
    %v1926 = vrot.slane %v1894, 6
    %v1927 = vrot.slane %v1895, 6
    %v1928 = vrot.slane %v1896, 6
    %v1929 = vrot.slane %v1897, 6
    %v1930 = vrot.slane %v1898, 6
    %v1931 = vrot.slane %v1899, 6
    %v1932 = vrot.slane %v1900, 6
    %v1933 = vrot.slane %v1901, 6
    %v1934 = vrot.slane %v1902, 6
    %v1935 = vrot.slane %v1903, 6
    %v1936 = vrot.slane %v1904, 6
    %v1937 = vrot.slane %v1905, 6
    %v1938 = vrot.slane %v1906, 6
    %v1939 = vrot.slane %v1907, 6
    %v1940 = vrot.slane %v1908, 6
    %vm1941 = vcmp.lt.s32.totalorder %v251, 2
    %v1942 = vsel %vm1941, %v1939, %v1940
    %v1943 = vsel %vm1941, %v1938, %v1939
    %v1944 = vsel %vm1941, %v1937, %v1938
    %v1945 = vsel %vm1941, %v1936, %v1937
    %v1946 = vsel %vm1941, %v1935, %v1936
    %v1947 = vsel %vm1941, %v1934, %v1935
    %v1948 = vsel %vm1941, %v1933, %v1934
    %v1949 = vsel %vm1941, %v1932, %v1933
    %v1950 = vsel %vm1941, %v1931, %v1932
    %v1951 = vsel %vm1941, %v1930, %v1931
    %v1952 = vsel %vm1941, %v1929, %v1930
    %v1953 = vsel %vm1941, %v1928, %v1929
    %v1954 = vsel %vm1941, %v1927, %v1928
    %v1955 = vsel %vm1941, %v1926, %v1927
    %v1956 = vsel %vm1941, %v1925, %v1926
    %v1957 = vsel %vm1941, %v1940, %v1925
    %v1958 = vpack.c.bf16 %v1957, %v1957
    %v1959 = vpack.c.bf16 %v1956, %v1956
    %v1960 = vpack.c.bf16 %v1955, %v1955
    %v1961 = vpack.c.bf16 %v1954, %v1954
    %v1962 = vpack.c.bf16 %v1953, %v1953
    %v1963 = vpack.c.bf16 %v1952, %v1952
    %v1964 = vpack.c.bf16 %v1951, %v1951
    %v1965 = vpack.c.bf16 %v1950, %v1950
    %v1966 = vpack.c.bf16 %v1949, %v1949
    %v1967 = vpack.c.bf16 %v1948, %v1948
    %v1968 = vpack.c.bf16 %v1947, %v1947
    %v1969 = vpack.c.bf16 %v1946, %v1946
    %v1970 = vpack.c.bf16 %v1945, %v1945
    %v1971 = vpack.c.bf16 %v1944, %v1944
    %v1972 = vpack.c.bf16 %v1943, %v1943
    %v1973 = vpack.c.bf16 %v1942, %v1942
    %v1974 = vsel %vm491, 1, 0
    %v1975 = vsel %vm492, 1, 0
    %v1976 = vsel %vm493, 1, 0
    %v1977 = vsel %vm494, 1, 0
    %v1978 = vsel %vm495, 1, 0
    %v1979 = vsel %vm496, 1, 0
    %v1980 = vsel %vm497, 1, 0
    %v1981 = vsel %vm498, 1, 0
    %v1982 = vsel %vm499, 1, 0
    %v1983 = vsel %vm500, 1, 0
    %v1984 = vsel %vm501, 1, 0
    %v1985 = vsel %vm502, 1, 0
    %v1986 = vsel %vm503, 1, 0
    %v1987 = vsel %vm504, 1, 0
    %v1988 = vsel %vm505, 1, 0
    %v1989 = vsel %vm506, 1, 0
    %vm1990 = vcmp.eq.s32.totalorder %v1974, 1
    %vm1991 = vcmp.eq.s32.totalorder %v1975, 1
    %vm1992 = vcmp.eq.s32.totalorder %v1976, 1
    %vm1993 = vcmp.eq.s32.totalorder %v1977, 1
    %vm1994 = vcmp.eq.s32.totalorder %v1978, 1
    %vm1995 = vcmp.eq.s32.totalorder %v1979, 1
    %vm1996 = vcmp.eq.s32.totalorder %v1980, 1
    %vm1997 = vcmp.eq.s32.totalorder %v1981, 1
    %vm1998 = vcmp.eq.s32.totalorder %v1982, 1
    %vm1999 = vcmp.eq.s32.totalorder %v1983, 1
    %vm2000 = vcmp.eq.s32.totalorder %v1984, 1
    %vm2001 = vcmp.eq.s32.totalorder %v1985, 1
    %vm2002 = vcmp.eq.s32.totalorder %v1986, 1
    %vm2003 = vcmp.eq.s32.totalorder %v1987, 1
    %vm2004 = vcmp.eq.s32.totalorder %v1988, 1
    %vm2005 = vcmp.eq.s32.totalorder %v1989, 1
    %vm2006 = vmpackc.low %vm1990, %vm1990
    %vm2007 = vmpackc.low %vm1991, %vm1991
    %vm2008 = vmpackc.low %vm1992, %vm1992
    %vm2009 = vmpackc.low %vm1993, %vm1993
    %vm2010 = vmpackc.low %vm1994, %vm1994
    %vm2011 = vmpackc.low %vm1995, %vm1995
    %vm2012 = vmpackc.low %vm1996, %vm1996
    %vm2013 = vmpackc.low %vm1997, %vm1997
    %vm2014 = vmpackc.low %vm1998, %vm1998
    %vm2015 = vmpackc.low %vm1999, %vm1999
    %vm2016 = vmpackc.low %vm2000, %vm2000
    %vm2017 = vmpackc.low %vm2001, %vm2001
    %vm2018 = vmpackc.low %vm2002, %vm2002
    %vm2019 = vmpackc.low %vm2003, %vm2003
    %vm2020 = vmpackc.low %vm2004, %vm2004
    %vm2021 = vmpackc.low %vm2005, %vm2005
    %v2022 = vsel %vm2006, %v1958, 0
    %v2023 = vsel %vm2007, %v1959, 0
    %v2024 = vsel %vm2008, %v1960, 0
    %v2025 = vsel %vm2009, %v1961, 0
    %v2026 = vsel %vm2010, %v1962, 0
    %v2027 = vsel %vm2011, %v1963, 0
    %v2028 = vsel %vm2012, %v1964, 0
    %v2029 = vsel %vm2013, %v1965, 0
    %v2030 = vsel %vm2014, %v1966, 0
    %v2031 = vsel %vm2015, %v1967, 0
    %v2032 = vsel %vm2016, %v1968, 0
    %v2033 = vsel %vm2017, %v1969, 0
    %v2034 = vsel %vm2018, %v1970, 0
    %v2035 = vsel %vm2019, %v1971, 0
    %v2036 = vsel %vm2020, %v1972, 0
    %v2037 = vsel %vm2021, %v1973, 0
    %v2038 = vrot.slane %v1893, 2
    %v2039 = vrot.slane %v1894, 2
    %v2040 = vrot.slane %v1895, 2
    %v2041 = vrot.slane %v1896, 2
    %v2042 = vrot.slane %v1897, 2
    %v2043 = vrot.slane %v1898, 2
    %v2044 = vrot.slane %v1899, 2
    %v2045 = vrot.slane %v1900, 2
    %v2046 = vrot.slane %v1901, 2
    %v2047 = vrot.slane %v1902, 2
    %v2048 = vrot.slane %v1903, 2
    %v2049 = vrot.slane %v1904, 2
    %v2050 = vrot.slane %v1905, 2
    %v2051 = vrot.slane %v1906, 2
    %v2052 = vrot.slane %v1907, 2
    %v2053 = vrot.slane %v1908, 2
    %vm2054 = vcmp.lt.s32.totalorder %v251, 6
    %v2055 = vsel %vm2054, %v2052, %v2053
    %v2056 = vsel %vm2054, %v2051, %v2052
    %v2057 = vsel %vm2054, %v2050, %v2051
    %v2058 = vsel %vm2054, %v2049, %v2050
    %v2059 = vsel %vm2054, %v2048, %v2049
    %v2060 = vsel %vm2054, %v2047, %v2048
    %v2061 = vsel %vm2054, %v2046, %v2047
    %v2062 = vsel %vm2054, %v2045, %v2046
    %v2063 = vsel %vm2054, %v2044, %v2045
    %v2064 = vsel %vm2054, %v2043, %v2044
    %v2065 = vsel %vm2054, %v2042, %v2043
    %v2066 = vsel %vm2054, %v2041, %v2042
    %v2067 = vsel %vm2054, %v2040, %v2041
    %v2068 = vsel %vm2054, %v2039, %v2040
    %v2069 = vsel %vm2054, %v2038, %v2039
    %v2070 = vsel %vm2054, %v2053, %v2038
    %v2071 = vpack.c.bf16 %v2069, %v2069
    %v2072 = vpack.c.bf16 %v2068, %v2068
    %v2073 = vpack.c.bf16 %v2067, %v2067
    %v2074 = vpack.c.bf16 %v2066, %v2066
    %v2075 = vpack.c.bf16 %v2065, %v2065
    %v2076 = vpack.c.bf16 %v2064, %v2064
    %v2077 = vpack.c.bf16 %v2063, %v2063
    %v2078 = vpack.c.bf16 %v2062, %v2062
    %v2079 = vpack.c.bf16 %v2061, %v2061
    %v2080 = vpack.c.bf16 %v2060, %v2060
    %v2081 = vpack.c.bf16 %v2059, %v2059
    %v2082 = vpack.c.bf16 %v2058, %v2058
    %v2083 = vpack.c.bf16 %v2057, %v2057
    %v2084 = vpack.c.bf16 %v2056, %v2056
    %v2085 = vpack.c.bf16 %v2055, %v2055
    %v2086 = vpack.c.bf16 %v2070, %v2070
    %v2087 = vsel %vm507, 1, 0
    %v2088 = vsel %vm508, 1, 0
    %v2089 = vsel %vm509, 1, 0
    %v2090 = vsel %vm510, 1, 0
    %v2091 = vsel %vm511, 1, 0
    %v2092 = vsel %vm512, 1, 0
    %v2093 = vsel %vm513, 1, 0
    %v2094 = vsel %vm514, 1, 0
    %v2095 = vsel %vm515, 1, 0
    %v2096 = vsel %vm516, 1, 0
    %v2097 = vsel %vm517, 1, 0
    %v2098 = vsel %vm518, 1, 0
    %v2099 = vsel %vm519, 1, 0
    %v2100 = vsel %vm520, 1, 0
    %v2101 = vsel %vm521, 1, 0
    %v2102 = vsel %vm522, 1, 0
    %vm2103 = vcmp.eq.s32.totalorder %v2087, 1
    %vm2104 = vcmp.eq.s32.totalorder %v2088, 1
    %vm2105 = vcmp.eq.s32.totalorder %v2089, 1
    %vm2106 = vcmp.eq.s32.totalorder %v2090, 1
    %vm2107 = vcmp.eq.s32.totalorder %v2091, 1
    %vm2108 = vcmp.eq.s32.totalorder %v2092, 1
    %vm2109 = vcmp.eq.s32.totalorder %v2093, 1
    %vm2110 = vcmp.eq.s32.totalorder %v2094, 1
    %vm2111 = vcmp.eq.s32.totalorder %v2095, 1
    %vm2112 = vcmp.eq.s32.totalorder %v2096, 1
    %vm2113 = vcmp.eq.s32.totalorder %v2097, 1
    %vm2114 = vcmp.eq.s32.totalorder %v2098, 1
    %vm2115 = vcmp.eq.s32.totalorder %v2099, 1
    %vm2116 = vcmp.eq.s32.totalorder %v2100, 1
    %vm2117 = vcmp.eq.s32.totalorder %v2101, 1
    %vm2118 = vcmp.eq.s32.totalorder %v2102, 1
    %vm2119 = vmpackc.low %vm2103, %vm2103
    %vm2120 = vmpackc.low %vm2104, %vm2104
    %vm2121 = vmpackc.low %vm2105, %vm2105
    %vm2122 = vmpackc.low %vm2106, %vm2106
    %vm2123 = vmpackc.low %vm2107, %vm2107
    %vm2124 = vmpackc.low %vm2108, %vm2108
    %vm2125 = vmpackc.low %vm2109, %vm2109
    %vm2126 = vmpackc.low %vm2110, %vm2110
    %vm2127 = vmpackc.low %vm2111, %vm2111
    %vm2128 = vmpackc.low %vm2112, %vm2112
    %vm2129 = vmpackc.low %vm2113, %vm2113
    %vm2130 = vmpackc.low %vm2114, %vm2114
    %vm2131 = vmpackc.low %vm2115, %vm2115
    %vm2132 = vmpackc.low %vm2116, %vm2116
    %vm2133 = vmpackc.low %vm2117, %vm2117
    %vm2134 = vmpackc.low %vm2118, %vm2118
    %v2135 = vsel %vm2119, %v2071, 0
    %v2136 = vsel %vm2120, %v2072, 0
    %v2137 = vsel %vm2121, %v2073, 0
    %v2138 = vsel %vm2122, %v2074, 0
    %v2139 = vsel %vm2123, %v2075, 0
    %v2140 = vsel %vm2124, %v2076, 0
    %v2141 = vsel %vm2125, %v2077, 0
    %v2142 = vsel %vm2126, %v2078, 0
    %v2143 = vsel %vm2127, %v2079, 0
    %v2144 = vsel %vm2128, %v2080, 0
    %v2145 = vsel %vm2129, %v2081, 0
    %v2146 = vsel %vm2130, %v2082, 0
    %v2147 = vsel %vm2131, %v2083, 0
    %v2148 = vsel %vm2132, %v2084, 0
    %v2149 = vsel %vm2133, %v2085, 0
    %v2150 = vsel %vm2134, %v2086, 0
    %v2167 = vunpack.c.l.b16 %v2022
    %v2168 = vunpack.c.l.b16 %v2023
    %v2169 = vunpack.c.l.b16 %v2024
    %v2170 = vunpack.c.l.b16 %v2025
    %v2171 = vunpack.c.l.b16 %v2026
    %v2172 = vunpack.c.l.b16 %v2027
    %v2173 = vunpack.c.l.b16 %v2028
    %v2174 = vunpack.c.l.b16 %v2029
    %v2175 = vunpack.c.l.b16 %v2030
    %v2176 = vunpack.c.l.b16 %v2031
    %v2177 = vunpack.c.l.b16 %v2032
    %v2178 = vunpack.c.l.b16 %v2033
    %v2179 = vunpack.c.l.b16 %v2034
    %v2180 = vunpack.c.l.b16 %v2035
    %v2181 = vunpack.c.l.b16 %v2036
    %v2182 = vunpack.c.l.b16 %v2037
    %v2183 = vpack.c.b16 %v2168, %v2167
    %v2184 = vpack.c.b16 %v2170, %v2169
    %v2185 = vpack.c.b16 %v2172, %v2171
    %v2186 = vpack.c.b16 %v2174, %v2173
    %v2187 = vpack.c.b16 %v2176, %v2175
    %v2188 = vpack.c.b16 %v2178, %v2177
    %v2189 = vpack.c.b16 %v2180, %v2179
    %v2190 = vpack.c.b16 %v2182, %v2181
    %v2215 = vunpack.c.l.b16 %v1909
    %v2216 = vunpack.c.l.b16 %v1910
    %v2217 = vunpack.c.l.b16 %v1911
    %v2218 = vunpack.c.l.b16 %v1912
    %v2219 = vunpack.c.l.b16 %v1913
    %v2220 = vunpack.c.l.b16 %v1914
    %v2221 = vunpack.c.l.b16 %v1915
    %v2222 = vunpack.c.l.b16 %v1916
    %v2223 = vunpack.c.l.b16 %v1917
    %v2224 = vunpack.c.l.b16 %v1918
    %v2225 = vunpack.c.l.b16 %v1919
    %v2226 = vunpack.c.l.b16 %v1920
    %v2227 = vunpack.c.l.b16 %v1921
    %v2228 = vunpack.c.l.b16 %v1922
    %v2229 = vunpack.c.l.b16 %v1923
    %v2230 = vunpack.c.l.b16 %v1924
    %v2231 = vpack.c.b16 %v2216, %v2215
    %v2232 = vpack.c.b16 %v2218, %v2217
    %v2233 = vpack.c.b16 %v2220, %v2219
    %v2234 = vpack.c.b16 %v2222, %v2221
    %v2235 = vpack.c.b16 %v2224, %v2223
    %v2236 = vpack.c.b16 %v2226, %v2225
    %v2237 = vpack.c.b16 %v2228, %v2227
    %v2238 = vpack.c.b16 %v2230, %v2229
    %v2263 = vunpack.c.l.b16 %v2135
    %v2264 = vunpack.c.l.b16 %v2136
    %v2265 = vunpack.c.l.b16 %v2137
    %v2266 = vunpack.c.l.b16 %v2138
    %v2267 = vunpack.c.l.b16 %v2139
    %v2268 = vunpack.c.l.b16 %v2140
    %v2269 = vunpack.c.l.b16 %v2141
    %v2270 = vunpack.c.l.b16 %v2142
    %v2271 = vunpack.c.l.b16 %v2143
    %v2272 = vunpack.c.l.b16 %v2144
    %v2273 = vunpack.c.l.b16 %v2145
    %v2274 = vunpack.c.l.b16 %v2146
    %v2275 = vunpack.c.l.b16 %v2147
    %v2276 = vunpack.c.l.b16 %v2148
    %v2277 = vunpack.c.l.b16 %v2149
    %v2278 = vunpack.c.l.b16 %v2150
    %v2279 = vpack.c.b16 %v2264, %v2263
    %v2280 = vpack.c.b16 %v2266, %v2265
    %v2281 = vpack.c.b16 %v2268, %v2267
    %v2282 = vpack.c.b16 %v2270, %v2269
    %v2283 = vpack.c.b16 %v2272, %v2271
    %v2284 = vpack.c.b16 %v2274, %v2273
    %v2285 = vpack.c.b16 %v2276, %v2275
    %v2286 = vpack.c.b16 %v2278, %v2277
    %s2295 = scalar_lea.vmem [#allocation3], 192
    %v2296 = vld [vmem:[%s2295] sm:$0xf]
    %v2297 = vld [vmem:[%s2295 + $0x4] sm:$0xf]
    %v2298 = vld [vmem:[%s2295 + $0x8] sm:$0xf]
    %v2299 = vld [vmem:[%s2295 + $0xc] sm:$0xf]
    %v2300 = vld [vmem:[%s2295 + $0x10] sm:$0xf]
    %v2301 = vld [vmem:[%s2295 + $0x14] sm:$0xf]
    %v2302 = vld [vmem:[%s2295 + $0x18] sm:$0xf]
    %v2303 = vld [vmem:[%s2295 + $0x1c] sm:$0xf]
    %v2304 = vld [vmem:[%s2295 + $0x20] sm:$0xf]
    %v2305 = vld [vmem:[%s2295 + $0x24] sm:$0xf]
    %v2306 = vld [vmem:[%s2295 + $0x28] sm:$0xf]
    %v2307 = vld [vmem:[%s2295 + $0x2c] sm:$0xf]
    %v2308 = vld [vmem:[%s2295 + $0x30] sm:$0xf]
    %v2309 = vld [vmem:[%s2295 + $0x34] sm:$0xf]
    %v2310 = vld [vmem:[%s2295 + $0x38] sm:$0xf]
    %v2311 = vld [vmem:[%s2295 + $0x3c] sm:$0xf]
    %v2312 = vld [vmem:[%s2295 + $0x40] sm:$0xf]
    %v2313 = vld [vmem:[%s2295 + $0x44] sm:$0xf]
    %v2314 = vld [vmem:[%s2295 + $0x48] sm:$0xf]
    %v2315 = vld [vmem:[%s2295 + $0x4c] sm:$0xf]
    %v2316 = vld [vmem:[%s2295 + $0x50] sm:$0xf]
    %v2317 = vld [vmem:[%s2295 + $0x54] sm:$0xf]
    %v2318 = vld [vmem:[%s2295 + $0x58] sm:$0xf]
    %v2319 = vld [vmem:[%s2295 + $0x5c] sm:$0xf]
    %v2320 = vld [vmem:[%s2295 + $0x60] sm:$0xf]
    %v2321 = vld [vmem:[%s2295 + $0x64] sm:$0xf]
    %v2322 = vld [vmem:[%s2295 + $0x68] sm:$0xf]
    %v2323 = vld [vmem:[%s2295 + $0x6c] sm:$0xf]
    %v2324 = vld [vmem:[%s2295 + $0x70] sm:$0xf]
    %v2325 = vld [vmem:[%s2295 + $0x74] sm:$0xf]
    %v2326 = vld [vmem:[%s2295 + $0x78] sm:$0xf]
    %v2327 = vld [vmem:[%s2295 + $0x7c] sm:$0xf]
    %v2328 = vld [vmem:[%s2295 + $0x80] sm:$0xf]
    %v2329 = vld [vmem:[%s2295 + $0x84] sm:$0xf]
    %v2330 = vld [vmem:[%s2295 + $0x88] sm:$0xf]
    %v2331 = vld [vmem:[%s2295 + $0x8c] sm:$0xf]
    %v2332 = vld [vmem:[%s2295 + $0x90] sm:$0xf]
    %v2333 = vld [vmem:[%s2295 + $0x94] sm:$0xf]
    %v2334 = vld [vmem:[%s2295 + $0x98] sm:$0xf]
    %v2335 = vld [vmem:[%s2295 + $0x9c] sm:$0xf]
    %v2336 = vld [vmem:[%s2295 + $0xa0] sm:$0xf]
    %v2337 = vld [vmem:[%s2295 + $0xa4] sm:$0xf]
    %v2338 = vld [vmem:[%s2295 + $0xa8] sm:$0xf]
    %v2339 = vld [vmem:[%s2295 + $0xac] sm:$0xf]
    %v2340 = vld [vmem:[%s2295 + $0xb0] sm:$0xf]
    %v2341 = vld [vmem:[%s2295 + $0xb4] sm:$0xf]
    %v2342 = vld [vmem:[%s2295 + $0xb8] sm:$0xf]
    %v2343 = vld [vmem:[%s2295 + $0xbc] sm:$0xf]
    %v2344 = vperm.slane %v54, 2
    %v2393 = vunpack.c.l.b16 %v2296
    %v2394 = vunpack.c.l.b16 %v2297
    %v2395 = vunpack.c.l.b16 %v2298
    %v2396 = vunpack.c.l.b16 %v2299
    %v2397 = vunpack.c.l.b16 %v2300
    %v2398 = vunpack.c.l.b16 %v2301
    %v2399 = vunpack.c.l.b16 %v2302
    %v2400 = vunpack.c.l.b16 %v2303
    %v2401 = vunpack.c.l.b16 %v2304
    %v2402 = vunpack.c.l.b16 %v2305
    %v2403 = vunpack.c.l.b16 %v2306
    %v2404 = vunpack.c.l.b16 %v2307
    %v2405 = vunpack.c.l.b16 %v2308
    %v2406 = vunpack.c.l.b16 %v2309
    %v2407 = vunpack.c.l.b16 %v2310
    %v2408 = vunpack.c.l.b16 %v2311
    %v2409 = vunpack.c.l.b16 %v2312
    %v2410 = vunpack.c.l.b16 %v2313
    %v2411 = vunpack.c.l.b16 %v2314
    %v2412 = vunpack.c.l.b16 %v2315
    %v2413 = vunpack.c.l.b16 %v2316
    %v2414 = vunpack.c.l.b16 %v2317
    %v2415 = vunpack.c.l.b16 %v2318
    %v2416 = vunpack.c.l.b16 %v2319
    %v2417 = vunpack.c.l.b16 %v2320
    %v2418 = vunpack.c.l.b16 %v2321
    %v2419 = vunpack.c.l.b16 %v2322
    %v2420 = vunpack.c.l.b16 %v2323
    %v2421 = vunpack.c.l.b16 %v2324
    %v2422 = vunpack.c.l.b16 %v2325
    %v2423 = vunpack.c.l.b16 %v2326
    %v2424 = vunpack.c.l.b16 %v2327
    %v2425 = vunpack.c.l.b16 %v2328
    %v2426 = vunpack.c.l.b16 %v2329
    %v2427 = vunpack.c.l.b16 %v2330
    %v2428 = vunpack.c.l.b16 %v2331
    %v2429 = vunpack.c.l.b16 %v2332
    %v2430 = vunpack.c.l.b16 %v2333
    %v2431 = vunpack.c.l.b16 %v2334
    %v2432 = vunpack.c.l.b16 %v2335
    %v2433 = vunpack.c.l.b16 %v2336
    %v2434 = vunpack.c.l.b16 %v2337
    %v2435 = vunpack.c.l.b16 %v2338
    %v2436 = vunpack.c.l.b16 %v2339
    %v2437 = vunpack.c.l.b16 %v2340
    %v2438 = vunpack.c.l.b16 %v2341
    %v2439 = vunpack.c.l.b16 %v2342
    %v2440 = vunpack.c.l.b16 %v2343
    %v2441 = vpack.c.b16 %v2394, %v2393
    %v2442 = vpack.c.b16 %v2396, %v2395
    %v2443 = vpack.c.b16 %v2398, %v2397
    %v2444 = vpack.c.b16 %v2400, %v2399
    %v2445 = vpack.c.b16 %v2402, %v2401
    %v2446 = vpack.c.b16 %v2404, %v2403
    %v2447 = vpack.c.b16 %v2406, %v2405
    %v2448 = vpack.c.b16 %v2408, %v2407
    %v2449 = vpack.c.b16 %v2410, %v2409
    %v2450 = vpack.c.b16 %v2412, %v2411
    %v2451 = vpack.c.b16 %v2414, %v2413
    %v2452 = vpack.c.b16 %v2416, %v2415
    %v2453 = vpack.c.b16 %v2418, %v2417
    %v2454 = vpack.c.b16 %v2420, %v2419
    %v2455 = vpack.c.b16 %v2422, %v2421
    %v2456 = vpack.c.b16 %v2424, %v2423
    %v2457 = vpack.c.b16 %v2426, %v2425
    %v2458 = vpack.c.b16 %v2428, %v2427
    %v2459 = vpack.c.b16 %v2430, %v2429
    %v2460 = vpack.c.b16 %v2432, %v2431
    %v2461 = vpack.c.b16 %v2434, %v2433
    %v2462 = vpack.c.b16 %v2436, %v2435
    %v2463 = vpack.c.b16 %v2438, %v2437
    %v2464 = vpack.c.b16 %v2440, %v2439
    %2489 = vmatpush.bf16.msra.mxu0 %v2448
    %2490 = vmatpush.bf16.msra.mxu0 %v2447
    %2491 = vmatpush.bf16.msra.mxu0 %v2446
    %2492 = vmatpush.bf16.msra.mxu0 %v2445
    %2493 = vmatpush.bf16.msra.mxu0 %v2444
    %2494 = vmatpush.bf16.msra.mxu0 %v2443
    %2495 = vmatpush.bf16.msra.mxu0 %v2442
    %2496 = vmatpush.bf16.msra.mxu0 %v2441
    %2497 = vmatmul.bf16.gmra.mxu0 %v2183
    %v2498 = vpop.f32.mrf.mxu0
    %v2499 = vadd.f32 %v2344, %v2498
    %v2500 = vpop.f32.mrf.mxu0
    %v2501 = vadd.f32 %v2344, %v2500
    %2502 = vmatmul.bf16.gmra.mxu0 %v2184
    %v2503 = vpop.f32.mrf.mxu0
    %v2504 = vadd.f32 %v2344, %v2503
    %v2505 = vpop.f32.mrf.mxu0
    %v2506 = vadd.f32 %v2344, %v2505
    %2507 = vmatmul.bf16.gmra.mxu0 %v2185
    %v2508 = vpop.f32.mrf.mxu0
    %v2509 = vadd.f32 %v2344, %v2508
    %v2510 = vpop.f32.mrf.mxu0
    %v2511 = vadd.f32 %v2344, %v2510
    %2512 = vmatmul.bf16.gmra.mxu0 %v2186
    %v2513 = vpop.f32.mrf.mxu0
    %v2514 = vadd.f32 %v2344, %v2513
    %v2515 = vpop.f32.mrf.mxu0
    %v2516 = vadd.f32 %v2344, %v2515
    %2517 = vmatmul.bf16.gmra.mxu0 %v2187
    %v2518 = vpop.f32.mrf.mxu0
    %v2519 = vadd.f32 %v2344, %v2518
    %v2520 = vpop.f32.mrf.mxu0
    %v2521 = vadd.f32 %v2344, %v2520
    %2522 = vmatmul.bf16.gmra.mxu0 %v2188
    %v2523 = vpop.f32.mrf.mxu0
    %v2524 = vadd.f32 %v2344, %v2523
    %v2525 = vpop.f32.mrf.mxu0
    %v2526 = vadd.f32 %v2344, %v2525
    %2527 = vmatmul.bf16.gmra.mxu0 %v2189
    %v2528 = vpop.f32.mrf.mxu0
    %v2529 = vadd.f32 %v2344, %v2528
    %v2530 = vpop.f32.mrf.mxu0
    %v2531 = vadd.f32 %v2344, %v2530
    %2532 = vmatmul.bf16.gmra.mxu0 %v2190
    %v2533 = vpop.f32.mrf.mxu0
    %v2534 = vadd.f32 %v2344, %v2533
    %v2535 = vpop.f32.mrf.mxu0
    %v2536 = vadd.f32 %v2344, %v2535
    %2537 = vdwg.mxu0
    %2538 = vmatpush.bf16.msra.mxu0 %v2456
    %2539 = vmatpush.bf16.msra.mxu0 %v2455
    %2540 = vmatpush.bf16.msra.mxu0 %v2454
    %2541 = vmatpush.bf16.msra.mxu0 %v2453
    %2542 = vmatpush.bf16.msra.mxu0 %v2452
    %2543 = vmatpush.bf16.msra.mxu0 %v2451
    %2544 = vmatpush.bf16.msra.mxu0 %v2450
    %2545 = vmatpush.bf16.msra.mxu0 %v2449
    %2546 = vmatmul.bf16.gmra.mxu0 %v2231
    %v2547 = vpop.f32.mrf.mxu0
    %v2548 = vadd.f32 %v2499, %v2547
    %v2549 = vpop.f32.mrf.mxu0
    %v2550 = vadd.f32 %v2501, %v2549
    %2551 = vmatmul.bf16.gmra.mxu0 %v2232
    %v2552 = vpop.f32.mrf.mxu0
    %v2553 = vadd.f32 %v2504, %v2552
    %v2554 = vpop.f32.mrf.mxu0
    %v2555 = vadd.f32 %v2506, %v2554
    %2556 = vmatmul.bf16.gmra.mxu0 %v2233
    %v2557 = vpop.f32.mrf.mxu0
    %v2558 = vadd.f32 %v2509, %v2557
    %v2559 = vpop.f32.mrf.mxu0
    %v2560 = vadd.f32 %v2511, %v2559
    %2561 = vmatmul.bf16.gmra.mxu0 %v2234
    %v2562 = vpop.f32.mrf.mxu0
    %v2563 = vadd.f32 %v2514, %v2562
    %v2564 = vpop.f32.mrf.mxu0
    %v2565 = vadd.f32 %v2516, %v2564
    %2566 = vmatmul.bf16.gmra.mxu0 %v2235
    %v2567 = vpop.f32.mrf.mxu0
    %v2568 = vadd.f32 %v2519, %v2567
    %v2569 = vpop.f32.mrf.mxu0
    %v2570 = vadd.f32 %v2521, %v2569
    %2571 = vmatmul.bf16.gmra.mxu0 %v2236
    %v2572 = vpop.f32.mrf.mxu0
    %v2573 = vadd.f32 %v2524, %v2572
    %v2574 = vpop.f32.mrf.mxu0
    %v2575 = vadd.f32 %v2526, %v2574
    %2576 = vmatmul.bf16.gmra.mxu0 %v2237
    %v2577 = vpop.f32.mrf.mxu0
    %v2578 = vadd.f32 %v2529, %v2577
    %v2579 = vpop.f32.mrf.mxu0
    %v2580 = vadd.f32 %v2531, %v2579
    %2581 = vmatmul.bf16.gmra.mxu0 %v2238
    %v2582 = vpop.f32.mrf.mxu0
    %v2583 = vadd.f32 %v2534, %v2582
    %v2584 = vpop.f32.mrf.mxu0
    %v2585 = vadd.f32 %v2536, %v2584
    %2586 = vdwg.mxu0
    %2587 = vmatpush.bf16.msra.mxu0 %v2464
    %2588 = vmatpush.bf16.msra.mxu0 %v2463
    %2589 = vmatpush.bf16.msra.mxu0 %v2462
    %2590 = vmatpush.bf16.msra.mxu0 %v2461
    %2591 = vmatpush.bf16.msra.mxu0 %v2460
    %2592 = vmatpush.bf16.msra.mxu0 %v2459
    %2593 = vmatpush.bf16.msra.mxu0 %v2458
    %2594 = vmatpush.bf16.msra.mxu0 %v2457
    %2595 = vmatmul.bf16.gmra.mxu0 %v2279
    %v2596 = vpop.f32.mrf.mxu0
    %v2597 = vadd.f32 %v2548, %v2596
    %v2598 = vpop.f32.mrf.mxu0
    %v2599 = vadd.f32 %v2550, %v2598
    %2600 = vmatmul.bf16.gmra.mxu0 %v2280
    %v2601 = vpop.f32.mrf.mxu0
    %v2602 = vadd.f32 %v2553, %v2601
    %v2603 = vpop.f32.mrf.mxu0
    %v2604 = vadd.f32 %v2555, %v2603
    %2605 = vmatmul.bf16.gmra.mxu0 %v2281
    %v2606 = vpop.f32.mrf.mxu0
    %v2607 = vadd.f32 %v2558, %v2606
    %v2608 = vpop.f32.mrf.mxu0
    %v2609 = vadd.f32 %v2560, %v2608
    %2610 = vmatmul.bf16.gmra.mxu0 %v2282
    %v2611 = vpop.f32.mrf.mxu0
    %v2612 = vadd.f32 %v2563, %v2611
    %v2613 = vpop.f32.mrf.mxu0
    %v2614 = vadd.f32 %v2565, %v2613
    %2615 = vmatmul.bf16.gmra.mxu0 %v2283
    %v2616 = vpop.f32.mrf.mxu0
    %v2617 = vadd.f32 %v2568, %v2616
    %v2618 = vpop.f32.mrf.mxu0
    %v2619 = vadd.f32 %v2570, %v2618
    %2620 = vmatmul.bf16.gmra.mxu0 %v2284
    %v2621 = vpop.f32.mrf.mxu0
    %v2622 = vadd.f32 %v2573, %v2621
    %v2623 = vpop.f32.mrf.mxu0
    %v2624 = vadd.f32 %v2575, %v2623
    %2625 = vmatmul.bf16.gmra.mxu0 %v2285
    %v2626 = vpop.f32.mrf.mxu0
    %v2627 = vadd.f32 %v2578, %v2626
    %v2628 = vpop.f32.mrf.mxu0
    %v2629 = vadd.f32 %v2580, %v2628
    %2630 = vmatmul.bf16.gmra.mxu0 %v2286
    %v2631 = vpop.f32.mrf.mxu0
    %v2632 = vadd.f32 %v2583, %v2631
    %v2633 = vpop.f32.mrf.mxu0
    %v2634 = vadd.f32 %v2585, %v2633
    %2635 = vdwg.mxu0
    %v2636 = vtanh.pop %v2597
    %v2637 = vtanh.pop %v2599
    %v2638 = vtanh.pop %v2602
    %v2639 = vtanh.pop %v2604
    %v2640 = vtanh.pop %v2607
    %v2641 = vtanh.pop %v2609
    %v2642 = vtanh.pop %v2612
    %v2643 = vtanh.pop %v2614
    %v2644 = vtanh.pop %v2617
    %v2645 = vtanh.pop %v2619
    %v2646 = vtanh.pop %v2622
    %v2647 = vtanh.pop %v2624
    %v2648 = vtanh.pop %v2627
    %v2649 = vtanh.pop %v2629
    %v2650 = vtanh.pop %v2632
    %v2651 = vtanh.pop %v2634
    %v2652 = vxor.u32 %v2597, 2147483648
    %v2653 = vxor.u32 %v2599, 2147483648
    %v2654 = vxor.u32 %v2602, 2147483648
    %v2655 = vxor.u32 %v2604, 2147483648
    %v2656 = vxor.u32 %v2607, 2147483648
    %v2657 = vxor.u32 %v2609, 2147483648
    %v2658 = vxor.u32 %v2612, 2147483648
    %v2659 = vxor.u32 %v2614, 2147483648
    %v2660 = vxor.u32 %v2617, 2147483648
    %v2661 = vxor.u32 %v2619, 2147483648
    %v2662 = vxor.u32 %v2622, 2147483648
    %v2663 = vxor.u32 %v2624, 2147483648
    %v2664 = vxor.u32 %v2627, 2147483648
    %v2665 = vxor.u32 %v2629, 2147483648
    %v2666 = vxor.u32 %v2632, 2147483648
    %v2667 = vxor.u32 %v2634, 2147483648
    %v2668 = vmul.f32 %v2652, 1.442695
    %v2669 = vpow.pop %v2668
    %v2670 = vmul.f32 %v2653, 1.442695
    %v2671 = vpow.pop %v2670
    %v2672 = vmul.f32 %v2654, 1.442695
    %v2673 = vpow.pop %v2672
    %v2674 = vmul.f32 %v2655, 1.442695
    %v2675 = vpow.pop %v2674
    %v2676 = vmul.f32 %v2656, 1.442695
    %v2677 = vpow.pop %v2676
    %v2678 = vmul.f32 %v2657, 1.442695
    %v2679 = vpow.pop %v2678
    %v2680 = vmul.f32 %v2658, 1.442695
    %v2681 = vpow.pop %v2680
    %v2682 = vmul.f32 %v2659, 1.442695
    %v2683 = vpow.pop %v2682
    %v2684 = vmul.f32 %v2660, 1.442695
    %v2685 = vpow.pop %v2684
    %v2686 = vmul.f32 %v2661, 1.442695
    %v2687 = vpow.pop %v2686
    %v2688 = vmul.f32 %v2662, 1.442695
    %v2689 = vpow.pop %v2688
    %v2690 = vmul.f32 %v2663, 1.442695
    %v2691 = vpow.pop %v2690
    %v2692 = vmul.f32 %v2664, 1.442695
    %v2693 = vpow.pop %v2692
    %v2694 = vmul.f32 %v2665, 1.442695
    %v2695 = vpow.pop %v2694
    %v2696 = vmul.f32 %v2666, 1.442695
    %v2697 = vpow.pop %v2696
    %v2698 = vmul.f32 %v2667, 1.442695
    %v2699 = vpow.pop %v2698
    %v2700 = vadd.f32 %v2669, 1.0
    %v2701 = vadd.f32 %v2671, 1.0
    %v2702 = vadd.f32 %v2673, 1.0
    %v2703 = vadd.f32 %v2675, 1.0
    %v2704 = vadd.f32 %v2677, 1.0
    %v2705 = vadd.f32 %v2679, 1.0
    %v2706 = vadd.f32 %v2681, 1.0
    %v2707 = vadd.f32 %v2683, 1.0
    %v2708 = vadd.f32 %v2685, 1.0
    %v2709 = vadd.f32 %v2687, 1.0
    %v2710 = vadd.f32 %v2689, 1.0
    %v2711 = vadd.f32 %v2691, 1.0
    %v2712 = vadd.f32 %v2693, 1.0
    %v2713 = vadd.f32 %v2695, 1.0
    %v2714 = vadd.f32 %v2697, 1.0
    %v2715 = vadd.f32 %v2699, 1.0
    %v2716 = vrcp.pop %v2700
    %v2717 = vmul.f32 %v2700, %v2716
    %v2718 = vsub.f32 1.0, %v2717
    %v2719 = vmul.f32 %v2716, %v2718
    %v2720 = vadd.f32 %v2716, %v2719
    %vm2721 = vweird.f32 %v2700
    %vm2722 = vweird.f32 %v2716
    %vm2723 = vmor %vm2721, %vm2722
    %v2724 = vsel %vm2723, %v2716, %v2720
    %v2725 = vand.u32 2147483647, %v2700
    %vm2726 = vcmp.eq.f32.partialorder %v2725, 8.507059e+37
    %v2727 = vand.u32 %v2700, 2147483648
    %v2728 = vor.u32 1.1754944e-38, %v2727
    %v2729 = vsel %vm2726, %v2728, %v2724
    %v2730 = vmul.f32 1.0, %v2729
    %v2731 = vrcp.pop %v2701
    %v2732 = vmul.f32 %v2701, %v2731
    %v2733 = vsub.f32 1.0, %v2732
    %v2734 = vmul.f32 %v2731, %v2733
    %v2735 = vadd.f32 %v2731, %v2734
    %vm2736 = vweird.f32 %v2701
    %vm2737 = vweird.f32 %v2731
    %vm2738 = vmor %vm2736, %vm2737
    %v2739 = vsel %vm2738, %v2731, %v2735
    %v2740 = vand.u32 2147483647, %v2701
    %vm2741 = vcmp.eq.f32.partialorder %v2740, 8.507059e+37
    %v2742 = vand.u32 %v2701, 2147483648
    %v2743 = vor.u32 1.1754944e-38, %v2742
    %v2744 = vsel %vm2741, %v2743, %v2739
    %v2745 = vmul.f32 1.0, %v2744
    %v2746 = vrcp.pop %v2702
    %v2747 = vmul.f32 %v2702, %v2746
    %v2748 = vsub.f32 1.0, %v2747
    %v2749 = vmul.f32 %v2746, %v2748
    %v2750 = vadd.f32 %v2746, %v2749
    %vm2751 = vweird.f32 %v2702
    %vm2752 = vweird.f32 %v2746
    %vm2753 = vmor %vm2751, %vm2752
    %v2754 = vsel %vm2753, %v2746, %v2750
    %v2755 = vand.u32 2147483647, %v2702
    %vm2756 = vcmp.eq.f32.partialorder %v2755, 8.507059e+37
    %v2757 = vand.u32 %v2702, 2147483648
    %v2758 = vor.u32 1.1754944e-38, %v2757
    %v2759 = vsel %vm2756, %v2758, %v2754
    %v2760 = vmul.f32 1.0, %v2759
    %v2761 = vrcp.pop %v2703
    %v2762 = vmul.f32 %v2703, %v2761
    %v2763 = vsub.f32 1.0, %v2762
    %v2764 = vmul.f32 %v2761, %v2763
    %v2765 = vadd.f32 %v2761, %v2764
    %vm2766 = vweird.f32 %v2703
    %vm2767 = vweird.f32 %v2761
    %vm2768 = vmor %vm2766, %vm2767
    %v2769 = vsel %vm2768, %v2761, %v2765
    %v2770 = vand.u32 2147483647, %v2703
    %vm2771 = vcmp.eq.f32.partialorder %v2770, 8.507059e+37
    %v2772 = vand.u32 %v2703, 2147483648
    %v2773 = vor.u32 1.1754944e-38, %v2772
    %v2774 = vsel %vm2771, %v2773, %v2769
    %v2775 = vmul.f32 1.0, %v2774
    %v2776 = vrcp.pop %v2704
    %v2777 = vmul.f32 %v2704, %v2776
    %v2778 = vsub.f32 1.0, %v2777
    %v2779 = vmul.f32 %v2776, %v2778
    %v2780 = vadd.f32 %v2776, %v2779
    %vm2781 = vweird.f32 %v2704
    %vm2782 = vweird.f32 %v2776
    %vm2783 = vmor %vm2781, %vm2782
    %v2784 = vsel %vm2783, %v2776, %v2780
    %v2785 = vand.u32 2147483647, %v2704
    %vm2786 = vcmp.eq.f32.partialorder %v2785, 8.507059e+37
    %v2787 = vand.u32 %v2704, 2147483648
    %v2788 = vor.u32 1.1754944e-38, %v2787
    %v2789 = vsel %vm2786, %v2788, %v2784
    %v2790 = vmul.f32 1.0, %v2789
    %v2791 = vrcp.pop %v2705
    %v2792 = vmul.f32 %v2705, %v2791
    %v2793 = vsub.f32 1.0, %v2792
    %v2794 = vmul.f32 %v2791, %v2793
    %v2795 = vadd.f32 %v2791, %v2794
    %vm2796 = vweird.f32 %v2705
    %vm2797 = vweird.f32 %v2791
    %vm2798 = vmor %vm2796, %vm2797
    %v2799 = vsel %vm2798, %v2791, %v2795
    %v2800 = vand.u32 2147483647, %v2705
    %vm2801 = vcmp.eq.f32.partialorder %v2800, 8.507059e+37
    %v2802 = vand.u32 %v2705, 2147483648
    %v2803 = vor.u32 1.1754944e-38, %v2802
    %v2804 = vsel %vm2801, %v2803, %v2799
    %v2805 = vmul.f32 1.0, %v2804
    %v2806 = vrcp.pop %v2706
    %v2807 = vmul.f32 %v2706, %v2806
    %v2808 = vsub.f32 1.0, %v2807
    %v2809 = vmul.f32 %v2806, %v2808
    %v2810 = vadd.f32 %v2806, %v2809
    %vm2811 = vweird.f32 %v2706
    %vm2812 = vweird.f32 %v2806
    %vm2813 = vmor %vm2811, %vm2812
    %v2814 = vsel %vm2813, %v2806, %v2810
    %v2815 = vand.u32 2147483647, %v2706
    %vm2816 = vcmp.eq.f32.partialorder %v2815, 8.507059e+37
    %v2817 = vand.u32 %v2706, 2147483648
    %v2818 = vor.u32 1.1754944e-38, %v2817
    %v2819 = vsel %vm2816, %v2818, %v2814
    %v2820 = vmul.f32 1.0, %v2819
    %v2821 = vrcp.pop %v2707
    %v2822 = vmul.f32 %v2707, %v2821
    %v2823 = vsub.f32 1.0, %v2822
    %v2824 = vmul.f32 %v2821, %v2823
    %v2825 = vadd.f32 %v2821, %v2824
    %vm2826 = vweird.f32 %v2707
    %vm2827 = vweird.f32 %v2821
    %vm2828 = vmor %vm2826, %vm2827
    %v2829 = vsel %vm2828, %v2821, %v2825
    %v2830 = vand.u32 2147483647, %v2707
    %vm2831 = vcmp.eq.f32.partialorder %v2830, 8.507059e+37
    %v2832 = vand.u32 %v2707, 2147483648
    %v2833 = vor.u32 1.1754944e-38, %v2832
    %v2834 = vsel %vm2831, %v2833, %v2829
    %v2835 = vmul.f32 1.0, %v2834
    %v2836 = vrcp.pop %v2708
    %v2837 = vmul.f32 %v2708, %v2836
    %v2838 = vsub.f32 1.0, %v2837
    %v2839 = vmul.f32 %v2836, %v2838
    %v2840 = vadd.f32 %v2836, %v2839
    %vm2841 = vweird.f32 %v2708
    %vm2842 = vweird.f32 %v2836
    %vm2843 = vmor %vm2841, %vm2842
    %v2844 = vsel %vm2843, %v2836, %v2840
    %v2845 = vand.u32 2147483647, %v2708
    %vm2846 = vcmp.eq.f32.partialorder %v2845, 8.507059e+37
    %v2847 = vand.u32 %v2708, 2147483648
    %v2848 = vor.u32 1.1754944e-38, %v2847
    %v2849 = vsel %vm2846, %v2848, %v2844
    %v2850 = vmul.f32 1.0, %v2849
    %v2851 = vrcp.pop %v2709
    %v2852 = vmul.f32 %v2709, %v2851
    %v2853 = vsub.f32 1.0, %v2852
    %v2854 = vmul.f32 %v2851, %v2853
    %v2855 = vadd.f32 %v2851, %v2854
    %vm2856 = vweird.f32 %v2709
    %vm2857 = vweird.f32 %v2851
    %vm2858 = vmor %vm2856, %vm2857
    %v2859 = vsel %vm2858, %v2851, %v2855
    %v2860 = vand.u32 2147483647, %v2709
    %vm2861 = vcmp.eq.f32.partialorder %v2860, 8.507059e+37
    %v2862 = vand.u32 %v2709, 2147483648
    %v2863 = vor.u32 1.1754944e-38, %v2862
    %v2864 = vsel %vm2861, %v2863, %v2859
    %v2865 = vmul.f32 1.0, %v2864
    %v2866 = vrcp.pop %v2710
    %v2867 = vmul.f32 %v2710, %v2866
    %v2868 = vsub.f32 1.0, %v2867
    %v2869 = vmul.f32 %v2866, %v2868
    %v2870 = vadd.f32 %v2866, %v2869
    %vm2871 = vweird.f32 %v2710
    %vm2872 = vweird.f32 %v2866
    %vm2873 = vmor %vm2871, %vm2872
    %v2874 = vsel %vm2873, %v2866, %v2870
    %v2875 = vand.u32 2147483647, %v2710
    %vm2876 = vcmp.eq.f32.partialorder %v2875, 8.507059e+37
    %v2877 = vand.u32 %v2710, 2147483648
    %v2878 = vor.u32 1.1754944e-38, %v2877
    %v2879 = vsel %vm2876, %v2878, %v2874
    %v2880 = vmul.f32 1.0, %v2879
    %v2881 = vrcp.pop %v2711
    %v2882 = vmul.f32 %v2711, %v2881
    %v2883 = vsub.f32 1.0, %v2882
    %v2884 = vmul.f32 %v2881, %v2883
    %v2885 = vadd.f32 %v2881, %v2884
    %vm2886 = vweird.f32 %v2711
    %vm2887 = vweird.f32 %v2881
    %vm2888 = vmor %vm2886, %vm2887
    %v2889 = vsel %vm2888, %v2881, %v2885
    %v2890 = vand.u32 2147483647, %v2711
    %vm2891 = vcmp.eq.f32.partialorder %v2890, 8.507059e+37
    %v2892 = vand.u32 %v2711, 2147483648
    %v2893 = vor.u32 1.1754944e-38, %v2892
    %v2894 = vsel %vm2891, %v2893, %v2889
    %v2895 = vmul.f32 1.0, %v2894
    %v2896 = vrcp.pop %v2712
    %v2897 = vmul.f32 %v2712, %v2896
    %v2898 = vsub.f32 1.0, %v2897
    %v2899 = vmul.f32 %v2896, %v2898
    %v2900 = vadd.f32 %v2896, %v2899
    %vm2901 = vweird.f32 %v2712
    %vm2902 = vweird.f32 %v2896
    %vm2903 = vmor %vm2901, %vm2902
    %v2904 = vsel %vm2903, %v2896, %v2900
    %v2905 = vand.u32 2147483647, %v2712
    %vm2906 = vcmp.eq.f32.partialorder %v2905, 8.507059e+37
    %v2907 = vand.u32 %v2712, 2147483648
    %v2908 = vor.u32 1.1754944e-38, %v2907
    %v2909 = vsel %vm2906, %v2908, %v2904
    %v2910 = vmul.f32 1.0, %v2909
    %v2911 = vrcp.pop %v2713
    %v2912 = vmul.f32 %v2713, %v2911
    %v2913 = vsub.f32 1.0, %v2912
    %v2914 = vmul.f32 %v2911, %v2913
    %v2915 = vadd.f32 %v2911, %v2914
    %vm2916 = vweird.f32 %v2713
    %vm2917 = vweird.f32 %v2911
    %vm2918 = vmor %vm2916, %vm2917
    %v2919 = vsel %vm2918, %v2911, %v2915
    %v2920 = vand.u32 2147483647, %v2713
    %vm2921 = vcmp.eq.f32.partialorder %v2920, 8.507059e+37
    %v2922 = vand.u32 %v2713, 2147483648
    %v2923 = vor.u32 1.1754944e-38, %v2922
    %v2924 = vsel %vm2921, %v2923, %v2919
    %v2925 = vmul.f32 1.0, %v2924
    %v2926 = vrcp.pop %v2714
    %v2927 = vmul.f32 %v2714, %v2926
    %v2928 = vsub.f32 1.0, %v2927
    %v2929 = vmul.f32 %v2926, %v2928
    %v2930 = vadd.f32 %v2926, %v2929
    %vm2931 = vweird.f32 %v2714
    %vm2932 = vweird.f32 %v2926
    %vm2933 = vmor %vm2931, %vm2932
    %v2934 = vsel %vm2933, %v2926, %v2930
    %v2935 = vand.u32 2147483647, %v2714
    %vm2936 = vcmp.eq.f32.partialorder %v2935, 8.507059e+37
    %v2937 = vand.u32 %v2714, 2147483648
    %v2938 = vor.u32 1.1754944e-38, %v2937
    %v2939 = vsel %vm2936, %v2938, %v2934
    %v2940 = vmul.f32 1.0, %v2939
    %v2941 = vrcp.pop %v2715
    %v2942 = vmul.f32 %v2715, %v2941
    %v2943 = vsub.f32 1.0, %v2942
    %v2944 = vmul.f32 %v2941, %v2943
    %v2945 = vadd.f32 %v2941, %v2944
    %vm2946 = vweird.f32 %v2715
    %vm2947 = vweird.f32 %v2941
    %vm2948 = vmor %vm2946, %vm2947
    %v2949 = vsel %vm2948, %v2941, %v2945
    %v2950 = vand.u32 2147483647, %v2715
    %vm2951 = vcmp.eq.f32.partialorder %v2950, 8.507059e+37
    %v2952 = vand.u32 %v2715, 2147483648
    %v2953 = vor.u32 1.1754944e-38, %v2952
    %v2954 = vsel %vm2951, %v2953, %v2949
    %v2955 = vmul.f32 1.0, %v2954
    %2972 = vrot.lane.b32.xlu0 %v2730, 64
    %v2973 = vpop.permute.xlu0 %2972
    %2974 = vrot.lane.b32.xlu0 %v2745, 64
    %v2975 = vpop.permute.xlu0 %2974
    %2976 = vrot.lane.b32.xlu0 %v2760, 64
    %v2977 = vpop.permute.xlu0 %2976
    %2978 = vrot.lane.b32.xlu0 %v2775, 64
    %v2979 = vpop.permute.xlu0 %2978
    %2980 = vrot.lane.b32.xlu0 %v2790, 64
    %v2981 = vpop.permute.xlu0 %2980
    %2982 = vrot.lane.b32.xlu0 %v2805, 64
    %v2983 = vpop.permute.xlu0 %2982
    %2984 = vrot.lane.b32.xlu0 %v2820, 64
    %v2985 = vpop.permute.xlu0 %2984
    %2986 = vrot.lane.b32.xlu0 %v2835, 64
    %v2987 = vpop.permute.xlu0 %2986
    %2988 = vrot.lane.b32.xlu0 %v2850, 64
    %v2989 = vpop.permute.xlu0 %2988
    %2990 = vrot.lane.b32.xlu0 %v2865, 64
    %v2991 = vpop.permute.xlu0 %2990
    %2992 = vrot.lane.b32.xlu0 %v2880, 64
    %v2993 = vpop.permute.xlu0 %2992
    %2994 = vrot.lane.b32.xlu0 %v2895, 64
    %v2995 = vpop.permute.xlu0 %2994
    %2996 = vrot.lane.b32.xlu0 %v2910, 64
    %v2997 = vpop.permute.xlu0 %2996
    %2998 = vrot.lane.b32.xlu0 %v2925, 64
    %v2999 = vpop.permute.xlu0 %2998
    %3000 = vrot.lane.b32.xlu0 %v2940, 64
    %v3001 = vpop.permute.xlu0 %3000
    %3002 = vrot.lane.b32.xlu0 %v2955, 64
    %v3003 = vpop.permute.xlu0 %3002
    %v3020 = vmul.f32 %v2636, %v2973
    %v3021 = vmul.f32 %v2637, %v2975
    %v3022 = vmul.f32 %v2638, %v2977
    %v3023 = vmul.f32 %v2639, %v2979
    %v3024 = vmul.f32 %v2640, %v2981
    %v3025 = vmul.f32 %v2641, %v2983
    %v3026 = vmul.f32 %v2642, %v2985
    %v3027 = vmul.f32 %v2643, %v2987
    %v3028 = vmul.f32 %v2644, %v2989
    %v3029 = vmul.f32 %v2645, %v2991
    %v3030 = vmul.f32 %v2646, %v2993
    %v3031 = vmul.f32 %v2647, %v2995
    %v3032 = vmul.f32 %v2648, %v2997
    %v3033 = vmul.f32 %v2649, %v2999
    %v3034 = vmul.f32 %v2650, %v3001
    %v3035 = vmul.f32 %v2651, %v3003
    %v3036 = vpack.c.bf16 %v3021, %v3020
    %v3037 = vpack.c.bf16 %v3023, %v3022
    %v3038 = vpack.c.bf16 %v3025, %v3024
    %v3039 = vpack.c.bf16 %v3027, %v3026
    %v3040 = vpack.c.bf16 %v3029, %v3028
    %v3041 = vpack.c.bf16 %v3031, %v3030
    %v3042 = vpack.c.bf16 %v3033, %v3032
    %v3043 = vpack.c.bf16 %v3035, %v3034
    %s3044 = scalar_lea.vmem [#allocation6], 64
    %v3045 = vld [vmem:[%s3044] sm:$0xff]
    %v3046 = vld [vmem:[%s3044 + $0x8] sm:$0xff]
    %v3047 = vld [vmem:[%s3044 + $0x10] sm:$0xff]
    %v3048 = vld [vmem:[%s3044 + $0x18] sm:$0xff]
    %v3049 = vld [vmem:[%s3044 + $0x20] sm:$0xff]
    %v3050 = vld [vmem:[%s3044 + $0x28] sm:$0xff]
    %v3051 = vld [vmem:[%s3044 + $0x30] sm:$0xff]
    %v3052 = vld [vmem:[%s3044 + $0x38] sm:$0xff]
    %v3061 = vunpack.c.l.b16 %v3045
    %v3062 = vunpack.c.h.b16 %v3045
    %v3063 = vunpack.c.l.b16 %v3046
    %v3064 = vunpack.c.h.b16 %v3046
    %v3065 = vunpack.c.l.b16 %v3047
    %v3066 = vunpack.c.h.b16 %v3047
    %v3067 = vunpack.c.l.b16 %v3048
    %v3068 = vunpack.c.h.b16 %v3048
    %v3069 = vunpack.c.l.b16 %v3049
    %v3070 = vunpack.c.h.b16 %v3049
    %v3071 = vunpack.c.l.b16 %v3050
    %v3072 = vunpack.c.h.b16 %v3050
    %v3073 = vunpack.c.l.b16 %v3051
    %v3074 = vunpack.c.h.b16 %v3051
    %v3075 = vunpack.c.l.b16 %v3052
    %v3076 = vunpack.c.h.b16 %v3052
    %v3077 = vpack.c.b16 %v3063, %v3061
    %v3078 = vpack.c.b16 %v3064, %v3062
    %v3079 = vpack.c.b16 %v3067, %v3065
    %v3080 = vpack.c.b16 %v3068, %v3066
    %v3081 = vpack.c.b16 %v3071, %v3069
    %v3082 = vpack.c.b16 %v3072, %v3070
    %v3083 = vpack.c.b16 %v3075, %v3073
    %v3084 = vpack.c.b16 %v3076, %v3074
    %v3094 = vsel %vm1705, %v3036, 0
    %v3097 = vsel %vm1705, %v3037, 0
    %v3100 = vsel %vm1705, %v3038, 0
    %v3103 = vsel %vm1705, %v3039, 0
    %v3106 = vsel %vm1705, %v3040, 0
    %v3109 = vsel %vm1705, %v3041, 0
    %v3112 = vsel %vm1705, %v3042, 0
    %v3115 = vsel %vm1705, %v3043, 0
    %3117 = vmatpush.bf16.msra.mxu0 0
    %3118 = vmatpush.bf16.msra.mxu0 0
    %3119 = vmatpush.bf16.msra.mxu0 0
    %3120 = vmatpush.bf16.msra.mxu0 0
    %3121 = vmatpush.bf16.msra.mxu0 %v3083
    %3122 = vmatpush.bf16.msra.mxu0 %v3081
    %3123 = vmatpush.bf16.msra.mxu0 %v3079
    %3124 = vmatpush.bf16.msra.mxu0 %v3077
    %3125 = vmatmul.bf16.gmra.mxu0 %v3094
    %v3126 = vpop.f32.mrf.mxu0
    %v3127 = vadd.f32 0.0, %v3126
    %v3128 = vpop.f32.mrf.mxu0
    %v3129 = vadd.f32 0.0, %v3128
    %3130 = vmatmul.bf16.gmra.mxu0 %v3097
    %v3131 = vpop.f32.mrf.mxu0
    %v3132 = vadd.f32 0.0, %v3131
    %v3133 = vpop.f32.mrf.mxu0
    %v3134 = vadd.f32 0.0, %v3133
    %3135 = vmatmul.bf16.gmra.mxu0 %v3100
    %v3136 = vpop.f32.mrf.mxu0
    %v3137 = vadd.f32 0.0, %v3136
    %v3138 = vpop.f32.mrf.mxu0
    %v3139 = vadd.f32 0.0, %v3138
    %3140 = vmatmul.bf16.gmra.mxu0 %v3103
    %v3141 = vpop.f32.mrf.mxu0
    %v3142 = vadd.f32 0.0, %v3141
    %v3143 = vpop.f32.mrf.mxu0
    %v3144 = vadd.f32 0.0, %v3143
    %3145 = vmatmul.bf16.gmra.mxu0 %v3106
    %v3146 = vpop.f32.mrf.mxu0
    %v3147 = vadd.f32 0.0, %v3146
    %v3148 = vpop.f32.mrf.mxu0
    %v3149 = vadd.f32 0.0, %v3148
    %3150 = vmatmul.bf16.gmra.mxu0 %v3109
    %v3151 = vpop.f32.mrf.mxu0
    %v3152 = vadd.f32 0.0, %v3151
    %v3153 = vpop.f32.mrf.mxu0
    %v3154 = vadd.f32 0.0, %v3153
    %3155 = vmatmul.bf16.gmra.mxu0 %v3112
    %v3156 = vpop.f32.mrf.mxu0
    %v3157 = vadd.f32 0.0, %v3156
    %v3158 = vpop.f32.mrf.mxu0
    %v3159 = vadd.f32 0.0, %v3158
    %3160 = vmatmul.bf16.gmra.mxu0 %v3115
    %v3161 = vpop.f32.mrf.mxu0
    %v3162 = vadd.f32 0.0, %v3161
    %v3163 = vpop.f32.mrf.mxu0
    %v3164 = vadd.f32 0.0, %v3163
    %3165 = vdwg.mxu0
    %3166 = vmatpush.bf16.msra.mxu0 0
    %3167 = vmatpush.bf16.msra.mxu0 0
    %3168 = vmatpush.bf16.msra.mxu0 0
    %3169 = vmatpush.bf16.msra.mxu0 0
    %3170 = vmatpush.bf16.msra.mxu0 %v3084
    %3171 = vmatpush.bf16.msra.mxu0 %v3082
    %3172 = vmatpush.bf16.msra.mxu0 %v3080
    %3173 = vmatpush.bf16.msra.mxu0 %v3078
    %3174 = vmatmul.bf16.gmra.mxu0 %v3094
    %v3175 = vpop.f32.mrf.mxu0
    %v3176 = vadd.f32 0.0, %v3175
    %v3177 = vpop.f32.mrf.mxu0
    %v3178 = vadd.f32 0.0, %v3177
    %3179 = vmatmul.bf16.gmra.mxu0 %v3097
    %v3180 = vpop.f32.mrf.mxu0
    %v3181 = vadd.f32 0.0, %v3180
    %v3182 = vpop.f32.mrf.mxu0
    %v3183 = vadd.f32 0.0, %v3182
    %3184 = vmatmul.bf16.gmra.mxu0 %v3100
    %v3185 = vpop.f32.mrf.mxu0
    %v3186 = vadd.f32 0.0, %v3185
    %v3187 = vpop.f32.mrf.mxu0
    %v3188 = vadd.f32 0.0, %v3187
    %3189 = vmatmul.bf16.gmra.mxu0 %v3103
    %v3190 = vpop.f32.mrf.mxu0
    %v3191 = vadd.f32 0.0, %v3190
    %v3192 = vpop.f32.mrf.mxu0
    %v3193 = vadd.f32 0.0, %v3192
    %3194 = vmatmul.bf16.gmra.mxu0 %v3106
    %v3195 = vpop.f32.mrf.mxu0
    %v3196 = vadd.f32 0.0, %v3195
    %v3197 = vpop.f32.mrf.mxu0
    %v3198 = vadd.f32 0.0, %v3197
    %3199 = vmatmul.bf16.gmra.mxu0 %v3109
    %v3200 = vpop.f32.mrf.mxu0
    %v3201 = vadd.f32 0.0, %v3200
    %v3202 = vpop.f32.mrf.mxu0
    %v3203 = vadd.f32 0.0, %v3202
    %3204 = vmatmul.bf16.gmra.mxu0 %v3112
    %v3205 = vpop.f32.mrf.mxu0
    %v3206 = vadd.f32 0.0, %v3205
    %v3207 = vpop.f32.mrf.mxu0
    %v3208 = vadd.f32 0.0, %v3207
    %3209 = vmatmul.bf16.gmra.mxu0 %v3115
    %v3210 = vpop.f32.mrf.mxu0
    %v3211 = vadd.f32 0.0, %v3210
    %v3212 = vpop.f32.mrf.mxu0
    %v3213 = vadd.f32 0.0, %v3212
    %3214 = vdwg.mxu0
    %v3215 = vld [vmem:[#allocation2] sm:$0xff]
    %v3216 = vld [vmem:[#allocation2 + $0x8] sm:$0xff]
    %v3217 = vld [vmem:[#allocation2 + $0x10] sm:$0xff]
    %v3218 = vld [vmem:[#allocation2 + $0x18] sm:$0xff]
    %v3219 = vld [vmem:[#allocation2 + $0x20] sm:$0xff]
    %v3220 = vld [vmem:[#allocation2 + $0x28] sm:$0xff]
    %v3221 = vld [vmem:[#allocation2 + $0x30] sm:$0xff]
    %v3222 = vld [vmem:[#allocation2 + $0x38] sm:$0xff]
    %v3223 = vld [vmem:[#allocation2 + $0x40] sm:$0xff]
    %v3224 = vld [vmem:[#allocation2 + $0x48] sm:$0xff]
    %v3225 = vld [vmem:[#allocation2 + $0x50] sm:$0xff]
    %v3226 = vld [vmem:[#allocation2 + $0x58] sm:$0xff]
    %v3227 = vld [vmem:[#allocation2 + $0x60] sm:$0xff]
    %v3228 = vld [vmem:[#allocation2 + $0x68] sm:$0xff]
    %v3229 = vld [vmem:[#allocation2 + $0x70] sm:$0xff]
    %v3230 = vld [vmem:[#allocation2 + $0x78] sm:$0xff]
    %v3231 = vadd.f32 %v3215, %v3127
    %v3232 = vadd.f32 %v3216, %v3129
    %v3233 = vadd.f32 %v3217, %v3132
    %v3234 = vadd.f32 %v3218, %v3134
    %v3235 = vadd.f32 %v3219, %v3137
    %v3236 = vadd.f32 %v3220, %v3139
    %v3237 = vadd.f32 %v3221, %v3142
    %v3238 = vadd.f32 %v3222, %v3144
    %v3239 = vadd.f32 %v3223, %v3147
    %v3240 = vadd.f32 %v3224, %v3149
    %v3241 = vadd.f32 %v3225, %v3152
    %v3242 = vadd.f32 %v3226, %v3154
    %v3243 = vadd.f32 %v3227, %v3157
    %v3244 = vadd.f32 %v3228, %v3159
    %v3245 = vadd.f32 %v3229, %v3162
    %v3246 = vadd.f32 %v3230, %v3164
    %3247 = vst [vmem:[#allocation2] sm:$0xff] %v3231
    %3248 = vst [vmem:[#allocation2 + $0x8] sm:$0xff] %v3232
    %3249 = vst [vmem:[#allocation2 + $0x10] sm:$0xff] %v3233
    %3250 = vst [vmem:[#allocation2 + $0x18] sm:$0xff] %v3234
    %3251 = vst [vmem:[#allocation2 + $0x20] sm:$0xff] %v3235
    %3252 = vst [vmem:[#allocation2 + $0x28] sm:$0xff] %v3236
    %3253 = vst [vmem:[#allocation2 + $0x30] sm:$0xff] %v3237
    %3254 = vst [vmem:[#allocation2 + $0x38] sm:$0xff] %v3238
    %3255 = vst [vmem:[#allocation2 + $0x40] sm:$0xff] %v3239
    %3256 = vst [vmem:[#allocation2 + $0x48] sm:$0xff] %v3240
    %3257 = vst [vmem:[#allocation2 + $0x50] sm:$0xff] %v3241
    %3258 = vst [vmem:[#allocation2 + $0x58] sm:$0xff] %v3242
    %3259 = vst [vmem:[#allocation2 + $0x60] sm:$0xff] %v3243
    %3260 = vst [vmem:[#allocation2 + $0x68] sm:$0xff] %v3244
    %3261 = vst [vmem:[#allocation2 + $0x70] sm:$0xff] %v3245
    %3262 = vst [vmem:[#allocation2 + $0x78] sm:$0xff] %v3246
    %v3263 = vperm.slane %v55, 0
    %v3264 = vadd.f32 %v3176, %v3263
    %v3265 = vadd.f32 %v3178, %v3263
    %v3266 = vadd.f32 %v3181, %v3263
    %v3267 = vadd.f32 %v3183, %v3263
    %v3268 = vadd.f32 %v3186, %v3263
    %v3269 = vadd.f32 %v3188, %v3263
    %v3270 = vadd.f32 %v3191, %v3263
    %v3271 = vadd.f32 %v3193, %v3263
    %v3272 = vadd.f32 %v3196, %v3263
    %v3273 = vadd.f32 %v3198, %v3263
    %v3274 = vadd.f32 %v3201, %v3263
    %v3275 = vadd.f32 %v3203, %v3263
    %v3276 = vadd.f32 %v3206, %v3263
    %v3277 = vadd.f32 %v3208, %v3263
    %v3278 = vadd.f32 %v3211, %v3263
    %v3279 = vadd.f32 %v3213, %v3263
    %v3280 = vadd.f32 %v3264, %v1893
    %v3281 = vadd.f32 %v3265, %v1894
    %v3282 = vadd.f32 %v3266, %v1895
    %v3283 = vadd.f32 %v3267, %v1896
    %v3284 = vadd.f32 %v3268, %v1897
    %v3285 = vadd.f32 %v3269, %v1898
    %v3286 = vadd.f32 %v3270, %v1899
    %v3287 = vadd.f32 %v3271, %v1900
    %v3288 = vadd.f32 %v3272, %v1901
    %v3289 = vadd.f32 %v3273, %v1902
    %v3290 = vadd.f32 %v3274, %v1903
    %v3291 = vadd.f32 %v3275, %v1904
    %v3292 = vadd.f32 %v3276, %v1905
    %v3293 = vadd.f32 %v3277, %v1906
    %v3294 = vadd.f32 %v3278, %v1907
    %v3295 = vadd.f32 %v3279, %v1908
    %v3296 = vpack.c.bf16 %v3280, %v3280
    %v3297 = vpack.c.bf16 %v3281, %v3281
    %v3298 = vpack.c.bf16 %v3282, %v3282
    %v3299 = vpack.c.bf16 %v3283, %v3283
    %v3300 = vpack.c.bf16 %v3284, %v3284
    %v3301 = vpack.c.bf16 %v3285, %v3285
    %v3302 = vpack.c.bf16 %v3286, %v3286
    %v3303 = vpack.c.bf16 %v3287, %v3287
    %v3304 = vpack.c.bf16 %v3288, %v3288
    %v3305 = vpack.c.bf16 %v3289, %v3289
    %v3306 = vpack.c.bf16 %v3290, %v3290
    %v3307 = vpack.c.bf16 %v3291, %v3291
    %v3308 = vpack.c.bf16 %v3292, %v3292
    %v3309 = vpack.c.bf16 %v3293, %v3293
    %v3310 = vpack.c.bf16 %v3294, %v3294
    %v3311 = vpack.c.bf16 %v3295, %v3295
    %v3312 = vrot.slane %v3280, 7
    %v3313 = vrot.slane %v3281, 7
    %v3314 = vrot.slane %v3282, 7
    %v3315 = vrot.slane %v3283, 7
    %v3316 = vrot.slane %v3284, 7
    %v3317 = vrot.slane %v3285, 7
    %v3318 = vrot.slane %v3286, 7
    %v3319 = vrot.slane %v3287, 7
    %v3320 = vrot.slane %v3288, 7
    %v3321 = vrot.slane %v3289, 7
    %v3322 = vrot.slane %v3290, 7
    %v3323 = vrot.slane %v3291, 7
    %v3324 = vrot.slane %v3292, 7
    %v3325 = vrot.slane %v3293, 7
    %v3326 = vrot.slane %v3294, 7
    %v3327 = vrot.slane %v3295, 7
    %v3328 = vsel %vm555, %v3326, %v3327
    %v3329 = vsel %vm555, %v3325, %v3326
    %v3330 = vsel %vm555, %v3324, %v3325
    %v3331 = vsel %vm555, %v3323, %v3324
    %v3332 = vsel %vm555, %v3322, %v3323
    %v3333 = vsel %vm555, %v3321, %v3322
    %v3334 = vsel %vm555, %v3320, %v3321
    %v3335 = vsel %vm555, %v3319, %v3320
    %v3336 = vsel %vm555, %v3318, %v3319
    %v3337 = vsel %vm555, %v3317, %v3318
    %v3338 = vsel %vm555, %v3316, %v3317
    %v3339 = vsel %vm555, %v3315, %v3316
    %v3340 = vsel %vm555, %v3314, %v3315
    %v3341 = vsel %vm555, %v3313, %v3314
    %v3342 = vsel %vm555, %v3312, %v3313
    %v3343 = vsel %vm555, %v3327, %v3312
    %v3344 = vpack.c.bf16 %v3343, %v3343
    %v3345 = vpack.c.bf16 %v3342, %v3342
    %v3346 = vpack.c.bf16 %v3341, %v3341
    %v3347 = vpack.c.bf16 %v3340, %v3340
    %v3348 = vpack.c.bf16 %v3339, %v3339
    %v3349 = vpack.c.bf16 %v3338, %v3338
    %v3350 = vpack.c.bf16 %v3337, %v3337
    %v3351 = vpack.c.bf16 %v3336, %v3336
    %v3352 = vpack.c.bf16 %v3335, %v3335
    %v3353 = vpack.c.bf16 %v3334, %v3334
    %v3354 = vpack.c.bf16 %v3333, %v3333
    %v3355 = vpack.c.bf16 %v3332, %v3332
    %v3356 = vpack.c.bf16 %v3331, %v3331
    %v3357 = vpack.c.bf16 %v3330, %v3330
    %v3358 = vpack.c.bf16 %v3329, %v3329
    %v3359 = vpack.c.bf16 %v3328, %v3328
    %v3360 = vsel %vm620, %v3344, 0
    %v3361 = vsel %vm621, %v3345, 0
    %v3362 = vsel %vm622, %v3346, 0
    %v3363 = vsel %vm623, %v3347, 0
    %v3364 = vsel %vm624, %v3348, 0
    %v3365 = vsel %vm625, %v3349, 0
    %v3366 = vsel %vm626, %v3350, 0
    %v3367 = vsel %vm627, %v3351, 0
    %v3368 = vsel %vm628, %v3352, 0
    %v3369 = vsel %vm629, %v3353, 0
    %v3370 = vsel %vm630, %v3354, 0
    %v3371 = vsel %vm631, %v3355, 0
    %v3372 = vsel %vm632, %v3356, 0
    %v3373 = vsel %vm633, %v3357, 0
    %v3374 = vsel %vm634, %v3358, 0
    %v3375 = vsel %vm635, %v3359, 0
    %v3376 = vrot.slane %v3280, 1
    %v3377 = vrot.slane %v3281, 1
    %v3378 = vrot.slane %v3282, 1
    %v3379 = vrot.slane %v3283, 1
    %v3380 = vrot.slane %v3284, 1
    %v3381 = vrot.slane %v3285, 1
    %v3382 = vrot.slane %v3286, 1
    %v3383 = vrot.slane %v3287, 1
    %v3384 = vrot.slane %v3288, 1
    %v3385 = vrot.slane %v3289, 1
    %v3386 = vrot.slane %v3290, 1
    %v3387 = vrot.slane %v3291, 1
    %v3388 = vrot.slane %v3292, 1
    %v3389 = vrot.slane %v3293, 1
    %v3390 = vrot.slane %v3294, 1
    %v3391 = vrot.slane %v3295, 1
    %v3392 = vsel %vm668, %v3390, %v3391
    %v3393 = vsel %vm668, %v3389, %v3390
    %v3394 = vsel %vm668, %v3388, %v3389
    %v3395 = vsel %vm668, %v3387, %v3388
    %v3396 = vsel %vm668, %v3386, %v3387
    %v3397 = vsel %vm668, %v3385, %v3386
    %v3398 = vsel %vm668, %v3384, %v3385
    %v3399 = vsel %vm668, %v3383, %v3384
    %v3400 = vsel %vm668, %v3382, %v3383
    %v3401 = vsel %vm668, %v3381, %v3382
    %v3402 = vsel %vm668, %v3380, %v3381
    %v3403 = vsel %vm668, %v3379, %v3380
    %v3404 = vsel %vm668, %v3378, %v3379
    %v3405 = vsel %vm668, %v3377, %v3378
    %v3406 = vsel %vm668, %v3376, %v3377
    %v3407 = vsel %vm668, %v3391, %v3376
    %v3408 = vpack.c.bf16 %v3406, %v3406
    %v3409 = vpack.c.bf16 %v3405, %v3405
    %v3410 = vpack.c.bf16 %v3404, %v3404
    %v3411 = vpack.c.bf16 %v3403, %v3403
    %v3412 = vpack.c.bf16 %v3402, %v3402
    %v3413 = vpack.c.bf16 %v3401, %v3401
    %v3414 = vpack.c.bf16 %v3400, %v3400
    %v3415 = vpack.c.bf16 %v3399, %v3399
    %v3416 = vpack.c.bf16 %v3398, %v3398
    %v3417 = vpack.c.bf16 %v3397, %v3397
    %v3418 = vpack.c.bf16 %v3396, %v3396
    %v3419 = vpack.c.bf16 %v3395, %v3395
    %v3420 = vpack.c.bf16 %v3394, %v3394
    %v3421 = vpack.c.bf16 %v3393, %v3393
    %v3422 = vpack.c.bf16 %v3392, %v3392
    %v3423 = vpack.c.bf16 %v3407, %v3407
    %v3424 = vsel %vm733, %v3408, 0
    %v3425 = vsel %vm734, %v3409, 0
    %v3426 = vsel %vm735, %v3410, 0
    %v3427 = vsel %vm736, %v3411, 0
    %v3428 = vsel %vm737, %v3412, 0
    %v3429 = vsel %vm738, %v3413, 0
    %v3430 = vsel %vm739, %v3414, 0
    %v3431 = vsel %vm740, %v3415, 0
    %v3432 = vsel %vm741, %v3416, 0
    %v3433 = vsel %vm742, %v3417, 0
    %v3434 = vsel %vm743, %v3418, 0
    %v3435 = vsel %vm744, %v3419, 0
    %v3436 = vsel %vm745, %v3420, 0
    %v3437 = vsel %vm746, %v3421, 0
    %v3438 = vsel %vm747, %v3422, 0
    %v3439 = vsel %vm748, %v3423, 0
    %v3456 = vunpack.c.l.b16 %v3360
    %v3457 = vunpack.c.l.b16 %v3361
    %v3458 = vunpack.c.l.b16 %v3362
    %v3459 = vunpack.c.l.b16 %v3363
    %v3460 = vunpack.c.l.b16 %v3364
    %v3461 = vunpack.c.l.b16 %v3365
    %v3462 = vunpack.c.l.b16 %v3366
    %v3463 = vunpack.c.l.b16 %v3367
    %v3464 = vunpack.c.l.b16 %v3368
    %v3465 = vunpack.c.l.b16 %v3369
    %v3466 = vunpack.c.l.b16 %v3370
    %v3467 = vunpack.c.l.b16 %v3371
    %v3468 = vunpack.c.l.b16 %v3372
    %v3469 = vunpack.c.l.b16 %v3373
    %v3470 = vunpack.c.l.b16 %v3374
    %v3471 = vunpack.c.l.b16 %v3375
    %v3472 = vpack.c.b16 %v3457, %v3456
    %v3473 = vpack.c.b16 %v3459, %v3458
    %v3474 = vpack.c.b16 %v3461, %v3460
    %v3475 = vpack.c.b16 %v3463, %v3462
    %v3476 = vpack.c.b16 %v3465, %v3464
    %v3477 = vpack.c.b16 %v3467, %v3466
    %v3478 = vpack.c.b16 %v3469, %v3468
    %v3479 = vpack.c.b16 %v3471, %v3470
    %v3504 = vunpack.c.l.b16 %v3296
    %v3505 = vunpack.c.l.b16 %v3297
    %v3506 = vunpack.c.l.b16 %v3298
    %v3507 = vunpack.c.l.b16 %v3299
    %v3508 = vunpack.c.l.b16 %v3300
    %v3509 = vunpack.c.l.b16 %v3301
    %v3510 = vunpack.c.l.b16 %v3302
    %v3511 = vunpack.c.l.b16 %v3303
    %v3512 = vunpack.c.l.b16 %v3304
    %v3513 = vunpack.c.l.b16 %v3305
    %v3514 = vunpack.c.l.b16 %v3306
    %v3515 = vunpack.c.l.b16 %v3307
    %v3516 = vunpack.c.l.b16 %v3308
    %v3517 = vunpack.c.l.b16 %v3309
    %v3518 = vunpack.c.l.b16 %v3310
    %v3519 = vunpack.c.l.b16 %v3311
    %v3520 = vpack.c.b16 %v3505, %v3504
    %v3521 = vpack.c.b16 %v3507, %v3506
    %v3522 = vpack.c.b16 %v3509, %v3508
    %v3523 = vpack.c.b16 %v3511, %v3510
    %v3524 = vpack.c.b16 %v3513, %v3512
    %v3525 = vpack.c.b16 %v3515, %v3514
    %v3526 = vpack.c.b16 %v3517, %v3516
    %v3527 = vpack.c.b16 %v3519, %v3518
    %v3552 = vunpack.c.l.b16 %v3424
    %v3553 = vunpack.c.l.b16 %v3425
    %v3554 = vunpack.c.l.b16 %v3426
    %v3555 = vunpack.c.l.b16 %v3427
    %v3556 = vunpack.c.l.b16 %v3428
    %v3557 = vunpack.c.l.b16 %v3429
    %v3558 = vunpack.c.l.b16 %v3430
    %v3559 = vunpack.c.l.b16 %v3431
    %v3560 = vunpack.c.l.b16 %v3432
    %v3561 = vunpack.c.l.b16 %v3433
    %v3562 = vunpack.c.l.b16 %v3434
    %v3563 = vunpack.c.l.b16 %v3435
    %v3564 = vunpack.c.l.b16 %v3436
    %v3565 = vunpack.c.l.b16 %v3437
    %v3566 = vunpack.c.l.b16 %v3438
    %v3567 = vunpack.c.l.b16 %v3439
    %v3568 = vpack.c.b16 %v3553, %v3552
    %v3569 = vpack.c.b16 %v3555, %v3554
    %v3570 = vpack.c.b16 %v3557, %v3556
    %v3571 = vpack.c.b16 %v3559, %v3558
    %v3572 = vpack.c.b16 %v3561, %v3560
    %v3573 = vpack.c.b16 %v3563, %v3562
    %v3574 = vpack.c.b16 %v3565, %v3564
    %v3575 = vpack.c.b16 %v3567, %v3566
    %s3584 = scalar_lea.vmem [#allocation3], 384
    %v3585 = vld [vmem:[%s3584] sm:$0xf]
    %v3586 = vld [vmem:[%s3584 + $0x4] sm:$0xf]
    %v3587 = vld [vmem:[%s3584 + $0x8] sm:$0xf]
    %v3588 = vld [vmem:[%s3584 + $0xc] sm:$0xf]
    %v3589 = vld [vmem:[%s3584 + $0x10] sm:$0xf]
    %v3590 = vld [vmem:[%s3584 + $0x14] sm:$0xf]
    %v3591 = vld [vmem:[%s3584 + $0x18] sm:$0xf]
    %v3592 = vld [vmem:[%s3584 + $0x1c] sm:$0xf]
    %v3593 = vld [vmem:[%s3584 + $0x20] sm:$0xf]
    %v3594 = vld [vmem:[%s3584 + $0x24] sm:$0xf]
    %v3595 = vld [vmem:[%s3584 + $0x28] sm:$0xf]
    %v3596 = vld [vmem:[%s3584 + $0x2c] sm:$0xf]
    %v3597 = vld [vmem:[%s3584 + $0x30] sm:$0xf]
    %v3598 = vld [vmem:[%s3584 + $0x34] sm:$0xf]
    %v3599 = vld [vmem:[%s3584 + $0x38] sm:$0xf]
    %v3600 = vld [vmem:[%s3584 + $0x3c] sm:$0xf]
    %v3601 = vld [vmem:[%s3584 + $0x40] sm:$0xf]
    %v3602 = vld [vmem:[%s3584 + $0x44] sm:$0xf]
    %v3603 = vld [vmem:[%s3584 + $0x48] sm:$0xf]
    %v3604 = vld [vmem:[%s3584 + $0x4c] sm:$0xf]
    %v3605 = vld [vmem:[%s3584 + $0x50] sm:$0xf]
    %v3606 = vld [vmem:[%s3584 + $0x54] sm:$0xf]
    %v3607 = vld [vmem:[%s3584 + $0x58] sm:$0xf]
    %v3608 = vld [vmem:[%s3584 + $0x5c] sm:$0xf]
    %v3609 = vld [vmem:[%s3584 + $0x60] sm:$0xf]
    %v3610 = vld [vmem:[%s3584 + $0x64] sm:$0xf]
    %v3611 = vld [vmem:[%s3584 + $0x68] sm:$0xf]
    %v3612 = vld [vmem:[%s3584 + $0x6c] sm:$0xf]
    %v3613 = vld [vmem:[%s3584 + $0x70] sm:$0xf]
    %v3614 = vld [vmem:[%s3584 + $0x74] sm:$0xf]
    %v3615 = vld [vmem:[%s3584 + $0x78] sm:$0xf]
    %v3616 = vld [vmem:[%s3584 + $0x7c] sm:$0xf]
    %v3617 = vld [vmem:[%s3584 + $0x80] sm:$0xf]
    %v3618 = vld [vmem:[%s3584 + $0x84] sm:$0xf]
    %v3619 = vld [vmem:[%s3584 + $0x88] sm:$0xf]
    %v3620 = vld [vmem:[%s3584 + $0x8c] sm:$0xf]
    %v3621 = vld [vmem:[%s3584 + $0x90] sm:$0xf]
    %v3622 = vld [vmem:[%s3584 + $0x94] sm:$0xf]
    %v3623 = vld [vmem:[%s3584 + $0x98] sm:$0xf]
    %v3624 = vld [vmem:[%s3584 + $0x9c] sm:$0xf]
    %v3625 = vld [vmem:[%s3584 + $0xa0] sm:$0xf]
    %v3626 = vld [vmem:[%s3584 + $0xa4] sm:$0xf]
    %v3627 = vld [vmem:[%s3584 + $0xa8] sm:$0xf]
    %v3628 = vld [vmem:[%s3584 + $0xac] sm:$0xf]
    %v3629 = vld [vmem:[%s3584 + $0xb0] sm:$0xf]
    %v3630 = vld [vmem:[%s3584 + $0xb4] sm:$0xf]
    %v3631 = vld [vmem:[%s3584 + $0xb8] sm:$0xf]
    %v3632 = vld [vmem:[%s3584 + $0xbc] sm:$0xf]
    %v3633 = vperm.slane %v54, 3
    %v3682 = vunpack.c.l.b16 %v3585
    %v3683 = vunpack.c.l.b16 %v3586
    %v3684 = vunpack.c.l.b16 %v3587
    %v3685 = vunpack.c.l.b16 %v3588
    %v3686 = vunpack.c.l.b16 %v3589
    %v3687 = vunpack.c.l.b16 %v3590
    %v3688 = vunpack.c.l.b16 %v3591
    %v3689 = vunpack.c.l.b16 %v3592
    %v3690 = vunpack.c.l.b16 %v3593
    %v3691 = vunpack.c.l.b16 %v3594
    %v3692 = vunpack.c.l.b16 %v3595
    %v3693 = vunpack.c.l.b16 %v3596
    %v3694 = vunpack.c.l.b16 %v3597
    %v3695 = vunpack.c.l.b16 %v3598
    %v3696 = vunpack.c.l.b16 %v3599
    %v3697 = vunpack.c.l.b16 %v3600
    %v3698 = vunpack.c.l.b16 %v3601
    %v3699 = vunpack.c.l.b16 %v3602
    %v3700 = vunpack.c.l.b16 %v3603
    %v3701 = vunpack.c.l.b16 %v3604
    %v3702 = vunpack.c.l.b16 %v3605
    %v3703 = vunpack.c.l.b16 %v3606
    %v3704 = vunpack.c.l.b16 %v3607
    %v3705 = vunpack.c.l.b16 %v3608
    %v3706 = vunpack.c.l.b16 %v3609
    %v3707 = vunpack.c.l.b16 %v3610
    %v3708 = vunpack.c.l.b16 %v3611
    %v3709 = vunpack.c.l.b16 %v3612
    %v3710 = vunpack.c.l.b16 %v3613
    %v3711 = vunpack.c.l.b16 %v3614
    %v3712 = vunpack.c.l.b16 %v3615
    %v3713 = vunpack.c.l.b16 %v3616
    %v3714 = vunpack.c.l.b16 %v3617
    %v3715 = vunpack.c.l.b16 %v3618
    %v3716 = vunpack.c.l.b16 %v3619
    %v3717 = vunpack.c.l.b16 %v3620
    %v3718 = vunpack.c.l.b16 %v3621
    %v3719 = vunpack.c.l.b16 %v3622
    %v3720 = vunpack.c.l.b16 %v3623
    %v3721 = vunpack.c.l.b16 %v3624
    %v3722 = vunpack.c.l.b16 %v3625
    %v3723 = vunpack.c.l.b16 %v3626
    %v3724 = vunpack.c.l.b16 %v3627
    %v3725 = vunpack.c.l.b16 %v3628
    %v3726 = vunpack.c.l.b16 %v3629
    %v3727 = vunpack.c.l.b16 %v3630
    %v3728 = vunpack.c.l.b16 %v3631
    %v3729 = vunpack.c.l.b16 %v3632
    %v3730 = vpack.c.b16 %v3683, %v3682
    %v3731 = vpack.c.b16 %v3685, %v3684
    %v3732 = vpack.c.b16 %v3687, %v3686
    %v3733 = vpack.c.b16 %v3689, %v3688
    %v3734 = vpack.c.b16 %v3691, %v3690
    %v3735 = vpack.c.b16 %v3693, %v3692
    %v3736 = vpack.c.b16 %v3695, %v3694
    %v3737 = vpack.c.b16 %v3697, %v3696
    %v3738 = vpack.c.b16 %v3699, %v3698
    %v3739 = vpack.c.b16 %v3701, %v3700
    %v3740 = vpack.c.b16 %v3703, %v3702
    %v3741 = vpack.c.b16 %v3705, %v3704
    %v3742 = vpack.c.b16 %v3707, %v3706
    %v3743 = vpack.c.b16 %v3709, %v3708
    %v3744 = vpack.c.b16 %v3711, %v3710
    %v3745 = vpack.c.b16 %v3713, %v3712
    %v3746 = vpack.c.b16 %v3715, %v3714
    %v3747 = vpack.c.b16 %v3717, %v3716
    %v3748 = vpack.c.b16 %v3719, %v3718
    %v3749 = vpack.c.b16 %v3721, %v3720
    %v3750 = vpack.c.b16 %v3723, %v3722
    %v3751 = vpack.c.b16 %v3725, %v3724
    %v3752 = vpack.c.b16 %v3727, %v3726
    %v3753 = vpack.c.b16 %v3729, %v3728
    %3778 = vmatpush.bf16.msra.mxu0 %v3737
    %3779 = vmatpush.bf16.msra.mxu0 %v3736
    %3780 = vmatpush.bf16.msra.mxu0 %v3735
    %3781 = vmatpush.bf16.msra.mxu0 %v3734
    %3782 = vmatpush.bf16.msra.mxu0 %v3733
    %3783 = vmatpush.bf16.msra.mxu0 %v3732
    %3784 = vmatpush.bf16.msra.mxu0 %v3731
    %3785 = vmatpush.bf16.msra.mxu0 %v3730
    %3786 = vmatmul.bf16.gmra.mxu0 %v3472
    %v3787 = vpop.f32.mrf.mxu0
    %v3788 = vadd.f32 %v3633, %v3787
    %v3789 = vpop.f32.mrf.mxu0
    %v3790 = vadd.f32 %v3633, %v3789
    %3791 = vmatmul.bf16.gmra.mxu0 %v3473
    %v3792 = vpop.f32.mrf.mxu0
    %v3793 = vadd.f32 %v3633, %v3792
    %v3794 = vpop.f32.mrf.mxu0
    %v3795 = vadd.f32 %v3633, %v3794
    %3796 = vmatmul.bf16.gmra.mxu0 %v3474
    %v3797 = vpop.f32.mrf.mxu0
    %v3798 = vadd.f32 %v3633, %v3797
    %v3799 = vpop.f32.mrf.mxu0
    %v3800 = vadd.f32 %v3633, %v3799
    %3801 = vmatmul.bf16.gmra.mxu0 %v3475
    %v3802 = vpop.f32.mrf.mxu0
    %v3803 = vadd.f32 %v3633, %v3802
    %v3804 = vpop.f32.mrf.mxu0
    %v3805 = vadd.f32 %v3633, %v3804
    %3806 = vmatmul.bf16.gmra.mxu0 %v3476
    %v3807 = vpop.f32.mrf.mxu0
    %v3808 = vadd.f32 %v3633, %v3807
    %v3809 = vpop.f32.mrf.mxu0
    %v3810 = vadd.f32 %v3633, %v3809
    %3811 = vmatmul.bf16.gmra.mxu0 %v3477
    %v3812 = vpop.f32.mrf.mxu0
    %v3813 = vadd.f32 %v3633, %v3812
    %v3814 = vpop.f32.mrf.mxu0
    %v3815 = vadd.f32 %v3633, %v3814
    %3816 = vmatmul.bf16.gmra.mxu0 %v3478
    %v3817 = vpop.f32.mrf.mxu0
    %v3818 = vadd.f32 %v3633, %v3817
    %v3819 = vpop.f32.mrf.mxu0
    %v3820 = vadd.f32 %v3633, %v3819
    %3821 = vmatmul.bf16.gmra.mxu0 %v3479
    %v3822 = vpop.f32.mrf.mxu0
    %v3823 = vadd.f32 %v3633, %v3822
    %v3824 = vpop.f32.mrf.mxu0
    %v3825 = vadd.f32 %v3633, %v3824
    %3826 = vdwg.mxu0
    %3827 = vmatpush.bf16.msra.mxu0 %v3745
    %3828 = vmatpush.bf16.msra.mxu0 %v3744
    %3829 = vmatpush.bf16.msra.mxu0 %v3743
    %3830 = vmatpush.bf16.msra.mxu0 %v3742
    %3831 = vmatpush.bf16.msra.mxu0 %v3741
    %3832 = vmatpush.bf16.msra.mxu0 %v3740
    %3833 = vmatpush.bf16.msra.mxu0 %v3739
    %3834 = vmatpush.bf16.msra.mxu0 %v3738
    %3835 = vmatmul.bf16.gmra.mxu0 %v3520
    %v3836 = vpop.f32.mrf.mxu0
    %v3837 = vadd.f32 %v3788, %v3836
    %v3838 = vpop.f32.mrf.mxu0
    %v3839 = vadd.f32 %v3790, %v3838
    %3840 = vmatmul.bf16.gmra.mxu0 %v3521
    %v3841 = vpop.f32.mrf.mxu0
    %v3842 = vadd.f32 %v3793, %v3841
    %v3843 = vpop.f32.mrf.mxu0
    %v3844 = vadd.f32 %v3795, %v3843
    %3845 = vmatmul.bf16.gmra.mxu0 %v3522
    %v3846 = vpop.f32.mrf.mxu0
    %v3847 = vadd.f32 %v3798, %v3846
    %v3848 = vpop.f32.mrf.mxu0
    %v3849 = vadd.f32 %v3800, %v3848
    %3850 = vmatmul.bf16.gmra.mxu0 %v3523
    %v3851 = vpop.f32.mrf.mxu0
    %v3852 = vadd.f32 %v3803, %v3851
    %v3853 = vpop.f32.mrf.mxu0
    %v3854 = vadd.f32 %v3805, %v3853
    %3855 = vmatmul.bf16.gmra.mxu0 %v3524
    %v3856 = vpop.f32.mrf.mxu0
    %v3857 = vadd.f32 %v3808, %v3856
    %v3858 = vpop.f32.mrf.mxu0
    %v3859 = vadd.f32 %v3810, %v3858
    %3860 = vmatmul.bf16.gmra.mxu0 %v3525
    %v3861 = vpop.f32.mrf.mxu0
    %v3862 = vadd.f32 %v3813, %v3861
    %v3863 = vpop.f32.mrf.mxu0
    %v3864 = vadd.f32 %v3815, %v3863
    %3865 = vmatmul.bf16.gmra.mxu0 %v3526
    %v3866 = vpop.f32.mrf.mxu0
    %v3867 = vadd.f32 %v3818, %v3866
    %v3868 = vpop.f32.mrf.mxu0
    %v3869 = vadd.f32 %v3820, %v3868
    %3870 = vmatmul.bf16.gmra.mxu0 %v3527
    %v3871 = vpop.f32.mrf.mxu0
    %v3872 = vadd.f32 %v3823, %v3871
    %v3873 = vpop.f32.mrf.mxu0
    %v3874 = vadd.f32 %v3825, %v3873
    %3875 = vdwg.mxu0
    %3876 = vmatpush.bf16.msra.mxu0 %v3753
    %3877 = vmatpush.bf16.msra.mxu0 %v3752
    %3878 = vmatpush.bf16.msra.mxu0 %v3751
    %3879 = vmatpush.bf16.msra.mxu0 %v3750
    %3880 = vmatpush.bf16.msra.mxu0 %v3749
    %3881 = vmatpush.bf16.msra.mxu0 %v3748
    %3882 = vmatpush.bf16.msra.mxu0 %v3747
    %3883 = vmatpush.bf16.msra.mxu0 %v3746
    %3884 = vmatmul.bf16.gmra.mxu0 %v3568
    %v3885 = vpop.f32.mrf.mxu0
    %v3886 = vadd.f32 %v3837, %v3885
    %v3887 = vpop.f32.mrf.mxu0
    %v3888 = vadd.f32 %v3839, %v3887
    %3889 = vmatmul.bf16.gmra.mxu0 %v3569
    %v3890 = vpop.f32.mrf.mxu0
    %v3891 = vadd.f32 %v3842, %v3890
    %v3892 = vpop.f32.mrf.mxu0
    %v3893 = vadd.f32 %v3844, %v3892
    %3894 = vmatmul.bf16.gmra.mxu0 %v3570
    %v3895 = vpop.f32.mrf.mxu0
    %v3896 = vadd.f32 %v3847, %v3895
    %v3897 = vpop.f32.mrf.mxu0
    %v3898 = vadd.f32 %v3849, %v3897
    %3899 = vmatmul.bf16.gmra.mxu0 %v3571
    %v3900 = vpop.f32.mrf.mxu0
    %v3901 = vadd.f32 %v3852, %v3900
    %v3902 = vpop.f32.mrf.mxu0
    %v3903 = vadd.f32 %v3854, %v3902
    %3904 = vmatmul.bf16.gmra.mxu0 %v3572
    %v3905 = vpop.f32.mrf.mxu0
    %v3906 = vadd.f32 %v3857, %v3905
    %v3907 = vpop.f32.mrf.mxu0
    %v3908 = vadd.f32 %v3859, %v3907
    %3909 = vmatmul.bf16.gmra.mxu0 %v3573
    %v3910 = vpop.f32.mrf.mxu0
    %v3911 = vadd.f32 %v3862, %v3910
    %v3912 = vpop.f32.mrf.mxu0
    %v3913 = vadd.f32 %v3864, %v3912
    %3914 = vmatmul.bf16.gmra.mxu0 %v3574
    %v3915 = vpop.f32.mrf.mxu0
    %v3916 = vadd.f32 %v3867, %v3915
    %v3917 = vpop.f32.mrf.mxu0
    %v3918 = vadd.f32 %v3869, %v3917
    %3919 = vmatmul.bf16.gmra.mxu0 %v3575
    %v3920 = vpop.f32.mrf.mxu0
    %v3921 = vadd.f32 %v3872, %v3920
    %v3922 = vpop.f32.mrf.mxu0
    %v3923 = vadd.f32 %v3874, %v3922
    %3924 = vdwg.mxu0
    %v3925 = vtanh.pop %v3886
    %v3926 = vtanh.pop %v3888
    %v3927 = vtanh.pop %v3891
    %v3928 = vtanh.pop %v3893
    %v3929 = vtanh.pop %v3896
    %v3930 = vtanh.pop %v3898
    %v3931 = vtanh.pop %v3901
    %v3932 = vtanh.pop %v3903
    %v3933 = vtanh.pop %v3906
    %v3934 = vtanh.pop %v3908
    %v3935 = vtanh.pop %v3911
    %v3936 = vtanh.pop %v3913
    %v3937 = vtanh.pop %v3916
    %v3938 = vtanh.pop %v3918
    %v3939 = vtanh.pop %v3921
    %v3940 = vtanh.pop %v3923
    %v3941 = vxor.u32 %v3886, 2147483648
    %v3942 = vxor.u32 %v3888, 2147483648
    %v3943 = vxor.u32 %v3891, 2147483648
    %v3944 = vxor.u32 %v3893, 2147483648
    %v3945 = vxor.u32 %v3896, 2147483648
    %v3946 = vxor.u32 %v3898, 2147483648
    %v3947 = vxor.u32 %v3901, 2147483648
    %v3948 = vxor.u32 %v3903, 2147483648
    %v3949 = vxor.u32 %v3906, 2147483648
    %v3950 = vxor.u32 %v3908, 2147483648
    %v3951 = vxor.u32 %v3911, 2147483648
    %v3952 = vxor.u32 %v3913, 2147483648
    %v3953 = vxor.u32 %v3916, 2147483648
    %v3954 = vxor.u32 %v3918, 2147483648
    %v3955 = vxor.u32 %v3921, 2147483648
    %v3956 = vxor.u32 %v3923, 2147483648
    %v3957 = vmul.f32 %v3941, 1.442695
    %v3958 = vpow.pop %v3957
    %v3959 = vmul.f32 %v3942, 1.442695
    %v3960 = vpow.pop %v3959
    %v3961 = vmul.f32 %v3943, 1.442695
    %v3962 = vpow.pop %v3961
    %v3963 = vmul.f32 %v3944, 1.442695
    %v3964 = vpow.pop %v3963
    %v3965 = vmul.f32 %v3945, 1.442695
    %v3966 = vpow.pop %v3965
    %v3967 = vmul.f32 %v3946, 1.442695
    %v3968 = vpow.pop %v3967
    %v3969 = vmul.f32 %v3947, 1.442695
    %v3970 = vpow.pop %v3969
    %v3971 = vmul.f32 %v3948, 1.442695
    %v3972 = vpow.pop %v3971
    %v3973 = vmul.f32 %v3949, 1.442695
    %v3974 = vpow.pop %v3973
    %v3975 = vmul.f32 %v3950, 1.442695
    %v3976 = vpow.pop %v3975
    %v3977 = vmul.f32 %v3951, 1.442695
    %v3978 = vpow.pop %v3977
    %v3979 = vmul.f32 %v3952, 1.442695
    %v3980 = vpow.pop %v3979
    %v3981 = vmul.f32 %v3953, 1.442695
    %v3982 = vpow.pop %v3981
    %v3983 = vmul.f32 %v3954, 1.442695
    %v3984 = vpow.pop %v3983
    %v3985 = vmul.f32 %v3955, 1.442695
    %v3986 = vpow.pop %v3985
    %v3987 = vmul.f32 %v3956, 1.442695
    %v3988 = vpow.pop %v3987
    %v3989 = vadd.f32 %v3958, 1.0
    %v3990 = vadd.f32 %v3960, 1.0
    %v3991 = vadd.f32 %v3962, 1.0
    %v3992 = vadd.f32 %v3964, 1.0
    %v3993 = vadd.f32 %v3966, 1.0
    %v3994 = vadd.f32 %v3968, 1.0
    %v3995 = vadd.f32 %v3970, 1.0
    %v3996 = vadd.f32 %v3972, 1.0
    %v3997 = vadd.f32 %v3974, 1.0
    %v3998 = vadd.f32 %v3976, 1.0
    %v3999 = vadd.f32 %v3978, 1.0
    %v4000 = vadd.f32 %v3980, 1.0
    %v4001 = vadd.f32 %v3982, 1.0
    %v4002 = vadd.f32 %v3984, 1.0
    %v4003 = vadd.f32 %v3986, 1.0
    %v4004 = vadd.f32 %v3988, 1.0
    %v4005 = vrcp.pop %v3989
    %v4006 = vmul.f32 %v3989, %v4005
    %v4007 = vsub.f32 1.0, %v4006
    %v4008 = vmul.f32 %v4005, %v4007
    %v4009 = vadd.f32 %v4005, %v4008
    %vm4010 = vweird.f32 %v3989
    %vm4011 = vweird.f32 %v4005
    %vm4012 = vmor %vm4010, %vm4011
    %v4013 = vsel %vm4012, %v4005, %v4009
    %v4014 = vand.u32 2147483647, %v3989
    %vm4015 = vcmp.eq.f32.partialorder %v4014, 8.507059e+37
    %v4016 = vand.u32 %v3989, 2147483648
    %v4017 = vor.u32 1.1754944e-38, %v4016
    %v4018 = vsel %vm4015, %v4017, %v4013
    %v4019 = vmul.f32 1.0, %v4018
    %v4020 = vrcp.pop %v3990
    %v4021 = vmul.f32 %v3990, %v4020
    %v4022 = vsub.f32 1.0, %v4021
    %v4023 = vmul.f32 %v4020, %v4022
    %v4024 = vadd.f32 %v4020, %v4023
    %vm4025 = vweird.f32 %v3990
    %vm4026 = vweird.f32 %v4020
    %vm4027 = vmor %vm4025, %vm4026
    %v4028 = vsel %vm4027, %v4020, %v4024
    %v4029 = vand.u32 2147483647, %v3990
    %vm4030 = vcmp.eq.f32.partialorder %v4029, 8.507059e+37
    %v4031 = vand.u32 %v3990, 2147483648
    %v4032 = vor.u32 1.1754944e-38, %v4031
    %v4033 = vsel %vm4030, %v4032, %v4028
    %v4034 = vmul.f32 1.0, %v4033
    %v4035 = vrcp.pop %v3991
    %v4036 = vmul.f32 %v3991, %v4035
    %v4037 = vsub.f32 1.0, %v4036
    %v4038 = vmul.f32 %v4035, %v4037
    %v4039 = vadd.f32 %v4035, %v4038
    %vm4040 = vweird.f32 %v3991
    %vm4041 = vweird.f32 %v4035
    %vm4042 = vmor %vm4040, %vm4041
    %v4043 = vsel %vm4042, %v4035, %v4039
    %v4044 = vand.u32 2147483647, %v3991
    %vm4045 = vcmp.eq.f32.partialorder %v4044, 8.507059e+37
    %v4046 = vand.u32 %v3991, 2147483648
    %v4047 = vor.u32 1.1754944e-38, %v4046
    %v4048 = vsel %vm4045, %v4047, %v4043
    %v4049 = vmul.f32 1.0, %v4048
    %v4050 = vrcp.pop %v3992
    %v4051 = vmul.f32 %v3992, %v4050
    %v4052 = vsub.f32 1.0, %v4051
    %v4053 = vmul.f32 %v4050, %v4052
    %v4054 = vadd.f32 %v4050, %v4053
    %vm4055 = vweird.f32 %v3992
    %vm4056 = vweird.f32 %v4050
    %vm4057 = vmor %vm4055, %vm4056
    %v4058 = vsel %vm4057, %v4050, %v4054
    %v4059 = vand.u32 2147483647, %v3992
    %vm4060 = vcmp.eq.f32.partialorder %v4059, 8.507059e+37
    %v4061 = vand.u32 %v3992, 2147483648
    %v4062 = vor.u32 1.1754944e-38, %v4061
    %v4063 = vsel %vm4060, %v4062, %v4058
    %v4064 = vmul.f32 1.0, %v4063
    %v4065 = vrcp.pop %v3993
    %v4066 = vmul.f32 %v3993, %v4065
    %v4067 = vsub.f32 1.0, %v4066
    %v4068 = vmul.f32 %v4065, %v4067
    %v4069 = vadd.f32 %v4065, %v4068
    %vm4070 = vweird.f32 %v3993
    %vm4071 = vweird.f32 %v4065
    %vm4072 = vmor %vm4070, %vm4071
    %v4073 = vsel %vm4072, %v4065, %v4069
    %v4074 = vand.u32 2147483647, %v3993
    %vm4075 = vcmp.eq.f32.partialorder %v4074, 8.507059e+37
    %v4076 = vand.u32 %v3993, 2147483648
    %v4077 = vor.u32 1.1754944e-38, %v4076
    %v4078 = vsel %vm4075, %v4077, %v4073
    %v4079 = vmul.f32 1.0, %v4078
    %v4080 = vrcp.pop %v3994
    %v4081 = vmul.f32 %v3994, %v4080
    %v4082 = vsub.f32 1.0, %v4081
    %v4083 = vmul.f32 %v4080, %v4082
    %v4084 = vadd.f32 %v4080, %v4083
    %vm4085 = vweird.f32 %v3994
    %vm4086 = vweird.f32 %v4080
    %vm4087 = vmor %vm4085, %vm4086
    %v4088 = vsel %vm4087, %v4080, %v4084
    %v4089 = vand.u32 2147483647, %v3994
    %vm4090 = vcmp.eq.f32.partialorder %v4089, 8.507059e+37
    %v4091 = vand.u32 %v3994, 2147483648
    %v4092 = vor.u32 1.1754944e-38, %v4091
    %v4093 = vsel %vm4090, %v4092, %v4088
    %v4094 = vmul.f32 1.0, %v4093
    %v4095 = vrcp.pop %v3995
    %v4096 = vmul.f32 %v3995, %v4095
    %v4097 = vsub.f32 1.0, %v4096
    %v4098 = vmul.f32 %v4095, %v4097
    %v4099 = vadd.f32 %v4095, %v4098
    %vm4100 = vweird.f32 %v3995
    %vm4101 = vweird.f32 %v4095
    %vm4102 = vmor %vm4100, %vm4101
    %v4103 = vsel %vm4102, %v4095, %v4099
    %v4104 = vand.u32 2147483647, %v3995
    %vm4105 = vcmp.eq.f32.partialorder %v4104, 8.507059e+37
    %v4106 = vand.u32 %v3995, 2147483648
    %v4107 = vor.u32 1.1754944e-38, %v4106
    %v4108 = vsel %vm4105, %v4107, %v4103
    %v4109 = vmul.f32 1.0, %v4108
    %v4110 = vrcp.pop %v3996
    %v4111 = vmul.f32 %v3996, %v4110
    %v4112 = vsub.f32 1.0, %v4111
    %v4113 = vmul.f32 %v4110, %v4112
    %v4114 = vadd.f32 %v4110, %v4113
    %vm4115 = vweird.f32 %v3996
    %vm4116 = vweird.f32 %v4110
    %vm4117 = vmor %vm4115, %vm4116
    %v4118 = vsel %vm4117, %v4110, %v4114
    %v4119 = vand.u32 2147483647, %v3996
    %vm4120 = vcmp.eq.f32.partialorder %v4119, 8.507059e+37
    %v4121 = vand.u32 %v3996, 2147483648
    %v4122 = vor.u32 1.1754944e-38, %v4121
    %v4123 = vsel %vm4120, %v4122, %v4118
    %v4124 = vmul.f32 1.0, %v4123
    %v4125 = vrcp.pop %v3997
    %v4126 = vmul.f32 %v3997, %v4125
    %v4127 = vsub.f32 1.0, %v4126
    %v4128 = vmul.f32 %v4125, %v4127
    %v4129 = vadd.f32 %v4125, %v4128
    %vm4130 = vweird.f32 %v3997
    %vm4131 = vweird.f32 %v4125
    %vm4132 = vmor %vm4130, %vm4131
    %v4133 = vsel %vm4132, %v4125, %v4129
    %v4134 = vand.u32 2147483647, %v3997
    %vm4135 = vcmp.eq.f32.partialorder %v4134, 8.507059e+37
    %v4136 = vand.u32 %v3997, 2147483648
    %v4137 = vor.u32 1.1754944e-38, %v4136
    %v4138 = vsel %vm4135, %v4137, %v4133
    %v4139 = vmul.f32 1.0, %v4138
    %v4140 = vrcp.pop %v3998
    %v4141 = vmul.f32 %v3998, %v4140
    %v4142 = vsub.f32 1.0, %v4141
    %v4143 = vmul.f32 %v4140, %v4142
    %v4144 = vadd.f32 %v4140, %v4143
    %vm4145 = vweird.f32 %v3998
    %vm4146 = vweird.f32 %v4140
    %vm4147 = vmor %vm4145, %vm4146
    %v4148 = vsel %vm4147, %v4140, %v4144
    %v4149 = vand.u32 2147483647, %v3998
    %vm4150 = vcmp.eq.f32.partialorder %v4149, 8.507059e+37
    %v4151 = vand.u32 %v3998, 2147483648
    %v4152 = vor.u32 1.1754944e-38, %v4151
    %v4153 = vsel %vm4150, %v4152, %v4148
    %v4154 = vmul.f32 1.0, %v4153
    %v4155 = vrcp.pop %v3999
    %v4156 = vmul.f32 %v3999, %v4155
    %v4157 = vsub.f32 1.0, %v4156
    %v4158 = vmul.f32 %v4155, %v4157
    %v4159 = vadd.f32 %v4155, %v4158
    %vm4160 = vweird.f32 %v3999
    %vm4161 = vweird.f32 %v4155
    %vm4162 = vmor %vm4160, %vm4161
    %v4163 = vsel %vm4162, %v4155, %v4159
    %v4164 = vand.u32 2147483647, %v3999
    %vm4165 = vcmp.eq.f32.partialorder %v4164, 8.507059e+37
    %v4166 = vand.u32 %v3999, 2147483648
    %v4167 = vor.u32 1.1754944e-38, %v4166
    %v4168 = vsel %vm4165, %v4167, %v4163
    %v4169 = vmul.f32 1.0, %v4168
    %v4170 = vrcp.pop %v4000
    %v4171 = vmul.f32 %v4000, %v4170
    %v4172 = vsub.f32 1.0, %v4171
    %v4173 = vmul.f32 %v4170, %v4172
    %v4174 = vadd.f32 %v4170, %v4173
    %vm4175 = vweird.f32 %v4000
    %vm4176 = vweird.f32 %v4170
    %vm4177 = vmor %vm4175, %vm4176
    %v4178 = vsel %vm4177, %v4170, %v4174
    %v4179 = vand.u32 2147483647, %v4000
    %vm4180 = vcmp.eq.f32.partialorder %v4179, 8.507059e+37
    %v4181 = vand.u32 %v4000, 2147483648
    %v4182 = vor.u32 1.1754944e-38, %v4181
    %v4183 = vsel %vm4180, %v4182, %v4178
    %v4184 = vmul.f32 1.0, %v4183
    %v4185 = vrcp.pop %v4001
    %v4186 = vmul.f32 %v4001, %v4185
    %v4187 = vsub.f32 1.0, %v4186
    %v4188 = vmul.f32 %v4185, %v4187
    %v4189 = vadd.f32 %v4185, %v4188
    %vm4190 = vweird.f32 %v4001
    %vm4191 = vweird.f32 %v4185
    %vm4192 = vmor %vm4190, %vm4191
    %v4193 = vsel %vm4192, %v4185, %v4189
    %v4194 = vand.u32 2147483647, %v4001
    %vm4195 = vcmp.eq.f32.partialorder %v4194, 8.507059e+37
    %v4196 = vand.u32 %v4001, 2147483648
    %v4197 = vor.u32 1.1754944e-38, %v4196
    %v4198 = vsel %vm4195, %v4197, %v4193
    %v4199 = vmul.f32 1.0, %v4198
    %v4200 = vrcp.pop %v4002
    %v4201 = vmul.f32 %v4002, %v4200
    %v4202 = vsub.f32 1.0, %v4201
    %v4203 = vmul.f32 %v4200, %v4202
    %v4204 = vadd.f32 %v4200, %v4203
    %vm4205 = vweird.f32 %v4002
    %vm4206 = vweird.f32 %v4200
    %vm4207 = vmor %vm4205, %vm4206
    %v4208 = vsel %vm4207, %v4200, %v4204
    %v4209 = vand.u32 2147483647, %v4002
    %vm4210 = vcmp.eq.f32.partialorder %v4209, 8.507059e+37
    %v4211 = vand.u32 %v4002, 2147483648
    %v4212 = vor.u32 1.1754944e-38, %v4211
    %v4213 = vsel %vm4210, %v4212, %v4208
    %v4214 = vmul.f32 1.0, %v4213
    %v4215 = vrcp.pop %v4003
    %v4216 = vmul.f32 %v4003, %v4215
    %v4217 = vsub.f32 1.0, %v4216
    %v4218 = vmul.f32 %v4215, %v4217
    %v4219 = vadd.f32 %v4215, %v4218
    %vm4220 = vweird.f32 %v4003
    %vm4221 = vweird.f32 %v4215
    %vm4222 = vmor %vm4220, %vm4221
    %v4223 = vsel %vm4222, %v4215, %v4219
    %v4224 = vand.u32 2147483647, %v4003
    %vm4225 = vcmp.eq.f32.partialorder %v4224, 8.507059e+37
    %v4226 = vand.u32 %v4003, 2147483648
    %v4227 = vor.u32 1.1754944e-38, %v4226
    %v4228 = vsel %vm4225, %v4227, %v4223
    %v4229 = vmul.f32 1.0, %v4228
    %v4230 = vrcp.pop %v4004
    %v4231 = vmul.f32 %v4004, %v4230
    %v4232 = vsub.f32 1.0, %v4231
    %v4233 = vmul.f32 %v4230, %v4232
    %v4234 = vadd.f32 %v4230, %v4233
    %vm4235 = vweird.f32 %v4004
    %vm4236 = vweird.f32 %v4230
    %vm4237 = vmor %vm4235, %vm4236
    %v4238 = vsel %vm4237, %v4230, %v4234
    %v4239 = vand.u32 2147483647, %v4004
    %vm4240 = vcmp.eq.f32.partialorder %v4239, 8.507059e+37
    %v4241 = vand.u32 %v4004, 2147483648
    %v4242 = vor.u32 1.1754944e-38, %v4241
    %v4243 = vsel %vm4240, %v4242, %v4238
    %v4244 = vmul.f32 1.0, %v4243
    %4261 = vrot.lane.b32.xlu0 %v4019, 64
    %v4262 = vpop.permute.xlu0 %4261
    %4263 = vrot.lane.b32.xlu0 %v4034, 64
    %v4264 = vpop.permute.xlu0 %4263
    %4265 = vrot.lane.b32.xlu0 %v4049, 64
    %v4266 = vpop.permute.xlu0 %4265
    %4267 = vrot.lane.b32.xlu0 %v4064, 64
    %v4268 = vpop.permute.xlu0 %4267
    %4269 = vrot.lane.b32.xlu0 %v4079, 64
    %v4270 = vpop.permute.xlu0 %4269
    %4271 = vrot.lane.b32.xlu0 %v4094, 64
    %v4272 = vpop.permute.xlu0 %4271
    %4273 = vrot.lane.b32.xlu0 %v4109, 64
    %v4274 = vpop.permute.xlu0 %4273
    %4275 = vrot.lane.b32.xlu0 %v4124, 64
    %v4276 = vpop.permute.xlu0 %4275
    %4277 = vrot.lane.b32.xlu0 %v4139, 64
    %v4278 = vpop.permute.xlu0 %4277
    %4279 = vrot.lane.b32.xlu0 %v4154, 64
    %v4280 = vpop.permute.xlu0 %4279
    %4281 = vrot.lane.b32.xlu0 %v4169, 64
    %v4282 = vpop.permute.xlu0 %4281
    %4283 = vrot.lane.b32.xlu0 %v4184, 64
    %v4284 = vpop.permute.xlu0 %4283
    %4285 = vrot.lane.b32.xlu0 %v4199, 64
    %v4286 = vpop.permute.xlu0 %4285
    %4287 = vrot.lane.b32.xlu0 %v4214, 64
    %v4288 = vpop.permute.xlu0 %4287
    %4289 = vrot.lane.b32.xlu0 %v4229, 64
    %v4290 = vpop.permute.xlu0 %4289
    %4291 = vrot.lane.b32.xlu0 %v4244, 64
    %v4292 = vpop.permute.xlu0 %4291
    %v4309 = vmul.f32 %v3925, %v4262
    %v4310 = vmul.f32 %v3926, %v4264
    %v4311 = vmul.f32 %v3927, %v4266
    %v4312 = vmul.f32 %v3928, %v4268
    %v4313 = vmul.f32 %v3929, %v4270
    %v4314 = vmul.f32 %v3930, %v4272
    %v4315 = vmul.f32 %v3931, %v4274
    %v4316 = vmul.f32 %v3932, %v4276
    %v4317 = vmul.f32 %v3933, %v4278
    %v4318 = vmul.f32 %v3934, %v4280
    %v4319 = vmul.f32 %v3935, %v4282
    %v4320 = vmul.f32 %v3936, %v4284
    %v4321 = vmul.f32 %v3937, %v4286
    %v4322 = vmul.f32 %v3938, %v4288
    %v4323 = vmul.f32 %v3939, %v4290
    %v4324 = vmul.f32 %v3940, %v4292
    %v4325 = vpack.c.bf16 %v4310, %v4309
    %v4326 = vpack.c.bf16 %v4312, %v4311
    %v4327 = vpack.c.bf16 %v4314, %v4313
    %v4328 = vpack.c.bf16 %v4316, %v4315
    %v4329 = vpack.c.bf16 %v4318, %v4317
    %v4330 = vpack.c.bf16 %v4320, %v4319
    %v4331 = vpack.c.bf16 %v4322, %v4321
    %v4332 = vpack.c.bf16 %v4324, %v4323
    %s4333 = scalar_lea.vmem [#allocation6], 128
    %v4334 = vld [vmem:[%s4333] sm:$0xff]
    %v4335 = vld [vmem:[%s4333 + $0x8] sm:$0xff]
    %v4336 = vld [vmem:[%s4333 + $0x10] sm:$0xff]
    %v4337 = vld [vmem:[%s4333 + $0x18] sm:$0xff]
    %v4338 = vld [vmem:[%s4333 + $0x20] sm:$0xff]
    %v4339 = vld [vmem:[%s4333 + $0x28] sm:$0xff]
    %v4340 = vld [vmem:[%s4333 + $0x30] sm:$0xff]
    %v4341 = vld [vmem:[%s4333 + $0x38] sm:$0xff]
    %v4350 = vunpack.c.l.b16 %v4334
    %v4351 = vunpack.c.h.b16 %v4334
    %v4352 = vunpack.c.l.b16 %v4335
    %v4353 = vunpack.c.h.b16 %v4335
    %v4354 = vunpack.c.l.b16 %v4336
    %v4355 = vunpack.c.h.b16 %v4336
    %v4356 = vunpack.c.l.b16 %v4337
    %v4357 = vunpack.c.h.b16 %v4337
    %v4358 = vunpack.c.l.b16 %v4338
    %v4359 = vunpack.c.h.b16 %v4338
    %v4360 = vunpack.c.l.b16 %v4339
    %v4361 = vunpack.c.h.b16 %v4339
    %v4362 = vunpack.c.l.b16 %v4340
    %v4363 = vunpack.c.h.b16 %v4340
    %v4364 = vunpack.c.l.b16 %v4341
    %v4365 = vunpack.c.h.b16 %v4341
    %v4366 = vpack.c.b16 %v4352, %v4350
    %v4367 = vpack.c.b16 %v4353, %v4351
    %v4368 = vpack.c.b16 %v4356, %v4354
    %v4369 = vpack.c.b16 %v4357, %v4355
    %v4370 = vpack.c.b16 %v4360, %v4358
    %v4371 = vpack.c.b16 %v4361, %v4359
    %v4372 = vpack.c.b16 %v4364, %v4362
    %v4373 = vpack.c.b16 %v4365, %v4363
    %v4383 = vsel %vm1705, %v4325, 0
    %v4386 = vsel %vm1705, %v4326, 0
    %v4389 = vsel %vm1705, %v4327, 0
    %v4392 = vsel %vm1705, %v4328, 0
    %v4395 = vsel %vm1705, %v4329, 0
    %v4398 = vsel %vm1705, %v4330, 0
    %v4401 = vsel %vm1705, %v4331, 0
    %v4404 = vsel %vm1705, %v4332, 0
    %4406 = vmatpush.bf16.msra.mxu0 0
    %4407 = vmatpush.bf16.msra.mxu0 0
    %4408 = vmatpush.bf16.msra.mxu0 0
    %4409 = vmatpush.bf16.msra.mxu0 0
    %4410 = vmatpush.bf16.msra.mxu0 %v4372
    %4411 = vmatpush.bf16.msra.mxu0 %v4370
    %4412 = vmatpush.bf16.msra.mxu0 %v4368
    %4413 = vmatpush.bf16.msra.mxu0 %v4366
    %4414 = vmatmul.bf16.gmra.mxu0 %v4383
    %v4415 = vpop.f32.mrf.mxu0
    %v4416 = vadd.f32 0.0, %v4415
    %v4417 = vpop.f32.mrf.mxu0
    %v4418 = vadd.f32 0.0, %v4417
    %4419 = vmatmul.bf16.gmra.mxu0 %v4386
    %v4420 = vpop.f32.mrf.mxu0
    %v4421 = vadd.f32 0.0, %v4420
    %v4422 = vpop.f32.mrf.mxu0
    %v4423 = vadd.f32 0.0, %v4422
    %4424 = vmatmul.bf16.gmra.mxu0 %v4389
    %v4425 = vpop.f32.mrf.mxu0
    %v4426 = vadd.f32 0.0, %v4425
    %v4427 = vpop.f32.mrf.mxu0
    %v4428 = vadd.f32 0.0, %v4427
    %4429 = vmatmul.bf16.gmra.mxu0 %v4392
    %v4430 = vpop.f32.mrf.mxu0
    %v4431 = vadd.f32 0.0, %v4430
    %v4432 = vpop.f32.mrf.mxu0
    %v4433 = vadd.f32 0.0, %v4432
    %4434 = vmatmul.bf16.gmra.mxu0 %v4395
    %v4435 = vpop.f32.mrf.mxu0
    %v4436 = vadd.f32 0.0, %v4435
    %v4437 = vpop.f32.mrf.mxu0
    %v4438 = vadd.f32 0.0, %v4437
    %4439 = vmatmul.bf16.gmra.mxu0 %v4398
    %v4440 = vpop.f32.mrf.mxu0
    %v4441 = vadd.f32 0.0, %v4440
    %v4442 = vpop.f32.mrf.mxu0
    %v4443 = vadd.f32 0.0, %v4442
    %4444 = vmatmul.bf16.gmra.mxu0 %v4401
    %v4445 = vpop.f32.mrf.mxu0
    %v4446 = vadd.f32 0.0, %v4445
    %v4447 = vpop.f32.mrf.mxu0
    %v4448 = vadd.f32 0.0, %v4447
    %4449 = vmatmul.bf16.gmra.mxu0 %v4404
    %v4450 = vpop.f32.mrf.mxu0
    %v4451 = vadd.f32 0.0, %v4450
    %v4452 = vpop.f32.mrf.mxu0
    %v4453 = vadd.f32 0.0, %v4452
    %4454 = vdwg.mxu0
    %4455 = vmatpush.bf16.msra.mxu0 0
    %4456 = vmatpush.bf16.msra.mxu0 0
    %4457 = vmatpush.bf16.msra.mxu0 0
    %4458 = vmatpush.bf16.msra.mxu0 0
    %4459 = vmatpush.bf16.msra.mxu0 %v4373
    %4460 = vmatpush.bf16.msra.mxu0 %v4371
    %4461 = vmatpush.bf16.msra.mxu0 %v4369
    %4462 = vmatpush.bf16.msra.mxu0 %v4367
    %4463 = vmatmul.bf16.gmra.mxu0 %v4383
    %v4464 = vpop.f32.mrf.mxu0
    %v4465 = vadd.f32 0.0, %v4464
    %v4466 = vpop.f32.mrf.mxu0
    %v4467 = vadd.f32 0.0, %v4466
    %4468 = vmatmul.bf16.gmra.mxu0 %v4386
    %v4469 = vpop.f32.mrf.mxu0
    %v4470 = vadd.f32 0.0, %v4469
    %v4471 = vpop.f32.mrf.mxu0
    %v4472 = vadd.f32 0.0, %v4471
    %4473 = vmatmul.bf16.gmra.mxu0 %v4389
    %v4474 = vpop.f32.mrf.mxu0
    %v4475 = vadd.f32 0.0, %v4474
    %v4476 = vpop.f32.mrf.mxu0
    %v4477 = vadd.f32 0.0, %v4476
    %4478 = vmatmul.bf16.gmra.mxu0 %v4392
    %v4479 = vpop.f32.mrf.mxu0
    %v4480 = vadd.f32 0.0, %v4479
    %v4481 = vpop.f32.mrf.mxu0
    %v4482 = vadd.f32 0.0, %v4481
    %4483 = vmatmul.bf16.gmra.mxu0 %v4395
    %v4484 = vpop.f32.mrf.mxu0
    %v4485 = vadd.f32 0.0, %v4484
    %v4486 = vpop.f32.mrf.mxu0
    %v4487 = vadd.f32 0.0, %v4486
    %4488 = vmatmul.bf16.gmra.mxu0 %v4398
    %v4489 = vpop.f32.mrf.mxu0
    %v4490 = vadd.f32 0.0, %v4489
    %v4491 = vpop.f32.mrf.mxu0
    %v4492 = vadd.f32 0.0, %v4491
    %4493 = vmatmul.bf16.gmra.mxu0 %v4401
    %v4494 = vpop.f32.mrf.mxu0
    %v4495 = vadd.f32 0.0, %v4494
    %v4496 = vpop.f32.mrf.mxu0
    %v4497 = vadd.f32 0.0, %v4496
    %4498 = vmatmul.bf16.gmra.mxu0 %v4404
    %v4499 = vpop.f32.mrf.mxu0
    %v4500 = vadd.f32 0.0, %v4499
    %v4501 = vpop.f32.mrf.mxu0
    %v4502 = vadd.f32 0.0, %v4501
    %4503 = vdwg.mxu0
    %v4504 = vld [vmem:[#allocation2] sm:$0xff]
    %v4505 = vld [vmem:[#allocation2 + $0x8] sm:$0xff]
    %v4506 = vld [vmem:[#allocation2 + $0x10] sm:$0xff]
    %v4507 = vld [vmem:[#allocation2 + $0x18] sm:$0xff]
    %v4508 = vld [vmem:[#allocation2 + $0x20] sm:$0xff]
    %v4509 = vld [vmem:[#allocation2 + $0x28] sm:$0xff]
    %v4510 = vld [vmem:[#allocation2 + $0x30] sm:$0xff]
    %v4511 = vld [vmem:[#allocation2 + $0x38] sm:$0xff]
    %v4512 = vld [vmem:[#allocation2 + $0x40] sm:$0xff]
    %v4513 = vld [vmem:[#allocation2 + $0x48] sm:$0xff]
    %v4514 = vld [vmem:[#allocation2 + $0x50] sm:$0xff]
    %v4515 = vld [vmem:[#allocation2 + $0x58] sm:$0xff]
    %v4516 = vld [vmem:[#allocation2 + $0x60] sm:$0xff]
    %v4517 = vld [vmem:[#allocation2 + $0x68] sm:$0xff]
    %v4518 = vld [vmem:[#allocation2 + $0x70] sm:$0xff]
    %v4519 = vld [vmem:[#allocation2 + $0x78] sm:$0xff]
    %v4520 = vadd.f32 %v4504, %v4416
    %v4521 = vadd.f32 %v4505, %v4418
    %v4522 = vadd.f32 %v4506, %v4421
    %v4523 = vadd.f32 %v4507, %v4423
    %v4524 = vadd.f32 %v4508, %v4426
    %v4525 = vadd.f32 %v4509, %v4428
    %v4526 = vadd.f32 %v4510, %v4431
    %v4527 = vadd.f32 %v4511, %v4433
    %v4528 = vadd.f32 %v4512, %v4436
    %v4529 = vadd.f32 %v4513, %v4438
    %v4530 = vadd.f32 %v4514, %v4441
    %v4531 = vadd.f32 %v4515, %v4443
    %v4532 = vadd.f32 %v4516, %v4446
    %v4533 = vadd.f32 %v4517, %v4448
    %v4534 = vadd.f32 %v4518, %v4451
    %v4535 = vadd.f32 %v4519, %v4453
    %4536 = vst [vmem:[#allocation2] sm:$0xff] %v4520
    %4537 = vst [vmem:[#allocation2 + $0x8] sm:$0xff] %v4521
    %4538 = vst [vmem:[#allocation2 + $0x10] sm:$0xff] %v4522
    %4539 = vst [vmem:[#allocation2 + $0x18] sm:$0xff] %v4523
    %4540 = vst [vmem:[#allocation2 + $0x20] sm:$0xff] %v4524
    %4541 = vst [vmem:[#allocation2 + $0x28] sm:$0xff] %v4525
    %4542 = vst [vmem:[#allocation2 + $0x30] sm:$0xff] %v4526
    %4543 = vst [vmem:[#allocation2 + $0x38] sm:$0xff] %v4527
    %4544 = vst [vmem:[#allocation2 + $0x40] sm:$0xff] %v4528
    %4545 = vst [vmem:[#allocation2 + $0x48] sm:$0xff] %v4529
    %4546 = vst [vmem:[#allocation2 + $0x50] sm:$0xff] %v4530
    %4547 = vst [vmem:[#allocation2 + $0x58] sm:$0xff] %v4531
    %4548 = vst [vmem:[#allocation2 + $0x60] sm:$0xff] %v4532
    %4549 = vst [vmem:[#allocation2 + $0x68] sm:$0xff] %v4533
    %4550 = vst [vmem:[#allocation2 + $0x70] sm:$0xff] %v4534
    %4551 = vst [vmem:[#allocation2 + $0x78] sm:$0xff] %v4535
    %v4552 = vperm.slane %v55, 1
    %v4553 = vadd.f32 %v4465, %v4552
    %v4554 = vadd.f32 %v4467, %v4552
    %v4555 = vadd.f32 %v4470, %v4552
    %v4556 = vadd.f32 %v4472, %v4552
    %v4557 = vadd.f32 %v4475, %v4552
    %v4558 = vadd.f32 %v4477, %v4552
    %v4559 = vadd.f32 %v4480, %v4552
    %v4560 = vadd.f32 %v4482, %v4552
    %v4561 = vadd.f32 %v4485, %v4552
    %v4562 = vadd.f32 %v4487, %v4552
    %v4563 = vadd.f32 %v4490, %v4552
    %v4564 = vadd.f32 %v4492, %v4552
    %v4565 = vadd.f32 %v4495, %v4552
    %v4566 = vadd.f32 %v4497, %v4552
    %v4567 = vadd.f32 %v4500, %v4552
    %v4568 = vadd.f32 %v4502, %v4552
    %v4569 = vadd.f32 %v4553, %v3280
    %v4570 = vadd.f32 %v4554, %v3281
    %v4571 = vadd.f32 %v4555, %v3282
    %v4572 = vadd.f32 %v4556, %v3283
    %v4573 = vadd.f32 %v4557, %v3284
    %v4574 = vadd.f32 %v4558, %v3285
    %v4575 = vadd.f32 %v4559, %v3286
    %v4576 = vadd.f32 %v4560, %v3287
    %v4577 = vadd.f32 %v4561, %v3288
    %v4578 = vadd.f32 %v4562, %v3289
    %v4579 = vadd.f32 %v4563, %v3290
    %v4580 = vadd.f32 %v4564, %v3291
    %v4581 = vadd.f32 %v4565, %v3292
    %v4582 = vadd.f32 %v4566, %v3293
    %v4583 = vadd.f32 %v4567, %v3294
    %v4584 = vadd.f32 %v4568, %v3295
    %v4585 = vpack.c.bf16 %v4569, %v4569
    %v4586 = vpack.c.bf16 %v4570, %v4570
    %v4587 = vpack.c.bf16 %v4571, %v4571
    %v4588 = vpack.c.bf16 %v4572, %v4572
    %v4589 = vpack.c.bf16 %v4573, %v4573
    %v4590 = vpack.c.bf16 %v4574, %v4574
    %v4591 = vpack.c.bf16 %v4575, %v4575
    %v4592 = vpack.c.bf16 %v4576, %v4576
    %v4593 = vpack.c.bf16 %v4577, %v4577
    %v4594 = vpack.c.bf16 %v4578, %v4578
    %v4595 = vpack.c.bf16 %v4579, %v4579
    %v4596 = vpack.c.bf16 %v4580, %v4580
    %v4597 = vpack.c.bf16 %v4581, %v4581
    %v4598 = vpack.c.bf16 %v4582, %v4582
    %v4599 = vpack.c.bf16 %v4583, %v4583
    %v4600 = vpack.c.bf16 %v4584, %v4584
    %v4601 = vrot.slane %v4569, 6
    %v4602 = vrot.slane %v4570, 6
    %v4603 = vrot.slane %v4571, 6
    %v4604 = vrot.slane %v4572, 6
    %v4605 = vrot.slane %v4573, 6
    %v4606 = vrot.slane %v4574, 6
    %v4607 = vrot.slane %v4575, 6
    %v4608 = vrot.slane %v4576, 6
    %v4609 = vrot.slane %v4577, 6
    %v4610 = vrot.slane %v4578, 6
    %v4611 = vrot.slane %v4579, 6
    %v4612 = vrot.slane %v4580, 6
    %v4613 = vrot.slane %v4581, 6
    %v4614 = vrot.slane %v4582, 6
    %v4615 = vrot.slane %v4583, 6
    %v4616 = vrot.slane %v4584, 6
    %v4617 = vsel %vm1941, %v4615, %v4616
    %v4618 = vsel %vm1941, %v4614, %v4615
    %v4619 = vsel %vm1941, %v4613, %v4614
    %v4620 = vsel %vm1941, %v4612, %v4613
    %v4621 = vsel %vm1941, %v4611, %v4612
    %v4622 = vsel %vm1941, %v4610, %v4611
    %v4623 = vsel %vm1941, %v4609, %v4610
    %v4624 = vsel %vm1941, %v4608, %v4609
    %v4625 = vsel %vm1941, %v4607, %v4608
    %v4626 = vsel %vm1941, %v4606, %v4607
    %v4627 = vsel %vm1941, %v4605, %v4606
    %v4628 = vsel %vm1941, %v4604, %v4605
    %v4629 = vsel %vm1941, %v4603, %v4604
    %v4630 = vsel %vm1941, %v4602, %v4603
    %v4631 = vsel %vm1941, %v4601, %v4602
    %v4632 = vsel %vm1941, %v4616, %v4601
    %v4633 = vpack.c.bf16 %v4632, %v4632
    %v4634 = vpack.c.bf16 %v4631, %v4631
    %v4635 = vpack.c.bf16 %v4630, %v4630
    %v4636 = vpack.c.bf16 %v4629, %v4629
    %v4637 = vpack.c.bf16 %v4628, %v4628
    %v4638 = vpack.c.bf16 %v4627, %v4627
    %v4639 = vpack.c.bf16 %v4626, %v4626
    %v4640 = vpack.c.bf16 %v4625, %v4625
    %v4641 = vpack.c.bf16 %v4624, %v4624
    %v4642 = vpack.c.bf16 %v4623, %v4623
    %v4643 = vpack.c.bf16 %v4622, %v4622
    %v4644 = vpack.c.bf16 %v4621, %v4621
    %v4645 = vpack.c.bf16 %v4620, %v4620
    %v4646 = vpack.c.bf16 %v4619, %v4619
    %v4647 = vpack.c.bf16 %v4618, %v4618
    %v4648 = vpack.c.bf16 %v4617, %v4617
    %v4649 = vsel %vm2006, %v4633, 0
    %v4650 = vsel %vm2007, %v4634, 0
    %v4651 = vsel %vm2008, %v4635, 0
    %v4652 = vsel %vm2009, %v4636, 0
    %v4653 = vsel %vm2010, %v4637, 0
    %v4654 = vsel %vm2011, %v4638, 0
    %v4655 = vsel %vm2012, %v4639, 0
    %v4656 = vsel %vm2013, %v4640, 0
    %v4657 = vsel %vm2014, %v4641, 0
    %v4658 = vsel %vm2015, %v4642, 0
    %v4659 = vsel %vm2016, %v4643, 0
    %v4660 = vsel %vm2017, %v4644, 0
    %v4661 = vsel %vm2018, %v4645, 0
    %v4662 = vsel %vm2019, %v4646, 0
    %v4663 = vsel %vm2020, %v4647, 0
    %v4664 = vsel %vm2021, %v4648, 0
    %v4665 = vrot.slane %v4569, 2
    %v4666 = vrot.slane %v4570, 2
    %v4667 = vrot.slane %v4571, 2
    %v4668 = vrot.slane %v4572, 2
    %v4669 = vrot.slane %v4573, 2
    %v4670 = vrot.slane %v4574, 2
    %v4671 = vrot.slane %v4575, 2
    %v4672 = vrot.slane %v4576, 2
    %v4673 = vrot.slane %v4577, 2
    %v4674 = vrot.slane %v4578, 2
    %v4675 = vrot.slane %v4579, 2
    %v4676 = vrot.slane %v4580, 2
    %v4677 = vrot.slane %v4581, 2
    %v4678 = vrot.slane %v4582, 2
    %v4679 = vrot.slane %v4583, 2
    %v4680 = vrot.slane %v4584, 2
    %v4681 = vsel %vm2054, %v4679, %v4680
    %v4682 = vsel %vm2054, %v4678, %v4679
    %v4683 = vsel %vm2054, %v4677, %v4678
    %v4684 = vsel %vm2054, %v4676, %v4677
    %v4685 = vsel %vm2054, %v4675, %v4676
    %v4686 = vsel %vm2054, %v4674, %v4675
    %v4687 = vsel %vm2054, %v4673, %v4674
    %v4688 = vsel %vm2054, %v4672, %v4673
    %v4689 = vsel %vm2054, %v4671, %v4672
    %v4690 = vsel %vm2054, %v4670, %v4671
    %v4691 = vsel %vm2054, %v4669, %v4670
    %v4692 = vsel %vm2054, %v4668, %v4669
    %v4693 = vsel %vm2054, %v4667, %v4668
    %v4694 = vsel %vm2054, %v4666, %v4667
    %v4695 = vsel %vm2054, %v4665, %v4666
    %v4696 = vsel %vm2054, %v4680, %v4665
    %v4697 = vpack.c.bf16 %v4695, %v4695
    %v4698 = vpack.c.bf16 %v4694, %v4694
    %v4699 = vpack.c.bf16 %v4693, %v4693
    %v4700 = vpack.c.bf16 %v4692, %v4692
    %v4701 = vpack.c.bf16 %v4691, %v4691
    %v4702 = vpack.c.bf16 %v4690, %v4690
    %v4703 = vpack.c.bf16 %v4689, %v4689
    %v4704 = vpack.c.bf16 %v4688, %v4688
    %v4705 = vpack.c.bf16 %v4687, %v4687
    %v4706 = vpack.c.bf16 %v4686, %v4686
    %v4707 = vpack.c.bf16 %v4685, %v4685
    %v4708 = vpack.c.bf16 %v4684, %v4684
    %v4709 = vpack.c.bf16 %v4683, %v4683
    %v4710 = vpack.c.bf16 %v4682, %v4682
    %v4711 = vpack.c.bf16 %v4681, %v4681
    %v4712 = vpack.c.bf16 %v4696, %v4696
    %v4713 = vsel %vm2119, %v4697, 0
    %v4714 = vsel %vm2120, %v4698, 0
    %v4715 = vsel %vm2121, %v4699, 0
    %v4716 = vsel %vm2122, %v4700, 0
    %v4717 = vsel %vm2123, %v4701, 0
    %v4718 = vsel %vm2124, %v4702, 0
    %v4719 = vsel %vm2125, %v4703, 0
    %v4720 = vsel %vm2126, %v4704, 0
    %v4721 = vsel %vm2127, %v4705, 0
    %v4722 = vsel %vm2128, %v4706, 0
    %v4723 = vsel %vm2129, %v4707, 0
    %v4724 = vsel %vm2130, %v4708, 0
    %v4725 = vsel %vm2131, %v4709, 0
    %v4726 = vsel %vm2132, %v4710, 0
    %v4727 = vsel %vm2133, %v4711, 0
    %v4728 = vsel %vm2134, %v4712, 0
    %v4745 = vunpack.c.l.b16 %v4649
    %v4746 = vunpack.c.l.b16 %v4650
    %v4747 = vunpack.c.l.b16 %v4651
    %v4748 = vunpack.c.l.b16 %v4652
    %v4749 = vunpack.c.l.b16 %v4653
    %v4750 = vunpack.c.l.b16 %v4654
    %v4751 = vunpack.c.l.b16 %v4655
    %v4752 = vunpack.c.l.b16 %v4656
    %v4753 = vunpack.c.l.b16 %v4657
    %v4754 = vunpack.c.l.b16 %v4658
    %v4755 = vunpack.c.l.b16 %v4659
    %v4756 = vunpack.c.l.b16 %v4660
    %v4757 = vunpack.c.l.b16 %v4661
    %v4758 = vunpack.c.l.b16 %v4662
    %v4759 = vunpack.c.l.b16 %v4663
    %v4760 = vunpack.c.l.b16 %v4664
    %v4761 = vpack.c.b16 %v4746, %v4745
    %v4762 = vpack.c.b16 %v4748, %v4747
    %v4763 = vpack.c.b16 %v4750, %v4749
    %v4764 = vpack.c.b16 %v4752, %v4751
    %v4765 = vpack.c.b16 %v4754, %v4753
    %v4766 = vpack.c.b16 %v4756, %v4755
    %v4767 = vpack.c.b16 %v4758, %v4757
    %v4768 = vpack.c.b16 %v4760, %v4759
    %v4793 = vunpack.c.l.b16 %v4585
    %v4794 = vunpack.c.l.b16 %v4586
    %v4795 = vunpack.c.l.b16 %v4587
    %v4796 = vunpack.c.l.b16 %v4588
    %v4797 = vunpack.c.l.b16 %v4589
    %v4798 = vunpack.c.l.b16 %v4590
    %v4799 = vunpack.c.l.b16 %v4591
    %v4800 = vunpack.c.l.b16 %v4592
    %v4801 = vunpack.c.l.b16 %v4593
    %v4802 = vunpack.c.l.b16 %v4594
    %v4803 = vunpack.c.l.b16 %v4595
    %v4804 = vunpack.c.l.b16 %v4596
    %v4805 = vunpack.c.l.b16 %v4597
    %v4806 = vunpack.c.l.b16 %v4598
    %v4807 = vunpack.c.l.b16 %v4599
    %v4808 = vunpack.c.l.b16 %v4600
    %v4809 = vpack.c.b16 %v4794, %v4793
    %v4810 = vpack.c.b16 %v4796, %v4795
    %v4811 = vpack.c.b16 %v4798, %v4797
    %v4812 = vpack.c.b16 %v4800, %v4799
    %v4813 = vpack.c.b16 %v4802, %v4801
    %v4814 = vpack.c.b16 %v4804, %v4803
    %v4815 = vpack.c.b16 %v4806, %v4805
    %v4816 = vpack.c.b16 %v4808, %v4807
    %v4841 = vunpack.c.l.b16 %v4713
    %v4842 = vunpack.c.l.b16 %v4714
    %v4843 = vunpack.c.l.b16 %v4715
    %v4844 = vunpack.c.l.b16 %v4716
    %v4845 = vunpack.c.l.b16 %v4717
    %v4846 = vunpack.c.l.b16 %v4718
    %v4847 = vunpack.c.l.b16 %v4719
    %v4848 = vunpack.c.l.b16 %v4720
    %v4849 = vunpack.c.l.b16 %v4721
    %v4850 = vunpack.c.l.b16 %v4722
    %v4851 = vunpack.c.l.b16 %v4723
    %v4852 = vunpack.c.l.b16 %v4724
    %v4853 = vunpack.c.l.b16 %v4725
    %v4854 = vunpack.c.l.b16 %v4726
    %v4855 = vunpack.c.l.b16 %v4727
    %v4856 = vunpack.c.l.b16 %v4728
    %v4857 = vpack.c.b16 %v4842, %v4841
    %v4858 = vpack.c.b16 %v4844, %v4843
    %v4859 = vpack.c.b16 %v4846, %v4845
    %v4860 = vpack.c.b16 %v4848, %v4847
    %v4861 = vpack.c.b16 %v4850, %v4849
    %v4862 = vpack.c.b16 %v4852, %v4851
    %v4863 = vpack.c.b16 %v4854, %v4853
    %v4864 = vpack.c.b16 %v4856, %v4855
    %s4873 = scalar_lea.vmem [#allocation3], 576
    %v4874 = vld [vmem:[%s4873] sm:$0xf]
    %v4875 = vld [vmem:[%s4873 + $0x4] sm:$0xf]
    %v4876 = vld [vmem:[%s4873 + $0x8] sm:$0xf]
    %v4877 = vld [vmem:[%s4873 + $0xc] sm:$0xf]
    %v4878 = vld [vmem:[%s4873 + $0x10] sm:$0xf]
    %v4879 = vld [vmem:[%s4873 + $0x14] sm:$0xf]
    %v4880 = vld [vmem:[%s4873 + $0x18] sm:$0xf]
    %v4881 = vld [vmem:[%s4873 + $0x1c] sm:$0xf]
    %v4882 = vld [vmem:[%s4873 + $0x20] sm:$0xf]
    %v4883 = vld [vmem:[%s4873 + $0x24] sm:$0xf]
    %v4884 = vld [vmem:[%s4873 + $0x28] sm:$0xf]
    %v4885 = vld [vmem:[%s4873 + $0x2c] sm:$0xf]
    %v4886 = vld [vmem:[%s4873 + $0x30] sm:$0xf]
    %v4887 = vld [vmem:[%s4873 + $0x34] sm:$0xf]
    %v4888 = vld [vmem:[%s4873 + $0x38] sm:$0xf]
    %v4889 = vld [vmem:[%s4873 + $0x3c] sm:$0xf]
    %v4890 = vld [vmem:[%s4873 + $0x40] sm:$0xf]
    %v4891 = vld [vmem:[%s4873 + $0x44] sm:$0xf]
    %v4892 = vld [vmem:[%s4873 + $0x48] sm:$0xf]
    %v4893 = vld [vmem:[%s4873 + $0x4c] sm:$0xf]
    %v4894 = vld [vmem:[%s4873 + $0x50] sm:$0xf]
    %v4895 = vld [vmem:[%s4873 + $0x54] sm:$0xf]
    %v4896 = vld [vmem:[%s4873 + $0x58] sm:$0xf]
    %v4897 = vld [vmem:[%s4873 + $0x5c] sm:$0xf]
    %v4898 = vld [vmem:[%s4873 + $0x60] sm:$0xf]
    %v4899 = vld [vmem:[%s4873 + $0x64] sm:$0xf]
    %v4900 = vld [vmem:[%s4873 + $0x68] sm:$0xf]
    %v4901 = vld [vmem:[%s4873 + $0x6c] sm:$0xf]
    %v4902 = vld [vmem:[%s4873 + $0x70] sm:$0xf]
    %v4903 = vld [vmem:[%s4873 + $0x74] sm:$0xf]
    %v4904 = vld [vmem:[%s4873 + $0x78] sm:$0xf]
    %v4905 = vld [vmem:[%s4873 + $0x7c] sm:$0xf]
    %v4906 = vld [vmem:[%s4873 + $0x80] sm:$0xf]
    %v4907 = vld [vmem:[%s4873 + $0x84] sm:$0xf]
    %v4908 = vld [vmem:[%s4873 + $0x88] sm:$0xf]
    %v4909 = vld [vmem:[%s4873 + $0x8c] sm:$0xf]
    %v4910 = vld [vmem:[%s4873 + $0x90] sm:$0xf]
    %v4911 = vld [vmem:[%s4873 + $0x94] sm:$0xf]
    %v4912 = vld [vmem:[%s4873 + $0x98] sm:$0xf]
    %v4913 = vld [vmem:[%s4873 + $0x9c] sm:$0xf]
    %v4914 = vld [vmem:[%s4873 + $0xa0] sm:$0xf]
    %v4915 = vld [vmem:[%s4873 + $0xa4] sm:$0xf]
    %v4916 = vld [vmem:[%s4873 + $0xa8] sm:$0xf]
    %v4917 = vld [vmem:[%s4873 + $0xac] sm:$0xf]
    %v4918 = vld [vmem:[%s4873 + $0xb0] sm:$0xf]
    %v4919 = vld [vmem:[%s4873 + $0xb4] sm:$0xf]
    %v4920 = vld [vmem:[%s4873 + $0xb8] sm:$0xf]
    %v4921 = vld [vmem:[%s4873 + $0xbc] sm:$0xf]
    %v4922 = vperm.slane %v54, 4
    %v4971 = vunpack.c.l.b16 %v4874
    %v4972 = vunpack.c.l.b16 %v4875
    %v4973 = vunpack.c.l.b16 %v4876
    %v4974 = vunpack.c.l.b16 %v4877
    %v4975 = vunpack.c.l.b16 %v4878
    %v4976 = vunpack.c.l.b16 %v4879
    %v4977 = vunpack.c.l.b16 %v4880
    %v4978 = vunpack.c.l.b16 %v4881
    %v4979 = vunpack.c.l.b16 %v4882
    %v4980 = vunpack.c.l.b16 %v4883
    %v4981 = vunpack.c.l.b16 %v4884
    %v4982 = vunpack.c.l.b16 %v4885
    %v4983 = vunpack.c.l.b16 %v4886
    %v4984 = vunpack.c.l.b16 %v4887
    %v4985 = vunpack.c.l.b16 %v4888
    %v4986 = vunpack.c.l.b16 %v4889
    %v4987 = vunpack.c.l.b16 %v4890
    %v4988 = vunpack.c.l.b16 %v4891
    %v4989 = vunpack.c.l.b16 %v4892
    %v4990 = vunpack.c.l.b16 %v4893
    %v4991 = vunpack.c.l.b16 %v4894
    %v4992 = vunpack.c.l.b16 %v4895
    %v4993 = vunpack.c.l.b16 %v4896
    %v4994 = vunpack.c.l.b16 %v4897
    %v4995 = vunpack.c.l.b16 %v4898
    %v4996 = vunpack.c.l.b16 %v4899
    %v4997 = vunpack.c.l.b16 %v4900
    %v4998 = vunpack.c.l.b16 %v4901
    %v4999 = vunpack.c.l.b16 %v4902
    %v5000 = vunpack.c.l.b16 %v4903
    %v5001 = vunpack.c.l.b16 %v4904
    %v5002 = vunpack.c.l.b16 %v4905
    %v5003 = vunpack.c.l.b16 %v4906
    %v5004 = vunpack.c.l.b16 %v4907
    %v5005 = vunpack.c.l.b16 %v4908
    %v5006 = vunpack.c.l.b16 %v4909
    %v5007 = vunpack.c.l.b16 %v4910
    %v5008 = vunpack.c.l.b16 %v4911
    %v5009 = vunpack.c.l.b16 %v4912
    %v5010 = vunpack.c.l.b16 %v4913
    %v5011 = vunpack.c.l.b16 %v4914
    %v5012 = vunpack.c.l.b16 %v4915
    %v5013 = vunpack.c.l.b16 %v4916
    %v5014 = vunpack.c.l.b16 %v4917
    %v5015 = vunpack.c.l.b16 %v4918
    %v5016 = vunpack.c.l.b16 %v4919
    %v5017 = vunpack.c.l.b16 %v4920
    %v5018 = vunpack.c.l.b16 %v4921
    %v5019 = vpack.c.b16 %v4972, %v4971
    %v5020 = vpack.c.b16 %v4974, %v4973
    %v5021 = vpack.c.b16 %v4976, %v4975
    %v5022 = vpack.c.b16 %v4978, %v4977
    %v5023 = vpack.c.b16 %v4980, %v4979
    %v5024 = vpack.c.b16 %v4982, %v4981
    %v5025 = vpack.c.b16 %v4984, %v4983
    %v5026 = vpack.c.b16 %v4986, %v4985
    %v5027 = vpack.c.b16 %v4988, %v4987
    %v5028 = vpack.c.b16 %v4990, %v4989
    %v5029 = vpack.c.b16 %v4992, %v4991
    %v5030 = vpack.c.b16 %v4994, %v4993
    %v5031 = vpack.c.b16 %v4996, %v4995
    %v5032 = vpack.c.b16 %v4998, %v4997
    %v5033 = vpack.c.b16 %v5000, %v4999
    %v5034 = vpack.c.b16 %v5002, %v5001
    %v5035 = vpack.c.b16 %v5004, %v5003
    %v5036 = vpack.c.b16 %v5006, %v5005
    %v5037 = vpack.c.b16 %v5008, %v5007
    %v5038 = vpack.c.b16 %v5010, %v5009
    %v5039 = vpack.c.b16 %v5012, %v5011
    %v5040 = vpack.c.b16 %v5014, %v5013
    %v5041 = vpack.c.b16 %v5016, %v5015
    %v5042 = vpack.c.b16 %v5018, %v5017
    %5067 = vmatpush.bf16.msra.mxu0 %v5026
    %5068 = vmatpush.bf16.msra.mxu0 %v5025
    %5069 = vmatpush.bf16.msra.mxu0 %v5024
    %5070 = vmatpush.bf16.msra.mxu0 %v5023
    %5071 = vmatpush.bf16.msra.mxu0 %v5022
    %5072 = vmatpush.bf16.msra.mxu0 %v5021
    %5073 = vmatpush.bf16.msra.mxu0 %v5020
    %5074 = vmatpush.bf16.msra.mxu0 %v5019
    %5075 = vmatmul.bf16.gmra.mxu0 %v4761
    %v5076 = vpop.f32.mrf.mxu0
    %v5077 = vadd.f32 %v4922, %v5076
    %v5078 = vpop.f32.mrf.mxu0
    %v5079 = vadd.f32 %v4922, %v5078
    %5080 = vmatmul.bf16.gmra.mxu0 %v4762
    %v5081 = vpop.f32.mrf.mxu0
    %v5082 = vadd.f32 %v4922, %v5081
    %v5083 = vpop.f32.mrf.mxu0
    %v5084 = vadd.f32 %v4922, %v5083
    %5085 = vmatmul.bf16.gmra.mxu0 %v4763
    %v5086 = vpop.f32.mrf.mxu0
    %v5087 = vadd.f32 %v4922, %v5086
    %v5088 = vpop.f32.mrf.mxu0
    %v5089 = vadd.f32 %v4922, %v5088
    %5090 = vmatmul.bf16.gmra.mxu0 %v4764
    %v5091 = vpop.f32.mrf.mxu0
    %v5092 = vadd.f32 %v4922, %v5091
    %v5093 = vpop.f32.mrf.mxu0
    %v5094 = vadd.f32 %v4922, %v5093
    %5095 = vmatmul.bf16.gmra.mxu0 %v4765
    %v5096 = vpop.f32.mrf.mxu0
    %v5097 = vadd.f32 %v4922, %v5096
    %v5098 = vpop.f32.mrf.mxu0
    %v5099 = vadd.f32 %v4922, %v5098
    %5100 = vmatmul.bf16.gmra.mxu0 %v4766
    %v5101 = vpop.f32.mrf.mxu0
    %v5102 = vadd.f32 %v4922, %v5101
    %v5103 = vpop.f32.mrf.mxu0
    %v5104 = vadd.f32 %v4922, %v5103
    %5105 = vmatmul.bf16.gmra.mxu0 %v4767
    %v5106 = vpop.f32.mrf.mxu0
    %v5107 = vadd.f32 %v4922, %v5106
    %v5108 = vpop.f32.mrf.mxu0
    %v5109 = vadd.f32 %v4922, %v5108
    %5110 = vmatmul.bf16.gmra.mxu0 %v4768
    %v5111 = vpop.f32.mrf.mxu0
    %v5112 = vadd.f32 %v4922, %v5111
    %v5113 = vpop.f32.mrf.mxu0
    %v5114 = vadd.f32 %v4922, %v5113
    %5115 = vdwg.mxu0
    %5116 = vmatpush.bf16.msra.mxu0 %v5034
    %5117 = vmatpush.bf16.msra.mxu0 %v5033
    %5118 = vmatpush.bf16.msra.mxu0 %v5032
    %5119 = vmatpush.bf16.msra.mxu0 %v5031
    %5120 = vmatpush.bf16.msra.mxu0 %v5030
    %5121 = vmatpush.bf16.msra.mxu0 %v5029
    %5122 = vmatpush.bf16.msra.mxu0 %v5028
    %5123 = vmatpush.bf16.msra.mxu0 %v5027
    %5124 = vmatmul.bf16.gmra.mxu0 %v4809
    %v5125 = vpop.f32.mrf.mxu0
    %v5126 = vadd.f32 %v5077, %v5125
    %v5127 = vpop.f32.mrf.mxu0
    %v5128 = vadd.f32 %v5079, %v5127
    %5129 = vmatmul.bf16.gmra.mxu0 %v4810
    %v5130 = vpop.f32.mrf.mxu0
    %v5131 = vadd.f32 %v5082, %v5130
    %v5132 = vpop.f32.mrf.mxu0
    %v5133 = vadd.f32 %v5084, %v5132
    %5134 = vmatmul.bf16.gmra.mxu0 %v4811
    %v5135 = vpop.f32.mrf.mxu0
    %v5136 = vadd.f32 %v5087, %v5135
    %v5137 = vpop.f32.mrf.mxu0
    %v5138 = vadd.f32 %v5089, %v5137
    %5139 = vmatmul.bf16.gmra.mxu0 %v4812
    %v5140 = vpop.f32.mrf.mxu0
    %v5141 = vadd.f32 %v5092, %v5140
    %v5142 = vpop.f32.mrf.mxu0
    %v5143 = vadd.f32 %v5094, %v5142
    %5144 = vmatmul.bf16.gmra.mxu0 %v4813
    %v5145 = vpop.f32.mrf.mxu0
    %v5146 = vadd.f32 %v5097, %v5145
    %v5147 = vpop.f32.mrf.mxu0
    %v5148 = vadd.f32 %v5099, %v5147
    %5149 = vmatmul.bf16.gmra.mxu0 %v4814
    %v5150 = vpop.f32.mrf.mxu0
    %v5151 = vadd.f32 %v5102, %v5150
    %v5152 = vpop.f32.mrf.mxu0
    %v5153 = vadd.f32 %v5104, %v5152
    %5154 = vmatmul.bf16.gmra.mxu0 %v4815
    %v5155 = vpop.f32.mrf.mxu0
    %v5156 = vadd.f32 %v5107, %v5155
    %v5157 = vpop.f32.mrf.mxu0
    %v5158 = vadd.f32 %v5109, %v5157
    %5159 = vmatmul.bf16.gmra.mxu0 %v4816
    %v5160 = vpop.f32.mrf.mxu0
    %v5161 = vadd.f32 %v5112, %v5160
    %v5162 = vpop.f32.mrf.mxu0
    %v5163 = vadd.f32 %v5114, %v5162
    %5164 = vdwg.mxu0
    %5165 = vmatpush.bf16.msra.mxu0 %v5042
    %5166 = vmatpush.bf16.msra.mxu0 %v5041
    %5167 = vmatpush.bf16.msra.mxu0 %v5040
    %5168 = vmatpush.bf16.msra.mxu0 %v5039
    %5169 = vmatpush.bf16.msra.mxu0 %v5038
    %5170 = vmatpush.bf16.msra.mxu0 %v5037
    %5171 = vmatpush.bf16.msra.mxu0 %v5036
    %5172 = vmatpush.bf16.msra.mxu0 %v5035
    %5173 = vmatmul.bf16.gmra.mxu0 %v4857
    %v5174 = vpop.f32.mrf.mxu0
    %v5175 = vadd.f32 %v5126, %v5174
    %v5176 = vpop.f32.mrf.mxu0
    %v5177 = vadd.f32 %v5128, %v5176
    %5178 = vmatmul.bf16.gmra.mxu0 %v4858
    %v5179 = vpop.f32.mrf.mxu0
    %v5180 = vadd.f32 %v5131, %v5179
    %v5181 = vpop.f32.mrf.mxu0
    %v5182 = vadd.f32 %v5133, %v5181
    %5183 = vmatmul.bf16.gmra.mxu0 %v4859
    %v5184 = vpop.f32.mrf.mxu0
    %v5185 = vadd.f32 %v5136, %v5184
    %v5186 = vpop.f32.mrf.mxu0
    %v5187 = vadd.f32 %v5138, %v5186
    %5188 = vmatmul.bf16.gmra.mxu0 %v4860
    %v5189 = vpop.f32.mrf.mxu0
    %v5190 = vadd.f32 %v5141, %v5189
    %v5191 = vpop.f32.mrf.mxu0
    %v5192 = vadd.f32 %v5143, %v5191
    %5193 = vmatmul.bf16.gmra.mxu0 %v4861
    %v5194 = vpop.f32.mrf.mxu0
    %v5195 = vadd.f32 %v5146, %v5194
    %v5196 = vpop.f32.mrf.mxu0
    %v5197 = vadd.f32 %v5148, %v5196
    %5198 = vmatmul.bf16.gmra.mxu0 %v4862
    %v5199 = vpop.f32.mrf.mxu0
    %v5200 = vadd.f32 %v5151, %v5199
    %v5201 = vpop.f32.mrf.mxu0
    %v5202 = vadd.f32 %v5153, %v5201
    %5203 = vmatmul.bf16.gmra.mxu0 %v4863
    %v5204 = vpop.f32.mrf.mxu0
    %v5205 = vadd.f32 %v5156, %v5204
    %v5206 = vpop.f32.mrf.mxu0
    %v5207 = vadd.f32 %v5158, %v5206
    %5208 = vmatmul.bf16.gmra.mxu0 %v4864
    %v5209 = vpop.f32.mrf.mxu0
    %v5210 = vadd.f32 %v5161, %v5209
    %v5211 = vpop.f32.mrf.mxu0
    %v5212 = vadd.f32 %v5163, %v5211
    %5213 = vdwg.mxu0
    %v5214 = vtanh.pop %v5175
    %v5215 = vtanh.pop %v5177
    %v5216 = vtanh.pop %v5180
    %v5217 = vtanh.pop %v5182
    %v5218 = vtanh.pop %v5185
    %v5219 = vtanh.pop %v5187
    %v5220 = vtanh.pop %v5190
    %v5221 = vtanh.pop %v5192
    %v5222 = vtanh.pop %v5195
    %v5223 = vtanh.pop %v5197
    %v5224 = vtanh.pop %v5200
    %v5225 = vtanh.pop %v5202
    %v5226 = vtanh.pop %v5205
    %v5227 = vtanh.pop %v5207
    %v5228 = vtanh.pop %v5210
    %v5229 = vtanh.pop %v5212
    %v5230 = vxor.u32 %v5175, 2147483648
    %v5231 = vxor.u32 %v5177, 2147483648
    %v5232 = vxor.u32 %v5180, 2147483648
    %v5233 = vxor.u32 %v5182, 2147483648
    %v5234 = vxor.u32 %v5185, 2147483648
    %v5235 = vxor.u32 %v5187, 2147483648
    %v5236 = vxor.u32 %v5190, 2147483648
    %v5237 = vxor.u32 %v5192, 2147483648
    %v5238 = vxor.u32 %v5195, 2147483648
    %v5239 = vxor.u32 %v5197, 2147483648
    %v5240 = vxor.u32 %v5200, 2147483648
    %v5241 = vxor.u32 %v5202, 2147483648
    %v5242 = vxor.u32 %v5205, 2147483648
    %v5243 = vxor.u32 %v5207, 2147483648
    %v5244 = vxor.u32 %v5210, 2147483648
    %v5245 = vxor.u32 %v5212, 2147483648
    %v5246 = vmul.f32 %v5230, 1.442695
    %v5247 = vpow.pop %v5246
    %v5248 = vmul.f32 %v5231, 1.442695
    %v5249 = vpow.pop %v5248
    %v5250 = vmul.f32 %v5232, 1.442695
    %v5251 = vpow.pop %v5250
    %v5252 = vmul.f32 %v5233, 1.442695
    %v5253 = vpow.pop %v5252
    %v5254 = vmul.f32 %v5234, 1.442695
    %v5255 = vpow.pop %v5254
    %v5256 = vmul.f32 %v5235, 1.442695
    %v5257 = vpow.pop %v5256
    %v5258 = vmul.f32 %v5236, 1.442695
    %v5259 = vpow.pop %v5258
    %v5260 = vmul.f32 %v5237, 1.442695
    %v5261 = vpow.pop %v5260
    %v5262 = vmul.f32 %v5238, 1.442695
    %v5263 = vpow.pop %v5262
    %v5264 = vmul.f32 %v5239, 1.442695
    %v5265 = vpow.pop %v5264
    %v5266 = vmul.f32 %v5240, 1.442695
    %v5267 = vpow.pop %v5266
    %v5268 = vmul.f32 %v5241, 1.442695
    %v5269 = vpow.pop %v5268
    %v5270 = vmul.f32 %v5242, 1.442695
    %v5271 = vpow.pop %v5270
    %v5272 = vmul.f32 %v5243, 1.442695
    %v5273 = vpow.pop %v5272
    %v5274 = vmul.f32 %v5244, 1.442695
    %v5275 = vpow.pop %v5274
    %v5276 = vmul.f32 %v5245, 1.442695
    %v5277 = vpow.pop %v5276
    %v5278 = vadd.f32 %v5247, 1.0
    %v5279 = vadd.f32 %v5249, 1.0
    %v5280 = vadd.f32 %v5251, 1.0
    %v5281 = vadd.f32 %v5253, 1.0
    %v5282 = vadd.f32 %v5255, 1.0
    %v5283 = vadd.f32 %v5257, 1.0
    %v5284 = vadd.f32 %v5259, 1.0
    %v5285 = vadd.f32 %v5261, 1.0
    %v5286 = vadd.f32 %v5263, 1.0
    %v5287 = vadd.f32 %v5265, 1.0
    %v5288 = vadd.f32 %v5267, 1.0
    %v5289 = vadd.f32 %v5269, 1.0
    %v5290 = vadd.f32 %v5271, 1.0
    %v5291 = vadd.f32 %v5273, 1.0
    %v5292 = vadd.f32 %v5275, 1.0
    %v5293 = vadd.f32 %v5277, 1.0
    %v5294 = vrcp.pop %v5278
    %v5295 = vmul.f32 %v5278, %v5294
    %v5296 = vsub.f32 1.0, %v5295
    %v5297 = vmul.f32 %v5294, %v5296
    %v5298 = vadd.f32 %v5294, %v5297
    %vm5299 = vweird.f32 %v5278
    %vm5300 = vweird.f32 %v5294
    %vm5301 = vmor %vm5299, %vm5300
    %v5302 = vsel %vm5301, %v5294, %v5298
    %v5303 = vand.u32 2147483647, %v5278
    %vm5304 = vcmp.eq.f32.partialorder %v5303, 8.507059e+37
    %v5305 = vand.u32 %v5278, 2147483648
    %v5306 = vor.u32 1.1754944e-38, %v5305
    %v5307 = vsel %vm5304, %v5306, %v5302
    %v5308 = vmul.f32 1.0, %v5307
    %v5309 = vrcp.pop %v5279
    %v5310 = vmul.f32 %v5279, %v5309
    %v5311 = vsub.f32 1.0, %v5310
    %v5312 = vmul.f32 %v5309, %v5311
    %v5313 = vadd.f32 %v5309, %v5312
    %vm5314 = vweird.f32 %v5279
    %vm5315 = vweird.f32 %v5309
    %vm5316 = vmor %vm5314, %vm5315
    %v5317 = vsel %vm5316, %v5309, %v5313
    %v5318 = vand.u32 2147483647, %v5279
    %vm5319 = vcmp.eq.f32.partialorder %v5318, 8.507059e+37
    %v5320 = vand.u32 %v5279, 2147483648
    %v5321 = vor.u32 1.1754944e-38, %v5320
    %v5322 = vsel %vm5319, %v5321, %v5317
    %v5323 = vmul.f32 1.0, %v5322
    %v5324 = vrcp.pop %v5280
    %v5325 = vmul.f32 %v5280, %v5324
    %v5326 = vsub.f32 1.0, %v5325
    %v5327 = vmul.f32 %v5324, %v5326
    %v5328 = vadd.f32 %v5324, %v5327
    %vm5329 = vweird.f32 %v5280
    %vm5330 = vweird.f32 %v5324
    %vm5331 = vmor %vm5329, %vm5330
    %v5332 = vsel %vm5331, %v5324, %v5328
    %v5333 = vand.u32 2147483647, %v5280
    %vm5334 = vcmp.eq.f32.partialorder %v5333, 8.507059e+37
    %v5335 = vand.u32 %v5280, 2147483648
    %v5336 = vor.u32 1.1754944e-38, %v5335
    %v5337 = vsel %vm5334, %v5336, %v5332
    %v5338 = vmul.f32 1.0, %v5337
    %v5339 = vrcp.pop %v5281
    %v5340 = vmul.f32 %v5281, %v5339
    %v5341 = vsub.f32 1.0, %v5340
    %v5342 = vmul.f32 %v5339, %v5341
    %v5343 = vadd.f32 %v5339, %v5342
    %vm5344 = vweird.f32 %v5281
    %vm5345 = vweird.f32 %v5339
    %vm5346 = vmor %vm5344, %vm5345
    %v5347 = vsel %vm5346, %v5339, %v5343
    %v5348 = vand.u32 2147483647, %v5281
    %vm5349 = vcmp.eq.f32.partialorder %v5348, 8.507059e+37
    %v5350 = vand.u32 %v5281, 2147483648
    %v5351 = vor.u32 1.1754944e-38, %v5350
    %v5352 = vsel %vm5349, %v5351, %v5347
    %v5353 = vmul.f32 1.0, %v5352
    %v5354 = vrcp.pop %v5282
    %v5355 = vmul.f32 %v5282, %v5354
    %v5356 = vsub.f32 1.0, %v5355
    %v5357 = vmul.f32 %v5354, %v5356
    %v5358 = vadd.f32 %v5354, %v5357
    %vm5359 = vweird.f32 %v5282
    %vm5360 = vweird.f32 %v5354
    %vm5361 = vmor %vm5359, %vm5360
    %v5362 = vsel %vm5361, %v5354, %v5358
    %v5363 = vand.u32 2147483647, %v5282
    %vm5364 = vcmp.eq.f32.partialorder %v5363, 8.507059e+37
    %v5365 = vand.u32 %v5282, 2147483648
    %v5366 = vor.u32 1.1754944e-38, %v5365
    %v5367 = vsel %vm5364, %v5366, %v5362
    %v5368 = vmul.f32 1.0, %v5367
    %v5369 = vrcp.pop %v5283
    %v5370 = vmul.f32 %v5283, %v5369
    %v5371 = vsub.f32 1.0, %v5370
    %v5372 = vmul.f32 %v5369, %v5371
    %v5373 = vadd.f32 %v5369, %v5372
    %vm5374 = vweird.f32 %v5283
    %vm5375 = vweird.f32 %v5369
    %vm5376 = vmor %vm5374, %vm5375
    %v5377 = vsel %vm5376, %v5369, %v5373
    %v5378 = vand.u32 2147483647, %v5283
    %vm5379 = vcmp.eq.f32.partialorder %v5378, 8.507059e+37
    %v5380 = vand.u32 %v5283, 2147483648
    %v5381 = vor.u32 1.1754944e-38, %v5380
    %v5382 = vsel %vm5379, %v5381, %v5377
    %v5383 = vmul.f32 1.0, %v5382
    %v5384 = vrcp.pop %v5284
    %v5385 = vmul.f32 %v5284, %v5384
    %v5386 = vsub.f32 1.0, %v5385
    %v5387 = vmul.f32 %v5384, %v5386
    %v5388 = vadd.f32 %v5384, %v5387
    %vm5389 = vweird.f32 %v5284
    %vm5390 = vweird.f32 %v5384
    %vm5391 = vmor %vm5389, %vm5390
    %v5392 = vsel %vm5391, %v5384, %v5388
    %v5393 = vand.u32 2147483647, %v5284
    %vm5394 = vcmp.eq.f32.partialorder %v5393, 8.507059e+37
    %v5395 = vand.u32 %v5284, 2147483648
    %v5396 = vor.u32 1.1754944e-38, %v5395
    %v5397 = vsel %vm5394, %v5396, %v5392
    %v5398 = vmul.f32 1.0, %v5397
    %v5399 = vrcp.pop %v5285
    %v5400 = vmul.f32 %v5285, %v5399
    %v5401 = vsub.f32 1.0, %v5400
    %v5402 = vmul.f32 %v5399, %v5401
    %v5403 = vadd.f32 %v5399, %v5402
    %vm5404 = vweird.f32 %v5285
    %vm5405 = vweird.f32 %v5399
    %vm5406 = vmor %vm5404, %vm5405
    %v5407 = vsel %vm5406, %v5399, %v5403
    %v5408 = vand.u32 2147483647, %v5285
    %vm5409 = vcmp.eq.f32.partialorder %v5408, 8.507059e+37
    %v5410 = vand.u32 %v5285, 2147483648
    %v5411 = vor.u32 1.1754944e-38, %v5410
    %v5412 = vsel %vm5409, %v5411, %v5407
    %v5413 = vmul.f32 1.0, %v5412
    %v5414 = vrcp.pop %v5286
    %v5415 = vmul.f32 %v5286, %v5414
    %v5416 = vsub.f32 1.0, %v5415
    %v5417 = vmul.f32 %v5414, %v5416
    %v5418 = vadd.f32 %v5414, %v5417
    %vm5419 = vweird.f32 %v5286
    %vm5420 = vweird.f32 %v5414
    %vm5421 = vmor %vm5419, %vm5420
    %v5422 = vsel %vm5421, %v5414, %v5418
    %v5423 = vand.u32 2147483647, %v5286
    %vm5424 = vcmp.eq.f32.partialorder %v5423, 8.507059e+37
    %v5425 = vand.u32 %v5286, 2147483648
    %v5426 = vor.u32 1.1754944e-38, %v5425
    %v5427 = vsel %vm5424, %v5426, %v5422
    %v5428 = vmul.f32 1.0, %v5427
    %v5429 = vrcp.pop %v5287
    %v5430 = vmul.f32 %v5287, %v5429
    %v5431 = vsub.f32 1.0, %v5430
    %v5432 = vmul.f32 %v5429, %v5431
    %v5433 = vadd.f32 %v5429, %v5432
    %vm5434 = vweird.f32 %v5287
    %vm5435 = vweird.f32 %v5429
    %vm5436 = vmor %vm5434, %vm5435
    %v5437 = vsel %vm5436, %v5429, %v5433
    %v5438 = vand.u32 2147483647, %v5287
    %vm5439 = vcmp.eq.f32.partialorder %v5438, 8.507059e+37
    %v5440 = vand.u32 %v5287, 2147483648
    %v5441 = vor.u32 1.1754944e-38, %v5440
    %v5442 = vsel %vm5439, %v5441, %v5437
    %v5443 = vmul.f32 1.0, %v5442
    %v5444 = vrcp.pop %v5288
    %v5445 = vmul.f32 %v5288, %v5444
    %v5446 = vsub.f32 1.0, %v5445
    %v5447 = vmul.f32 %v5444, %v5446
    %v5448 = vadd.f32 %v5444, %v5447
    %vm5449 = vweird.f32 %v5288
    %vm5450 = vweird.f32 %v5444
    %vm5451 = vmor %vm5449, %vm5450
    %v5452 = vsel %vm5451, %v5444, %v5448
    %v5453 = vand.u32 2147483647, %v5288
    %vm5454 = vcmp.eq.f32.partialorder %v5453, 8.507059e+37
    %v5455 = vand.u32 %v5288, 2147483648
    %v5456 = vor.u32 1.1754944e-38, %v5455
    %v5457 = vsel %vm5454, %v5456, %v5452
    %v5458 = vmul.f32 1.0, %v5457
    %v5459 = vrcp.pop %v5289
    %v5460 = vmul.f32 %v5289, %v5459
    %v5461 = vsub.f32 1.0, %v5460
    %v5462 = vmul.f32 %v5459, %v5461
    %v5463 = vadd.f32 %v5459, %v5462
    %vm5464 = vweird.f32 %v5289
    %vm5465 = vweird.f32 %v5459
    %vm5466 = vmor %vm5464, %vm5465
    %v5467 = vsel %vm5466, %v5459, %v5463
    %v5468 = vand.u32 2147483647, %v5289
    %vm5469 = vcmp.eq.f32.partialorder %v5468, 8.507059e+37
    %v5470 = vand.u32 %v5289, 2147483648
    %v5471 = vor.u32 1.1754944e-38, %v5470
    %v5472 = vsel %vm5469, %v5471, %v5467
    %v5473 = vmul.f32 1.0, %v5472
    %v5474 = vrcp.pop %v5290
    %v5475 = vmul.f32 %v5290, %v5474
    %v5476 = vsub.f32 1.0, %v5475
    %v5477 = vmul.f32 %v5474, %v5476
    %v5478 = vadd.f32 %v5474, %v5477
    %vm5479 = vweird.f32 %v5290
    %vm5480 = vweird.f32 %v5474
    %vm5481 = vmor %vm5479, %vm5480
    %v5482 = vsel %vm5481, %v5474, %v5478
    %v5483 = vand.u32 2147483647, %v5290
    %vm5484 = vcmp.eq.f32.partialorder %v5483, 8.507059e+37
    %v5485 = vand.u32 %v5290, 2147483648
    %v5486 = vor.u32 1.1754944e-38, %v5485
    %v5487 = vsel %vm5484, %v5486, %v5482
    %v5488 = vmul.f32 1.0, %v5487
    %v5489 = vrcp.pop %v5291
    %v5490 = vmul.f32 %v5291, %v5489
    %v5491 = vsub.f32 1.0, %v5490
    %v5492 = vmul.f32 %v5489, %v5491
    %v5493 = vadd.f32 %v5489, %v5492
    %vm5494 = vweird.f32 %v5291
    %vm5495 = vweird.f32 %v5489
    %vm5496 = vmor %vm5494, %vm5495
    %v5497 = vsel %vm5496, %v5489, %v5493
    %v5498 = vand.u32 2147483647, %v5291
    %vm5499 = vcmp.eq.f32.partialorder %v5498, 8.507059e+37
    %v5500 = vand.u32 %v5291, 2147483648
    %v5501 = vor.u32 1.1754944e-38, %v5500
    %v5502 = vsel %vm5499, %v5501, %v5497
    %v5503 = vmul.f32 1.0, %v5502
    %v5504 = vrcp.pop %v5292
    %v5505 = vmul.f32 %v5292, %v5504
    %v5506 = vsub.f32 1.0, %v5505
    %v5507 = vmul.f32 %v5504, %v5506
    %v5508 = vadd.f32 %v5504, %v5507
    %vm5509 = vweird.f32 %v5292
    %vm5510 = vweird.f32 %v5504
    %vm5511 = vmor %vm5509, %vm5510
    %v5512 = vsel %vm5511, %v5504, %v5508
    %v5513 = vand.u32 2147483647, %v5292
    %vm5514 = vcmp.eq.f32.partialorder %v5513, 8.507059e+37
    %v5515 = vand.u32 %v5292, 2147483648
    %v5516 = vor.u32 1.1754944e-38, %v5515
    %v5517 = vsel %vm5514, %v5516, %v5512
    %v5518 = vmul.f32 1.0, %v5517
    %v5519 = vrcp.pop %v5293
    %v5520 = vmul.f32 %v5293, %v5519
    %v5521 = vsub.f32 1.0, %v5520
    %v5522 = vmul.f32 %v5519, %v5521
    %v5523 = vadd.f32 %v5519, %v5522
    %vm5524 = vweird.f32 %v5293
    %vm5525 = vweird.f32 %v5519
    %vm5526 = vmor %vm5524, %vm5525
    %v5527 = vsel %vm5526, %v5519, %v5523
    %v5528 = vand.u32 2147483647, %v5293
    %vm5529 = vcmp.eq.f32.partialorder %v5528, 8.507059e+37
    %v5530 = vand.u32 %v5293, 2147483648
    %v5531 = vor.u32 1.1754944e-38, %v5530
    %v5532 = vsel %vm5529, %v5531, %v5527
    %v5533 = vmul.f32 1.0, %v5532
    %5550 = vrot.lane.b32.xlu0 %v5308, 64
    %v5551 = vpop.permute.xlu0 %5550
    %5552 = vrot.lane.b32.xlu0 %v5323, 64
    %v5553 = vpop.permute.xlu0 %5552
    %5554 = vrot.lane.b32.xlu0 %v5338, 64
    %v5555 = vpop.permute.xlu0 %5554
    %5556 = vrot.lane.b32.xlu0 %v5353, 64
    %v5557 = vpop.permute.xlu0 %5556
    %5558 = vrot.lane.b32.xlu0 %v5368, 64
    %v5559 = vpop.permute.xlu0 %5558
    %5560 = vrot.lane.b32.xlu0 %v5383, 64
    %v5561 = vpop.permute.xlu0 %5560
    %5562 = vrot.lane.b32.xlu0 %v5398, 64
    %v5563 = vpop.permute.xlu0 %5562
    %5564 = vrot.lane.b32.xlu0 %v5413, 64
    %v5565 = vpop.permute.xlu0 %5564
    %5566 = vrot.lane.b32.xlu0 %v5428, 64
    %v5567 = vpop.permute.xlu0 %5566
    %5568 = vrot.lane.b32.xlu0 %v5443, 64
    %v5569 = vpop.permute.xlu0 %5568
    %5570 = vrot.lane.b32.xlu0 %v5458, 64
    %v5571 = vpop.permute.xlu0 %5570
    %5572 = vrot.lane.b32.xlu0 %v5473, 64
    %v5573 = vpop.permute.xlu0 %5572
    %5574 = vrot.lane.b32.xlu0 %v5488, 64
    %v5575 = vpop.permute.xlu0 %5574
    %5576 = vrot.lane.b32.xlu0 %v5503, 64
    %v5577 = vpop.permute.xlu0 %5576
    %5578 = vrot.lane.b32.xlu0 %v5518, 64
    %v5579 = vpop.permute.xlu0 %5578
    %5580 = vrot.lane.b32.xlu0 %v5533, 64
    %v5581 = vpop.permute.xlu0 %5580
    %v5598 = vmul.f32 %v5214, %v5551
    %v5599 = vmul.f32 %v5215, %v5553
    %v5600 = vmul.f32 %v5216, %v5555
    %v5601 = vmul.f32 %v5217, %v5557
    %v5602 = vmul.f32 %v5218, %v5559
    %v5603 = vmul.f32 %v5219, %v5561
    %v5604 = vmul.f32 %v5220, %v5563
    %v5605 = vmul.f32 %v5221, %v5565
    %v5606 = vmul.f32 %v5222, %v5567
    %v5607 = vmul.f32 %v5223, %v5569
    %v5608 = vmul.f32 %v5224, %v5571
    %v5609 = vmul.f32 %v5225, %v5573
    %v5610 = vmul.f32 %v5226, %v5575
    %v5611 = vmul.f32 %v5227, %v5577
    %v5612 = vmul.f32 %v5228, %v5579
    %v5613 = vmul.f32 %v5229, %v5581
    %v5614 = vpack.c.bf16 %v5599, %v5598
    %v5615 = vpack.c.bf16 %v5601, %v5600
    %v5616 = vpack.c.bf16 %v5603, %v5602
    %v5617 = vpack.c.bf16 %v5605, %v5604
    %v5618 = vpack.c.bf16 %v5607, %v5606
    %v5619 = vpack.c.bf16 %v5609, %v5608
    %v5620 = vpack.c.bf16 %v5611, %v5610
    %v5621 = vpack.c.bf16 %v5613, %v5612
    %s5622 = scalar_lea.vmem [#allocation6], 192
    %v5623 = vld [vmem:[%s5622] sm:$0xff]
    %v5624 = vld [vmem:[%s5622 + $0x8] sm:$0xff]
    %v5625 = vld [vmem:[%s5622 + $0x10] sm:$0xff]
    %v5626 = vld [vmem:[%s5622 + $0x18] sm:$0xff]
    %v5627 = vld [vmem:[%s5622 + $0x20] sm:$0xff]
    %v5628 = vld [vmem:[%s5622 + $0x28] sm:$0xff]
    %v5629 = vld [vmem:[%s5622 + $0x30] sm:$0xff]
    %v5630 = vld [vmem:[%s5622 + $0x38] sm:$0xff]
    %v5639 = vunpack.c.l.b16 %v5623
    %v5640 = vunpack.c.h.b16 %v5623
    %v5641 = vunpack.c.l.b16 %v5624
    %v5642 = vunpack.c.h.b16 %v5624
    %v5643 = vunpack.c.l.b16 %v5625
    %v5644 = vunpack.c.h.b16 %v5625
    %v5645 = vunpack.c.l.b16 %v5626
    %v5646 = vunpack.c.h.b16 %v5626
    %v5647 = vunpack.c.l.b16 %v5627
    %v5648 = vunpack.c.h.b16 %v5627
    %v5649 = vunpack.c.l.b16 %v5628
    %v5650 = vunpack.c.h.b16 %v5628
    %v5651 = vunpack.c.l.b16 %v5629
    %v5652 = vunpack.c.h.b16 %v5629
    %v5653 = vunpack.c.l.b16 %v5630
    %v5654 = vunpack.c.h.b16 %v5630
    %v5655 = vpack.c.b16 %v5641, %v5639
    %v5656 = vpack.c.b16 %v5642, %v5640
    %v5657 = vpack.c.b16 %v5645, %v5643
    %v5658 = vpack.c.b16 %v5646, %v5644
    %v5659 = vpack.c.b16 %v5649, %v5647
    %v5660 = vpack.c.b16 %v5650, %v5648
    %v5661 = vpack.c.b16 %v5653, %v5651
    %v5662 = vpack.c.b16 %v5654, %v5652
    %v5672 = vsel %vm1705, %v5614, 0
    %v5675 = vsel %vm1705, %v5615, 0
    %v5678 = vsel %vm1705, %v5616, 0
    %v5681 = vsel %vm1705, %v5617, 0
    %v5684 = vsel %vm1705, %v5618, 0
    %v5687 = vsel %vm1705, %v5619, 0
    %v5690 = vsel %vm1705, %v5620, 0
    %v5693 = vsel %vm1705, %v5621, 0
    %5695 = vmatpush.bf16.msra.mxu0 0
    %5696 = vmatpush.bf16.msra.mxu0 0
    %5697 = vmatpush.bf16.msra.mxu0 0
    %5698 = vmatpush.bf16.msra.mxu0 0
    %5699 = vmatpush.bf16.msra.mxu0 %v5661
    %5700 = vmatpush.bf16.msra.mxu0 %v5659
    %5701 = vmatpush.bf16.msra.mxu0 %v5657
    %5702 = vmatpush.bf16.msra.mxu0 %v5655
    %5703 = vmatmul.bf16.gmra.mxu0 %v5672
    %v5704 = vpop.f32.mrf.mxu0
    %v5705 = vadd.f32 0.0, %v5704
    %v5706 = vpop.f32.mrf.mxu0
    %v5707 = vadd.f32 0.0, %v5706
    %5708 = vmatmul.bf16.gmra.mxu0 %v5675
    %v5709 = vpop.f32.mrf.mxu0
    %v5710 = vadd.f32 0.0, %v5709
    %v5711 = vpop.f32.mrf.mxu0
    %v5712 = vadd.f32 0.0, %v5711
    %5713 = vmatmul.bf16.gmra.mxu0 %v5678
    %v5714 = vpop.f32.mrf.mxu0
    %v5715 = vadd.f32 0.0, %v5714
    %v5716 = vpop.f32.mrf.mxu0
    %v5717 = vadd.f32 0.0, %v5716
    %5718 = vmatmul.bf16.gmra.mxu0 %v5681
    %v5719 = vpop.f32.mrf.mxu0
    %v5720 = vadd.f32 0.0, %v5719
    %v5721 = vpop.f32.mrf.mxu0
    %v5722 = vadd.f32 0.0, %v5721
    %5723 = vmatmul.bf16.gmra.mxu0 %v5684
    %v5724 = vpop.f32.mrf.mxu0
    %v5725 = vadd.f32 0.0, %v5724
    %v5726 = vpop.f32.mrf.mxu0
    %v5727 = vadd.f32 0.0, %v5726
    %5728 = vmatmul.bf16.gmra.mxu0 %v5687
    %v5729 = vpop.f32.mrf.mxu0
    %v5730 = vadd.f32 0.0, %v5729
    %v5731 = vpop.f32.mrf.mxu0
    %v5732 = vadd.f32 0.0, %v5731
    %5733 = vmatmul.bf16.gmra.mxu0 %v5690
    %v5734 = vpop.f32.mrf.mxu0
    %v5735 = vadd.f32 0.0, %v5734
    %v5736 = vpop.f32.mrf.mxu0
    %v5737 = vadd.f32 0.0, %v5736
    %5738 = vmatmul.bf16.gmra.mxu0 %v5693
    %v5739 = vpop.f32.mrf.mxu0
    %v5740 = vadd.f32 0.0, %v5739
    %v5741 = vpop.f32.mrf.mxu0
    %v5742 = vadd.f32 0.0, %v5741
    %5743 = vdwg.mxu0
    %5744 = vmatpush.bf16.msra.mxu0 0
    %5745 = vmatpush.bf16.msra.mxu0 0
    %5746 = vmatpush.bf16.msra.mxu0 0
    %5747 = vmatpush.bf16.msra.mxu0 0
    %5748 = vmatpush.bf16.msra.mxu0 %v5662
    %5749 = vmatpush.bf16.msra.mxu0 %v5660
    %5750 = vmatpush.bf16.msra.mxu0 %v5658
    %5751 = vmatpush.bf16.msra.mxu0 %v5656
    %5752 = vmatmul.bf16.gmra.mxu0 %v5672
    %v5753 = vpop.f32.mrf.mxu0
    %v5754 = vadd.f32 0.0, %v5753
    %v5755 = vpop.f32.mrf.mxu0
    %v5756 = vadd.f32 0.0, %v5755
    %5757 = vmatmul.bf16.gmra.mxu0 %v5675
    %v5758 = vpop.f32.mrf.mxu0
    %v5759 = vadd.f32 0.0, %v5758
    %v5760 = vpop.f32.mrf.mxu0
    %v5761 = vadd.f32 0.0, %v5760
    %5762 = vmatmul.bf16.gmra.mxu0 %v5678
    %v5763 = vpop.f32.mrf.mxu0
    %v5764 = vadd.f32 0.0, %v5763
    %v5765 = vpop.f32.mrf.mxu0
    %v5766 = vadd.f32 0.0, %v5765
    %5767 = vmatmul.bf16.gmra.mxu0 %v5681
    %v5768 = vpop.f32.mrf.mxu0
    %v5769 = vadd.f32 0.0, %v5768
    %v5770 = vpop.f32.mrf.mxu0
    %v5771 = vadd.f32 0.0, %v5770
    %5772 = vmatmul.bf16.gmra.mxu0 %v5684
    %v5773 = vpop.f32.mrf.mxu0
    %v5774 = vadd.f32 0.0, %v5773
    %v5775 = vpop.f32.mrf.mxu0
    %v5776 = vadd.f32 0.0, %v5775
    %5777 = vmatmul.bf16.gmra.mxu0 %v5687
    %v5778 = vpop.f32.mrf.mxu0
    %v5779 = vadd.f32 0.0, %v5778
    %v5780 = vpop.f32.mrf.mxu0
    %v5781 = vadd.f32 0.0, %v5780
    %5782 = vmatmul.bf16.gmra.mxu0 %v5690
    %v5783 = vpop.f32.mrf.mxu0
    %v5784 = vadd.f32 0.0, %v5783
    %v5785 = vpop.f32.mrf.mxu0
    %v5786 = vadd.f32 0.0, %v5785
    %5787 = vmatmul.bf16.gmra.mxu0 %v5693
    %v5788 = vpop.f32.mrf.mxu0
    %v5789 = vadd.f32 0.0, %v5788
    %v5790 = vpop.f32.mrf.mxu0
    %v5791 = vadd.f32 0.0, %v5790
    %5792 = vdwg.mxu0
    %v5793 = vld [vmem:[#allocation2] sm:$0xff]
    %v5794 = vld [vmem:[#allocation2 + $0x8] sm:$0xff]
    %v5795 = vld [vmem:[#allocation2 + $0x10] sm:$0xff]
    %v5796 = vld [vmem:[#allocation2 + $0x18] sm:$0xff]
    %v5797 = vld [vmem:[#allocation2 + $0x20] sm:$0xff]
    %v5798 = vld [vmem:[#allocation2 + $0x28] sm:$0xff]
    %v5799 = vld [vmem:[#allocation2 + $0x30] sm:$0xff]
    %v5800 = vld [vmem:[#allocation2 + $0x38] sm:$0xff]
    %v5801 = vld [vmem:[#allocation2 + $0x40] sm:$0xff]
    %v5802 = vld [vmem:[#allocation2 + $0x48] sm:$0xff]
    %v5803 = vld [vmem:[#allocation2 + $0x50] sm:$0xff]
    %v5804 = vld [vmem:[#allocation2 + $0x58] sm:$0xff]
    %v5805 = vld [vmem:[#allocation2 + $0x60] sm:$0xff]
    %v5806 = vld [vmem:[#allocation2 + $0x68] sm:$0xff]
    %v5807 = vld [vmem:[#allocation2 + $0x70] sm:$0xff]
    %v5808 = vld [vmem:[#allocation2 + $0x78] sm:$0xff]
    %v5809 = vadd.f32 %v5793, %v5705
    %v5810 = vadd.f32 %v5794, %v5707
    %v5811 = vadd.f32 %v5795, %v5710
    %v5812 = vadd.f32 %v5796, %v5712
    %v5813 = vadd.f32 %v5797, %v5715
    %v5814 = vadd.f32 %v5798, %v5717
    %v5815 = vadd.f32 %v5799, %v5720
    %v5816 = vadd.f32 %v5800, %v5722
    %v5817 = vadd.f32 %v5801, %v5725
    %v5818 = vadd.f32 %v5802, %v5727
    %v5819 = vadd.f32 %v5803, %v5730
    %v5820 = vadd.f32 %v5804, %v5732
    %v5821 = vadd.f32 %v5805, %v5735
    %v5822 = vadd.f32 %v5806, %v5737
    %v5823 = vadd.f32 %v5807, %v5740
    %v5824 = vadd.f32 %v5808, %v5742
    %5825 = vst [vmem:[#allocation2] sm:$0xff] %v5809
    %5826 = vst [vmem:[#allocation2 + $0x8] sm:$0xff] %v5810
    %5827 = vst [vmem:[#allocation2 + $0x10] sm:$0xff] %v5811
    %5828 = vst [vmem:[#allocation2 + $0x18] sm:$0xff] %v5812
    %5829 = vst [vmem:[#allocation2 + $0x20] sm:$0xff] %v5813
    %5830 = vst [vmem:[#allocation2 + $0x28] sm:$0xff] %v5814
    %5831 = vst [vmem:[#allocation2 + $0x30] sm:$0xff] %v5815
    %5832 = vst [vmem:[#allocation2 + $0x38] sm:$0xff] %v5816
    %5833 = vst [vmem:[#allocation2 + $0x40] sm:$0xff] %v5817
    %5834 = vst [vmem:[#allocation2 + $0x48] sm:$0xff] %v5818
    %5835 = vst [vmem:[#allocation2 + $0x50] sm:$0xff] %v5819
    %5836 = vst [vmem:[#allocation2 + $0x58] sm:$0xff] %v5820
    %5837 = vst [vmem:[#allocation2 + $0x60] sm:$0xff] %v5821
    %5838 = vst [vmem:[#allocation2 + $0x68] sm:$0xff] %v5822
    %5839 = vst [vmem:[#allocation2 + $0x70] sm:$0xff] %v5823
    %5840 = vst [vmem:[#allocation2 + $0x78] sm:$0xff] %v5824
    %v5841 = vperm.slane %v55, 2
    %v5842 = vadd.f32 %v5754, %v5841
    %v5843 = vadd.f32 %v5756, %v5841
    %v5844 = vadd.f32 %v5759, %v5841
    %v5845 = vadd.f32 %v5761, %v5841
    %v5846 = vadd.f32 %v5764, %v5841
    %v5847 = vadd.f32 %v5766, %v5841
    %v5848 = vadd.f32 %v5769, %v5841
    %v5849 = vadd.f32 %v5771, %v5841
    %v5850 = vadd.f32 %v5774, %v5841
    %v5851 = vadd.f32 %v5776, %v5841
    %v5852 = vadd.f32 %v5779, %v5841
    %v5853 = vadd.f32 %v5781, %v5841
    %v5854 = vadd.f32 %v5784, %v5841
    %v5855 = vadd.f32 %v5786, %v5841
    %v5856 = vadd.f32 %v5789, %v5841
    %v5857 = vadd.f32 %v5791, %v5841
    %v5858 = vadd.f32 %v5842, %v4569
    %v5859 = vadd.f32 %v5843, %v4570
    %v5860 = vadd.f32 %v5844, %v4571
    %v5861 = vadd.f32 %v5845, %v4572
    %v5862 = vadd.f32 %v5846, %v4573
    %v5863 = vadd.f32 %v5847, %v4574
    %v5864 = vadd.f32 %v5848, %v4575
    %v5865 = vadd.f32 %v5849, %v4576
    %v5866 = vadd.f32 %v5850, %v4577
    %v5867 = vadd.f32 %v5851, %v4578
    %v5868 = vadd.f32 %v5852, %v4579
    %v5869 = vadd.f32 %v5853, %v4580
    %v5870 = vadd.f32 %v5854, %v4581
    %v5871 = vadd.f32 %v5855, %v4582
    %v5872 = vadd.f32 %v5856, %v4583
    %v5873 = vadd.f32 %v5857, %v4584
    %v5874 = vpack.c.bf16 %v5858, %v5858
    %v5875 = vpack.c.bf16 %v5859, %v5859
    %v5876 = vpack.c.bf16 %v5860, %v5860
    %v5877 = vpack.c.bf16 %v5861, %v5861
    %v5878 = vpack.c.bf16 %v5862, %v5862
    %v5879 = vpack.c.bf16 %v5863, %v5863
    %v5880 = vpack.c.bf16 %v5864, %v5864
    %v5881 = vpack.c.bf16 %v5865, %v5865
    %v5882 = vpack.c.bf16 %v5866, %v5866
    %v5883 = vpack.c.bf16 %v5867, %v5867
    %v5884 = vpack.c.bf16 %v5868, %v5868
    %v5885 = vpack.c.bf16 %v5869, %v5869
    %v5886 = vpack.c.bf16 %v5870, %v5870
    %v5887 = vpack.c.bf16 %v5871, %v5871
    %v5888 = vpack.c.bf16 %v5872, %v5872
    %v5889 = vpack.c.bf16 %v5873, %v5873
    %v5890 = vrot.slane %v5858, 7
    %v5891 = vrot.slane %v5859, 7
    %v5892 = vrot.slane %v5860, 7
    %v5893 = vrot.slane %v5861, 7
    %v5894 = vrot.slane %v5862, 7
    %v5895 = vrot.slane %v5863, 7
    %v5896 = vrot.slane %v5864, 7
    %v5897 = vrot.slane %v5865, 7
    %v5898 = vrot.slane %v5866, 7
    %v5899 = vrot.slane %v5867, 7
    %v5900 = vrot.slane %v5868, 7
    %v5901 = vrot.slane %v5869, 7
    %v5902 = vrot.slane %v5870, 7
    %v5903 = vrot.slane %v5871, 7
    %v5904 = vrot.slane %v5872, 7
    %v5905 = vrot.slane %v5873, 7
    %v5906 = vsel %vm555, %v5904, %v5905
    %v5907 = vsel %vm555, %v5903, %v5904
    %v5908 = vsel %vm555, %v5902, %v5903
    %v5909 = vsel %vm555, %v5901, %v5902
    %v5910 = vsel %vm555, %v5900, %v5901
    %v5911 = vsel %vm555, %v5899, %v5900
    %v5912 = vsel %vm555, %v5898, %v5899
    %v5913 = vsel %vm555, %v5897, %v5898
    %v5914 = vsel %vm555, %v5896, %v5897
    %v5915 = vsel %vm555, %v5895, %v5896
    %v5916 = vsel %vm555, %v5894, %v5895
    %v5917 = vsel %vm555, %v5893, %v5894
    %v5918 = vsel %vm555, %v5892, %v5893
    %v5919 = vsel %vm555, %v5891, %v5892
    %v5920 = vsel %vm555, %v5890, %v5891
    %v5921 = vsel %vm555, %v5905, %v5890
    %v5922 = vpack.c.bf16 %v5921, %v5921
    %v5923 = vpack.c.bf16 %v5920, %v5920
    %v5924 = vpack.c.bf16 %v5919, %v5919
    %v5925 = vpack.c.bf16 %v5918, %v5918
    %v5926 = vpack.c.bf16 %v5917, %v5917
    %v5927 = vpack.c.bf16 %v5916, %v5916
    %v5928 = vpack.c.bf16 %v5915, %v5915
    %v5929 = vpack.c.bf16 %v5914, %v5914
    %v5930 = vpack.c.bf16 %v5913, %v5913
    %v5931 = vpack.c.bf16 %v5912, %v5912
    %v5932 = vpack.c.bf16 %v5911, %v5911
    %v5933 = vpack.c.bf16 %v5910, %v5910
    %v5934 = vpack.c.bf16 %v5909, %v5909
    %v5935 = vpack.c.bf16 %v5908, %v5908
    %v5936 = vpack.c.bf16 %v5907, %v5907
    %v5937 = vpack.c.bf16 %v5906, %v5906
    %v5938 = vsel %vm620, %v5922, 0
    %v5939 = vsel %vm621, %v5923, 0
    %v5940 = vsel %vm622, %v5924, 0
    %v5941 = vsel %vm623, %v5925, 0
    %v5942 = vsel %vm624, %v5926, 0
    %v5943 = vsel %vm625, %v5927, 0
    %v5944 = vsel %vm626, %v5928, 0
    %v5945 = vsel %vm627, %v5929, 0
    %v5946 = vsel %vm628, %v5930, 0
    %v5947 = vsel %vm629, %v5931, 0
    %v5948 = vsel %vm630, %v5932, 0
    %v5949 = vsel %vm631, %v5933, 0
    %v5950 = vsel %vm632, %v5934, 0
    %v5951 = vsel %vm633, %v5935, 0
    %v5952 = vsel %vm634, %v5936, 0
    %v5953 = vsel %vm635, %v5937, 0
    %v5954 = vrot.slane %v5858, 1
    %v5955 = vrot.slane %v5859, 1
    %v5956 = vrot.slane %v5860, 1
    %v5957 = vrot.slane %v5861, 1
    %v5958 = vrot.slane %v5862, 1
    %v5959 = vrot.slane %v5863, 1
    %v5960 = vrot.slane %v5864, 1
    %v5961 = vrot.slane %v5865, 1
    %v5962 = vrot.slane %v5866, 1
    %v5963 = vrot.slane %v5867, 1
    %v5964 = vrot.slane %v5868, 1
    %v5965 = vrot.slane %v5869, 1
    %v5966 = vrot.slane %v5870, 1
    %v5967 = vrot.slane %v5871, 1
    %v5968 = vrot.slane %v5872, 1
    %v5969 = vrot.slane %v5873, 1
    %v5970 = vsel %vm668, %v5968, %v5969
    %v5971 = vsel %vm668, %v5967, %v5968
    %v5972 = vsel %vm668, %v5966, %v5967
    %v5973 = vsel %vm668, %v5965, %v5966
    %v5974 = vsel %vm668, %v5964, %v5965
    %v5975 = vsel %vm668, %v5963, %v5964
    %v5976 = vsel %vm668, %v5962, %v5963
    %v5977 = vsel %vm668, %v5961, %v5962
    %v5978 = vsel %vm668, %v5960, %v5961
    %v5979 = vsel %vm668, %v5959, %v5960
    %v5980 = vsel %vm668, %v5958, %v5959
    %v5981 = vsel %vm668, %v5957, %v5958
    %v5982 = vsel %vm668, %v5956, %v5957
    %v5983 = vsel %vm668, %v5955, %v5956
    %v5984 = vsel %vm668, %v5954, %v5955
    %v5985 = vsel %vm668, %v5969, %v5954
    %v5986 = vpack.c.bf16 %v5984, %v5984
    %v5987 = vpack.c.bf16 %v5983, %v5983
    %v5988 = vpack.c.bf16 %v5982, %v5982
    %v5989 = vpack.c.bf16 %v5981, %v5981
    %v5990 = vpack.c.bf16 %v5980, %v5980
    %v5991 = vpack.c.bf16 %v5979, %v5979
    %v5992 = vpack.c.bf16 %v5978, %v5978
    %v5993 = vpack.c.bf16 %v5977, %v5977
    %v5994 = vpack.c.bf16 %v5976, %v5976
    %v5995 = vpack.c.bf16 %v5975, %v5975
    %v5996 = vpack.c.bf16 %v5974, %v5974
    %v5997 = vpack.c.bf16 %v5973, %v5973
    %v5998 = vpack.c.bf16 %v5972, %v5972
    %v5999 = vpack.c.bf16 %v5971, %v5971
    %v6000 = vpack.c.bf16 %v5970, %v5970
    %v6001 = vpack.c.bf16 %v5985, %v5985
    %v6002 = vsel %vm733, %v5986, 0
    %v6003 = vsel %vm734, %v5987, 0
    %v6004 = vsel %vm735, %v5988, 0
    %v6005 = vsel %vm736, %v5989, 0
    %v6006 = vsel %vm737, %v5990, 0
    %v6007 = vsel %vm738, %v5991, 0
    %v6008 = vsel %vm739, %v5992, 0
    %v6009 = vsel %vm740, %v5993, 0
    %v6010 = vsel %vm741, %v5994, 0
    %v6011 = vsel %vm742, %v5995, 0
    %v6012 = vsel %vm743, %v5996, 0
    %v6013 = vsel %vm744, %v5997, 0
    %v6014 = vsel %vm745, %v5998, 0
    %v6015 = vsel %vm746, %v5999, 0
    %v6016 = vsel %vm747, %v6000, 0
    %v6017 = vsel %vm748, %v6001, 0
    %v6034 = vunpack.c.l.b16 %v5938
    %v6035 = vunpack.c.l.b16 %v5939
    %v6036 = vunpack.c.l.b16 %v5940
    %v6037 = vunpack.c.l.b16 %v5941
    %v6038 = vunpack.c.l.b16 %v5942
    %v6039 = vunpack.c.l.b16 %v5943
    %v6040 = vunpack.c.l.b16 %v5944
    %v6041 = vunpack.c.l.b16 %v5945
    %v6042 = vunpack.c.l.b16 %v5946
    %v6043 = vunpack.c.l.b16 %v5947
    %v6044 = vunpack.c.l.b16 %v5948
    %v6045 = vunpack.c.l.b16 %v5949
    %v6046 = vunpack.c.l.b16 %v5950
    %v6047 = vunpack.c.l.b16 %v5951
    %v6048 = vunpack.c.l.b16 %v5952
    %v6049 = vunpack.c.l.b16 %v5953
    %v6050 = vpack.c.b16 %v6035, %v6034
    %v6051 = vpack.c.b16 %v6037, %v6036
    %v6052 = vpack.c.b16 %v6039, %v6038
    %v6053 = vpack.c.b16 %v6041, %v6040
    %v6054 = vpack.c.b16 %v6043, %v6042
    %v6055 = vpack.c.b16 %v6045, %v6044
    %v6056 = vpack.c.b16 %v6047, %v6046
    %v6057 = vpack.c.b16 %v6049, %v6048
    %v6082 = vunpack.c.l.b16 %v5874
    %v6083 = vunpack.c.l.b16 %v5875
    %v6084 = vunpack.c.l.b16 %v5876
    %v6085 = vunpack.c.l.b16 %v5877
    %v6086 = vunpack.c.l.b16 %v5878
    %v6087 = vunpack.c.l.b16 %v5879
    %v6088 = vunpack.c.l.b16 %v5880
    %v6089 = vunpack.c.l.b16 %v5881
    %v6090 = vunpack.c.l.b16 %v5882
    %v6091 = vunpack.c.l.b16 %v5883
    %v6092 = vunpack.c.l.b16 %v5884
    %v6093 = vunpack.c.l.b16 %v5885
    %v6094 = vunpack.c.l.b16 %v5886
    %v6095 = vunpack.c.l.b16 %v5887
    %v6096 = vunpack.c.l.b16 %v5888
    %v6097 = vunpack.c.l.b16 %v5889
    %v6098 = vpack.c.b16 %v6083, %v6082
    %v6099 = vpack.c.b16 %v6085, %v6084
    %v6100 = vpack.c.b16 %v6087, %v6086
    %v6101 = vpack.c.b16 %v6089, %v6088
    %v6102 = vpack.c.b16 %v6091, %v6090
    %v6103 = vpack.c.b16 %v6093, %v6092
    %v6104 = vpack.c.b16 %v6095, %v6094
    %v6105 = vpack.c.b16 %v6097, %v6096
    %v6130 = vunpack.c.l.b16 %v6002
    %v6131 = vunpack.c.l.b16 %v6003
    %v6132 = vunpack.c.l.b16 %v6004
    %v6133 = vunpack.c.l.b16 %v6005
    %v6134 = vunpack.c.l.b16 %v6006
    %v6135 = vunpack.c.l.b16 %v6007
    %v6136 = vunpack.c.l.b16 %v6008
    %v6137 = vunpack.c.l.b16 %v6009
    %v6138 = vunpack.c.l.b16 %v6010
    %v6139 = vunpack.c.l.b16 %v6011
    %v6140 = vunpack.c.l.b16 %v6012
    %v6141 = vunpack.c.l.b16 %v6013
    %v6142 = vunpack.c.l.b16 %v6014
    %v6143 = vunpack.c.l.b16 %v6015
    %v6144 = vunpack.c.l.b16 %v6016
    %v6145 = vunpack.c.l.b16 %v6017
    %v6146 = vpack.c.b16 %v6131, %v6130
    %v6147 = vpack.c.b16 %v6133, %v6132
    %v6148 = vpack.c.b16 %v6135, %v6134
    %v6149 = vpack.c.b16 %v6137, %v6136
    %v6150 = vpack.c.b16 %v6139, %v6138
    %v6151 = vpack.c.b16 %v6141, %v6140
    %v6152 = vpack.c.b16 %v6143, %v6142
    %v6153 = vpack.c.b16 %v6145, %v6144
    %s6162 = scalar_lea.vmem [#allocation3], 768
    %v6163 = vld [vmem:[%s6162] sm:$0xf]
    %v6164 = vld [vmem:[%s6162 + $0x4] sm:$0xf]
    %v6165 = vld [vmem:[%s6162 + $0x8] sm:$0xf]
    %v6166 = vld [vmem:[%s6162 + $0xc] sm:$0xf]
    %v6167 = vld [vmem:[%s6162 + $0x10] sm:$0xf]
    %v6168 = vld [vmem:[%s6162 + $0x14] sm:$0xf]
    %v6169 = vld [vmem:[%s6162 + $0x18] sm:$0xf]
    %v6170 = vld [vmem:[%s6162 + $0x1c] sm:$0xf]
    %v6171 = vld [vmem:[%s6162 + $0x20] sm:$0xf]
    %v6172 = vld [vmem:[%s6162 + $0x24] sm:$0xf]
    %v6173 = vld [vmem:[%s6162 + $0x28] sm:$0xf]
    %v6174 = vld [vmem:[%s6162 + $0x2c] sm:$0xf]
    %v6175 = vld [vmem:[%s6162 + $0x30] sm:$0xf]
    %v6176 = vld [vmem:[%s6162 + $0x34] sm:$0xf]
    %v6177 = vld [vmem:[%s6162 + $0x38] sm:$0xf]
    %v6178 = vld [vmem:[%s6162 + $0x3c] sm:$0xf]
    %v6179 = vld [vmem:[%s6162 + $0x40] sm:$0xf]
    %v6180 = vld [vmem:[%s6162 + $0x44] sm:$0xf]
    %v6181 = vld [vmem:[%s6162 + $0x48] sm:$0xf]
    %v6182 = vld [vmem:[%s6162 + $0x4c] sm:$0xf]
    %v6183 = vld [vmem:[%s6162 + $0x50] sm:$0xf]
    %v6184 = vld [vmem:[%s6162 + $0x54] sm:$0xf]
    %v6185 = vld [vmem:[%s6162 + $0x58] sm:$0xf]
    %v6186 = vld [vmem:[%s6162 + $0x5c] sm:$0xf]
    %v6187 = vld [vmem:[%s6162 + $0x60] sm:$0xf]
    %v6188 = vld [vmem:[%s6162 + $0x64] sm:$0xf]
    %v6189 = vld [vmem:[%s6162 + $0x68] sm:$0xf]
    %v6190 = vld [vmem:[%s6162 + $0x6c] sm:$0xf]
    %v6191 = vld [vmem:[%s6162 + $0x70] sm:$0xf]
    %v6192 = vld [vmem:[%s6162 + $0x74] sm:$0xf]
    %v6193 = vld [vmem:[%s6162 + $0x78] sm:$0xf]
    %v6194 = vld [vmem:[%s6162 + $0x7c] sm:$0xf]
    %v6195 = vld [vmem:[%s6162 + $0x80] sm:$0xf]
    %v6196 = vld [vmem:[%s6162 + $0x84] sm:$0xf]
    %v6197 = vld [vmem:[%s6162 + $0x88] sm:$0xf]
    %v6198 = vld [vmem:[%s6162 + $0x8c] sm:$0xf]
    %v6199 = vld [vmem:[%s6162 + $0x90] sm:$0xf]
    %v6200 = vld [vmem:[%s6162 + $0x94] sm:$0xf]
    %v6201 = vld [vmem:[%s6162 + $0x98] sm:$0xf]
    %v6202 = vld [vmem:[%s6162 + $0x9c] sm:$0xf]
    %v6203 = vld [vmem:[%s6162 + $0xa0] sm:$0xf]
    %v6204 = vld [vmem:[%s6162 + $0xa4] sm:$0xf]
    %v6205 = vld [vmem:[%s6162 + $0xa8] sm:$0xf]
    %v6206 = vld [vmem:[%s6162 + $0xac] sm:$0xf]
    %v6207 = vld [vmem:[%s6162 + $0xb0] sm:$0xf]
    %v6208 = vld [vmem:[%s6162 + $0xb4] sm:$0xf]
    %v6209 = vld [vmem:[%s6162 + $0xb8] sm:$0xf]
    %v6210 = vld [vmem:[%s6162 + $0xbc] sm:$0xf]
    %v6211 = vperm.slane %v54, 5
    %v6260 = vunpack.c.l.b16 %v6163
    %v6261 = vunpack.c.l.b16 %v6164
    %v6262 = vunpack.c.l.b16 %v6165
    %v6263 = vunpack.c.l.b16 %v6166
    %v6264 = vunpack.c.l.b16 %v6167
    %v6265 = vunpack.c.l.b16 %v6168
    %v6266 = vunpack.c.l.b16 %v6169
    %v6267 = vunpack.c.l.b16 %v6170
    %v6268 = vunpack.c.l.b16 %v6171
    %v6269 = vunpack.c.l.b16 %v6172
    %v6270 = vunpack.c.l.b16 %v6173
    %v6271 = vunpack.c.l.b16 %v6174
    %v6272 = vunpack.c.l.b16 %v6175
    %v6273 = vunpack.c.l.b16 %v6176
    %v6274 = vunpack.c.l.b16 %v6177
    %v6275 = vunpack.c.l.b16 %v6178
    %v6276 = vunpack.c.l.b16 %v6179
    %v6277 = vunpack.c.l.b16 %v6180
    %v6278 = vunpack.c.l.b16 %v6181
    %v6279 = vunpack.c.l.b16 %v6182
    %v6280 = vunpack.c.l.b16 %v6183
    %v6281 = vunpack.c.l.b16 %v6184
    %v6282 = vunpack.c.l.b16 %v6185
    %v6283 = vunpack.c.l.b16 %v6186
    %v6284 = vunpack.c.l.b16 %v6187
    %v6285 = vunpack.c.l.b16 %v6188
    %v6286 = vunpack.c.l.b16 %v6189
    %v6287 = vunpack.c.l.b16 %v6190
    %v6288 = vunpack.c.l.b16 %v6191
    %v6289 = vunpack.c.l.b16 %v6192
    %v6290 = vunpack.c.l.b16 %v6193
    %v6291 = vunpack.c.l.b16 %v6194
    %v6292 = vunpack.c.l.b16 %v6195
    %v6293 = vunpack.c.l.b16 %v6196
    %v6294 = vunpack.c.l.b16 %v6197
    %v6295 = vunpack.c.l.b16 %v6198
    %v6296 = vunpack.c.l.b16 %v6199
    %v6297 = vunpack.c.l.b16 %v6200
    %v6298 = vunpack.c.l.b16 %v6201
    %v6299 = vunpack.c.l.b16 %v6202
    %v6300 = vunpack.c.l.b16 %v6203
    %v6301 = vunpack.c.l.b16 %v6204
    %v6302 = vunpack.c.l.b16 %v6205
    %v6303 = vunpack.c.l.b16 %v6206
    %v6304 = vunpack.c.l.b16 %v6207
    %v6305 = vunpack.c.l.b16 %v6208
    %v6306 = vunpack.c.l.b16 %v6209
    %v6307 = vunpack.c.l.b16 %v6210
    %v6308 = vpack.c.b16 %v6261, %v6260
    %v6309 = vpack.c.b16 %v6263, %v6262
    %v6310 = vpack.c.b16 %v6265, %v6264
    %v6311 = vpack.c.b16 %v6267, %v6266
    %v6312 = vpack.c.b16 %v6269, %v6268
    %v6313 = vpack.c.b16 %v6271, %v6270
    %v6314 = vpack.c.b16 %v6273, %v6272
    %v6315 = vpack.c.b16 %v6275, %v6274
    %v6316 = vpack.c.b16 %v6277, %v6276
    %v6317 = vpack.c.b16 %v6279, %v6278
    %v6318 = vpack.c.b16 %v6281, %v6280
    %v6319 = vpack.c.b16 %v6283, %v6282
    %v6320 = vpack.c.b16 %v6285, %v6284
    %v6321 = vpack.c.b16 %v6287, %v6286
    %v6322 = vpack.c.b16 %v6289, %v6288
    %v6323 = vpack.c.b16 %v6291, %v6290
    %v6324 = vpack.c.b16 %v6293, %v6292
    %v6325 = vpack.c.b16 %v6295, %v6294
    %v6326 = vpack.c.b16 %v6297, %v6296
    %v6327 = vpack.c.b16 %v6299, %v6298
    %v6328 = vpack.c.b16 %v6301, %v6300
    %v6329 = vpack.c.b16 %v6303, %v6302
    %v6330 = vpack.c.b16 %v6305, %v6304
    %v6331 = vpack.c.b16 %v6307, %v6306
    %6356 = vmatpush.bf16.msra.mxu0 %v6315
    %6357 = vmatpush.bf16.msra.mxu0 %v6314
    %6358 = vmatpush.bf16.msra.mxu0 %v6313
    %6359 = vmatpush.bf16.msra.mxu0 %v6312
    %6360 = vmatpush.bf16.msra.mxu0 %v6311
    %6361 = vmatpush.bf16.msra.mxu0 %v6310
    %6362 = vmatpush.bf16.msra.mxu0 %v6309
    %6363 = vmatpush.bf16.msra.mxu0 %v6308
    %6364 = vmatmul.bf16.gmra.mxu0 %v6050
    %v6365 = vpop.f32.mrf.mxu0
    %v6366 = vadd.f32 %v6211, %v6365
    %v6367 = vpop.f32.mrf.mxu0
    %v6368 = vadd.f32 %v6211, %v6367
    %6369 = vmatmul.bf16.gmra.mxu0 %v6051
    %v6370 = vpop.f32.mrf.mxu0
    %v6371 = vadd.f32 %v6211, %v6370
    %v6372 = vpop.f32.mrf.mxu0
    %v6373 = vadd.f32 %v6211, %v6372
    %6374 = vmatmul.bf16.gmra.mxu0 %v6052
    %v6375 = vpop.f32.mrf.mxu0
    %v6376 = vadd.f32 %v6211, %v6375
    %v6377 = vpop.f32.mrf.mxu0
    %v6378 = vadd.f32 %v6211, %v6377
    %6379 = vmatmul.bf16.gmra.mxu0 %v6053
    %v6380 = vpop.f32.mrf.mxu0
    %v6381 = vadd.f32 %v6211, %v6380
    %v6382 = vpop.f32.mrf.mxu0
    %v6383 = vadd.f32 %v6211, %v6382
    %6384 = vmatmul.bf16.gmra.mxu0 %v6054
    %v6385 = vpop.f32.mrf.mxu0
    %v6386 = vadd.f32 %v6211, %v6385
    %v6387 = vpop.f32.mrf.mxu0
    %v6388 = vadd.f32 %v6211, %v6387
    %6389 = vmatmul.bf16.gmra.mxu0 %v6055
    %v6390 = vpop.f32.mrf.mxu0
    %v6391 = vadd.f32 %v6211, %v6390
    %v6392 = vpop.f32.mrf.mxu0
    %v6393 = vadd.f32 %v6211, %v6392
    %6394 = vmatmul.bf16.gmra.mxu0 %v6056
    %v6395 = vpop.f32.mrf.mxu0
    %v6396 = vadd.f32 %v6211, %v6395
    %v6397 = vpop.f32.mrf.mxu0
    %v6398 = vadd.f32 %v6211, %v6397
    %6399 = vmatmul.bf16.gmra.mxu0 %v6057
    %v6400 = vpop.f32.mrf.mxu0
    %v6401 = vadd.f32 %v6211, %v6400
    %v6402 = vpop.f32.mrf.mxu0
    %v6403 = vadd.f32 %v6211, %v6402
    %6404 = vdwg.mxu0
    %6405 = vmatpush.bf16.msra.mxu0 %v6323
    %6406 = vmatpush.bf16.msra.mxu0 %v6322
    %6407 = vmatpush.bf16.msra.mxu0 %v6321
    %6408 = vmatpush.bf16.msra.mxu0 %v6320
    %6409 = vmatpush.bf16.msra.mxu0 %v6319
    %6410 = vmatpush.bf16.msra.mxu0 %v6318
    %6411 = vmatpush.bf16.msra.mxu0 %v6317
    %6412 = vmatpush.bf16.msra.mxu0 %v6316
    %6413 = vmatmul.bf16.gmra.mxu0 %v6098
    %v6414 = vpop.f32.mrf.mxu0
    %v6415 = vadd.f32 %v6366, %v6414
    %v6416 = vpop.f32.mrf.mxu0
    %v6417 = vadd.f32 %v6368, %v6416
    %6418 = vmatmul.bf16.gmra.mxu0 %v6099
    %v6419 = vpop.f32.mrf.mxu0
    %v6420 = vadd.f32 %v6371, %v6419
    %v6421 = vpop.f32.mrf.mxu0
    %v6422 = vadd.f32 %v6373, %v6421
    %6423 = vmatmul.bf16.gmra.mxu0 %v6100
    %v6424 = vpop.f32.mrf.mxu0
    %v6425 = vadd.f32 %v6376, %v6424
    %v6426 = vpop.f32.mrf.mxu0
    %v6427 = vadd.f32 %v6378, %v6426
    %6428 = vmatmul.bf16.gmra.mxu0 %v6101
    %v6429 = vpop.f32.mrf.mxu0
    %v6430 = vadd.f32 %v6381, %v6429
    %v6431 = vpop.f32.mrf.mxu0
    %v6432 = vadd.f32 %v6383, %v6431
    %6433 = vmatmul.bf16.gmra.mxu0 %v6102
    %v6434 = vpop.f32.mrf.mxu0
    %v6435 = vadd.f32 %v6386, %v6434
    %v6436 = vpop.f32.mrf.mxu0
    %v6437 = vadd.f32 %v6388, %v6436
    %6438 = vmatmul.bf16.gmra.mxu0 %v6103
    %v6439 = vpop.f32.mrf.mxu0
    %v6440 = vadd.f32 %v6391, %v6439
    %v6441 = vpop.f32.mrf.mxu0
    %v6442 = vadd.f32 %v6393, %v6441
    %6443 = vmatmul.bf16.gmra.mxu0 %v6104
    %v6444 = vpop.f32.mrf.mxu0
    %v6445 = vadd.f32 %v6396, %v6444
    %v6446 = vpop.f32.mrf.mxu0
    %v6447 = vadd.f32 %v6398, %v6446
    %6448 = vmatmul.bf16.gmra.mxu0 %v6105
    %v6449 = vpop.f32.mrf.mxu0
    %v6450 = vadd.f32 %v6401, %v6449
    %v6451 = vpop.f32.mrf.mxu0
    %v6452 = vadd.f32 %v6403, %v6451
    %6453 = vdwg.mxu0
    %6454 = vmatpush.bf16.msra.mxu0 %v6331
    %6455 = vmatpush.bf16.msra.mxu0 %v6330
    %6456 = vmatpush.bf16.msra.mxu0 %v6329
    %6457 = vmatpush.bf16.msra.mxu0 %v6328
    %6458 = vmatpush.bf16.msra.mxu0 %v6327
    %6459 = vmatpush.bf16.msra.mxu0 %v6326
    %6460 = vmatpush.bf16.msra.mxu0 %v6325
    %6461 = vmatpush.bf16.msra.mxu0 %v6324
    %6462 = vmatmul.bf16.gmra.mxu0 %v6146
    %v6463 = vpop.f32.mrf.mxu0
    %v6464 = vadd.f32 %v6415, %v6463
    %v6465 = vpop.f32.mrf.mxu0
    %v6466 = vadd.f32 %v6417, %v6465
    %6467 = vmatmul.bf16.gmra.mxu0 %v6147
    %v6468 = vpop.f32.mrf.mxu0
    %v6469 = vadd.f32 %v6420, %v6468
    %v6470 = vpop.f32.mrf.mxu0
    %v6471 = vadd.f32 %v6422, %v6470
    %6472 = vmatmul.bf16.gmra.mxu0 %v6148
    %v6473 = vpop.f32.mrf.mxu0
    %v6474 = vadd.f32 %v6425, %v6473
    %v6475 = vpop.f32.mrf.mxu0
    %v6476 = vadd.f32 %v6427, %v6475
    %6477 = vmatmul.bf16.gmra.mxu0 %v6149
    %v6478 = vpop.f32.mrf.mxu0
    %v6479 = vadd.f32 %v6430, %v6478
    %v6480 = vpop.f32.mrf.mxu0
    %v6481 = vadd.f32 %v6432, %v6480
    %6482 = vmatmul.bf16.gmra.mxu0 %v6150
    %v6483 = vpop.f32.mrf.mxu0
    %v6484 = vadd.f32 %v6435, %v6483
    %v6485 = vpop.f32.mrf.mxu0
    %v6486 = vadd.f32 %v6437, %v6485
    %6487 = vmatmul.bf16.gmra.mxu0 %v6151
    %v6488 = vpop.f32.mrf.mxu0
    %v6489 = vadd.f32 %v6440, %v6488
    %v6490 = vpop.f32.mrf.mxu0
    %v6491 = vadd.f32 %v6442, %v6490
    %6492 = vmatmul.bf16.gmra.mxu0 %v6152
    %v6493 = vpop.f32.mrf.mxu0
    %v6494 = vadd.f32 %v6445, %v6493
    %v6495 = vpop.f32.mrf.mxu0
    %v6496 = vadd.f32 %v6447, %v6495
    %6497 = vmatmul.bf16.gmra.mxu0 %v6153
    %v6498 = vpop.f32.mrf.mxu0
    %v6499 = vadd.f32 %v6450, %v6498
    %v6500 = vpop.f32.mrf.mxu0
    %v6501 = vadd.f32 %v6452, %v6500
    %6502 = vdwg.mxu0
    %v6503 = vtanh.pop %v6464
    %v6504 = vtanh.pop %v6466
    %v6505 = vtanh.pop %v6469
    %v6506 = vtanh.pop %v6471
    %v6507 = vtanh.pop %v6474
    %v6508 = vtanh.pop %v6476
    %v6509 = vtanh.pop %v6479
    %v6510 = vtanh.pop %v6481
    %v6511 = vtanh.pop %v6484
    %v6512 = vtanh.pop %v6486
    %v6513 = vtanh.pop %v6489
    %v6514 = vtanh.pop %v6491
    %v6515 = vtanh.pop %v6494
    %v6516 = vtanh.pop %v6496
    %v6517 = vtanh.pop %v6499
    %v6518 = vtanh.pop %v6501
    %v6519 = vxor.u32 %v6464, 2147483648
    %v6520 = vxor.u32 %v6466, 2147483648
    %v6521 = vxor.u32 %v6469, 2147483648
    %v6522 = vxor.u32 %v6471, 2147483648
    %v6523 = vxor.u32 %v6474, 2147483648
    %v6524 = vxor.u32 %v6476, 2147483648
    %v6525 = vxor.u32 %v6479, 2147483648
    %v6526 = vxor.u32 %v6481, 2147483648
    %v6527 = vxor.u32 %v6484, 2147483648
    %v6528 = vxor.u32 %v6486, 2147483648
    %v6529 = vxor.u32 %v6489, 2147483648
    %v6530 = vxor.u32 %v6491, 2147483648
    %v6531 = vxor.u32 %v6494, 2147483648
    %v6532 = vxor.u32 %v6496, 2147483648
    %v6533 = vxor.u32 %v6499, 2147483648
    %v6534 = vxor.u32 %v6501, 2147483648
    %v6535 = vmul.f32 %v6519, 1.442695
    %v6536 = vpow.pop %v6535
    %v6537 = vmul.f32 %v6520, 1.442695
    %v6538 = vpow.pop %v6537
    %v6539 = vmul.f32 %v6521, 1.442695
    %v6540 = vpow.pop %v6539
    %v6541 = vmul.f32 %v6522, 1.442695
    %v6542 = vpow.pop %v6541
    %v6543 = vmul.f32 %v6523, 1.442695
    %v6544 = vpow.pop %v6543
    %v6545 = vmul.f32 %v6524, 1.442695
    %v6546 = vpow.pop %v6545
    %v6547 = vmul.f32 %v6525, 1.442695
    %v6548 = vpow.pop %v6547
    %v6549 = vmul.f32 %v6526, 1.442695
    %v6550 = vpow.pop %v6549
    %v6551 = vmul.f32 %v6527, 1.442695
    %v6552 = vpow.pop %v6551
    %v6553 = vmul.f32 %v6528, 1.442695
    %v6554 = vpow.pop %v6553
    %v6555 = vmul.f32 %v6529, 1.442695
    %v6556 = vpow.pop %v6555
    %v6557 = vmul.f32 %v6530, 1.442695
    %v6558 = vpow.pop %v6557
    %v6559 = vmul.f32 %v6531, 1.442695
    %v6560 = vpow.pop %v6559
    %v6561 = vmul.f32 %v6532, 1.442695
    %v6562 = vpow.pop %v6561
    %v6563 = vmul.f32 %v6533, 1.442695
    %v6564 = vpow.pop %v6563
    %v6565 = vmul.f32 %v6534, 1.442695
    %v6566 = vpow.pop %v6565
    %v6567 = vadd.f32 %v6536, 1.0
    %v6568 = vadd.f32 %v6538, 1.0
    %v6569 = vadd.f32 %v6540, 1.0
    %v6570 = vadd.f32 %v6542, 1.0
    %v6571 = vadd.f32 %v6544, 1.0
    %v6572 = vadd.f32 %v6546, 1.0
    %v6573 = vadd.f32 %v6548, 1.0
    %v6574 = vadd.f32 %v6550, 1.0
    %v6575 = vadd.f32 %v6552, 1.0
    %v6576 = vadd.f32 %v6554, 1.0
    %v6577 = vadd.f32 %v6556, 1.0
    %v6578 = vadd.f32 %v6558, 1.0
    %v6579 = vadd.f32 %v6560, 1.0
    %v6580 = vadd.f32 %v6562, 1.0
    %v6581 = vadd.f32 %v6564, 1.0
    %v6582 = vadd.f32 %v6566, 1.0
    %v6583 = vrcp.pop %v6567
    %v6584 = vmul.f32 %v6567, %v6583
    %v6585 = vsub.f32 1.0, %v6584
    %v6586 = vmul.f32 %v6583, %v6585
    %v6587 = vadd.f32 %v6583, %v6586
    %vm6588 = vweird.f32 %v6567
    %vm6589 = vweird.f32 %v6583
    %vm6590 = vmor %vm6588, %vm6589
    %v6591 = vsel %vm6590, %v6583, %v6587
    %v6592 = vand.u32 2147483647, %v6567
    %vm6593 = vcmp.eq.f32.partialorder %v6592, 8.507059e+37
    %v6594 = vand.u32 %v6567, 2147483648
    %v6595 = vor.u32 1.1754944e-38, %v6594
    %v6596 = vsel %vm6593, %v6595, %v6591
    %v6597 = vmul.f32 1.0, %v6596
    %v6598 = vrcp.pop %v6568
    %v6599 = vmul.f32 %v6568, %v6598
    %v6600 = vsub.f32 1.0, %v6599
    %v6601 = vmul.f32 %v6598, %v6600
    %v6602 = vadd.f32 %v6598, %v6601
    %vm6603 = vweird.f32 %v6568
    %vm6604 = vweird.f32 %v6598
    %vm6605 = vmor %vm6603, %vm6604
    %v6606 = vsel %vm6605, %v6598, %v6602
    %v6607 = vand.u32 2147483647, %v6568
    %vm6608 = vcmp.eq.f32.partialorder %v6607, 8.507059e+37
    %v6609 = vand.u32 %v6568, 2147483648
    %v6610 = vor.u32 1.1754944e-38, %v6609
    %v6611 = vsel %vm6608, %v6610, %v6606
    %v6612 = vmul.f32 1.0, %v6611
    %v6613 = vrcp.pop %v6569
    %v6614 = vmul.f32 %v6569, %v6613
    %v6615 = vsub.f32 1.0, %v6614
    %v6616 = vmul.f32 %v6613, %v6615
    %v6617 = vadd.f32 %v6613, %v6616
    %vm6618 = vweird.f32 %v6569
    %vm6619 = vweird.f32 %v6613
    %vm6620 = vmor %vm6618, %vm6619
    %v6621 = vsel %vm6620, %v6613, %v6617
    %v6622 = vand.u32 2147483647, %v6569
    %vm6623 = vcmp.eq.f32.partialorder %v6622, 8.507059e+37
    %v6624 = vand.u32 %v6569, 2147483648
    %v6625 = vor.u32 1.1754944e-38, %v6624
    %v6626 = vsel %vm6623, %v6625, %v6621
    %v6627 = vmul.f32 1.0, %v6626
    %v6628 = vrcp.pop %v6570
    %v6629 = vmul.f32 %v6570, %v6628
    %v6630 = vsub.f32 1.0, %v6629
    %v6631 = vmul.f32 %v6628, %v6630
    %v6632 = vadd.f32 %v6628, %v6631
    %vm6633 = vweird.f32 %v6570
    %vm6634 = vweird.f32 %v6628
    %vm6635 = vmor %vm6633, %vm6634
    %v6636 = vsel %vm6635, %v6628, %v6632
    %v6637 = vand.u32 2147483647, %v6570
    %vm6638 = vcmp.eq.f32.partialorder %v6637, 8.507059e+37
    %v6639 = vand.u32 %v6570, 2147483648
    %v6640 = vor.u32 1.1754944e-38, %v6639
    %v6641 = vsel %vm6638, %v6640, %v6636
    %v6642 = vmul.f32 1.0, %v6641
    %v6643 = vrcp.pop %v6571
    %v6644 = vmul.f32 %v6571, %v6643
    %v6645 = vsub.f32 1.0, %v6644
    %v6646 = vmul.f32 %v6643, %v6645
    %v6647 = vadd.f32 %v6643, %v6646
    %vm6648 = vweird.f32 %v6571
    %vm6649 = vweird.f32 %v6643
    %vm6650 = vmor %vm6648, %vm6649
    %v6651 = vsel %vm6650, %v6643, %v6647
    %v6652 = vand.u32 2147483647, %v6571
    %vm6653 = vcmp.eq.f32.partialorder %v6652, 8.507059e+37
    %v6654 = vand.u32 %v6571, 2147483648
    %v6655 = vor.u32 1.1754944e-38, %v6654
    %v6656 = vsel %vm6653, %v6655, %v6651
    %v6657 = vmul.f32 1.0, %v6656
    %v6658 = vrcp.pop %v6572
    %v6659 = vmul.f32 %v6572, %v6658
    %v6660 = vsub.f32 1.0, %v6659
    %v6661 = vmul.f32 %v6658, %v6660
    %v6662 = vadd.f32 %v6658, %v6661
    %vm6663 = vweird.f32 %v6572
    %vm6664 = vweird.f32 %v6658
    %vm6665 = vmor %vm6663, %vm6664
    %v6666 = vsel %vm6665, %v6658, %v6662
    %v6667 = vand.u32 2147483647, %v6572
    %vm6668 = vcmp.eq.f32.partialorder %v6667, 8.507059e+37
    %v6669 = vand.u32 %v6572, 2147483648
    %v6670 = vor.u32 1.1754944e-38, %v6669
    %v6671 = vsel %vm6668, %v6670, %v6666
    %v6672 = vmul.f32 1.0, %v6671
    %v6673 = vrcp.pop %v6573
    %v6674 = vmul.f32 %v6573, %v6673
    %v6675 = vsub.f32 1.0, %v6674
    %v6676 = vmul.f32 %v6673, %v6675
    %v6677 = vadd.f32 %v6673, %v6676
    %vm6678 = vweird.f32 %v6573
    %vm6679 = vweird.f32 %v6673
    %vm6680 = vmor %vm6678, %vm6679
    %v6681 = vsel %vm6680, %v6673, %v6677
    %v6682 = vand.u32 2147483647, %v6573
    %vm6683 = vcmp.eq.f32.partialorder %v6682, 8.507059e+37
    %v6684 = vand.u32 %v6573, 2147483648
    %v6685 = vor.u32 1.1754944e-38, %v6684
    %v6686 = vsel %vm6683, %v6685, %v6681
    %v6687 = vmul.f32 1.0, %v6686
    %v6688 = vrcp.pop %v6574
    %v6689 = vmul.f32 %v6574, %v6688
    %v6690 = vsub.f32 1.0, %v6689
    %v6691 = vmul.f32 %v6688, %v6690
    %v6692 = vadd.f32 %v6688, %v6691
    %vm6693 = vweird.f32 %v6574
    %vm6694 = vweird.f32 %v6688
    %vm6695 = vmor %vm6693, %vm6694
    %v6696 = vsel %vm6695, %v6688, %v6692
    %v6697 = vand.u32 2147483647, %v6574
    %vm6698 = vcmp.eq.f32.partialorder %v6697, 8.507059e+37
    %v6699 = vand.u32 %v6574, 2147483648
    %v6700 = vor.u32 1.1754944e-38, %v6699
    %v6701 = vsel %vm6698, %v6700, %v6696
    %v6702 = vmul.f32 1.0, %v6701
    %v6703 = vrcp.pop %v6575
    %v6704 = vmul.f32 %v6575, %v6703
    %v6705 = vsub.f32 1.0, %v6704
    %v6706 = vmul.f32 %v6703, %v6705
    %v6707 = vadd.f32 %v6703, %v6706
    %vm6708 = vweird.f32 %v6575
    %vm6709 = vweird.f32 %v6703
    %vm6710 = vmor %vm6708, %vm6709
    %v6711 = vsel %vm6710, %v6703, %v6707
    %v6712 = vand.u32 2147483647, %v6575
    %vm6713 = vcmp.eq.f32.partialorder %v6712, 8.507059e+37
    %v6714 = vand.u32 %v6575, 2147483648
    %v6715 = vor.u32 1.1754944e-38, %v6714
    %v6716 = vsel %vm6713, %v6715, %v6711
    %v6717 = vmul.f32 1.0, %v6716
    %v6718 = vrcp.pop %v6576
    %v6719 = vmul.f32 %v6576, %v6718
    %v6720 = vsub.f32 1.0, %v6719
    %v6721 = vmul.f32 %v6718, %v6720
    %v6722 = vadd.f32 %v6718, %v6721
    %vm6723 = vweird.f32 %v6576
    %vm6724 = vweird.f32 %v6718
    %vm6725 = vmor %vm6723, %vm6724
    %v6726 = vsel %vm6725, %v6718, %v6722
    %v6727 = vand.u32 2147483647, %v6576
    %vm6728 = vcmp.eq.f32.partialorder %v6727, 8.507059e+37
    %v6729 = vand.u32 %v6576, 2147483648
    %v6730 = vor.u32 1.1754944e-38, %v6729
    %v6731 = vsel %vm6728, %v6730, %v6726
    %v6732 = vmul.f32 1.0, %v6731
    %v6733 = vrcp.pop %v6577
    %v6734 = vmul.f32 %v6577, %v6733
    %v6735 = vsub.f32 1.0, %v6734
    %v6736 = vmul.f32 %v6733, %v6735
    %v6737 = vadd.f32 %v6733, %v6736
    %vm6738 = vweird.f32 %v6577
    %vm6739 = vweird.f32 %v6733
    %vm6740 = vmor %vm6738, %vm6739
    %v6741 = vsel %vm6740, %v6733, %v6737
    %v6742 = vand.u32 2147483647, %v6577
    %vm6743 = vcmp.eq.f32.partialorder %v6742, 8.507059e+37
    %v6744 = vand.u32 %v6577, 2147483648
    %v6745 = vor.u32 1.1754944e-38, %v6744
    %v6746 = vsel %vm6743, %v6745, %v6741
    %v6747 = vmul.f32 1.0, %v6746
    %v6748 = vrcp.pop %v6578
    %v6749 = vmul.f32 %v6578, %v6748
    %v6750 = vsub.f32 1.0, %v6749
    %v6751 = vmul.f32 %v6748, %v6750
    %v6752 = vadd.f32 %v6748, %v6751
    %vm6753 = vweird.f32 %v6578
    %vm6754 = vweird.f32 %v6748
    %vm6755 = vmor %vm6753, %vm6754
    %v6756 = vsel %vm6755, %v6748, %v6752
    %v6757 = vand.u32 2147483647, %v6578
    %vm6758 = vcmp.eq.f32.partialorder %v6757, 8.507059e+37
    %v6759 = vand.u32 %v6578, 2147483648
    %v6760 = vor.u32 1.1754944e-38, %v6759
    %v6761 = vsel %vm6758, %v6760, %v6756
    %v6762 = vmul.f32 1.0, %v6761
    %v6763 = vrcp.pop %v6579
    %v6764 = vmul.f32 %v6579, %v6763
    %v6765 = vsub.f32 1.0, %v6764
    %v6766 = vmul.f32 %v6763, %v6765
    %v6767 = vadd.f32 %v6763, %v6766
    %vm6768 = vweird.f32 %v6579
    %vm6769 = vweird.f32 %v6763
    %vm6770 = vmor %vm6768, %vm6769
    %v6771 = vsel %vm6770, %v6763, %v6767
    %v6772 = vand.u32 2147483647, %v6579
    %vm6773 = vcmp.eq.f32.partialorder %v6772, 8.507059e+37
    %v6774 = vand.u32 %v6579, 2147483648
    %v6775 = vor.u32 1.1754944e-38, %v6774
    %v6776 = vsel %vm6773, %v6775, %v6771
    %v6777 = vmul.f32 1.0, %v6776
    %v6778 = vrcp.pop %v6580
    %v6779 = vmul.f32 %v6580, %v6778
    %v6780 = vsub.f32 1.0, %v6779
    %v6781 = vmul.f32 %v6778, %v6780
    %v6782 = vadd.f32 %v6778, %v6781
    %vm6783 = vweird.f32 %v6580
    %vm6784 = vweird.f32 %v6778
    %vm6785 = vmor %vm6783, %vm6784
    %v6786 = vsel %vm6785, %v6778, %v6782
    %v6787 = vand.u32 2147483647, %v6580
    %vm6788 = vcmp.eq.f32.partialorder %v6787, 8.507059e+37
    %v6789 = vand.u32 %v6580, 2147483648
    %v6790 = vor.u32 1.1754944e-38, %v6789
    %v6791 = vsel %vm6788, %v6790, %v6786
    %v6792 = vmul.f32 1.0, %v6791
    %v6793 = vrcp.pop %v6581
    %v6794 = vmul.f32 %v6581, %v6793
    %v6795 = vsub.f32 1.0, %v6794
    %v6796 = vmul.f32 %v6793, %v6795
    %v6797 = vadd.f32 %v6793, %v6796
    %vm6798 = vweird.f32 %v6581
    %vm6799 = vweird.f32 %v6793
    %vm6800 = vmor %vm6798, %vm6799
    %v6801 = vsel %vm6800, %v6793, %v6797
    %v6802 = vand.u32 2147483647, %v6581
    %vm6803 = vcmp.eq.f32.partialorder %v6802, 8.507059e+37
    %v6804 = vand.u32 %v6581, 2147483648
    %v6805 = vor.u32 1.1754944e-38, %v6804
    %v6806 = vsel %vm6803, %v6805, %v6801
    %v6807 = vmul.f32 1.0, %v6806
    %v6808 = vrcp.pop %v6582
    %v6809 = vmul.f32 %v6582, %v6808
    %v6810 = vsub.f32 1.0, %v6809
    %v6811 = vmul.f32 %v6808, %v6810
    %v6812 = vadd.f32 %v6808, %v6811
    %vm6813 = vweird.f32 %v6582
    %vm6814 = vweird.f32 %v6808
    %vm6815 = vmor %vm6813, %vm6814
    %v6816 = vsel %vm6815, %v6808, %v6812
    %v6817 = vand.u32 2147483647, %v6582
    %vm6818 = vcmp.eq.f32.partialorder %v6817, 8.507059e+37
    %v6819 = vand.u32 %v6582, 2147483648
    %v6820 = vor.u32 1.1754944e-38, %v6819
    %v6821 = vsel %vm6818, %v6820, %v6816
    %v6822 = vmul.f32 1.0, %v6821
    %6839 = vrot.lane.b32.xlu0 %v6597, 64
    %v6840 = vpop.permute.xlu0 %6839
    %6841 = vrot.lane.b32.xlu0 %v6612, 64
    %v6842 = vpop.permute.xlu0 %6841
    %6843 = vrot.lane.b32.xlu0 %v6627, 64
    %v6844 = vpop.permute.xlu0 %6843
    %6845 = vrot.lane.b32.xlu0 %v6642, 64
    %v6846 = vpop.permute.xlu0 %6845
    %6847 = vrot.lane.b32.xlu0 %v6657, 64
    %v6848 = vpop.permute.xlu0 %6847
    %6849 = vrot.lane.b32.xlu0 %v6672, 64
    %v6850 = vpop.permute.xlu0 %6849
    %6851 = vrot.lane.b32.xlu0 %v6687, 64
    %v6852 = vpop.permute.xlu0 %6851
    %6853 = vrot.lane.b32.xlu0 %v6702, 64
    %v6854 = vpop.permute.xlu0 %6853
    %6855 = vrot.lane.b32.xlu0 %v6717, 64
    %v6856 = vpop.permute.xlu0 %6855
    %6857 = vrot.lane.b32.xlu0 %v6732, 64
    %v6858 = vpop.permute.xlu0 %6857
    %6859 = vrot.lane.b32.xlu0 %v6747, 64
    %v6860 = vpop.permute.xlu0 %6859
    %6861 = vrot.lane.b32.xlu0 %v6762, 64
    %v6862 = vpop.permute.xlu0 %6861
    %6863 = vrot.lane.b32.xlu0 %v6777, 64
    %v6864 = vpop.permute.xlu0 %6863
    %6865 = vrot.lane.b32.xlu0 %v6792, 64
    %v6866 = vpop.permute.xlu0 %6865
    %6867 = vrot.lane.b32.xlu0 %v6807, 64
    %v6868 = vpop.permute.xlu0 %6867
    %6869 = vrot.lane.b32.xlu0 %v6822, 64
    %v6870 = vpop.permute.xlu0 %6869
    %v6887 = vmul.f32 %v6503, %v6840
    %v6888 = vmul.f32 %v6504, %v6842
    %v6889 = vmul.f32 %v6505, %v6844
    %v6890 = vmul.f32 %v6506, %v6846
    %v6891 = vmul.f32 %v6507, %v6848
    %v6892 = vmul.f32 %v6508, %v6850
    %v6893 = vmul.f32 %v6509, %v6852
    %v6894 = vmul.f32 %v6510, %v6854
    %v6895 = vmul.f32 %v6511, %v6856
    %v6896 = vmul.f32 %v6512, %v6858
    %v6897 = vmul.f32 %v6513, %v6860
    %v6898 = vmul.f32 %v6514, %v6862
    %v6899 = vmul.f32 %v6515, %v6864
    %v6900 = vmul.f32 %v6516, %v6866
    %v6901 = vmul.f32 %v6517, %v6868
    %v6902 = vmul.f32 %v6518, %v6870
    %v6903 = vpack.c.bf16 %v6888, %v6887
    %v6904 = vpack.c.bf16 %v6890, %v6889
    %v6905 = vpack.c.bf16 %v6892, %v6891
    %v6906 = vpack.c.bf16 %v6894, %v6893
    %v6907 = vpack.c.bf16 %v6896, %v6895
    %v6908 = vpack.c.bf16 %v6898, %v6897
    %v6909 = vpack.c.bf16 %v6900, %v6899
    %v6910 = vpack.c.bf16 %v6902, %v6901
    %s6911 = scalar_lea.vmem [#allocation6], 256
    %v6912 = vld [vmem:[%s6911] sm:$0xff]
    %v6913 = vld [vmem:[%s6911 + $0x8] sm:$0xff]
    %v6914 = vld [vmem:[%s6911 + $0x10] sm:$0xff]
    %v6915 = vld [vmem:[%s6911 + $0x18] sm:$0xff]
    %v6916 = vld [vmem:[%s6911 + $0x20] sm:$0xff]
    %v6917 = vld [vmem:[%s6911 + $0x28] sm:$0xff]
    %v6918 = vld [vmem:[%s6911 + $0x30] sm:$0xff]
    %v6919 = vld [vmem:[%s6911 + $0x38] sm:$0xff]
    %v6928 = vunpack.c.l.b16 %v6912
    %v6929 = vunpack.c.h.b16 %v6912
    %v6930 = vunpack.c.l.b16 %v6913
    %v6931 = vunpack.c.h.b16 %v6913
    %v6932 = vunpack.c.l.b16 %v6914
    %v6933 = vunpack.c.h.b16 %v6914
    %v6934 = vunpack.c.l.b16 %v6915
    %v6935 = vunpack.c.h.b16 %v6915
    %v6936 = vunpack.c.l.b16 %v6916
    %v6937 = vunpack.c.h.b16 %v6916
    %v6938 = vunpack.c.l.b16 %v6917
    %v6939 = vunpack.c.h.b16 %v6917
    %v6940 = vunpack.c.l.b16 %v6918
    %v6941 = vunpack.c.h.b16 %v6918
    %v6942 = vunpack.c.l.b16 %v6919
    %v6943 = vunpack.c.h.b16 %v6919
    %v6944 = vpack.c.b16 %v6930, %v6928
    %v6945 = vpack.c.b16 %v6931, %v6929
    %v6946 = vpack.c.b16 %v6934, %v6932
    %v6947 = vpack.c.b16 %v6935, %v6933
    %v6948 = vpack.c.b16 %v6938, %v6936
    %v6949 = vpack.c.b16 %v6939, %v6937
    %v6950 = vpack.c.b16 %v6942, %v6940
    %v6951 = vpack.c.b16 %v6943, %v6941
    %v6961 = vsel %vm1705, %v6903, 0
    %v6964 = vsel %vm1705, %v6904, 0
    %v6967 = vsel %vm1705, %v6905, 0
    %v6970 = vsel %vm1705, %v6906, 0
    %v6973 = vsel %vm1705, %v6907, 0
    %v6976 = vsel %vm1705, %v6908, 0
    %v6979 = vsel %vm1705, %v6909, 0
    %v6982 = vsel %vm1705, %v6910, 0
    %6984 = vmatpush.bf16.msra.mxu0 0
    %6985 = vmatpush.bf16.msra.mxu0 0
    %6986 = vmatpush.bf16.msra.mxu0 0
    %6987 = vmatpush.bf16.msra.mxu0 0
    %6988 = vmatpush.bf16.msra.mxu0 %v6950
    %6989 = vmatpush.bf16.msra.mxu0 %v6948
    %6990 = vmatpush.bf16.msra.mxu0 %v6946
    %6991 = vmatpush.bf16.msra.mxu0 %v6944
    %6992 = vmatmul.bf16.gmra.mxu0 %v6961
    %v6993 = vpop.f32.mrf.mxu0
    %v6994 = vadd.f32 0.0, %v6993
    %v6995 = vpop.f32.mrf.mxu0
    %v6996 = vadd.f32 0.0, %v6995
    %6997 = vmatmul.bf16.gmra.mxu0 %v6964
    %v6998 = vpop.f32.mrf.mxu0
    %v6999 = vadd.f32 0.0, %v6998
    %v7000 = vpop.f32.mrf.mxu0
    %v7001 = vadd.f32 0.0, %v7000
    %7002 = vmatmul.bf16.gmra.mxu0 %v6967
    %v7003 = vpop.f32.mrf.mxu0
    %v7004 = vadd.f32 0.0, %v7003
    %v7005 = vpop.f32.mrf.mxu0
    %v7006 = vadd.f32 0.0, %v7005
    %7007 = vmatmul.bf16.gmra.mxu0 %v6970
    %v7008 = vpop.f32.mrf.mxu0
    %v7009 = vadd.f32 0.0, %v7008
    %v7010 = vpop.f32.mrf.mxu0
    %v7011 = vadd.f32 0.0, %v7010
    %7012 = vmatmul.bf16.gmra.mxu0 %v6973
    %v7013 = vpop.f32.mrf.mxu0
    %v7014 = vadd.f32 0.0, %v7013
    %v7015 = vpop.f32.mrf.mxu0
    %v7016 = vadd.f32 0.0, %v7015
    %7017 = vmatmul.bf16.gmra.mxu0 %v6976
    %v7018 = vpop.f32.mrf.mxu0
    %v7019 = vadd.f32 0.0, %v7018
    %v7020 = vpop.f32.mrf.mxu0
    %v7021 = vadd.f32 0.0, %v7020
    %7022 = vmatmul.bf16.gmra.mxu0 %v6979
    %v7023 = vpop.f32.mrf.mxu0
    %v7024 = vadd.f32 0.0, %v7023
    %v7025 = vpop.f32.mrf.mxu0
    %v7026 = vadd.f32 0.0, %v7025
    %7027 = vmatmul.bf16.gmra.mxu0 %v6982
    %v7028 = vpop.f32.mrf.mxu0
    %v7029 = vadd.f32 0.0, %v7028
    %v7030 = vpop.f32.mrf.mxu0
    %v7031 = vadd.f32 0.0, %v7030
    %7032 = vdwg.mxu0
    %7033 = vmatpush.bf16.msra.mxu0 0
    %7034 = vmatpush.bf16.msra.mxu0 0
    %7035 = vmatpush.bf16.msra.mxu0 0
    %7036 = vmatpush.bf16.msra.mxu0 0
    %7037 = vmatpush.bf16.msra.mxu0 %v6951
    %7038 = vmatpush.bf16.msra.mxu0 %v6949
    %7039 = vmatpush.bf16.msra.mxu0 %v6947
    %7040 = vmatpush.bf16.msra.mxu0 %v6945
    %7041 = vmatmul.bf16.gmra.mxu0 %v6961
    %v7042 = vpop.f32.mrf.mxu0
    %v7043 = vadd.f32 0.0, %v7042
    %v7044 = vpop.f32.mrf.mxu0
    %v7045 = vadd.f32 0.0, %v7044
    %7046 = vmatmul.bf16.gmra.mxu0 %v6964
    %v7047 = vpop.f32.mrf.mxu0
    %v7048 = vadd.f32 0.0, %v7047
    %v7049 = vpop.f32.mrf.mxu0
    %v7050 = vadd.f32 0.0, %v7049
    %7051 = vmatmul.bf16.gmra.mxu0 %v6967
    %v7052 = vpop.f32.mrf.mxu0
    %v7053 = vadd.f32 0.0, %v7052
    %v7054 = vpop.f32.mrf.mxu0
    %v7055 = vadd.f32 0.0, %v7054
    %7056 = vmatmul.bf16.gmra.mxu0 %v6970
    %v7057 = vpop.f32.mrf.mxu0
    %v7058 = vadd.f32 0.0, %v7057
    %v7059 = vpop.f32.mrf.mxu0
    %v7060 = vadd.f32 0.0, %v7059
    %7061 = vmatmul.bf16.gmra.mxu0 %v6973
    %v7062 = vpop.f32.mrf.mxu0
    %v7063 = vadd.f32 0.0, %v7062
    %v7064 = vpop.f32.mrf.mxu0
    %v7065 = vadd.f32 0.0, %v7064
    %7066 = vmatmul.bf16.gmra.mxu0 %v6976
    %v7067 = vpop.f32.mrf.mxu0
    %v7068 = vadd.f32 0.0, %v7067
    %v7069 = vpop.f32.mrf.mxu0
    %v7070 = vadd.f32 0.0, %v7069
    %7071 = vmatmul.bf16.gmra.mxu0 %v6979
    %v7072 = vpop.f32.mrf.mxu0
    %v7073 = vadd.f32 0.0, %v7072
    %v7074 = vpop.f32.mrf.mxu0
    %v7075 = vadd.f32 0.0, %v7074
    %7076 = vmatmul.bf16.gmra.mxu0 %v6982
    %v7077 = vpop.f32.mrf.mxu0
    %v7078 = vadd.f32 0.0, %v7077
    %v7079 = vpop.f32.mrf.mxu0
    %v7080 = vadd.f32 0.0, %v7079
    %7081 = vdwg.mxu0
    %v7082 = vld [vmem:[#allocation2] sm:$0xff]
    %v7083 = vld [vmem:[#allocation2 + $0x8] sm:$0xff]
    %v7084 = vld [vmem:[#allocation2 + $0x10] sm:$0xff]
    %v7085 = vld [vmem:[#allocation2 + $0x18] sm:$0xff]
    %v7086 = vld [vmem:[#allocation2 + $0x20] sm:$0xff]
    %v7087 = vld [vmem:[#allocation2 + $0x28] sm:$0xff]
    %v7088 = vld [vmem:[#allocation2 + $0x30] sm:$0xff]
    %v7089 = vld [vmem:[#allocation2 + $0x38] sm:$0xff]
    %v7090 = vld [vmem:[#allocation2 + $0x40] sm:$0xff]
    %v7091 = vld [vmem:[#allocation2 + $0x48] sm:$0xff]
    %v7092 = vld [vmem:[#allocation2 + $0x50] sm:$0xff]
    %v7093 = vld [vmem:[#allocation2 + $0x58] sm:$0xff]
    %v7094 = vld [vmem:[#allocation2 + $0x60] sm:$0xff]
    %v7095 = vld [vmem:[#allocation2 + $0x68] sm:$0xff]
    %v7096 = vld [vmem:[#allocation2 + $0x70] sm:$0xff]
    %v7097 = vld [vmem:[#allocation2 + $0x78] sm:$0xff]
    %v7098 = vadd.f32 %v7082, %v6994
    %v7099 = vadd.f32 %v7083, %v6996
    %v7100 = vadd.f32 %v7084, %v6999
    %v7101 = vadd.f32 %v7085, %v7001
    %v7102 = vadd.f32 %v7086, %v7004
    %v7103 = vadd.f32 %v7087, %v7006
    %v7104 = vadd.f32 %v7088, %v7009
    %v7105 = vadd.f32 %v7089, %v7011
    %v7106 = vadd.f32 %v7090, %v7014
    %v7107 = vadd.f32 %v7091, %v7016
    %v7108 = vadd.f32 %v7092, %v7019
    %v7109 = vadd.f32 %v7093, %v7021
    %v7110 = vadd.f32 %v7094, %v7024
    %v7111 = vadd.f32 %v7095, %v7026
    %v7112 = vadd.f32 %v7096, %v7029
    %v7113 = vadd.f32 %v7097, %v7031
    %7114 = vst [vmem:[#allocation2] sm:$0xff] %v7098
    %7115 = vst [vmem:[#allocation2 + $0x8] sm:$0xff] %v7099
    %7116 = vst [vmem:[#allocation2 + $0x10] sm:$0xff] %v7100
    %7117 = vst [vmem:[#allocation2 + $0x18] sm:$0xff] %v7101
    %7118 = vst [vmem:[#allocation2 + $0x20] sm:$0xff] %v7102
    %7119 = vst [vmem:[#allocation2 + $0x28] sm:$0xff] %v7103
    %7120 = vst [vmem:[#allocation2 + $0x30] sm:$0xff] %v7104
    %7121 = vst [vmem:[#allocation2 + $0x38] sm:$0xff] %v7105
    %7122 = vst [vmem:[#allocation2 + $0x40] sm:$0xff] %v7106
    %7123 = vst [vmem:[#allocation2 + $0x48] sm:$0xff] %v7107
    %7124 = vst [vmem:[#allocation2 + $0x50] sm:$0xff] %v7108
    %7125 = vst [vmem:[#allocation2 + $0x58] sm:$0xff] %v7109
    %7126 = vst [vmem:[#allocation2 + $0x60] sm:$0xff] %v7110
    %7127 = vst [vmem:[#allocation2 + $0x68] sm:$0xff] %v7111
    %7128 = vst [vmem:[#allocation2 + $0x70] sm:$0xff] %v7112
    %7129 = vst [vmem:[#allocation2 + $0x78] sm:$0xff] %v7113
    %v7130 = vperm.slane %v55, 3
    %v7131 = vadd.f32 %v7043, %v7130
    %v7132 = vadd.f32 %v7045, %v7130
    %v7133 = vadd.f32 %v7048, %v7130
    %v7134 = vadd.f32 %v7050, %v7130
    %v7135 = vadd.f32 %v7053, %v7130
    %v7136 = vadd.f32 %v7055, %v7130
    %v7137 = vadd.f32 %v7058, %v7130
    %v7138 = vadd.f32 %v7060, %v7130
    %v7139 = vadd.f32 %v7063, %v7130
    %v7140 = vadd.f32 %v7065, %v7130
    %v7141 = vadd.f32 %v7068, %v7130
    %v7142 = vadd.f32 %v7070, %v7130
    %v7143 = vadd.f32 %v7073, %v7130
    %v7144 = vadd.f32 %v7075, %v7130
    %v7145 = vadd.f32 %v7078, %v7130
    %v7146 = vadd.f32 %v7080, %v7130
    %v7147 = vadd.f32 %v7131, %v5858
    %v7148 = vadd.f32 %v7132, %v5859
    %v7149 = vadd.f32 %v7133, %v5860
    %v7150 = vadd.f32 %v7134, %v5861
    %v7151 = vadd.f32 %v7135, %v5862
    %v7152 = vadd.f32 %v7136, %v5863
    %v7153 = vadd.f32 %v7137, %v5864
    %v7154 = vadd.f32 %v7138, %v5865
    %v7155 = vadd.f32 %v7139, %v5866
    %v7156 = vadd.f32 %v7140, %v5867
    %v7157 = vadd.f32 %v7141, %v5868
    %v7158 = vadd.f32 %v7142, %v5869
    %v7159 = vadd.f32 %v7143, %v5870
    %v7160 = vadd.f32 %v7144, %v5871
    %v7161 = vadd.f32 %v7145, %v5872
    %v7162 = vadd.f32 %v7146, %v5873
    %v7163 = vpack.c.bf16 %v7147, %v7147
    %v7164 = vpack.c.bf16 %v7148, %v7148
    %v7165 = vpack.c.bf16 %v7149, %v7149
    %v7166 = vpack.c.bf16 %v7150, %v7150
    %v7167 = vpack.c.bf16 %v7151, %v7151
    %v7168 = vpack.c.bf16 %v7152, %v7152
    %v7169 = vpack.c.bf16 %v7153, %v7153
    %v7170 = vpack.c.bf16 %v7154, %v7154
    %v7171 = vpack.c.bf16 %v7155, %v7155
    %v7172 = vpack.c.bf16 %v7156, %v7156
    %v7173 = vpack.c.bf16 %v7157, %v7157
    %v7174 = vpack.c.bf16 %v7158, %v7158
    %v7175 = vpack.c.bf16 %v7159, %v7159
    %v7176 = vpack.c.bf16 %v7160, %v7160
    %v7177 = vpack.c.bf16 %v7161, %v7161
    %v7178 = vpack.c.bf16 %v7162, %v7162
    %v7179 = vrot.slane %v7147, 6
    %v7180 = vrot.slane %v7148, 6
    %v7181 = vrot.slane %v7149, 6
    %v7182 = vrot.slane %v7150, 6
    %v7183 = vrot.slane %v7151, 6
    %v7184 = vrot.slane %v7152, 6
    %v7185 = vrot.slane %v7153, 6
    %v7186 = vrot.slane %v7154, 6
    %v7187 = vrot.slane %v7155, 6
    %v7188 = vrot.slane %v7156, 6
    %v7189 = vrot.slane %v7157, 6
    %v7190 = vrot.slane %v7158, 6
    %v7191 = vrot.slane %v7159, 6
    %v7192 = vrot.slane %v7160, 6
    %v7193 = vrot.slane %v7161, 6
    %v7194 = vrot.slane %v7162, 6
    %v7195 = vsel %vm1941, %v7193, %v7194
    %v7196 = vsel %vm1941, %v7192, %v7193
    %v7197 = vsel %vm1941, %v7191, %v7192
    %v7198 = vsel %vm1941, %v7190, %v7191
    %v7199 = vsel %vm1941, %v7189, %v7190
    %v7200 = vsel %vm1941, %v7188, %v7189
    %v7201 = vsel %vm1941, %v7187, %v7188
    %v7202 = vsel %vm1941, %v7186, %v7187
    %v7203 = vsel %vm1941, %v7185, %v7186
    %v7204 = vsel %vm1941, %v7184, %v7185
    %v7205 = vsel %vm1941, %v7183, %v7184
    %v7206 = vsel %vm1941, %v7182, %v7183
    %v7207 = vsel %vm1941, %v7181, %v7182
    %v7208 = vsel %vm1941, %v7180, %v7181
    %v7209 = vsel %vm1941, %v7179, %v7180
    %v7210 = vsel %vm1941, %v7194, %v7179
    %v7211 = vpack.c.bf16 %v7210, %v7210
    %v7212 = vpack.c.bf16 %v7209, %v7209
    %v7213 = vpack.c.bf16 %v7208, %v7208
    %v7214 = vpack.c.bf16 %v7207, %v7207
    %v7215 = vpack.c.bf16 %v7206, %v7206
    %v7216 = vpack.c.bf16 %v7205, %v7205
    %v7217 = vpack.c.bf16 %v7204, %v7204
    %v7218 = vpack.c.bf16 %v7203, %v7203
    %v7219 = vpack.c.bf16 %v7202, %v7202
    %v7220 = vpack.c.bf16 %v7201, %v7201
    %v7221 = vpack.c.bf16 %v7200, %v7200
    %v7222 = vpack.c.bf16 %v7199, %v7199
    %v7223 = vpack.c.bf16 %v7198, %v7198
    %v7224 = vpack.c.bf16 %v7197, %v7197
    %v7225 = vpack.c.bf16 %v7196, %v7196
    %v7226 = vpack.c.bf16 %v7195, %v7195
    %v7227 = vsel %vm2006, %v7211, 0
    %v7228 = vsel %vm2007, %v7212, 0
    %v7229 = vsel %vm2008, %v7213, 0
    %v7230 = vsel %vm2009, %v7214, 0
    %v7231 = vsel %vm2010, %v7215, 0
    %v7232 = vsel %vm2011, %v7216, 0
    %v7233 = vsel %vm2012, %v7217, 0
    %v7234 = vsel %vm2013, %v7218, 0
    %v7235 = vsel %vm2014, %v7219, 0
    %v7236 = vsel %vm2015, %v7220, 0
    %v7237 = vsel %vm2016, %v7221, 0
    %v7238 = vsel %vm2017, %v7222, 0
    %v7239 = vsel %vm2018, %v7223, 0
    %v7240 = vsel %vm2019, %v7224, 0
    %v7241 = vsel %vm2020, %v7225, 0
    %v7242 = vsel %vm2021, %v7226, 0
    %v7243 = vrot.slane %v7147, 2
    %v7244 = vrot.slane %v7148, 2
    %v7245 = vrot.slane %v7149, 2
    %v7246 = vrot.slane %v7150, 2
    %v7247 = vrot.slane %v7151, 2
    %v7248 = vrot.slane %v7152, 2
    %v7249 = vrot.slane %v7153, 2
    %v7250 = vrot.slane %v7154, 2
    %v7251 = vrot.slane %v7155, 2
    %v7252 = vrot.slane %v7156, 2
    %v7253 = vrot.slane %v7157, 2
    %v7254 = vrot.slane %v7158, 2
    %v7255 = vrot.slane %v7159, 2
    %v7256 = vrot.slane %v7160, 2
    %v7257 = vrot.slane %v7161, 2
    %v7258 = vrot.slane %v7162, 2
    %v7259 = vsel %vm2054, %v7257, %v7258
    %v7260 = vsel %vm2054, %v7256, %v7257
    %v7261 = vsel %vm2054, %v7255, %v7256
    %v7262 = vsel %vm2054, %v7254, %v7255
    %v7263 = vsel %vm2054, %v7253, %v7254
    %v7264 = vsel %vm2054, %v7252, %v7253
    %v7265 = vsel %vm2054, %v7251, %v7252
    %v7266 = vsel %vm2054, %v7250, %v7251
    %v7267 = vsel %vm2054, %v7249, %v7250
    %v7268 = vsel %vm2054, %v7248, %v7249
    %v7269 = vsel %vm2054, %v7247, %v7248
    %v7270 = vsel %vm2054, %v7246, %v7247
    %v7271 = vsel %vm2054, %v7245, %v7246
    %v7272 = vsel %vm2054, %v7244, %v7245
    %v7273 = vsel %vm2054, %v7243, %v7244
    %v7274 = vsel %vm2054, %v7258, %v7243
    %v7275 = vpack.c.bf16 %v7273, %v7273
    %v7276 = vpack.c.bf16 %v7272, %v7272
    %v7277 = vpack.c.bf16 %v7271, %v7271
    %v7278 = vpack.c.bf16 %v7270, %v7270
    %v7279 = vpack.c.bf16 %v7269, %v7269
    %v7280 = vpack.c.bf16 %v7268, %v7268
    %v7281 = vpack.c.bf16 %v7267, %v7267
    %v7282 = vpack.c.bf16 %v7266, %v7266
    %v7283 = vpack.c.bf16 %v7265, %v7265
    %v7284 = vpack.c.bf16 %v7264, %v7264
    %v7285 = vpack.c.bf16 %v7263, %v7263
    %v7286 = vpack.c.bf16 %v7262, %v7262
    %v7287 = vpack.c.bf16 %v7261, %v7261
    %v7288 = vpack.c.bf16 %v7260, %v7260
    %v7289 = vpack.c.bf16 %v7259, %v7259
    %v7290 = vpack.c.bf16 %v7274, %v7274
    %v7291 = vsel %vm2119, %v7275, 0
    %v7292 = vsel %vm2120, %v7276, 0
    %v7293 = vsel %vm2121, %v7277, 0
    %v7294 = vsel %vm2122, %v7278, 0
    %v7295 = vsel %vm2123, %v7279, 0
    %v7296 = vsel %vm2124, %v7280, 0
    %v7297 = vsel %vm2125, %v7281, 0
    %v7298 = vsel %vm2126, %v7282, 0
    %v7299 = vsel %vm2127, %v7283, 0
    %v7300 = vsel %vm2128, %v7284, 0
    %v7301 = vsel %vm2129, %v7285, 0
    %v7302 = vsel %vm2130, %v7286, 0
    %v7303 = vsel %vm2131, %v7287, 0
    %v7304 = vsel %vm2132, %v7288, 0
    %v7305 = vsel %vm2133, %v7289, 0
    %v7306 = vsel %vm2134, %v7290, 0
    %v7323 = vunpack.c.l.b16 %v7227
    %v7324 = vunpack.c.l.b16 %v7228
    %v7325 = vunpack.c.l.b16 %v7229
    %v7326 = vunpack.c.l.b16 %v7230
    %v7327 = vunpack.c.l.b16 %v7231
    %v7328 = vunpack.c.l.b16 %v7232
    %v7329 = vunpack.c.l.b16 %v7233
    %v7330 = vunpack.c.l.b16 %v7234
    %v7331 = vunpack.c.l.b16 %v7235
    %v7332 = vunpack.c.l.b16 %v7236
    %v7333 = vunpack.c.l.b16 %v7237
    %v7334 = vunpack.c.l.b16 %v7238
    %v7335 = vunpack.c.l.b16 %v7239
    %v7336 = vunpack.c.l.b16 %v7240
    %v7337 = vunpack.c.l.b16 %v7241
    %v7338 = vunpack.c.l.b16 %v7242
    %v7339 = vpack.c.b16 %v7324, %v7323
    %v7340 = vpack.c.b16 %v7326, %v7325
    %v7341 = vpack.c.b16 %v7328, %v7327
    %v7342 = vpack.c.b16 %v7330, %v7329
    %v7343 = vpack.c.b16 %v7332, %v7331
    %v7344 = vpack.c.b16 %v7334, %v7333
    %v7345 = vpack.c.b16 %v7336, %v7335
    %v7346 = vpack.c.b16 %v7338, %v7337
    %v7371 = vunpack.c.l.b16 %v7163
    %v7372 = vunpack.c.l.b16 %v7164
    %v7373 = vunpack.c.l.b16 %v7165
    %v7374 = vunpack.c.l.b16 %v7166
    %v7375 = vunpack.c.l.b16 %v7167
    %v7376 = vunpack.c.l.b16 %v7168
    %v7377 = vunpack.c.l.b16 %v7169
    %v7378 = vunpack.c.l.b16 %v7170
    %v7379 = vunpack.c.l.b16 %v7171
    %v7380 = vunpack.c.l.b16 %v7172
    %v7381 = vunpack.c.l.b16 %v7173
    %v7382 = vunpack.c.l.b16 %v7174
    %v7383 = vunpack.c.l.b16 %v7175
    %v7384 = vunpack.c.l.b16 %v7176
    %v7385 = vunpack.c.l.b16 %v7177
    %v7386 = vunpack.c.l.b16 %v7178
    %v7387 = vpack.c.b16 %v7372, %v7371
    %v7388 = vpack.c.b16 %v7374, %v7373
    %v7389 = vpack.c.b16 %v7376, %v7375
    %v7390 = vpack.c.b16 %v7378, %v7377
    %v7391 = vpack.c.b16 %v7380, %v7379
    %v7392 = vpack.c.b16 %v7382, %v7381
    %v7393 = vpack.c.b16 %v7384, %v7383
    %v7394 = vpack.c.b16 %v7386, %v7385
    %v7419 = vunpack.c.l.b16 %v7291
    %v7420 = vunpack.c.l.b16 %v7292
    %v7421 = vunpack.c.l.b16 %v7293
    %v7422 = vunpack.c.l.b16 %v7294
    %v7423 = vunpack.c.l.b16 %v7295
    %v7424 = vunpack.c.l.b16 %v7296
    %v7425 = vunpack.c.l.b16 %v7297
    %v7426 = vunpack.c.l.b16 %v7298
    %v7427 = vunpack.c.l.b16 %v7299
    %v7428 = vunpack.c.l.b16 %v7300
    %v7429 = vunpack.c.l.b16 %v7301
    %v7430 = vunpack.c.l.b16 %v7302
    %v7431 = vunpack.c.l.b16 %v7303
    %v7432 = vunpack.c.l.b16 %v7304
    %v7433 = vunpack.c.l.b16 %v7305
    %v7434 = vunpack.c.l.b16 %v7306
    %v7435 = vpack.c.b16 %v7420, %v7419
    %v7436 = vpack.c.b16 %v7422, %v7421
    %v7437 = vpack.c.b16 %v7424, %v7423
    %v7438 = vpack.c.b16 %v7426, %v7425
    %v7439 = vpack.c.b16 %v7428, %v7427
    %v7440 = vpack.c.b16 %v7430, %v7429
    %v7441 = vpack.c.b16 %v7432, %v7431
    %v7442 = vpack.c.b16 %v7434, %v7433
    %s7451 = scalar_lea.vmem [#allocation3], 960
    %v7452 = vld [vmem:[%s7451] sm:$0xf]
    %v7453 = vld [vmem:[%s7451 + $0x4] sm:$0xf]
    %v7454 = vld [vmem:[%s7451 + $0x8] sm:$0xf]
    %v7455 = vld [vmem:[%s7451 + $0xc] sm:$0xf]
    %v7456 = vld [vmem:[%s7451 + $0x10] sm:$0xf]
    %v7457 = vld [vmem:[%s7451 + $0x14] sm:$0xf]
    %v7458 = vld [vmem:[%s7451 + $0x18] sm:$0xf]
    %v7459 = vld [vmem:[%s7451 + $0x1c] sm:$0xf]
    %v7460 = vld [vmem:[%s7451 + $0x20] sm:$0xf]
    %v7461 = vld [vmem:[%s7451 + $0x24] sm:$0xf]
    %v7462 = vld [vmem:[%s7451 + $0x28] sm:$0xf]
    %v7463 = vld [vmem:[%s7451 + $0x2c] sm:$0xf]
    %v7464 = vld [vmem:[%s7451 + $0x30] sm:$0xf]
    %v7465 = vld [vmem:[%s7451 + $0x34] sm:$0xf]
    %v7466 = vld [vmem:[%s7451 + $0x38] sm:$0xf]
    %v7467 = vld [vmem:[%s7451 + $0x3c] sm:$0xf]
    %v7468 = vld [vmem:[%s7451 + $0x40] sm:$0xf]
    %v7469 = vld [vmem:[%s7451 + $0x44] sm:$0xf]
    %v7470 = vld [vmem:[%s7451 + $0x48] sm:$0xf]
    %v7471 = vld [vmem:[%s7451 + $0x4c] sm:$0xf]
    %v7472 = vld [vmem:[%s7451 + $0x50] sm:$0xf]
    %v7473 = vld [vmem:[%s7451 + $0x54] sm:$0xf]
    %v7474 = vld [vmem:[%s7451 + $0x58] sm:$0xf]
    %v7475 = vld [vmem:[%s7451 + $0x5c] sm:$0xf]
    %v7476 = vld [vmem:[%s7451 + $0x60] sm:$0xf]
    %v7477 = vld [vmem:[%s7451 + $0x64] sm:$0xf]
    %v7478 = vld [vmem:[%s7451 + $0x68] sm:$0xf]
    %v7479 = vld [vmem:[%s7451 + $0x6c] sm:$0xf]
    %v7480 = vld [vmem:[%s7451 + $0x70] sm:$0xf]
    %v7481 = vld [vmem:[%s7451 + $0x74] sm:$0xf]
    %v7482 = vld [vmem:[%s7451 + $0x78] sm:$0xf]
    %v7483 = vld [vmem:[%s7451 + $0x7c] sm:$0xf]
    %v7484 = vld [vmem:[%s7451 + $0x80] sm:$0xf]
    %v7485 = vld [vmem:[%s7451 + $0x84] sm:$0xf]
    %v7486 = vld [vmem:[%s7451 + $0x88] sm:$0xf]
    %v7487 = vld [vmem:[%s7451 + $0x8c] sm:$0xf]
    %v7488 = vld [vmem:[%s7451 + $0x90] sm:$0xf]
    %v7489 = vld [vmem:[%s7451 + $0x94] sm:$0xf]
    %v7490 = vld [vmem:[%s7451 + $0x98] sm:$0xf]
    %v7491 = vld [vmem:[%s7451 + $0x9c] sm:$0xf]
    %v7492 = vld [vmem:[%s7451 + $0xa0] sm:$0xf]
    %v7493 = vld [vmem:[%s7451 + $0xa4] sm:$0xf]
    %v7494 = vld [vmem:[%s7451 + $0xa8] sm:$0xf]
    %v7495 = vld [vmem:[%s7451 + $0xac] sm:$0xf]
    %v7496 = vld [vmem:[%s7451 + $0xb0] sm:$0xf]
    %v7497 = vld [vmem:[%s7451 + $0xb4] sm:$0xf]
    %v7498 = vld [vmem:[%s7451 + $0xb8] sm:$0xf]
    %v7499 = vld [vmem:[%s7451 + $0xbc] sm:$0xf]
    %v7500 = vperm.slane %v54, 6
    %v7549 = vunpack.c.l.b16 %v7452
    %v7550 = vunpack.c.l.b16 %v7453
    %v7551 = vunpack.c.l.b16 %v7454
    %v7552 = vunpack.c.l.b16 %v7455
    %v7553 = vunpack.c.l.b16 %v7456
    %v7554 = vunpack.c.l.b16 %v7457
    %v7555 = vunpack.c.l.b16 %v7458
    %v7556 = vunpack.c.l.b16 %v7459
    %v7557 = vunpack.c.l.b16 %v7460
    %v7558 = vunpack.c.l.b16 %v7461
    %v7559 = vunpack.c.l.b16 %v7462
    %v7560 = vunpack.c.l.b16 %v7463
    %v7561 = vunpack.c.l.b16 %v7464
    %v7562 = vunpack.c.l.b16 %v7465
    %v7563 = vunpack.c.l.b16 %v7466
    %v7564 = vunpack.c.l.b16 %v7467
    %v7565 = vunpack.c.l.b16 %v7468
    %v7566 = vunpack.c.l.b16 %v7469
    %v7567 = vunpack.c.l.b16 %v7470
    %v7568 = vunpack.c.l.b16 %v7471
    %v7569 = vunpack.c.l.b16 %v7472
    %v7570 = vunpack.c.l.b16 %v7473
    %v7571 = vunpack.c.l.b16 %v7474
    %v7572 = vunpack.c.l.b16 %v7475
    %v7573 = vunpack.c.l.b16 %v7476
    %v7574 = vunpack.c.l.b16 %v7477
    %v7575 = vunpack.c.l.b16 %v7478
    %v7576 = vunpack.c.l.b16 %v7479
    %v7577 = vunpack.c.l.b16 %v7480
    %v7578 = vunpack.c.l.b16 %v7481
    %v7579 = vunpack.c.l.b16 %v7482
    %v7580 = vunpack.c.l.b16 %v7483
    %v7581 = vunpack.c.l.b16 %v7484
    %v7582 = vunpack.c.l.b16 %v7485
    %v7583 = vunpack.c.l.b16 %v7486
    %v7584 = vunpack.c.l.b16 %v7487
    %v7585 = vunpack.c.l.b16 %v7488
    %v7586 = vunpack.c.l.b16 %v7489
    %v7587 = vunpack.c.l.b16 %v7490
    %v7588 = vunpack.c.l.b16 %v7491
    %v7589 = vunpack.c.l.b16 %v7492
    %v7590 = vunpack.c.l.b16 %v7493
    %v7591 = vunpack.c.l.b16 %v7494
    %v7592 = vunpack.c.l.b16 %v7495
    %v7593 = vunpack.c.l.b16 %v7496
    %v7594 = vunpack.c.l.b16 %v7497
    %v7595 = vunpack.c.l.b16 %v7498
    %v7596 = vunpack.c.l.b16 %v7499
    %v7597 = vpack.c.b16 %v7550, %v7549
    %v7598 = vpack.c.b16 %v7552, %v7551
    %v7599 = vpack.c.b16 %v7554, %v7553
    %v7600 = vpack.c.b16 %v7556, %v7555
    %v7601 = vpack.c.b16 %v7558, %v7557
    %v7602 = vpack.c.b16 %v7560, %v7559
    %v7603 = vpack.c.b16 %v7562, %v7561
    %v7604 = vpack.c.b16 %v7564, %v7563
    %v7605 = vpack.c.b16 %v7566, %v7565
    %v7606 = vpack.c.b16 %v7568, %v7567
    %v7607 = vpack.c.b16 %v7570, %v7569
    %v7608 = vpack.c.b16 %v7572, %v7571
    %v7609 = vpack.c.b16 %v7574, %v7573
    %v7610 = vpack.c.b16 %v7576, %v7575
    %v7611 = vpack.c.b16 %v7578, %v7577
    %v7612 = vpack.c.b16 %v7580, %v7579
    %v7613 = vpack.c.b16 %v7582, %v7581
    %v7614 = vpack.c.b16 %v7584, %v7583
    %v7615 = vpack.c.b16 %v7586, %v7585
    %v7616 = vpack.c.b16 %v7588, %v7587
    %v7617 = vpack.c.b16 %v7590, %v7589
    %v7618 = vpack.c.b16 %v7592, %v7591
    %v7619 = vpack.c.b16 %v7594, %v7593
    %v7620 = vpack.c.b16 %v7596, %v7595
    %7645 = vmatpush.bf16.msra.mxu0 %v7604
    %7646 = vmatpush.bf16.msra.mxu0 %v7603
    %7647 = vmatpush.bf16.msra.mxu0 %v7602
    %7648 = vmatpush.bf16.msra.mxu0 %v7601
    %7649 = vmatpush.bf16.msra.mxu0 %v7600
    %7650 = vmatpush.bf16.msra.mxu0 %v7599
    %7651 = vmatpush.bf16.msra.mxu0 %v7598
    %7652 = vmatpush.bf16.msra.mxu0 %v7597
    %7653 = vmatmul.bf16.gmra.mxu0 %v7339
    %v7654 = vpop.f32.mrf.mxu0
    %v7655 = vadd.f32 %v7500, %v7654
    %v7656 = vpop.f32.mrf.mxu0
    %v7657 = vadd.f32 %v7500, %v7656
    %7658 = vmatmul.bf16.gmra.mxu0 %v7340
    %v7659 = vpop.f32.mrf.mxu0
    %v7660 = vadd.f32 %v7500, %v7659
    %v7661 = vpop.f32.mrf.mxu0
    %v7662 = vadd.f32 %v7500, %v7661
    %7663 = vmatmul.bf16.gmra.mxu0 %v7341
    %v7664 = vpop.f32.mrf.mxu0
    %v7665 = vadd.f32 %v7500, %v7664
    %v7666 = vpop.f32.mrf.mxu0
    %v7667 = vadd.f32 %v7500, %v7666
    %7668 = vmatmul.bf16.gmra.mxu0 %v7342
    %v7669 = vpop.f32.mrf.mxu0
    %v7670 = vadd.f32 %v7500, %v7669
    %v7671 = vpop.f32.mrf.mxu0
    %v7672 = vadd.f32 %v7500, %v7671
    %7673 = vmatmul.bf16.gmra.mxu0 %v7343
    %v7674 = vpop.f32.mrf.mxu0
    %v7675 = vadd.f32 %v7500, %v7674
    %v7676 = vpop.f32.mrf.mxu0
    %v7677 = vadd.f32 %v7500, %v7676
    %7678 = vmatmul.bf16.gmra.mxu0 %v7344
    %v7679 = vpop.f32.mrf.mxu0
    %v7680 = vadd.f32 %v7500, %v7679
    %v7681 = vpop.f32.mrf.mxu0
    %v7682 = vadd.f32 %v7500, %v7681
    %7683 = vmatmul.bf16.gmra.mxu0 %v7345
    %v7684 = vpop.f32.mrf.mxu0
    %v7685 = vadd.f32 %v7500, %v7684
    %v7686 = vpop.f32.mrf.mxu0
    %v7687 = vadd.f32 %v7500, %v7686
    %7688 = vmatmul.bf16.gmra.mxu0 %v7346
    %v7689 = vpop.f32.mrf.mxu0
    %v7690 = vadd.f32 %v7500, %v7689
    %v7691 = vpop.f32.mrf.mxu0
    %v7692 = vadd.f32 %v7500, %v7691
    %7693 = vdwg.mxu0
    %7694 = vmatpush.bf16.msra.mxu0 %v7612
    %7695 = vmatpush.bf16.msra.mxu0 %v7611
    %7696 = vmatpush.bf16.msra.mxu0 %v7610
    %7697 = vmatpush.bf16.msra.mxu0 %v7609
    %7698 = vmatpush.bf16.msra.mxu0 %v7608
    %7699 = vmatpush.bf16.msra.mxu0 %v7607
    %7700 = vmatpush.bf16.msra.mxu0 %v7606
    %7701 = vmatpush.bf16.msra.mxu0 %v7605
    %7702 = vmatmul.bf16.gmra.mxu0 %v7387
    %v7703 = vpop.f32.mrf.mxu0
    %v7704 = vadd.f32 %v7655, %v7703
    %v7705 = vpop.f32.mrf.mxu0
    %v7706 = vadd.f32 %v7657, %v7705
    %7707 = vmatmul.bf16.gmra.mxu0 %v7388
    %v7708 = vpop.f32.mrf.mxu0
    %v7709 = vadd.f32 %v7660, %v7708
    %v7710 = vpop.f32.mrf.mxu0
    %v7711 = vadd.f32 %v7662, %v7710
    %7712 = vmatmul.bf16.gmra.mxu0 %v7389
    %v7713 = vpop.f32.mrf.mxu0
    %v7714 = vadd.f32 %v7665, %v7713
    %v7715 = vpop.f32.mrf.mxu0
    %v7716 = vadd.f32 %v7667, %v7715
    %7717 = vmatmul.bf16.gmra.mxu0 %v7390
    %v7718 = vpop.f32.mrf.mxu0
    %v7719 = vadd.f32 %v7670, %v7718
    %v7720 = vpop.f32.mrf.mxu0
    %v7721 = vadd.f32 %v7672, %v7720
    %7722 = vmatmul.bf16.gmra.mxu0 %v7391
    %v7723 = vpop.f32.mrf.mxu0
    %v7724 = vadd.f32 %v7675, %v7723
    %v7725 = vpop.f32.mrf.mxu0
    %v7726 = vadd.f32 %v7677, %v7725
    %7727 = vmatmul.bf16.gmra.mxu0 %v7392
    %v7728 = vpop.f32.mrf.mxu0
    %v7729 = vadd.f32 %v7680, %v7728
    %v7730 = vpop.f32.mrf.mxu0
    %v7731 = vadd.f32 %v7682, %v7730
    %7732 = vmatmul.bf16.gmra.mxu0 %v7393
    %v7733 = vpop.f32.mrf.mxu0
    %v7734 = vadd.f32 %v7685, %v7733
    %v7735 = vpop.f32.mrf.mxu0
    %v7736 = vadd.f32 %v7687, %v7735
    %7737 = vmatmul.bf16.gmra.mxu0 %v7394
    %v7738 = vpop.f32.mrf.mxu0
    %v7739 = vadd.f32 %v7690, %v7738
    %v7740 = vpop.f32.mrf.mxu0
    %v7741 = vadd.f32 %v7692, %v7740
    %7742 = vdwg.mxu0
    %7743 = vmatpush.bf16.msra.mxu0 %v7620
    %7744 = vmatpush.bf16.msra.mxu0 %v7619
    %7745 = vmatpush.bf16.msra.mxu0 %v7618
    %7746 = vmatpush.bf16.msra.mxu0 %v7617
    %7747 = vmatpush.bf16.msra.mxu0 %v7616
    %7748 = vmatpush.bf16.msra.mxu0 %v7615
    %7749 = vmatpush.bf16.msra.mxu0 %v7614
    %7750 = vmatpush.bf16.msra.mxu0 %v7613
    %7751 = vmatmul.bf16.gmra.mxu0 %v7435
    %v7752 = vpop.f32.mrf.mxu0
    %v7753 = vadd.f32 %v7704, %v7752
    %v7754 = vpop.f32.mrf.mxu0
    %v7755 = vadd.f32 %v7706, %v7754
    %7756 = vmatmul.bf16.gmra.mxu0 %v7436
    %v7757 = vpop.f32.mrf.mxu0
    %v7758 = vadd.f32 %v7709, %v7757
    %v7759 = vpop.f32.mrf.mxu0
    %v7760 = vadd.f32 %v7711, %v7759
    %7761 = vmatmul.bf16.gmra.mxu0 %v7437
    %v7762 = vpop.f32.mrf.mxu0
    %v7763 = vadd.f32 %v7714, %v7762
    %v7764 = vpop.f32.mrf.mxu0
    %v7765 = vadd.f32 %v7716, %v7764
    %7766 = vmatmul.bf16.gmra.mxu0 %v7438
    %v7767 = vpop.f32.mrf.mxu0
    %v7768 = vadd.f32 %v7719, %v7767
    %v7769 = vpop.f32.mrf.mxu0
    %v7770 = vadd.f32 %v7721, %v7769
    %7771 = vmatmul.bf16.gmra.mxu0 %v7439
    %v7772 = vpop.f32.mrf.mxu0
    %v7773 = vadd.f32 %v7724, %v7772
    %v7774 = vpop.f32.mrf.mxu0
    %v7775 = vadd.f32 %v7726, %v7774
    %7776 = vmatmul.bf16.gmra.mxu0 %v7440
    %v7777 = vpop.f32.mrf.mxu0
    %v7778 = vadd.f32 %v7729, %v7777
    %v7779 = vpop.f32.mrf.mxu0
    %v7780 = vadd.f32 %v7731, %v7779
    %7781 = vmatmul.bf16.gmra.mxu0 %v7441
    %v7782 = vpop.f32.mrf.mxu0
    %v7783 = vadd.f32 %v7734, %v7782
    %v7784 = vpop.f32.mrf.mxu0
    %v7785 = vadd.f32 %v7736, %v7784
    %7786 = vmatmul.bf16.gmra.mxu0 %v7442
    %v7787 = vpop.f32.mrf.mxu0
    %v7788 = vadd.f32 %v7739, %v7787
    %v7789 = vpop.f32.mrf.mxu0
    %v7790 = vadd.f32 %v7741, %v7789
    %7791 = vdwg.mxu0
    %v7792 = vtanh.pop %v7753
    %v7793 = vtanh.pop %v7755
    %v7794 = vtanh.pop %v7758
    %v7795 = vtanh.pop %v7760
    %v7796 = vtanh.pop %v7763
    %v7797 = vtanh.pop %v7765
    %v7798 = vtanh.pop %v7768
    %v7799 = vtanh.pop %v7770
    %v7800 = vtanh.pop %v7773
    %v7801 = vtanh.pop %v7775
    %v7802 = vtanh.pop %v7778
    %v7803 = vtanh.pop %v7780
    %v7804 = vtanh.pop %v7783
    %v7805 = vtanh.pop %v7785
    %v7806 = vtanh.pop %v7788
    %v7807 = vtanh.pop %v7790
    %v7808 = vxor.u32 %v7753, 2147483648
    %v7809 = vxor.u32 %v7755, 2147483648
    %v7810 = vxor.u32 %v7758, 2147483648
    %v7811 = vxor.u32 %v7760, 2147483648
    %v7812 = vxor.u32 %v7763, 2147483648
    %v7813 = vxor.u32 %v7765, 2147483648
    %v7814 = vxor.u32 %v7768, 2147483648
    %v7815 = vxor.u32 %v7770, 2147483648
    %v7816 = vxor.u32 %v7773, 2147483648
    %v7817 = vxor.u32 %v7775, 2147483648
    %v7818 = vxor.u32 %v7778, 2147483648
    %v7819 = vxor.u32 %v7780, 2147483648
    %v7820 = vxor.u32 %v7783, 2147483648
    %v7821 = vxor.u32 %v7785, 2147483648
    %v7822 = vxor.u32 %v7788, 2147483648
    %v7823 = vxor.u32 %v7790, 2147483648
    %v7824 = vmul.f32 %v7808, 1.442695
    %v7825 = vpow.pop %v7824
    %v7826 = vmul.f32 %v7809, 1.442695
    %v7827 = vpow.pop %v7826
    %v7828 = vmul.f32 %v7810, 1.442695
    %v7829 = vpow.pop %v7828
    %v7830 = vmul.f32 %v7811, 1.442695
    %v7831 = vpow.pop %v7830
    %v7832 = vmul.f32 %v7812, 1.442695
    %v7833 = vpow.pop %v7832
    %v7834 = vmul.f32 %v7813, 1.442695
    %v7835 = vpow.pop %v7834
    %v7836 = vmul.f32 %v7814, 1.442695
    %v7837 = vpow.pop %v7836
    %v7838 = vmul.f32 %v7815, 1.442695
    %v7839 = vpow.pop %v7838
    %v7840 = vmul.f32 %v7816, 1.442695
    %v7841 = vpow.pop %v7840
    %v7842 = vmul.f32 %v7817, 1.442695
    %v7843 = vpow.pop %v7842
    %v7844 = vmul.f32 %v7818, 1.442695
    %v7845 = vpow.pop %v7844
    %v7846 = vmul.f32 %v7819, 1.442695
    %v7847 = vpow.pop %v7846
    %v7848 = vmul.f32 %v7820, 1.442695
    %v7849 = vpow.pop %v7848
    %v7850 = vmul.f32 %v7821, 1.442695
    %v7851 = vpow.pop %v7850
    %v7852 = vmul.f32 %v7822, 1.442695
    %v7853 = vpow.pop %v7852
    %v7854 = vmul.f32 %v7823, 1.442695
    %v7855 = vpow.pop %v7854
    %v7856 = vadd.f32 %v7825, 1.0
    %v7857 = vadd.f32 %v7827, 1.0
    %v7858 = vadd.f32 %v7829, 1.0
    %v7859 = vadd.f32 %v7831, 1.0
    %v7860 = vadd.f32 %v7833, 1.0
    %v7861 = vadd.f32 %v7835, 1.0
    %v7862 = vadd.f32 %v7837, 1.0
    %v7863 = vadd.f32 %v7839, 1.0
    %v7864 = vadd.f32 %v7841, 1.0
    %v7865 = vadd.f32 %v7843, 1.0
    %v7866 = vadd.f32 %v7845, 1.0
    %v7867 = vadd.f32 %v7847, 1.0
    %v7868 = vadd.f32 %v7849, 1.0
    %v7869 = vadd.f32 %v7851, 1.0
    %v7870 = vadd.f32 %v7853, 1.0
    %v7871 = vadd.f32 %v7855, 1.0
    %v7872 = vrcp.pop %v7856
    %v7873 = vmul.f32 %v7856, %v7872
    %v7874 = vsub.f32 1.0, %v7873
    %v7875 = vmul.f32 %v7872, %v7874
    %v7876 = vadd.f32 %v7872, %v7875
    %vm7877 = vweird.f32 %v7856
    %vm7878 = vweird.f32 %v7872
    %vm7879 = vmor %vm7877, %vm7878
    %v7880 = vsel %vm7879, %v7872, %v7876
    %v7881 = vand.u32 2147483647, %v7856
    %vm7882 = vcmp.eq.f32.partialorder %v7881, 8.507059e+37
    %v7883 = vand.u32 %v7856, 2147483648
    %v7884 = vor.u32 1.1754944e-38, %v7883
    %v7885 = vsel %vm7882, %v7884, %v7880
    %v7886 = vmul.f32 1.0, %v7885
    %v7887 = vrcp.pop %v7857
    %v7888 = vmul.f32 %v7857, %v7887
    %v7889 = vsub.f32 1.0, %v7888
    %v7890 = vmul.f32 %v7887, %v7889
    %v7891 = vadd.f32 %v7887, %v7890
    %vm7892 = vweird.f32 %v7857
    %vm7893 = vweird.f32 %v7887
    %vm7894 = vmor %vm7892, %vm7893
    %v7895 = vsel %vm7894, %v7887, %v7891
    %v7896 = vand.u32 2147483647, %v7857
    %vm7897 = vcmp.eq.f32.partialorder %v7896, 8.507059e+37
    %v7898 = vand.u32 %v7857, 2147483648
    %v7899 = vor.u32 1.1754944e-38, %v7898
    %v7900 = vsel %vm7897, %v7899, %v7895
    %v7901 = vmul.f32 1.0, %v7900
    %v7902 = vrcp.pop %v7858
    %v7903 = vmul.f32 %v7858, %v7902
    %v7904 = vsub.f32 1.0, %v7903
    %v7905 = vmul.f32 %v7902, %v7904
    %v7906 = vadd.f32 %v7902, %v7905
    %vm7907 = vweird.f32 %v7858
    %vm7908 = vweird.f32 %v7902
    %vm7909 = vmor %vm7907, %vm7908
    %v7910 = vsel %vm7909, %v7902, %v7906
    %v7911 = vand.u32 2147483647, %v7858
    %vm7912 = vcmp.eq.f32.partialorder %v7911, 8.507059e+37
    %v7913 = vand.u32 %v7858, 2147483648
    %v7914 = vor.u32 1.1754944e-38, %v7913
    %v7915 = vsel %vm7912, %v7914, %v7910
    %v7916 = vmul.f32 1.0, %v7915
    %v7917 = vrcp.pop %v7859
    %v7918 = vmul.f32 %v7859, %v7917
    %v7919 = vsub.f32 1.0, %v7918
    %v7920 = vmul.f32 %v7917, %v7919
    %v7921 = vadd.f32 %v7917, %v7920
    %vm7922 = vweird.f32 %v7859
    %vm7923 = vweird.f32 %v7917
    %vm7924 = vmor %vm7922, %vm7923
    %v7925 = vsel %vm7924, %v7917, %v7921
    %v7926 = vand.u32 2147483647, %v7859
    %vm7927 = vcmp.eq.f32.partialorder %v7926, 8.507059e+37
    %v7928 = vand.u32 %v7859, 2147483648
    %v7929 = vor.u32 1.1754944e-38, %v7928
    %v7930 = vsel %vm7927, %v7929, %v7925
    %v7931 = vmul.f32 1.0, %v7930
    %v7932 = vrcp.pop %v7860
    %v7933 = vmul.f32 %v7860, %v7932
    %v7934 = vsub.f32 1.0, %v7933
    %v7935 = vmul.f32 %v7932, %v7934
    %v7936 = vadd.f32 %v7932, %v7935
    %vm7937 = vweird.f32 %v7860
    %vm7938 = vweird.f32 %v7932
    %vm7939 = vmor %vm7937, %vm7938
    %v7940 = vsel %vm7939, %v7932, %v7936
    %v7941 = vand.u32 2147483647, %v7860
    %vm7942 = vcmp.eq.f32.partialorder %v7941, 8.507059e+37
    %v7943 = vand.u32 %v7860, 2147483648
    %v7944 = vor.u32 1.1754944e-38, %v7943
    %v7945 = vsel %vm7942, %v7944, %v7940
    %v7946 = vmul.f32 1.0, %v7945
    %v7947 = vrcp.pop %v7861
    %v7948 = vmul.f32 %v7861, %v7947
    %v7949 = vsub.f32 1.0, %v7948
    %v7950 = vmul.f32 %v7947, %v7949
    %v7951 = vadd.f32 %v7947, %v7950
    %vm7952 = vweird.f32 %v7861
    %vm7953 = vweird.f32 %v7947
    %vm7954 = vmor %vm7952, %vm7953
    %v7955 = vsel %vm7954, %v7947, %v7951
    %v7956 = vand.u32 2147483647, %v7861
    %vm7957 = vcmp.eq.f32.partialorder %v7956, 8.507059e+37
    %v7958 = vand.u32 %v7861, 2147483648
    %v7959 = vor.u32 1.1754944e-38, %v7958
    %v7960 = vsel %vm7957, %v7959, %v7955
    %v7961 = vmul.f32 1.0, %v7960
    %v7962 = vrcp.pop %v7862
    %v7963 = vmul.f32 %v7862, %v7962
    %v7964 = vsub.f32 1.0, %v7963
    %v7965 = vmul.f32 %v7962, %v7964
    %v7966 = vadd.f32 %v7962, %v7965
    %vm7967 = vweird.f32 %v7862
    %vm7968 = vweird.f32 %v7962
    %vm7969 = vmor %vm7967, %vm7968
    %v7970 = vsel %vm7969, %v7962, %v7966
    %v7971 = vand.u32 2147483647, %v7862
    %vm7972 = vcmp.eq.f32.partialorder %v7971, 8.507059e+37
    %v7973 = vand.u32 %v7862, 2147483648
    %v7974 = vor.u32 1.1754944e-38, %v7973
    %v7975 = vsel %vm7972, %v7974, %v7970
    %v7976 = vmul.f32 1.0, %v7975
    %v7977 = vrcp.pop %v7863
    %v7978 = vmul.f32 %v7863, %v7977
    %v7979 = vsub.f32 1.0, %v7978
    %v7980 = vmul.f32 %v7977, %v7979
    %v7981 = vadd.f32 %v7977, %v7980
    %vm7982 = vweird.f32 %v7863
    %vm7983 = vweird.f32 %v7977
    %vm7984 = vmor %vm7982, %vm7983
    %v7985 = vsel %vm7984, %v7977, %v7981
    %v7986 = vand.u32 2147483647, %v7863
    %vm7987 = vcmp.eq.f32.partialorder %v7986, 8.507059e+37
    %v7988 = vand.u32 %v7863, 2147483648
    %v7989 = vor.u32 1.1754944e-38, %v7988
    %v7990 = vsel %vm7987, %v7989, %v7985
    %v7991 = vmul.f32 1.0, %v7990
    %v7992 = vrcp.pop %v7864
    %v7993 = vmul.f32 %v7864, %v7992
    %v7994 = vsub.f32 1.0, %v7993
    %v7995 = vmul.f32 %v7992, %v7994
    %v7996 = vadd.f32 %v7992, %v7995
    %vm7997 = vweird.f32 %v7864
    %vm7998 = vweird.f32 %v7992
    %vm7999 = vmor %vm7997, %vm7998
    %v8000 = vsel %vm7999, %v7992, %v7996
    %v8001 = vand.u32 2147483647, %v7864
    %vm8002 = vcmp.eq.f32.partialorder %v8001, 8.507059e+37
    %v8003 = vand.u32 %v7864, 2147483648
    %v8004 = vor.u32 1.1754944e-38, %v8003
    %v8005 = vsel %vm8002, %v8004, %v8000
    %v8006 = vmul.f32 1.0, %v8005
    %v8007 = vrcp.pop %v7865
    %v8008 = vmul.f32 %v7865, %v8007
    %v8009 = vsub.f32 1.0, %v8008
    %v8010 = vmul.f32 %v8007, %v8009
    %v8011 = vadd.f32 %v8007, %v8010
    %vm8012 = vweird.f32 %v7865
    %vm8013 = vweird.f32 %v8007
    %vm8014 = vmor %vm8012, %vm8013
    %v8015 = vsel %vm8014, %v8007, %v8011
    %v8016 = vand.u32 2147483647, %v7865
    %vm8017 = vcmp.eq.f32.partialorder %v8016, 8.507059e+37
    %v8018 = vand.u32 %v7865, 2147483648
    %v8019 = vor.u32 1.1754944e-38, %v8018
    %v8020 = vsel %vm8017, %v8019, %v8015
    %v8021 = vmul.f32 1.0, %v8020
    %v8022 = vrcp.pop %v7866
    %v8023 = vmul.f32 %v7866, %v8022
    %v8024 = vsub.f32 1.0, %v8023
    %v8025 = vmul.f32 %v8022, %v8024
    %v8026 = vadd.f32 %v8022, %v8025
    %vm8027 = vweird.f32 %v7866
    %vm8028 = vweird.f32 %v8022
    %vm8029 = vmor %vm8027, %vm8028
    %v8030 = vsel %vm8029, %v8022, %v8026
    %v8031 = vand.u32 2147483647, %v7866
    %vm8032 = vcmp.eq.f32.partialorder %v8031, 8.507059e+37
    %v8033 = vand.u32 %v7866, 2147483648
    %v8034 = vor.u32 1.1754944e-38, %v8033
    %v8035 = vsel %vm8032, %v8034, %v8030
    %v8036 = vmul.f32 1.0, %v8035
    %v8037 = vrcp.pop %v7867
    %v8038 = vmul.f32 %v7867, %v8037
    %v8039 = vsub.f32 1.0, %v8038
    %v8040 = vmul.f32 %v8037, %v8039
    %v8041 = vadd.f32 %v8037, %v8040
    %vm8042 = vweird.f32 %v7867
    %vm8043 = vweird.f32 %v8037
    %vm8044 = vmor %vm8042, %vm8043
    %v8045 = vsel %vm8044, %v8037, %v8041
    %v8046 = vand.u32 2147483647, %v7867
    %vm8047 = vcmp.eq.f32.partialorder %v8046, 8.507059e+37
    %v8048 = vand.u32 %v7867, 2147483648
    %v8049 = vor.u32 1.1754944e-38, %v8048
    %v8050 = vsel %vm8047, %v8049, %v8045
    %v8051 = vmul.f32 1.0, %v8050
    %v8052 = vrcp.pop %v7868
    %v8053 = vmul.f32 %v7868, %v8052
    %v8054 = vsub.f32 1.0, %v8053
    %v8055 = vmul.f32 %v8052, %v8054
    %v8056 = vadd.f32 %v8052, %v8055
    %vm8057 = vweird.f32 %v7868
    %vm8058 = vweird.f32 %v8052
    %vm8059 = vmor %vm8057, %vm8058
    %v8060 = vsel %vm8059, %v8052, %v8056
    %v8061 = vand.u32 2147483647, %v7868
    %vm8062 = vcmp.eq.f32.partialorder %v8061, 8.507059e+37
    %v8063 = vand.u32 %v7868, 2147483648
    %v8064 = vor.u32 1.1754944e-38, %v8063
    %v8065 = vsel %vm8062, %v8064, %v8060
    %v8066 = vmul.f32 1.0, %v8065
    %v8067 = vrcp.pop %v7869
    %v8068 = vmul.f32 %v7869, %v8067
    %v8069 = vsub.f32 1.0, %v8068
    %v8070 = vmul.f32 %v8067, %v8069
    %v8071 = vadd.f32 %v8067, %v8070
    %vm8072 = vweird.f32 %v7869
    %vm8073 = vweird.f32 %v8067
    %vm8074 = vmor %vm8072, %vm8073
    %v8075 = vsel %vm8074, %v8067, %v8071
    %v8076 = vand.u32 2147483647, %v7869
    %vm8077 = vcmp.eq.f32.partialorder %v8076, 8.507059e+37
    %v8078 = vand.u32 %v7869, 2147483648
    %v8079 = vor.u32 1.1754944e-38, %v8078
    %v8080 = vsel %vm8077, %v8079, %v8075
    %v8081 = vmul.f32 1.0, %v8080
    %v8082 = vrcp.pop %v7870
    %v8083 = vmul.f32 %v7870, %v8082
    %v8084 = vsub.f32 1.0, %v8083
    %v8085 = vmul.f32 %v8082, %v8084
    %v8086 = vadd.f32 %v8082, %v8085
    %vm8087 = vweird.f32 %v7870
    %vm8088 = vweird.f32 %v8082
    %vm8089 = vmor %vm8087, %vm8088
    %v8090 = vsel %vm8089, %v8082, %v8086
    %v8091 = vand.u32 2147483647, %v7870
    %vm8092 = vcmp.eq.f32.partialorder %v8091, 8.507059e+37
    %v8093 = vand.u32 %v7870, 2147483648
    %v8094 = vor.u32 1.1754944e-38, %v8093
    %v8095 = vsel %vm8092, %v8094, %v8090
    %v8096 = vmul.f32 1.0, %v8095
    %v8097 = vrcp.pop %v7871
    %v8098 = vmul.f32 %v7871, %v8097
    %v8099 = vsub.f32 1.0, %v8098
    %v8100 = vmul.f32 %v8097, %v8099
    %v8101 = vadd.f32 %v8097, %v8100
    %vm8102 = vweird.f32 %v7871
    %vm8103 = vweird.f32 %v8097
    %vm8104 = vmor %vm8102, %vm8103
    %v8105 = vsel %vm8104, %v8097, %v8101
    %v8106 = vand.u32 2147483647, %v7871
    %vm8107 = vcmp.eq.f32.partialorder %v8106, 8.507059e+37
    %v8108 = vand.u32 %v7871, 2147483648
    %v8109 = vor.u32 1.1754944e-38, %v8108
    %v8110 = vsel %vm8107, %v8109, %v8105
    %v8111 = vmul.f32 1.0, %v8110
    %8128 = vrot.lane.b32.xlu0 %v7886, 64
    %v8129 = vpop.permute.xlu0 %8128
    %8130 = vrot.lane.b32.xlu0 %v7901, 64
    %v8131 = vpop.permute.xlu0 %8130
    %8132 = vrot.lane.b32.xlu0 %v7916, 64
    %v8133 = vpop.permute.xlu0 %8132
    %8134 = vrot.lane.b32.xlu0 %v7931, 64
    %v8135 = vpop.permute.xlu0 %8134
    %8136 = vrot.lane.b32.xlu0 %v7946, 64
    %v8137 = vpop.permute.xlu0 %8136
    %8138 = vrot.lane.b32.xlu0 %v7961, 64
    %v8139 = vpop.permute.xlu0 %8138
    %8140 = vrot.lane.b32.xlu0 %v7976, 64
    %v8141 = vpop.permute.xlu0 %8140
    %8142 = vrot.lane.b32.xlu0 %v7991, 64
    %v8143 = vpop.permute.xlu0 %8142
    %8144 = vrot.lane.b32.xlu0 %v8006, 64
    %v8145 = vpop.permute.xlu0 %8144
    %8146 = vrot.lane.b32.xlu0 %v8021, 64
    %v8147 = vpop.permute.xlu0 %8146
    %8148 = vrot.lane.b32.xlu0 %v8036, 64
    %v8149 = vpop.permute.xlu0 %8148
    %8150 = vrot.lane.b32.xlu0 %v8051, 64
    %v8151 = vpop.permute.xlu0 %8150
    %8152 = vrot.lane.b32.xlu0 %v8066, 64
    %v8153 = vpop.permute.xlu0 %8152
    %8154 = vrot.lane.b32.xlu0 %v8081, 64
    %v8155 = vpop.permute.xlu0 %8154
    %8156 = vrot.lane.b32.xlu0 %v8096, 64
    %v8157 = vpop.permute.xlu0 %8156
    %8158 = vrot.lane.b32.xlu0 %v8111, 64
    %v8159 = vpop.permute.xlu0 %8158
    %v8176 = vmul.f32 %v7792, %v8129
    %v8177 = vmul.f32 %v7793, %v8131
    %v8178 = vmul.f32 %v7794, %v8133
    %v8179 = vmul.f32 %v7795, %v8135
    %v8180 = vmul.f32 %v7796, %v8137
    %v8181 = vmul.f32 %v7797, %v8139
    %v8182 = vmul.f32 %v7798, %v8141
    %v8183 = vmul.f32 %v7799, %v8143
    %v8184 = vmul.f32 %v7800, %v8145
    %v8185 = vmul.f32 %v7801, %v8147
    %v8186 = vmul.f32 %v7802, %v8149
    %v8187 = vmul.f32 %v7803, %v8151
    %v8188 = vmul.f32 %v7804, %v8153
    %v8189 = vmul.f32 %v7805, %v8155
    %v8190 = vmul.f32 %v7806, %v8157
    %v8191 = vmul.f32 %v7807, %v8159
    %v8192 = vpack.c.bf16 %v8177, %v8176
    %v8193 = vpack.c.bf16 %v8179, %v8178
    %v8194 = vpack.c.bf16 %v8181, %v8180
    %v8195 = vpack.c.bf16 %v8183, %v8182
    %v8196 = vpack.c.bf16 %v8185, %v8184
    %v8197 = vpack.c.bf16 %v8187, %v8186
    %v8198 = vpack.c.bf16 %v8189, %v8188
    %v8199 = vpack.c.bf16 %v8191, %v8190
    %s8200 = scalar_lea.vmem [#allocation6], 320
    %v8201 = vld [vmem:[%s8200] sm:$0xff]
    %v8202 = vld [vmem:[%s8200 + $0x8] sm:$0xff]
    %v8203 = vld [vmem:[%s8200 + $0x10] sm:$0xff]
    %v8204 = vld [vmem:[%s8200 + $0x18] sm:$0xff]
    %v8205 = vld [vmem:[%s8200 + $0x20] sm:$0xff]
    %v8206 = vld [vmem:[%s8200 + $0x28] sm:$0xff]
    %v8207 = vld [vmem:[%s8200 + $0x30] sm:$0xff]
    %v8208 = vld [vmem:[%s8200 + $0x38] sm:$0xff]
    %v8217 = vunpack.c.l.b16 %v8201
    %v8218 = vunpack.c.l.b16 %v8202
    %v8219 = vunpack.c.l.b16 %v8203
    %v8220 = vunpack.c.l.b16 %v8204
    %v8221 = vunpack.c.l.b16 %v8205
    %v8222 = vunpack.c.l.b16 %v8206
    %v8223 = vunpack.c.l.b16 %v8207
    %v8224 = vunpack.c.l.b16 %v8208
    %v8225 = vpack.c.b16 %v8218, %v8217
    %v8226 = vpack.c.b16 %v8220, %v8219
    %v8227 = vpack.c.b16 %v8222, %v8221
    %v8228 = vpack.c.b16 %v8224, %v8223
    %v8234 = vsel %vm1705, %v8192, 0
    %v8237 = vsel %vm1705, %v8193, 0
    %v8240 = vsel %vm1705, %v8194, 0
    %v8243 = vsel %vm1705, %v8195, 0
    %v8246 = vsel %vm1705, %v8196, 0
    %v8249 = vsel %vm1705, %v8197, 0
    %v8252 = vsel %vm1705, %v8198, 0
    %v8255 = vsel %vm1705, %v8199, 0
    %8257 = vmatpush.bf16.msra.mxu0 0
    %8258 = vmatpush.bf16.msra.mxu0 0
    %8259 = vmatpush.bf16.msra.mxu0 0
    %8260 = vmatpush.bf16.msra.mxu0 0
    %8261 = vmatpush.bf16.msra.mxu0 %v8228
    %8262 = vmatpush.bf16.msra.mxu0 %v8227
    %8263 = vmatpush.bf16.msra.mxu0 %v8226
    %8264 = vmatpush.bf16.msra.mxu0 %v8225
    %8265 = vmatmul.bf16.gmra.mxu0 %v8234
    %v8266 = vpop.f32.mrf.mxu0
    %v8267 = vadd.f32 0.0, %v8266
    %v8268 = vpop.f32.mrf.mxu0
    %v8269 = vadd.f32 0.0, %v8268
    %8270 = vmatmul.bf16.gmra.mxu0 %v8237
    %v8271 = vpop.f32.mrf.mxu0
    %v8272 = vadd.f32 0.0, %v8271
    %v8273 = vpop.f32.mrf.mxu0
    %v8274 = vadd.f32 0.0, %v8273
    %8275 = vmatmul.bf16.gmra.mxu0 %v8240
    %v8276 = vpop.f32.mrf.mxu0
    %v8277 = vadd.f32 0.0, %v8276
    %v8278 = vpop.f32.mrf.mxu0
    %v8279 = vadd.f32 0.0, %v8278
    %8280 = vmatmul.bf16.gmra.mxu0 %v8243
    %v8281 = vpop.f32.mrf.mxu0
    %v8282 = vadd.f32 0.0, %v8281
    %v8283 = vpop.f32.mrf.mxu0
    %v8284 = vadd.f32 0.0, %v8283
    %8285 = vmatmul.bf16.gmra.mxu0 %v8246
    %v8286 = vpop.f32.mrf.mxu0
    %v8287 = vadd.f32 0.0, %v8286
    %v8288 = vpop.f32.mrf.mxu0
    %v8289 = vadd.f32 0.0, %v8288
    %8290 = vmatmul.bf16.gmra.mxu0 %v8249
    %v8291 = vpop.f32.mrf.mxu0
    %v8292 = vadd.f32 0.0, %v8291
    %v8293 = vpop.f32.mrf.mxu0
    %v8294 = vadd.f32 0.0, %v8293
    %8295 = vmatmul.bf16.gmra.mxu0 %v8252
    %v8296 = vpop.f32.mrf.mxu0
    %v8297 = vadd.f32 0.0, %v8296
    %v8298 = vpop.f32.mrf.mxu0
    %v8299 = vadd.f32 0.0, %v8298
    %8300 = vmatmul.bf16.gmra.mxu0 %v8255
    %v8301 = vpop.f32.mrf.mxu0
    %v8302 = vadd.f32 0.0, %v8301
    %v8303 = vpop.f32.mrf.mxu0
    %v8304 = vadd.f32 0.0, %v8303
    %8305 = vdwg.mxu0
    %v8306 = vld [vmem:[#allocation2] sm:$0xff]
    %v8307 = vld [vmem:[#allocation2 + $0x8] sm:$0xff]
    %v8308 = vld [vmem:[#allocation2 + $0x10] sm:$0xff]
    %v8309 = vld [vmem:[#allocation2 + $0x18] sm:$0xff]
    %v8310 = vld [vmem:[#allocation2 + $0x20] sm:$0xff]
    %v8311 = vld [vmem:[#allocation2 + $0x28] sm:$0xff]
    %v8312 = vld [vmem:[#allocation2 + $0x30] sm:$0xff]
    %v8313 = vld [vmem:[#allocation2 + $0x38] sm:$0xff]
    %v8314 = vld [vmem:[#allocation2 + $0x40] sm:$0xff]
    %v8315 = vld [vmem:[#allocation2 + $0x48] sm:$0xff]
    %v8316 = vld [vmem:[#allocation2 + $0x50] sm:$0xff]
    %v8317 = vld [vmem:[#allocation2 + $0x58] sm:$0xff]
    %v8318 = vld [vmem:[#allocation2 + $0x60] sm:$0xff]
    %v8319 = vld [vmem:[#allocation2 + $0x68] sm:$0xff]
    %v8320 = vld [vmem:[#allocation2 + $0x70] sm:$0xff]
    %v8321 = vld [vmem:[#allocation2 + $0x78] sm:$0xff]
    %v8322 = vadd.f32 %v8306, %v8267
    %v8323 = vadd.f32 %v8307, %v8269
    %v8324 = vadd.f32 %v8308, %v8272
    %v8325 = vadd.f32 %v8309, %v8274
    %v8326 = vadd.f32 %v8310, %v8277
    %v8327 = vadd.f32 %v8311, %v8279
    %v8328 = vadd.f32 %v8312, %v8282
    %v8329 = vadd.f32 %v8313, %v8284
    %v8330 = vadd.f32 %v8314, %v8287
    %v8331 = vadd.f32 %v8315, %v8289
    %v8332 = vadd.f32 %v8316, %v8292
    %v8333 = vadd.f32 %v8317, %v8294
    %v8334 = vadd.f32 %v8318, %v8297
    %v8335 = vadd.f32 %v8319, %v8299
    %v8336 = vadd.f32 %v8320, %v8302
    %v8337 = vadd.f32 %v8321, %v8304
    %8338 = vst [vmem:[#allocation2] sm:$0xff] %v8322
    %8339 = vst [vmem:[#allocation2 + $0x8] sm:$0xff] %v8323
    %8340 = vst [vmem:[#allocation2 + $0x10] sm:$0xff] %v8324
    %8341 = vst [vmem:[#allocation2 + $0x18] sm:$0xff] %v8325
    %8342 = vst [vmem:[#allocation2 + $0x20] sm:$0xff] %v8326
    %8343 = vst [vmem:[#allocation2 + $0x28] sm:$0xff] %v8327
    %8344 = vst [vmem:[#allocation2 + $0x30] sm:$0xff] %v8328
    %8345 = vst [vmem:[#allocation2 + $0x38] sm:$0xff] %v8329
    %8346 = vst [vmem:[#allocation2 + $0x40] sm:$0xff] %v8330
    %8347 = vst [vmem:[#allocation2 + $0x48] sm:$0xff] %v8331
    %8348 = vst [vmem:[#allocation2 + $0x50] sm:$0xff] %v8332
    %8349 = vst [vmem:[#allocation2 + $0x58] sm:$0xff] %v8333
    %8350 = vst [vmem:[#allocation2 + $0x60] sm:$0xff] %v8334
    %8351 = vst [vmem:[#allocation2 + $0x68] sm:$0xff] %v8335
    %8352 = vst [vmem:[#allocation2 + $0x70] sm:$0xff] %v8336
    %8353 = vst [vmem:[#allocation2 + $0x78] sm:$0xff] %v8337
    %v8354 = vld [vmem:[#allocation2] sm:$0xff]
    %v8355 = vld [vmem:[#allocation2 + $0x8] sm:$0xff]
    %v8356 = vld [vmem:[#allocation2 + $0x10] sm:$0xff]
    %v8357 = vld [vmem:[#allocation2 + $0x18] sm:$0xff]
    %v8358 = vld [vmem:[#allocation2 + $0x20] sm:$0xff]
    %v8359 = vld [vmem:[#allocation2 + $0x28] sm:$0xff]
    %v8360 = vld [vmem:[#allocation2 + $0x30] sm:$0xff]
    %v8361 = vld [vmem:[#allocation2 + $0x38] sm:$0xff]
    %v8362 = vld [vmem:[#allocation2 + $0x40] sm:$0xff]
    %v8363 = vld [vmem:[#allocation2 + $0x48] sm:$0xff]
    %v8364 = vld [vmem:[#allocation2 + $0x50] sm:$0xff]
    %v8365 = vld [vmem:[#allocation2 + $0x58] sm:$0xff]
    %v8366 = vld [vmem:[#allocation2 + $0x60] sm:$0xff]
    %v8367 = vld [vmem:[#allocation2 + $0x68] sm:$0xff]
    %v8368 = vld [vmem:[#allocation2 + $0x70] sm:$0xff]
    %v8369 = vld [vmem:[#allocation2 + $0x78] sm:$0xff]
    %v8370 = vperm.slane %v55, 5
    %v8371 = vadd.f32 %v8354, %v8370
    %v8372 = vadd.f32 %v8355, %v8370
    %v8373 = vadd.f32 %v8356, %v8370
    %v8374 = vadd.f32 %v8357, %v8370
    %v8375 = vadd.f32 %v8358, %v8370
    %v8376 = vadd.f32 %v8359, %v8370
    %v8377 = vadd.f32 %v8360, %v8370
    %v8378 = vadd.f32 %v8361, %v8370
    %v8379 = vadd.f32 %v8362, %v8370
    %v8380 = vadd.f32 %v8363, %v8370
    %v8381 = vadd.f32 %v8364, %v8370
    %v8382 = vadd.f32 %v8365, %v8370
    %v8383 = vadd.f32 %v8366, %v8370
    %v8384 = vadd.f32 %v8367, %v8370
    %v8385 = vadd.f32 %v8368, %v8370
    %v8386 = vadd.f32 %v8369, %v8370
    %v8387 = vmax.f32 %v8371, 0.0
    %v8388 = vmax.f32 %v8372, 0.0
    %v8389 = vmax.f32 %v8373, 0.0
    %v8390 = vmax.f32 %v8374, 0.0
    %v8391 = vmax.f32 %v8375, 0.0
    %v8392 = vmax.f32 %v8376, 0.0
    %v8393 = vmax.f32 %v8377, 0.0
    %v8394 = vmax.f32 %v8378, 0.0
    %v8395 = vmax.f32 %v8379, 0.0
    %v8396 = vmax.f32 %v8380, 0.0
    %v8397 = vmax.f32 %v8381, 0.0
    %v8398 = vmax.f32 %v8382, 0.0
    %v8399 = vmax.f32 %v8383, 0.0
    %v8400 = vmax.f32 %v8384, 0.0
    %v8401 = vmax.f32 %v8385, 0.0
    %v8402 = vmax.f32 %v8386, 0.0
    %v8403 = vpack.c.bf16 %v8388, %v8387
    %v8404 = vpack.c.bf16 %v8390, %v8389
    %v8405 = vpack.c.bf16 %v8392, %v8391
    %v8406 = vpack.c.bf16 %v8394, %v8393
    %v8407 = vpack.c.bf16 %v8396, %v8395
    %v8408 = vpack.c.bf16 %v8398, %v8397
    %v8409 = vpack.c.bf16 %v8400, %v8399
    %v8410 = vpack.c.bf16 %v8402, %v8401
    %s8411 = scalar_lea.vmem %s1, 64
    %v8412 = vld [vmem:[%s8411] sm:$0xf]
    %v8413 = vld [vmem:[%s8411 + $0x4] sm:$0xf]
    %v8414 = vld [vmem:[%s8411 + $0x8] sm:$0xf]
    %v8415 = vld [vmem:[%s8411 + $0xc] sm:$0xf]
    %v8416 = vld [vmem:[%s8411 + $0x10] sm:$0xf]
    %v8417 = vld [vmem:[%s8411 + $0x14] sm:$0xf]
    %v8418 = vld [vmem:[%s8411 + $0x18] sm:$0xf]
    %v8419 = vld [vmem:[%s8411 + $0x1c] sm:$0xf]
    %v8420 = vld [vmem:[%s8411 + $0x20] sm:$0xf]
    %v8421 = vld [vmem:[%s8411 + $0x24] sm:$0xf]
    %v8422 = vld [vmem:[%s8411 + $0x28] sm:$0xf]
    %v8423 = vld [vmem:[%s8411 + $0x2c] sm:$0xf]
    %v8424 = vld [vmem:[%s8411 + $0x30] sm:$0xf]
    %v8425 = vld [vmem:[%s8411 + $0x34] sm:$0xf]
    %v8426 = vld [vmem:[%s8411 + $0x38] sm:$0xf]
    %v8427 = vld [vmem:[%s8411 + $0x3c] sm:$0xf]
    %v8428 = vperm.slane %v55, 6
    %v8445 = vunpack.c.l.b16 %v8412
    %v8446 = vunpack.c.l.b16 %v8413
    %v8447 = vunpack.c.l.b16 %v8414
    %v8448 = vunpack.c.l.b16 %v8415
    %v8449 = vunpack.c.l.b16 %v8416
    %v8450 = vunpack.c.l.b16 %v8417
    %v8451 = vunpack.c.l.b16 %v8418
    %v8452 = vunpack.c.l.b16 %v8419
    %v8453 = vunpack.c.l.b16 %v8420
    %v8454 = vunpack.c.l.b16 %v8421
    %v8455 = vunpack.c.l.b16 %v8422
    %v8456 = vunpack.c.l.b16 %v8423
    %v8457 = vunpack.c.l.b16 %v8424
    %v8458 = vunpack.c.l.b16 %v8425
    %v8459 = vunpack.c.l.b16 %v8426
    %v8460 = vunpack.c.l.b16 %v8427
    %v8461 = vpack.c.b16 %v8446, %v8445
    %v8462 = vpack.c.b16 %v8448, %v8447
    %v8463 = vpack.c.b16 %v8450, %v8449
    %v8464 = vpack.c.b16 %v8452, %v8451
    %v8465 = vpack.c.b16 %v8454, %v8453
    %v8466 = vpack.c.b16 %v8456, %v8455
    %v8467 = vpack.c.b16 %v8458, %v8457
    %v8468 = vpack.c.b16 %v8460, %v8459
    %8477 = vmatpush.bf16.msra.mxu0 %v8468
    %8478 = vmatpush.bf16.msra.mxu0 %v8467
    %8479 = vmatpush.bf16.msra.mxu0 %v8466
    %8480 = vmatpush.bf16.msra.mxu0 %v8465
    %8481 = vmatpush.bf16.msra.mxu0 %v8464
    %8482 = vmatpush.bf16.msra.mxu0 %v8463
    %8483 = vmatpush.bf16.msra.mxu0 %v8462
    %8484 = vmatpush.bf16.msra.mxu0 %v8461
    %8485 = vmatmul.bf16.gmra.mxu0 %v8403
    %v8486 = vpop.f32.mrf.mxu0
    %v8487 = vadd.f32 %v8428, %v8486
    %v8488 = vpop.f32.mrf.mxu0
    %v8489 = vadd.f32 %v8428, %v8488
    %8490 = vmatmul.bf16.gmra.mxu0 %v8404
    %v8491 = vpop.f32.mrf.mxu0
    %v8492 = vadd.f32 %v8428, %v8491
    %v8493 = vpop.f32.mrf.mxu0
    %v8494 = vadd.f32 %v8428, %v8493
    %8495 = vmatmul.bf16.gmra.mxu0 %v8405
    %v8496 = vpop.f32.mrf.mxu0
    %v8497 = vadd.f32 %v8428, %v8496
    %v8498 = vpop.f32.mrf.mxu0
    %v8499 = vadd.f32 %v8428, %v8498
    %8500 = vmatmul.bf16.gmra.mxu0 %v8406
    %v8501 = vpop.f32.mrf.mxu0
    %v8502 = vadd.f32 %v8428, %v8501
    %v8503 = vpop.f32.mrf.mxu0
    %v8504 = vadd.f32 %v8428, %v8503
    %8505 = vmatmul.bf16.gmra.mxu0 %v8407
    %v8506 = vpop.f32.mrf.mxu0
    %v8507 = vadd.f32 %v8428, %v8506
    %v8508 = vpop.f32.mrf.mxu0
    %v8509 = vadd.f32 %v8428, %v8508
    %8510 = vmatmul.bf16.gmra.mxu0 %v8408
    %v8511 = vpop.f32.mrf.mxu0
    %v8512 = vadd.f32 %v8428, %v8511
    %v8513 = vpop.f32.mrf.mxu0
    %v8514 = vadd.f32 %v8428, %v8513
    %8515 = vmatmul.bf16.gmra.mxu0 %v8409
    %v8516 = vpop.f32.mrf.mxu0
    %v8517 = vadd.f32 %v8428, %v8516
    %v8518 = vpop.f32.mrf.mxu0
    %v8519 = vadd.f32 %v8428, %v8518
    %8520 = vmatmul.bf16.gmra.mxu0 %v8410
    %v8521 = vpop.f32.mrf.mxu0
    %v8522 = vadd.f32 %v8428, %v8521
    %v8523 = vpop.f32.mrf.mxu0
    %v8524 = vadd.f32 %v8428, %v8523
    %8525 = vdwg.mxu0
    %v8526 = vmax.f32 %v8487, 0.0
    %v8527 = vmax.f32 %v8489, 0.0
    %v8528 = vmax.f32 %v8492, 0.0
    %v8529 = vmax.f32 %v8494, 0.0
    %v8530 = vmax.f32 %v8497, 0.0
    %v8531 = vmax.f32 %v8499, 0.0
    %v8532 = vmax.f32 %v8502, 0.0
    %v8533 = vmax.f32 %v8504, 0.0
    %v8534 = vmax.f32 %v8507, 0.0
    %v8535 = vmax.f32 %v8509, 0.0
    %v8536 = vmax.f32 %v8512, 0.0
    %v8537 = vmax.f32 %v8514, 0.0
    %v8538 = vmax.f32 %v8517, 0.0
    %v8539 = vmax.f32 %v8519, 0.0
    %v8540 = vmax.f32 %v8522, 0.0
    %v8541 = vmax.f32 %v8524, 0.0
    %v8542 = vpack.c.bf16 %v8527, %v8526
    %v8543 = vpack.c.bf16 %v8529, %v8528
    %v8544 = vpack.c.bf16 %v8531, %v8530
    %v8545 = vpack.c.bf16 %v8533, %v8532
    %v8546 = vpack.c.bf16 %v8535, %v8534
    %v8547 = vpack.c.bf16 %v8537, %v8536
    %v8548 = vpack.c.bf16 %v8539, %v8538
    %v8549 = vpack.c.bf16 %v8541, %v8540
    %s8550 = scalar_lea.vmem %s1, 128
    %v8551 = vld [vmem:[%s8550] sm:$0xf]
    %v8552 = vld [vmem:[%s8550 + $0x4] sm:$0xf]
    %v8553 = vld [vmem:[%s8550 + $0x8] sm:$0xf]
    %v8554 = vld [vmem:[%s8550 + $0xc] sm:$0xf]
    %v8555 = vld [vmem:[%s8550 + $0x10] sm:$0xf]
    %v8556 = vld [vmem:[%s8550 + $0x14] sm:$0xf]
    %v8557 = vld [vmem:[%s8550 + $0x18] sm:$0xf]
    %v8558 = vld [vmem:[%s8550 + $0x1c] sm:$0xf]
    %v8559 = vld [vmem:[%s8550 + $0x20] sm:$0xf]
    %v8560 = vld [vmem:[%s8550 + $0x24] sm:$0xf]
    %v8561 = vld [vmem:[%s8550 + $0x28] sm:$0xf]
    %v8562 = vld [vmem:[%s8550 + $0x2c] sm:$0xf]
    %v8563 = vld [vmem:[%s8550 + $0x30] sm:$0xf]
    %v8564 = vld [vmem:[%s8550 + $0x34] sm:$0xf]
    %v8565 = vld [vmem:[%s8550 + $0x38] sm:$0xf]
    %v8566 = vld [vmem:[%s8550 + $0x3c] sm:$0xf]
    %v8567 = vperm.slane %v55, 7
    %v8584 = vunpack.c.l.b16 %v8551
    %v8585 = vunpack.c.l.b16 %v8552
    %v8586 = vunpack.c.l.b16 %v8553
    %v8587 = vunpack.c.l.b16 %v8554
    %v8588 = vunpack.c.l.b16 %v8555
    %v8589 = vunpack.c.l.b16 %v8556
    %v8590 = vunpack.c.l.b16 %v8557
    %v8591 = vunpack.c.l.b16 %v8558
    %v8592 = vunpack.c.l.b16 %v8559
    %v8593 = vunpack.c.l.b16 %v8560
    %v8594 = vunpack.c.l.b16 %v8561
    %v8595 = vunpack.c.l.b16 %v8562
    %v8596 = vunpack.c.l.b16 %v8563
    %v8597 = vunpack.c.l.b16 %v8564
    %v8598 = vunpack.c.l.b16 %v8565
    %v8599 = vunpack.c.l.b16 %v8566
    %v8600 = vpack.c.b16 %v8585, %v8584
    %v8601 = vpack.c.b16 %v8587, %v8586
    %v8602 = vpack.c.b16 %v8589, %v8588
    %v8603 = vpack.c.b16 %v8591, %v8590
    %v8604 = vpack.c.b16 %v8593, %v8592
    %v8605 = vpack.c.b16 %v8595, %v8594
    %v8606 = vpack.c.b16 %v8597, %v8596
    %v8607 = vpack.c.b16 %v8599, %v8598
    %8616 = vmatpush.bf16.msra.mxu0 %v8607
    %8617 = vmatpush.bf16.msra.mxu0 %v8606
    %8618 = vmatpush.bf16.msra.mxu0 %v8605
    %8619 = vmatpush.bf16.msra.mxu0 %v8604
    %8620 = vmatpush.bf16.msra.mxu0 %v8603
    %8621 = vmatpush.bf16.msra.mxu0 %v8602
    %8622 = vmatpush.bf16.msra.mxu0 %v8601
    %8623 = vmatpush.bf16.msra.mxu0 %v8600
    %8624 = vmatmul.bf16.gmra.mxu0 %v8542
    %v8625 = vpop.f32.mrf.mxu0
    %v8626 = vadd.f32 %v8567, %v8625
    %v8627 = vpop.f32.mrf.mxu0
    %v8628 = vadd.f32 %v8567, %v8627
    %8629 = vmatmul.bf16.gmra.mxu0 %v8543
    %v8630 = vpop.f32.mrf.mxu0
    %v8631 = vadd.f32 %v8567, %v8630
    %v8632 = vpop.f32.mrf.mxu0
    %v8633 = vadd.f32 %v8567, %v8632
    %8634 = vmatmul.bf16.gmra.mxu0 %v8544
    %v8635 = vpop.f32.mrf.mxu0
    %v8636 = vadd.f32 %v8567, %v8635
    %v8637 = vpop.f32.mrf.mxu0
    %v8638 = vadd.f32 %v8567, %v8637
    %8639 = vmatmul.bf16.gmra.mxu0 %v8545
    %v8640 = vpop.f32.mrf.mxu0
    %v8641 = vadd.f32 %v8567, %v8640
    %v8642 = vpop.f32.mrf.mxu0
    %v8643 = vadd.f32 %v8567, %v8642
    %8644 = vmatmul.bf16.gmra.mxu0 %v8546
    %v8645 = vpop.f32.mrf.mxu0
    %v8646 = vadd.f32 %v8567, %v8645
    %v8647 = vpop.f32.mrf.mxu0
    %v8648 = vadd.f32 %v8567, %v8647
    %8649 = vmatmul.bf16.gmra.mxu0 %v8547
    %v8650 = vpop.f32.mrf.mxu0
    %v8651 = vadd.f32 %v8567, %v8650
    %v8652 = vpop.f32.mrf.mxu0
    %v8653 = vadd.f32 %v8567, %v8652
    %8654 = vmatmul.bf16.gmra.mxu0 %v8548
    %v8655 = vpop.f32.mrf.mxu0
    %v8656 = vadd.f32 %v8567, %v8655
    %v8657 = vpop.f32.mrf.mxu0
    %v8658 = vadd.f32 %v8567, %v8657
    %8659 = vmatmul.bf16.gmra.mxu0 %v8549
    %v8660 = vpop.f32.mrf.mxu0
    %v8661 = vadd.f32 %v8567, %v8660
    %v8662 = vpop.f32.mrf.mxu0
    %v8663 = vadd.f32 %v8567, %v8662
    %8664 = vdwg.mxu0
    %8665 = vst [vmem:[#allocation8] sm:$0xff] %v8626
    %8666 = vst [vmem:[#allocation8 + $0x8] sm:$0xff] %v8628
    %8667 = vst [vmem:[#allocation8 + $0x10] sm:$0xff] %v8631
    %8668 = vst [vmem:[#allocation8 + $0x18] sm:$0xff] %v8633
    %8669 = vst [vmem:[#allocation8 + $0x20] sm:$0xff] %v8636
    %8670 = vst [vmem:[#allocation8 + $0x28] sm:$0xff] %v8638
    %8671 = vst [vmem:[#allocation8 + $0x30] sm:$0xff] %v8641
    %8672 = vst [vmem:[#allocation8 + $0x38] sm:$0xff] %v8643
    %8673 = vst [vmem:[#allocation8 + $0x40] sm:$0xff] %v8646
    %8674 = vst [vmem:[#allocation8 + $0x48] sm:$0xff] %v8648
    %8675 = vst [vmem:[#allocation8 + $0x50] sm:$0xff] %v8651
    %8676 = vst [vmem:[#allocation8 + $0x58] sm:$0xff] %v8653
    %8677 = vst [vmem:[#allocation8 + $0x60] sm:$0xff] %v8656
    %8678 = vst [vmem:[#allocation8 + $0x68] sm:$0xff] %v8658
    %8679 = vst [vmem:[#allocation8 + $0x70] sm:$0xff] %v8661
    %8680 = vst [vmem:[#allocation8 + $0x78] sm:$0xff] %v8663
    // Predicated region
    $region30: #{neuralformants_forward.1} parent=1 // pred_check
      _
    $region31: #{neuralformants_forward.1} parent=1 // pred_check_branch
      %8682 = sbr.rel (0) target = $region33
    $region32: #{neuralformants_forward.1} parent=1 // pred_region
      %8684 = vsyncadd [#allocation5], 0
      %s8685 = sshll.u32 [#allocation8], 4
      %s8686 = int_to_ptr.vmem [resolvable:$true] %s8685
      %s8687 = sshll.u32 %s5, 4
      %s8688 = int_to_ptr.hbm [resolvable:$true] %s8687
      %8693 = dma.vmem_to_hbm [thread:$0]  %s8686, 2048, %s8688, [#allocation5], 128, 128, 8
    $region33: #{neuralformants_forward.1} parent=1 // pred_fallthru
      _
    // Predicated region
    $region34: #{neuralformants_forward.1} parent=1 // pred_check
      _
    $region35: #{neuralformants_forward.1} parent=1 // pred_check_branch
      %8695 = sbr.rel (0) target = $region37
    $region36: #{neuralformants_forward.1} parent=1 // pred_region
      %8697 = dma.done [#allocation5], 2048
    $region37: #{neuralformants_forward.1} parent=1 // pred_fallthru
      _
    %8698 = vsyncpa [#allocation4], 1
    %8699 = vsyncpa [#allocation7], 1
    %8700 = vsyncpa [#allocation5], 1

</llo_original>
